<compile_context>
chip_gen: v5e
topology: v5e:2x2
jax: 0.10.0
libtpu: 0.0.40
codegen_flags: <defaults>
</compile_context>

<pallas_src>
import functools

import jax
import jax.numpy as jnp
import numpy as np
from jax.experimental import pallas as pl
from jax.experimental.pallas import tpu as pltpu


# ----------------------------------------------------------------------------
# Fused kernel: whole network forward for one image per grid step.
# ----------------------------------------------------------------------------
def net_kernel(x_ref, w1, b1, w2, b2, w3, b3, gmixT, waT, baT, wvT, bvT,
               wfa, bfa, wfv1, bfv1, wfv2, bfv2,
               pol_ref, val_ref,
               pad1, sh1, pad2, sh2, pad3, sh3, *, H, W):
    P = H * W
    # column index of every flattened position (P, 1) -- used to mask the
    # left/right wrap of the flattened spatial shifts.
    col = jax.lax.broadcasted_iota(jnp.int32, (P, 1), 0) % W

    def conv3x3_relu(x_pc, pad_ref, sh_ref, w_ref, b_ref, cin):
        """3x3 conv (stride 1, pad 1) + bias + ReLU as ONE K-folded matmul.

        x_pc  : (P, cin) f32 flattened NHWC activation
        pad_ref: (P + 4W, cin) f32 scratch (zero-padded slab)
        sh_ref : (P, 9*cin) f32 scratch (taps folded into lanes/K)
        w_ref  : (9*cin, cout) bf16 folded weight, b_ref: (1, cout) f32
        """
        off = 2 * W
        pad_ref[...] = jnp.zeros(pad_ref.shape, pad_ref.dtype)
        pad_ref[off:off + P, :] = x_pc
        k = 0
        for dy in range(3):
            for dx in range(3):
                start = off + (dy - 1) * W + (dx - 1)      # static offset
                sl = pad_ref[start:start + P, :]           # (P, cin)
                if dx == 0:        # source col = x-1 -> invalid at x == 0
                    sl = jnp.where(col > 0, sl, 0.0)
                elif dx == 2:      # source col = x+1 -> invalid at x == W-1
                    sl = jnp.where(col < W - 1, sl, 0.0)
                sh_ref[:, k * cin:(k + 1) * cin] = sl
                k += 1
        acc = jnp.dot(sh_ref[...].astype(jnp.bfloat16), w_ref[...],
                      preferred_element_type=jnp.float32)  # (P, cout)
        return jnp.maximum(acc + b_ref[...], 0.0)

    # ---------------- conv trunk (all in VMEM) ----------------
    a1 = conv3x3_relu(x_ref[0], pad1, sh1, w1, b1, 4)      # (P, 32)
    a2 = conv3x3_relu(a1, pad2, sh2, w2, b2, 32)           # (P, 64)
    x = conv3x3_relu(a2, pad3, sh3, w3, b3, 64)            # (P, 128)

    # ------------- global pooling + heads, channel-major (C, P) -------------
    xT = x.T                                               # (128, P)
    mean_c = jnp.mean(xT, axis=1, keepdims=True)           # (128, 1)
    max_c = jnp.max(xT, axis=1, keepdims=True)             # (128, 1)
    # gpool^T = Mm^T @ mean^T + Mx^T @ max^T  (Mm already folds the 1/W term)
    gpT = (jnp.dot(gmixT[0], mean_c, preferred_element_type=jnp.float32)
           + jnp.dot(gmixT[1], max_c, preferred_element_type=jnp.float32))
    featT = (xT + gpT).astype(jnp.bfloat16)                # (128, P)

    actT = jnp.maximum(
        jnp.dot(waT[...], featT, preferred_element_type=jnp.float32) + baT[...],
        0.0)                                               # (4, P) lane-dense
    valT = jnp.maximum(
        jnp.dot(wvT[...], featT, preferred_element_type=jnp.float32) + bvT[...],
        0.0)                                               # (2, P) lane-dense

    # (c, p) row-major flatten == torch NCHW .view(-1, C*H*W) ordering, so the
    # FC weights (reshaped to (C, P, out) at init) consume the maps directly.

    # ---------------- policy FC + log_softmax ----------------
    logits = bfa[...]                                      # (1, P) f32
    actT_b = actT.astype(jnp.bfloat16)
    for c in range(4):
        logits = logits + jnp.dot(actT_b[c:c + 1, :], wfa[c],
                                  preferred_element_type=jnp.float32)
    m = jnp.max(logits, axis=1, keepdims=True)
    lse = jnp.log(jnp.sum(jnp.exp(logits - m), axis=1, keepdims=True)) + m
    pol_ref[0] = logits - lse                              # log_softmax(dim=1)

    # ---------------- value FC ----------------
    v = bfv1[...]                                          # (1, 64) f32
    valT_b = valT.astype(jnp.bfloat16)
    for c in range(2):
        v = v + jnp.dot(valT_b[c:c + 1, :], wfv1[c],
                        preferred_element_type=jnp.float32)
    v = jnp.maximum(v, 0.0)
    v = jnp.dot(v, wfv2[...], preferred_element_type=jnp.float32) + bfv2[...]
    val_ref[0] = jnp.tanh(v)                               # (1, 1)


# ----------------------------------------------------------------------------
# Wrapper
# ----------------------------------------------------------------------------
def forward(params, state_nchw):
    N, C, H, W = state_nchw.shape
    P = H * W
    # NCHW -> flattened NHWC (N, P, C)
    x = jnp.transpose(state_nchw, (0, 2, 3, 1)).reshape(N, P, C)
    x = x.astype(jnp.float32)

    def const(shape):
        zeros = (0,) * len(shape)
        return pl.BlockSpec(shape, lambda n: zeros)

    kern = functools.partial(net_kernel, H=H, W=W)
    pol, val = pl.pallas_call(
        kern,
        out_shape=(jax.ShapeDtypeStruct((N, 1, P), jnp.float32),
                   jax.ShapeDtypeStruct((N, 1, 1), jnp.float32)),
        grid=(N,),
        in_specs=[
            pl.BlockSpec((1, P, C), lambda n: (n, 0, 0)),   # input image
            const((36, 32)), const((1, 32)),                # conv1 (folded)
            const((288, 64)), const((1, 64)),               # conv2 (folded)
            const((576, 128)), const((1, 128)),             # conv3 (folded)
            const((2, 128, 128)),                           # gpool remix (T)
            const((4, 128)), const((4, 1)),                 # act_conv1
            const((2, 128)), const((2, 1)),                 # val_conv1
            const((4, P, P)), const((1, P)),                # act_fc1
            const((2, P, 64)), const((1, 64)),              # val_fc1
            const((64, 1)), const((1, 1)),                  # val_fc2
        ],
        out_specs=(pl.BlockSpec((1, 1, P), lambda n: (n, 0, 0)),
                   pl.BlockSpec((1, 1, 1), lambda n: (n, 0, 0))),
        scratch_shapes=[
            pltpu.VMEM((P + 4 * W, 4), jnp.float32),        # pad slab conv1
            pltpu.VMEM((P, 36), jnp.float32),               # folded taps conv1
            pltpu.VMEM((P + 4 * W, 32), jnp.float32),       # pad slab conv2
            pltpu.VMEM((P, 288), jnp.float32),              # folded taps conv2
            pltpu.VMEM((P + 4 * W, 64), jnp.float32),       # pad slab conv3
            pltpu.VMEM((P, 576), jnp.float32),              # folded taps conv3
        ],
        compiler_params=pltpu.CompilerParams(
            dimension_semantics=("parallel",)),
    )(x,
      params["w1"], params["b1"], params["w2"], params["b2"],
      params["w3"], params["b3"], params["gmixT"],
      params["wa"], params["ba"], params["wv"], params["bv"],
      params["wfa"], params["bfa"], params["wfv1"], params["bfv1"],
      params["wfv2"], params["bfv2"])
    return pol.reshape(N, P), val.reshape(N, 1)


# ----------------------------------------------------------------------------
# Parameters (deterministic synthetic init) in kernel-friendly layouts
# ----------------------------------------------------------------------------
def init_params(board_w, board_h, seed=42):
    key = jax.random.PRNGKey(seed)
    ks = jax.random.split(key, 16)

    def nrm(k, shape, scale=0.1):
        return scale * jax.random.normal(k, shape, jnp.float32)

    P = board_w * board_h
    bf16 = jnp.bfloat16
    # conv weights generated as (kh, kw, Cin, Cout) then K-folded to (9*Cin, Cout)
    c1 = nrm(ks[0], (3, 3, 4, 32))
    c2 = nrm(ks[2], (3, 3, 32, 64))
    c3 = nrm(ks[4], (3, 3, 64, 128))
    p = {
        "w1": c1.reshape(36, 32).astype(bf16),   "b1": nrm(ks[1], (1, 32)),
        "w2": c2.reshape(288, 64).astype(bf16),  "b2": nrm(ks[3], (1, 64)),
        "w3": c3.reshape(576, 128).astype(bf16), "b3": nrm(ks[5], (1, 128)),
        # 1x1 head convs stored channel-major: (Cout, Cin), bias (Cout, 1)
        "wa": nrm(ks[6], (4, 128)).astype(bf16), "ba": nrm(ks[7], (4, 1)),
        "wv": nrm(ks[8], (2, 128)).astype(bf16), "bv": nrm(ks[9], (2, 1)),
        # FC weights stored (in, out), then the `in` axis (torch order c*P+p)
        # is split to (C, P, out) so the kernel's (C, P) maps feed it directly.
        "wfa": nrm(ks[10], (4 * P, P), 0.02).reshape(4, P, P).astype(bf16),
        "bfa": nrm(ks[11], (1, P)),
        "wfv1": nrm(ks[12], (2 * P, 64), 0.02).reshape(2, P, 64).astype(bf16),
        "bfv1": nrm(ks[13], (1, 64)),
        "wfv2": nrm(ks[14], (64, 1)), "bfv2": nrm(ks[15], (1, 1)),
    }
    # TODO(synk): reference Net defines res_blocks but never uses them in
    # forward(); they are omitted here on purpose.

    # GlobalPoolingLayer remix: gpool = mean @ (M0 + M1/W) + max @ M2, where
    # M[k, k//3] = 1/3 reproduces cat([mean, mean/W, max]).view(N,128,3).mean(-1).
    M = np.zeros((384, 128), np.float32)
    for k in range(384):
        M[k, k // 3] = 1.0 / 3.0
    Mm = M[:128] + M[128:256] * (1.0 / board_w)
    Mx = M[256:]
    # stored transposed because the kernel works in channel-major (C, P) land
    p["gmixT"] = jnp.asarray(np.stack([Mm.T, Mx.T], axis=0))
    return p


if __name__ == "__main__":
    board_w = board_h = 16
    N = 2
    key = jax.random.PRNGKey(0)
    state_input = jax.random.normal(key, (N, 4, board_h, board_w), jnp.float32)

    params = init_params(board_w, board_h)
    fwd = jax.jit(forward)
    x_act, x_val = fwd(params, state_input)
    jax.block_until_ready((x_act, x_val))

    assert x_act.shape == (N, board_w * board_h)
    assert x_val.shape == (N, 1)
    assert bool(jnp.all(jnp.isfinite(x_act))) and bool(jnp.all(jnp.isfinite(x_val)))
    # log-softmax rows should sum to ~1 in prob space; value is tanh-bounded
    assert bool(jnp.allclose(jnp.sum(jnp.exp(x_act), axis=1), 1.0, atol=1e-4))
    assert bool(jnp.all(jnp.abs(x_val) <= 1.0))
    print("KERNEL_OK")
</pallas_src>

<mosaic_0001>
module attributes {stable_mosaic.version = 11 : i64} {
  func.func @net_kernel(%arg0: i32, %arg1: memref<1x256x4xf32, #tpu.memory_space<vmem>>, %arg2: memref<36x32xbf16, #tpu.memory_space<vmem>>, %arg3: memref<1x32xf32, #tpu.memory_space<vmem>>, %arg4: memref<288x64xbf16, #tpu.memory_space<vmem>>, %arg5: memref<1x64xf32, #tpu.memory_space<vmem>>, %arg6: memref<576x128xbf16, #tpu.memory_space<vmem>>, %arg7: memref<1x128xf32, #tpu.memory_space<vmem>>, %arg8: memref<2x128x128xf32, #tpu.memory_space<vmem>>, %arg9: memref<4x128xbf16, #tpu.memory_space<vmem>>, %arg10: memref<4x1xf32, #tpu.memory_space<vmem>>, %arg11: memref<2x128xbf16, #tpu.memory_space<vmem>>, %arg12: memref<2x1xf32, #tpu.memory_space<vmem>>, %arg13: memref<4x256x256xbf16, #tpu.memory_space<vmem>>, %arg14: memref<1x256xf32, #tpu.memory_space<vmem>>, %arg15: memref<2x256x64xbf16, #tpu.memory_space<vmem>>, %arg16: memref<1x64xf32, #tpu.memory_space<vmem>>, %arg17: memref<64x1xf32, #tpu.memory_space<vmem>>, %arg18: memref<1x1xf32, #tpu.memory_space<vmem>>, %arg19: memref<1x1x256xf32, #tpu.memory_space<vmem>>, %arg20: memref<1x1x1xf32, #tpu.memory_space<vmem>>, %arg21: memref<320x4xf32, #tpu.memory_space<vmem>>, %arg22: memref<256x36xf32, #tpu.memory_space<vmem>>, %arg23: memref<320x32xf32, #tpu.memory_space<vmem>>, %arg24: memref<256x288xf32, #tpu.memory_space<vmem>>, %arg25: memref<320x64xf32, #tpu.memory_space<vmem>>, %arg26: memref<256x576xf32, #tpu.memory_space<vmem>>) attributes {dimension_semantics = [#tpu.dimension_semantics<parallel>], iteration_bounds = array<i64: 2>, scalar_prefetch = 0 : i64, scratch_operands = 6 : i64, tpu.core_type = #tpu.core_type<tc>, window_params = [{transform_indices = @transform_0, window_bounds = array<i64: 1, 256, 4>}, {pipeline_mode = #tpu.pipeline_mode<synchronous>, transform_indices = @transform_1, window_bounds = array<i64: 36, 32>}, {pipeline_mode = #tpu.pipeline_mode<synchronous>, transform_indices = @transform_2, window_bounds = array<i64: 1, 32>}, {pipeline_mode = #tpu.pipeline_mode<synchronous>, transform_indices = @transform_3, window_bounds = array<i64: 288, 64>}, {pipeline_mode = #tpu.pipeline_mode<synchronous>, transform_indices = @transform_4, window_bounds = array<i64: 1, 64>}, {pipeline_mode = #tpu.pipeline_mode<synchronous>, transform_indices = @transform_5, window_bounds = array<i64: 576, 128>}, {pipeline_mode = #tpu.pipeline_mode<synchronous>, transform_indices = @transform_6, window_bounds = array<i64: 1, 128>}, {pipeline_mode = #tpu.pipeline_mode<synchronous>, transform_indices = @transform_7, window_bounds = array<i64: 2, 128, 128>}, {pipeline_mode = #tpu.pipeline_mode<synchronous>, transform_indices = @transform_8, window_bounds = array<i64: 4, 128>}, {pipeline_mode = #tpu.pipeline_mode<synchronous>, transform_indices = @transform_9, window_bounds = array<i64: 4, 1>}, {pipeline_mode = #tpu.pipeline_mode<synchronous>, transform_indices = @transform_10, window_bounds = array<i64: 2, 128>}, {pipeline_mode = #tpu.pipeline_mode<synchronous>, transform_indices = @transform_11, window_bounds = array<i64: 2, 1>}, {pipeline_mode = #tpu.pipeline_mode<synchronous>, transform_indices = @transform_12, window_bounds = array<i64: 4, 256, 256>}, {pipeline_mode = #tpu.pipeline_mode<synchronous>, transform_indices = @transform_13, window_bounds = array<i64: 1, 256>}, {pipeline_mode = #tpu.pipeline_mode<synchronous>, transform_indices = @transform_14, window_bounds = array<i64: 2, 256, 64>}, {pipeline_mode = #tpu.pipeline_mode<synchronous>, transform_indices = @transform_15, window_bounds = array<i64: 1, 64>}, {pipeline_mode = #tpu.pipeline_mode<synchronous>, transform_indices = @transform_16, window_bounds = array<i64: 64, 1>}, {pipeline_mode = #tpu.pipeline_mode<synchronous>, transform_indices = @transform_17, window_bounds = array<i64: 1, 1>}, {transform_indices = @transform_18, window_bounds = array<i64: 1, 1, 256>}, {transform_indices = @transform_19, window_bounds = array<i64: 1, 1, 1>}]} {
    %0 = tpu.iota {dimensions = array<i32: 0>} : vector<256x1xi32>
    %c16_i32 = arith.constant 16 : i32
    %c0_i32 = arith.constant 0 : i32
    %1 = arith.cmpi eq, %c16_i32, %c0_i32 : i32
    %c1_i32 = arith.constant 1 : i32
    %2 = arith.select %1, %c1_i32, %c16_i32 : i32
    %3 = vector.broadcast %2 : i32 to vector<256x1xi32>
    %4 = arith.remsi %0, %3 : vector<256x1xi32>
    %c0_i32_0 = arith.constant 0 : i32
    %5 = vector.broadcast %c0_i32_0 : i32 to vector<256x1xi32>
    %6 = arith.cmpi ne, %4, %5 : vector<256x1xi32>
    %c0_i32_1 = arith.constant 0 : i32
    %7 = vector.broadcast %c0_i32_1 : i32 to vector<256x1xi32>
    %8 = arith.cmpi slt, %4, %7 : vector<256x1xi32>
    %c0_i32_2 = arith.constant 0 : i32
    %9 = arith.cmpi slt, %2, %c0_i32_2 : i32
    %10 = vector.broadcast %9 : i1 to vector<256x1xi1>
    %11 = vector.broadcast %10 : vector<256x1xi1> to vector<256x1xi1>
    %12 = arith.xori %8, %11 : vector<256x1xi1>
    %13 = arith.andi %12, %6 : vector<256x1xi1>
    %14 = vector.broadcast %2 : i32 to vector<256x1xi32>
    %15 = arith.addi %4, %14 : vector<256x1xi32>
    %16 = arith.select %13, %15, %4 : vector<256x1xi1>, vector<256x1xi32>
    %c0 = arith.constant 0 : index
    %c0_3 = arith.constant 0 : index
    %c0_4 = arith.constant 0 : index
    %17 = vector.load %arg1[%c0, %c0_3, %c0_4] : memref<1x256x4xf32, #tpu.memory_space<vmem>>, vector<1x256x4xf32>
    %18 = vector.shape_cast %17 : vector<1x256x4xf32> to vector<256x4xf32>
    %cst = arith.constant 0.000000e+00 : f32
    %19 = vector.broadcast %cst : f32 to vector<320x4xf32>
    %c0_5 = arith.constant 0 : index
    %c0_6 = arith.constant 0 : index
    %20 = vector.load %arg21[%c0_5, %c0_6] : memref<320x4xf32, #tpu.memory_space<vmem>>, vector<320x4xf32>
    tpu.vector_store %arg21[%c0_5, %c0_6], %19 {strides = array<i32>} : memref<320x4xf32, #tpu.memory_space<vmem>>, vector<320x4xf32>,
    %c32 = arith.constant 32 : index
    %c0_7 = arith.constant 0 : index
    %21 = vector.load %arg21[%c32, %c0_7] : memref<320x4xf32, #tpu.memory_space<vmem>>, vector<256x4xf32>
    tpu.vector_store %arg21[%c32, %c0_7], %18 {strides = array<i32>} : memref<320x4xf32, #tpu.memory_space<vmem>>, vector<256x4xf32>,
    %c15 = arith.constant 15 : index
    %c0_8 = arith.constant 0 : index
    %22 = vector.load %arg21[%c15, %c0_8] : memref<320x4xf32, #tpu.memory_space<vmem>>, vector<256x4xf32>
    %c0_i32_9 = arith.constant 0 : i32
    %23 = vector.broadcast %c0_i32_9 : i32 to vector<256x1xi32>
    %24 = arith.cmpi sgt, %16, %23 : vector<256x1xi32>
    %cst_10 = arith.constant 0.000000e+00 : f32
    %25 = vector.shape_cast %24 : vector<256x1xi1> to vector<256x1xi1>
    %26 = vector.broadcast %25 : vector<256x1xi1> to vector<256x4xi1>
    %27 = vector.broadcast %cst_10 : f32 to vector<256x4xf32>
    %28 = arith.select %26, %22, %27 : vector<256x4xi1>, vector<256x4xf32>
    %c0_11 = arith.constant 0 : index
    %c0_12 = arith.constant 0 : index
    %29 = vector.load %arg22[%c0_11, %c0_12] : memref<256x36xf32, #tpu.memory_space<vmem>>, vector<256x4xf32>
    tpu.vector_store %arg22[%c0_11, %c0_12], %28 {strides = array<i32>} : memref<256x36xf32, #tpu.memory_space<vmem>>, vector<256x4xf32>,
    %c16 = arith.constant 16 : index
    %c0_13 = arith.constant 0 : index
    %30 = vector.load %arg21[%c16, %c0_13] : memref<320x4xf32, #tpu.memory_space<vmem>>, vector<256x4xf32>
    %c0_14 = arith.constant 0 : index
    %c4 = arith.constant 4 : index
    %31 = vector.load %arg22[%c0_14, %c4] : memref<256x36xf32, #tpu.memory_space<vmem>>, vector<256x4xf32>
    tpu.vector_store %arg22[%c0_14, %c4], %30 {strides = array<i32>} : memref<256x36xf32, #tpu.memory_space<vmem>>, vector<256x4xf32>,
    %c17 = arith.constant 17 : index
    %c0_15 = arith.constant 0 : index
    %32 = vector.load %arg21[%c17, %c0_15] : memref<320x4xf32, #tpu.memory_space<vmem>>, vector<256x4xf32>
    %c15_i32 = arith.constant 15 : i32
    %33 = vector.broadcast %c15_i32 : i32 to vector<256x1xi32>
    %34 = arith.cmpi slt, %16, %33 : vector<256x1xi32>
    %cst_16 = arith.constant 0.000000e+00 : f32
    %35 = vector.shape_cast %34 : vector<256x1xi1> to vector<256x1xi1>
    %36 = vector.broadcast %35 : vector<256x1xi1> to vector<256x4xi1>
    %37 = vector.broadcast %cst_16 : f32 to vector<256x4xf32>
    %38 = arith.select %36, %32, %37 : vector<256x4xi1>, vector<256x4xf32>
    %c0_17 = arith.constant 0 : index
    %c8 = arith.constant 8 : index
    %39 = vector.load %arg22[%c0_17, %c8] : memref<256x36xf32, #tpu.memory_space<vmem>>, vector<256x4xf32>
    tpu.vector_store %arg22[%c0_17, %c8], %38 {strides = array<i32>} : memref<256x36xf32, #tpu.memory_space<vmem>>, vector<256x4xf32>,
    %c31 = arith.constant 31 : index
    %c0_18 = arith.constant 0 : index
    %40 = vector.load %arg21[%c31, %c0_18] : memref<320x4xf32, #tpu.memory_space<vmem>>, vector<256x4xf32>
    %c0_i32_19 = arith.constant 0 : i32
    %41 = vector.broadcast %c0_i32_19 : i32 to vector<256x1xi32>
    %42 = arith.cmpi sgt, %16, %41 : vector<256x1xi32>
    %cst_20 = arith.constant 0.000000e+00 : f32
    %43 = vector.shape_cast %42 : vector<256x1xi1> to vector<256x1xi1>
    %44 = vector.broadcast %43 : vector<256x1xi1> to vector<256x4xi1>
    %45 = vector.broadcast %cst_20 : f32 to vector<256x4xf32>
    %46 = arith.select %44, %40, %45 : vector<256x4xi1>, vector<256x4xf32>
    %c0_21 = arith.constant 0 : index
    %c12 = arith.constant 12 : index
    %47 = vector.load %arg22[%c0_21, %c12] : memref<256x36xf32, #tpu.memory_space<vmem>>, vector<256x4xf32>
    tpu.vector_store %arg22[%c0_21, %c12], %46 {strides = array<i32>} : memref<256x36xf32, #tpu.memory_space<vmem>>, vector<256x4xf32>,
    %c32_22 = arith.constant 32 : index
    %c0_23 = arith.constant 0 : index
    %48 = vector.load %arg21[%c32_22, %c0_23] : memref<320x4xf32, #tpu.memory_space<vmem>>, vector<256x4xf32>
    %c0_24 = arith.constant 0 : index
    %c16_25 = arith.constant 16 : index
    %49 = vector.load %arg22[%c0_24, %c16_25] : memref<256x36xf32, #tpu.memory_space<vmem>>, vector<256x4xf32>
    tpu.vector_store %arg22[%c0_24, %c16_25], %48 {strides = array<i32>} : memref<256x36xf32, #tpu.memory_space<vmem>>, vector<256x4xf32>,
    %c33 = arith.constant 33 : index
    %c0_26 = arith.constant 0 : index
    %50 = vector.load %arg21[%c33, %c0_26] : memref<320x4xf32, #tpu.memory_space<vmem>>, vector<256x4xf32>
    %c15_i32_27 = arith.constant 15 : i32
    %51 = vector.broadcast %c15_i32_27 : i32 to vector<256x1xi32>
    %52 = arith.cmpi slt, %16, %51 : vector<256x1xi32>
    %cst_28 = arith.constant 0.000000e+00 : f32
    %53 = vector.shape_cast %52 : vector<256x1xi1> to vector<256x1xi1>
    %54 = vector.broadcast %53 : vector<256x1xi1> to vector<256x4xi1>
    %55 = vector.broadcast %cst_28 : f32 to vector<256x4xf32>
    %56 = arith.select %54, %50, %55 : vector<256x4xi1>, vector<256x4xf32>
    %c0_29 = arith.constant 0 : index
    %c20 = arith.constant 20 : index
    %57 = vector.load %arg22[%c0_29, %c20] : memref<256x36xf32, #tpu.memory_space<vmem>>, vector<256x4xf32>
    tpu.vector_store %arg22[%c0_29, %c20], %56 {strides = array<i32>} : memref<256x36xf32, #tpu.memory_space<vmem>>, vector<256x4xf32>,
    %c47 = arith.constant 47 : index
    %c0_30 = arith.constant 0 : index
    %58 = vector.load %arg21[%c47, %c0_30] : memref<320x4xf32, #tpu.memory_space<vmem>>, vector<256x4xf32>
    %c0_i32_31 = arith.constant 0 : i32
    %59 = vector.broadcast %c0_i32_31 : i32 to vector<256x1xi32>
    %60 = arith.cmpi sgt, %16, %59 : vector<256x1xi32>
    %cst_32 = arith.constant 0.000000e+00 : f32
    %61 = vector.shape_cast %60 : vector<256x1xi1> to vector<256x1xi1>
    %62 = vector.broadcast %61 : vector<256x1xi1> to vector<256x4xi1>
    %63 = vector.broadcast %cst_32 : f32 to vector<256x4xf32>
    %64 = arith.select %62, %58, %63 : vector<256x4xi1>, vector<256x4xf32>
    %c0_33 = arith.constant 0 : index
    %c24 = arith.constant 24 : index
    %65 = vector.load %arg22[%c0_33, %c24] : memref<256x36xf32, #tpu.memory_space<vmem>>, vector<256x4xf32>
    tpu.vector_store %arg22[%c0_33, %c24], %64 {strides = array<i32>} : memref<256x36xf32, #tpu.memory_space<vmem>>, vector<256x4xf32>,
    %c48 = arith.constant 48 : index
    %c0_34 = arith.constant 0 : index
    %66 = vector.load %arg21[%c48, %c0_34] : memref<320x4xf32, #tpu.memory_space<vmem>>, vector<256x4xf32>
    %c0_35 = arith.constant 0 : index
    %c28 = arith.constant 28 : index
    %67 = vector.load %arg22[%c0_35, %c28] : memref<256x36xf32, #tpu.memory_space<vmem>>, vector<256x4xf32>
    tpu.vector_store %arg22[%c0_35, %c28], %66 {strides = array<i32>} : memref<256x36xf32, #tpu.memory_space<vmem>>, vector<256x4xf32>,
    %c49 = arith.constant 49 : index
    %c0_36 = arith.constant 0 : index
    %68 = vector.load %arg21[%c49, %c0_36] : memref<320x4xf32, #tpu.memory_space<vmem>>, vector<256x4xf32>
    %c15_i32_37 = arith.constant 15 : i32
    %69 = vector.broadcast %c15_i32_37 : i32 to vector<256x1xi32>
    %70 = arith.cmpi slt, %16, %69 : vector<256x1xi32>
    %cst_38 = arith.constant 0.000000e+00 : f32
    %71 = vector.shape_cast %70 : vector<256x1xi1> to vector<256x1xi1>
    %72 = vector.broadcast %71 : vector<256x1xi1> to vector<256x4xi1>
    %73 = vector.broadcast %cst_38 : f32 to vector<256x4xf32>
    %74 = arith.select %72, %68, %73 : vector<256x4xi1>, vector<256x4xf32>
    %c0_39 = arith.constant 0 : index
    %c32_40 = arith.constant 32 : index
    %75 = vector.load %arg22[%c0_39, %c32_40] : memref<256x36xf32, #tpu.memory_space<vmem>>, vector<256x4xf32>
    tpu.vector_store %arg22[%c0_39, %c32_40], %74 {strides = array<i32>} : memref<256x36xf32, #tpu.memory_space<vmem>>, vector<256x4xf32>,
    %c0_41 = arith.constant 0 : index
    %c0_42 = arith.constant 0 : index
    %76 = vector.load %arg22[%c0_41, %c0_42] : memref<256x36xf32, #tpu.memory_space<vmem>>, vector<256x36xf32>
    %77 = arith.truncf %76 : vector<256x36xf32> to vector<256x36xbf16>
    %c0_43 = arith.constant 0 : index
    %c0_44 = arith.constant 0 : index
    %78 = vector.load %arg2[%c0_43, %c0_44] : memref<36x32xbf16, #tpu.memory_space<vmem>>, vector<36x32xbf16>
    %cst_45 = arith.constant dense<0.000000e+00> : vector<256x32xf32>
    %79 = tpu.matmul %77, %78, %cst_45 {dimension_numbers = #tpu.dot_dimension_numbers<[1], [0], [0], [1], [0, 0, 1, 1], [], []>} : vector<256x36xbf16>, vector<36x32xbf16>, vector<256x32xf32> -> vector<256x32xf32>
    %c0_46 = arith.constant 0 : index
    %c0_47 = arith.constant 0 : index
    %80 = vector.load %arg3[%c0_46, %c0_47] : memref<1x32xf32, #tpu.memory_space<vmem>>, vector<1x32xf32>
    %81 = vector.broadcast %80 : vector<1x32xf32> to vector<256x32xf32>
    %82 = arith.addf %79, %81 : vector<256x32xf32>
    %cst_48 = arith.constant 0.000000e+00 : f32
    %83 = vector.broadcast %cst_48 : f32 to vector<256x32xf32>
    %84 = arith.maximumf %82, %83 : vector<256x32xf32>
    %cst_49 = arith.constant 0.000000e+00 : f32
    %85 = vector.broadcast %cst_49 : f32 to vector<320x32xf32>
    %c0_50 = arith.constant 0 : index
    %c0_51 = arith.constant 0 : index
    %86 = vector.load %arg23[%c0_50, %c0_51] : memref<320x32xf32, #tpu.memory_space<vmem>>, vector<320x32xf32>
    tpu.vector_store %arg23[%c0_50, %c0_51], %85 {strides = array<i32>} : memref<320x32xf32, #tpu.memory_space<vmem>>, vector<320x32xf32>,
    %c32_52 = arith.constant 32 : index
    %c0_53 = arith.constant 0 : index
    %87 = vector.load %arg23[%c32_52, %c0_53] : memref<320x32xf32, #tpu.memory_space<vmem>>, vector<256x32xf32>
    tpu.vector_store %arg23[%c32_52, %c0_53], %84 {strides = array<i32>} : memref<320x32xf32, #tpu.memory_space<vmem>>, vector<256x32xf32>,
    %c15_54 = arith.constant 15 : index
    %c0_55 = arith.constant 0 : index
    %88 = vector.load %arg23[%c15_54, %c0_55] : memref<320x32xf32, #tpu.memory_space<vmem>>, vector<256x32xf32>
    %c0_i32_56 = arith.constant 0 : i32
    %89 = vector.broadcast %c0_i32_56 : i32 to vector<256x1xi32>
    %90 = arith.cmpi sgt, %16, %89 : vector<256x1xi32>
    %cst_57 = arith.constant 0.000000e+00 : f32
    %91 = vector.shape_cast %90 : vector<256x1xi1> to vector<256x1xi1>
    %92 = vector.broadcast %91 : vector<256x1xi1> to vector<256x32xi1>
    %93 = vector.broadcast %cst_57 : f32 to vector<256x32xf32>
    %94 = arith.select %92, %88, %93 : vector<256x32xi1>, vector<256x32xf32>
    %c0_58 = arith.constant 0 : index
    %c0_59 = arith.constant 0 : index
    %95 = vector.load %arg24[%c0_58, %c0_59] : memref<256x288xf32, #tpu.memory_space<vmem>>, vector<256x32xf32>
    tpu.vector_store %arg24[%c0_58, %c0_59], %94 {strides = array<i32>} : memref<256x288xf32, #tpu.memory_space<vmem>>, vector<256x32xf32>,
    %c16_60 = arith.constant 16 : index
    %c0_61 = arith.constant 0 : index
    %96 = vector.load %arg23[%c16_60, %c0_61] : memref<320x32xf32, #tpu.memory_space<vmem>>, vector<256x32xf32>
    %c0_62 = arith.constant 0 : index
    %c32_63 = arith.constant 32 : index
    %97 = vector.load %arg24[%c0_62, %c32_63] : memref<256x288xf32, #tpu.memory_space<vmem>>, vector<256x32xf32>
    tpu.vector_store %arg24[%c0_62, %c32_63], %96 {strides = array<i32>} : memref<256x288xf32, #tpu.memory_space<vmem>>, vector<256x32xf32>,
    %c17_64 = arith.constant 17 : index
    %c0_65 = arith.constant 0 : index
    %98 = vector.load %arg23[%c17_64, %c0_65] : memref<320x32xf32, #tpu.memory_space<vmem>>, vector<256x32xf32>
    %c15_i32_66 = arith.constant 15 : i32
    %99 = vector.broadcast %c15_i32_66 : i32 to vector<256x1xi32>
    %100 = arith.cmpi slt, %16, %99 : vector<256x1xi32>
    %cst_67 = arith.constant 0.000000e+00 : f32
    %101 = vector.shape_cast %100 : vector<256x1xi1> to vector<256x1xi1>
    %102 = vector.broadcast %101 : vector<256x1xi1> to vector<256x32xi1>
    %103 = vector.broadcast %cst_67 : f32 to vector<256x32xf32>
    %104 = arith.select %102, %98, %103 : vector<256x32xi1>, vector<256x32xf32>
    %c0_68 = arith.constant 0 : index
    %c64 = arith.constant 64 : index
    %105 = vector.load %arg24[%c0_68, %c64] : memref<256x288xf32, #tpu.memory_space<vmem>>, vector<256x32xf32>
    tpu.vector_store %arg24[%c0_68, %c64], %104 {strides = array<i32>} : memref<256x288xf32, #tpu.memory_space<vmem>>, vector<256x32xf32>,
    %c31_69 = arith.constant 31 : index
    %c0_70 = arith.constant 0 : index
    %106 = vector.load %arg23[%c31_69, %c0_70] : memref<320x32xf32, #tpu.memory_space<vmem>>, vector<256x32xf32>
    %c0_i32_71 = arith.constant 0 : i32
    %107 = vector.broadcast %c0_i32_71 : i32 to vector<256x1xi32>
    %108 = arith.cmpi sgt, %16, %107 : vector<256x1xi32>
    %cst_72 = arith.constant 0.000000e+00 : f32
    %109 = vector.shape_cast %108 : vector<256x1xi1> to vector<256x1xi1>
    %110 = vector.broadcast %109 : vector<256x1xi1> to vector<256x32xi1>
    %111 = vector.broadcast %cst_72 : f32 to vector<256x32xf32>
    %112 = arith.select %110, %106, %111 : vector<256x32xi1>, vector<256x32xf32>
    %c0_73 = arith.constant 0 : index
    %c96 = arith.constant 96 : index
    %113 = vector.load %arg24[%c0_73, %c96] : memref<256x288xf32, #tpu.memory_space<vmem>>, vector<256x32xf32>
    tpu.vector_store %arg24[%c0_73, %c96], %112 {strides = array<i32>} : memref<256x288xf32, #tpu.memory_space<vmem>>, vector<256x32xf32>,
    %c32_74 = arith.constant 32 : index
    %c0_75 = arith.constant 0 : index
    %114 = vector.load %arg23[%c32_74, %c0_75] : memref<320x32xf32, #tpu.memory_space<vmem>>, vector<256x32xf32>
    %c0_76 = arith.constant 0 : index
    %c128 = arith.constant 128 : index
    %115 = vector.load %arg24[%c0_76, %c128] : memref<256x288xf32, #tpu.memory_space<vmem>>, vector<256x32xf32>
    tpu.vector_store %arg24[%c0_76, %c128], %114 {strides = array<i32>} : memref<256x288xf32, #tpu.memory_space<vmem>>, vector<256x32xf32>,
    %c33_77 = arith.constant 33 : index
    %c0_78 = arith.constant 0 : index
    %116 = vector.load %arg23[%c33_77, %c0_78] : memref<320x32xf32, #tpu.memory_space<vmem>>, vector<256x32xf32>
    %c15_i32_79 = arith.constant 15 : i32
    %117 = vector.broadcast %c15_i32_79 : i32 to vector<256x1xi32>
    %118 = arith.cmpi slt, %16, %117 : vector<256x1xi32>
    %cst_80 = arith.constant 0.000000e+00 : f32
    %119 = vector.shape_cast %118 : vector<256x1xi1> to vector<256x1xi1>
    %120 = vector.broadcast %119 : vector<256x1xi1> to vector<256x32xi1>
    %121 = vector.broadcast %cst_80 : f32 to vector<256x32xf32>
    %122 = arith.select %120, %116, %121 : vector<256x32xi1>, vector<256x32xf32>
    %c0_81 = arith.constant 0 : index
    %c160 = arith.constant 160 : index
    %123 = vector.load %arg24[%c0_81, %c160] : memref<256x288xf32, #tpu.memory_space<vmem>>, vector<256x32xf32>
    tpu.vector_store %arg24[%c0_81, %c160], %122 {strides = array<i32>} : memref<256x288xf32, #tpu.memory_space<vmem>>, vector<256x32xf32>,
    %c47_82 = arith.constant 47 : index
    %c0_83 = arith.constant 0 : index
    %124 = vector.load %arg23[%c47_82, %c0_83] : memref<320x32xf32, #tpu.memory_space<vmem>>, vector<256x32xf32>
    %c0_i32_84 = arith.constant 0 : i32
    %125 = vector.broadcast %c0_i32_84 : i32 to vector<256x1xi32>
    %126 = arith.cmpi sgt, %16, %125 : vector<256x1xi32>
    %cst_85 = arith.constant 0.000000e+00 : f32
    %127 = vector.shape_cast %126 : vector<256x1xi1> to vector<256x1xi1>
    %128 = vector.broadcast %127 : vector<256x1xi1> to vector<256x32xi1>
    %129 = vector.broadcast %cst_85 : f32 to vector<256x32xf32>
    %130 = arith.select %128, %124, %129 : vector<256x32xi1>, vector<256x32xf32>
    %c0_86 = arith.constant 0 : index
    %c192 = arith.constant 192 : index
    %131 = vector.load %arg24[%c0_86, %c192] : memref<256x288xf32, #tpu.memory_space<vmem>>, vector<256x32xf32>
    tpu.vector_store %arg24[%c0_86, %c192], %130 {strides = array<i32>} : memref<256x288xf32, #tpu.memory_space<vmem>>, vector<256x32xf32>,
    %c48_87 = arith.constant 48 : index
    %c0_88 = arith.constant 0 : index
    %132 = vector.load %arg23[%c48_87, %c0_88] : memref<320x32xf32, #tpu.memory_space<vmem>>, vector<256x32xf32>
    %c0_89 = arith.constant 0 : index
    %c224 = arith.constant 224 : index
    %133 = vector.load %arg24[%c0_89, %c224] : memref<256x288xf32, #tpu.memory_space<vmem>>, vector<256x32xf32>
    tpu.vector_store %arg24[%c0_89, %c224], %132 {strides = array<i32>} : memref<256x288xf32, #tpu.memory_space<vmem>>, vector<256x32xf32>,
    %c49_90 = arith.constant 49 : index
    %c0_91 = arith.constant 0 : index
    %134 = vector.load %arg23[%c49_90, %c0_91] : memref<320x32xf32, #tpu.memory_space<vmem>>, vector<256x32xf32>
    %c15_i32_92 = arith.constant 15 : i32
    %135 = vector.broadcast %c15_i32_92 : i32 to vector<256x1xi32>
    %136 = arith.cmpi slt, %16, %135 : vector<256x1xi32>
    %cst_93 = arith.constant 0.000000e+00 : f32
    %137 = vector.shape_cast %136 : vector<256x1xi1> to vector<256x1xi1>
    %138 = vector.broadcast %137 : vector<256x1xi1> to vector<256x32xi1>
    %139 = vector.broadcast %cst_93 : f32 to vector<256x32xf32>
    %140 = arith.select %138, %134, %139 : vector<256x32xi1>, vector<256x32xf32>
    %c0_94 = arith.constant 0 : index
    %c256 = arith.constant 256 : index
    %141 = vector.load %arg24[%c0_94, %c256] : memref<256x288xf32, #tpu.memory_space<vmem>>, vector<256x32xf32>
    tpu.vector_store %arg24[%c0_94, %c256], %140 {strides = array<i32>} : memref<256x288xf32, #tpu.memory_space<vmem>>, vector<256x32xf32>,
    %c0_95 = arith.constant 0 : index
    %c0_96 = arith.constant 0 : index
    %142 = vector.load %arg24[%c0_95, %c0_96] : memref<256x288xf32, #tpu.memory_space<vmem>>, vector<256x288xf32>
    %143 = arith.truncf %142 : vector<256x288xf32> to vector<256x288xbf16>
    %c0_97 = arith.constant 0 : index
    %c0_98 = arith.constant 0 : index
    %144 = vector.load %arg4[%c0_97, %c0_98] : memref<288x64xbf16, #tpu.memory_space<vmem>>, vector<288x64xbf16>
    %cst_99 = arith.constant dense<0.000000e+00> : vector<256x64xf32>
    %145 = tpu.matmul %143, %144, %cst_99 {dimension_numbers = #tpu.dot_dimension_numbers<[1], [0], [0], [1], [0, 0, 1, 1], [], []>} : vector<256x288xbf16>, vector<288x64xbf16>, vector<256x64xf32> -> vector<256x64xf32>
    %c0_100 = arith.constant 0 : index
    %c0_101 = arith.constant 0 : index
    %146 = vector.load %arg5[%c0_100, %c0_101] : memref<1x64xf32, #tpu.memory_space<vmem>>, vector<1x64xf32>
    %147 = vector.broadcast %146 : vector<1x64xf32> to vector<256x64xf32>
    %148 = arith.addf %145, %147 : vector<256x64xf32>
    %cst_102 = arith.constant 0.000000e+00 : f32
    %149 = vector.broadcast %cst_102 : f32 to vector<256x64xf32>
    %150 = arith.maximumf %148, %149 : vector<256x64xf32>
    %cst_103 = arith.constant 0.000000e+00 : f32
    %151 = vector.broadcast %cst_103 : f32 to vector<320x64xf32>
    %c0_104 = arith.constant 0 : index
    %c0_105 = arith.constant 0 : index
    %152 = vector.load %arg25[%c0_104, %c0_105] : memref<320x64xf32, #tpu.memory_space<vmem>>, vector<320x64xf32>
    tpu.vector_store %arg25[%c0_104, %c0_105], %151 {strides = array<i32>} : memref<320x64xf32, #tpu.memory_space<vmem>>, vector<320x64xf32>,
    %c32_106 = arith.constant 32 : index
    %c0_107 = arith.constant 0 : index
    %153 = vector.load %arg25[%c32_106, %c0_107] : memref<320x64xf32, #tpu.memory_space<vmem>>, vector<256x64xf32>
    tpu.vector_store %arg25[%c32_106, %c0_107], %150 {strides = array<i32>} : memref<320x64xf32, #tpu.memory_space<vmem>>, vector<256x64xf32>,
    %c15_108 = arith.constant 15 : index
    %c0_109 = arith.constant 0 : index
    %154 = vector.load %arg25[%c15_108, %c0_109] : memref<320x64xf32, #tpu.memory_space<vmem>>, vector<256x64xf32>
    %c0_i32_110 = arith.constant 0 : i32
    %155 = vector.broadcast %c0_i32_110 : i32 to vector<256x1xi32>
    %156 = arith.cmpi sgt, %16, %155 : vector<256x1xi32>
    %cst_111 = arith.constant 0.000000e+00 : f32
    %157 = vector.shape_cast %156 : vector<256x1xi1> to vector<256x1xi1>
    %158 = vector.broadcast %157 : vector<256x1xi1> to vector<256x64xi1>
    %159 = vector.broadcast %cst_111 : f32 to vector<256x64xf32>
    %160 = arith.select %158, %154, %159 : vector<256x64xi1>, vector<256x64xf32>
    %c0_112 = arith.constant 0 : index
    %c0_113 = arith.constant 0 : index
    %161 = vector.load %arg26[%c0_112, %c0_113] : memref<256x576xf32, #tpu.memory_space<vmem>>, vector<256x64xf32>
    tpu.vector_store %arg26[%c0_112, %c0_113], %160 {strides = array<i32>} : memref<256x576xf32, #tpu.memory_space<vmem>>, vector<256x64xf32>,
    %c16_114 = arith.constant 16 : index
    %c0_115 = arith.constant 0 : index
    %162 = vector.load %arg25[%c16_114, %c0_115] : memref<320x64xf32, #tpu.memory_space<vmem>>, vector<256x64xf32>
    %c0_116 = arith.constant 0 : index
    %c64_117 = arith.constant 64 : index
    %163 = vector.load %arg26[%c0_116, %c64_117] : memref<256x576xf32, #tpu.memory_space<vmem>>, vector<256x64xf32>
    tpu.vector_store %arg26[%c0_116, %c64_117], %162 {strides = array<i32>} : memref<256x576xf32, #tpu.memory_space<vmem>>, vector<256x64xf32>,
    %c17_118 = arith.constant 17 : index
    %c0_119 = arith.constant 0 : index
    %164 = vector.load %arg25[%c17_118, %c0_119] : memref<320x64xf32, #tpu.memory_space<vmem>>, vector<256x64xf32>
    %c15_i32_120 = arith.constant 15 : i32
    %165 = vector.broadcast %c15_i32_120 : i32 to vector<256x1xi32>
    %166 = arith.cmpi slt, %16, %165 : vector<256x1xi32>
    %cst_121 = arith.constant 0.000000e+00 : f32
    %167 = vector.shape_cast %166 : vector<256x1xi1> to vector<256x1xi1>
    %168 = vector.broadcast %167 : vector<256x1xi1> to vector<256x64xi1>
    %169 = vector.broadcast %cst_121 : f32 to vector<256x64xf32>
    %170 = arith.select %168, %164, %169 : vector<256x64xi1>, vector<256x64xf32>
    %c0_122 = arith.constant 0 : index
    %c128_123 = arith.constant 128 : index
    %171 = vector.load %arg26[%c0_122, %c128_123] : memref<256x576xf32, #tpu.memory_space<vmem>>, vector<256x64xf32>
    tpu.vector_store %arg26[%c0_122, %c128_123], %170 {strides = array<i32>} : memref<256x576xf32, #tpu.memory_space<vmem>>, vector<256x64xf32>,
    %c31_124 = arith.constant 31 : index
    %c0_125 = arith.constant 0 : index
    %172 = vector.load %arg25[%c31_124, %c0_125] : memref<320x64xf32, #tpu.memory_space<vmem>>, vector<256x64xf32>
    %c0_i32_126 = arith.constant 0 : i32
    %173 = vector.broadcast %c0_i32_126 : i32 to vector<256x1xi32>
    %174 = arith.cmpi sgt, %16, %173 : vector<256x1xi32>
    %cst_127 = arith.constant 0.000000e+00 : f32
    %175 = vector.shape_cast %174 : vector<256x1xi1> to vector<256x1xi1>
    %176 = vector.broadcast %175 : vector<256x1xi1> to vector<256x64xi1>
    %177 = vector.broadcast %cst_127 : f32 to vector<256x64xf32>
    %178 = arith.select %176, %172, %177 : vector<256x64xi1>, vector<256x64xf32>
    %c0_128 = arith.constant 0 : index
    %c192_129 = arith.constant 192 : index
    %179 = vector.load %arg26[%c0_128, %c192_129] : memref<256x576xf32, #tpu.memory_space<vmem>>, vector<256x64xf32>
    tpu.vector_store %arg26[%c0_128, %c192_129], %178 {strides = array<i32>} : memref<256x576xf32, #tpu.memory_space<vmem>>, vector<256x64xf32>,
    %c32_130 = arith.constant 32 : index
    %c0_131 = arith.constant 0 : index
    %180 = vector.load %arg25[%c32_130, %c0_131] : memref<320x64xf32, #tpu.memory_space<vmem>>, vector<256x64xf32>
    %c0_132 = arith.constant 0 : index
    %c256_133 = arith.constant 256 : index
    %181 = vector.load %arg26[%c0_132, %c256_133] : memref<256x576xf32, #tpu.memory_space<vmem>>, vector<256x64xf32>
    tpu.vector_store %arg26[%c0_132, %c256_133], %180 {strides = array<i32>} : memref<256x576xf32, #tpu.memory_space<vmem>>, vector<256x64xf32>,
    %c33_134 = arith.constant 33 : index
    %c0_135 = arith.constant 0 : index
    %182 = vector.load %arg25[%c33_134, %c0_135] : memref<320x64xf32, #tpu.memory_space<vmem>>, vector<256x64xf32>
    %c15_i32_136 = arith.constant 15 : i32
    %183 = vector.broadcast %c15_i32_136 : i32 to vector<256x1xi32>
    %184 = arith.cmpi slt, %16, %183 : vector<256x1xi32>
    %cst_137 = arith.constant 0.000000e+00 : f32
    %185 = vector.shape_cast %184 : vector<256x1xi1> to vector<256x1xi1>
    %186 = vector.broadcast %185 : vector<256x1xi1> to vector<256x64xi1>
    %187 = vector.broadcast %cst_137 : f32 to vector<256x64xf32>
    %188 = arith.select %186, %182, %187 : vector<256x64xi1>, vector<256x64xf32>
    %c0_138 = arith.constant 0 : index
    %c320 = arith.constant 320 : index
    %189 = vector.load %arg26[%c0_138, %c320] : memref<256x576xf32, #tpu.memory_space<vmem>>, vector<256x64xf32>
    tpu.vector_store %arg26[%c0_138, %c320], %188 {strides = array<i32>} : memref<256x576xf32, #tpu.memory_space<vmem>>, vector<256x64xf32>,
    %c47_139 = arith.constant 47 : index
    %c0_140 = arith.constant 0 : index
    %190 = vector.load %arg25[%c47_139, %c0_140] : memref<320x64xf32, #tpu.memory_space<vmem>>, vector<256x64xf32>
    %c0_i32_141 = arith.constant 0 : i32
    %191 = vector.broadcast %c0_i32_141 : i32 to vector<256x1xi32>
    %192 = arith.cmpi sgt, %16, %191 : vector<256x1xi32>
    %cst_142 = arith.constant 0.000000e+00 : f32
    %193 = vector.shape_cast %192 : vector<256x1xi1> to vector<256x1xi1>
    %194 = vector.broadcast %193 : vector<256x1xi1> to vector<256x64xi1>
    %195 = vector.broadcast %cst_142 : f32 to vector<256x64xf32>
    %196 = arith.select %194, %190, %195 : vector<256x64xi1>, vector<256x64xf32>
    %c0_143 = arith.constant 0 : index
    %c384 = arith.constant 384 : index
    %197 = vector.load %arg26[%c0_143, %c384] : memref<256x576xf32, #tpu.memory_space<vmem>>, vector<256x64xf32>
    tpu.vector_store %arg26[%c0_143, %c384], %196 {strides = array<i32>} : memref<256x576xf32, #tpu.memory_space<vmem>>, vector<256x64xf32>,
    %c48_144 = arith.constant 48 : index
    %c0_145 = arith.constant 0 : index
    %198 = vector.load %arg25[%c48_144, %c0_145] : memref<320x64xf32, #tpu.memory_space<vmem>>, vector<256x64xf32>
    %c0_146 = arith.constant 0 : index
    %c448 = arith.constant 448 : index
    %199 = vector.load %arg26[%c0_146, %c448] : memref<256x576xf32, #tpu.memory_space<vmem>>, vector<256x64xf32>
    tpu.vector_store %arg26[%c0_146, %c448], %198 {strides = array<i32>} : memref<256x576xf32, #tpu.memory_space<vmem>>, vector<256x64xf32>,
    %c49_147 = arith.constant 49 : index
    %c0_148 = arith.constant 0 : index
    %200 = vector.load %arg25[%c49_147, %c0_148] : memref<320x64xf32, #tpu.memory_space<vmem>>, vector<256x64xf32>
    %c15_i32_149 = arith.constant 15 : i32
    %201 = vector.broadcast %c15_i32_149 : i32 to vector<256x1xi32>
    %202 = arith.cmpi slt, %16, %201 : vector<256x1xi32>
    %cst_150 = arith.constant 0.000000e+00 : f32
    %203 = vector.shape_cast %202 : vector<256x1xi1> to vector<256x1xi1>
    %204 = vector.broadcast %203 : vector<256x1xi1> to vector<256x64xi1>
    %205 = vector.broadcast %cst_150 : f32 to vector<256x64xf32>
    %206 = arith.select %204, %200, %205 : vector<256x64xi1>, vector<256x64xf32>
    %c0_151 = arith.constant 0 : index
    %c512 = arith.constant 512 : index
    %207 = vector.load %arg26[%c0_151, %c512] : memref<256x576xf32, #tpu.memory_space<vmem>>, vector<256x64xf32>
    tpu.vector_store %arg26[%c0_151, %c512], %206 {strides = array<i32>} : memref<256x576xf32, #tpu.memory_space<vmem>>, vector<256x64xf32>,
    %c0_152 = arith.constant 0 : index
    %c0_153 = arith.constant 0 : index
    %208 = vector.load %arg26[%c0_152, %c0_153] : memref<256x576xf32, #tpu.memory_space<vmem>>, vector<256x576xf32>
    %209 = arith.truncf %208 : vector<256x576xf32> to vector<256x576xbf16>
    %c0_154 = arith.constant 0 : index
    %c0_155 = arith.constant 0 : index
    %210 = vector.load %arg6[%c0_154, %c0_155] : memref<576x128xbf16, #tpu.memory_space<vmem>>, vector<576x128xbf16>
    %cst_156 = arith.constant dense<0.000000e+00> : vector<256x128xf32>
    %211 = tpu.matmul %209, %210, %cst_156 {dimension_numbers = #tpu.dot_dimension_numbers<[1], [0], [0], [1], [0, 0, 1, 1], [], []>} : vector<256x576xbf16>, vector<576x128xbf16>, vector<256x128xf32> -> vector<256x128xf32>
    %c0_157 = arith.constant 0 : index
    %c0_158 = arith.constant 0 : index
    %212 = vector.load %arg7[%c0_157, %c0_158] : memref<1x128xf32, #tpu.memory_space<vmem>>, vector<1x128xf32>
    %213 = vector.broadcast %212 : vector<1x128xf32> to vector<256x128xf32>
    %214 = arith.addf %211, %213 : vector<256x128xf32>
    %cst_159 = arith.constant 0.000000e+00 : f32
    %215 = vector.broadcast %cst_159 : f32 to vector<256x128xf32>
    %216 = arith.maximumf %214, %215 : vector<256x128xf32>
    %217 = tpu.transpose %216, [1, 0] : vector<256x128xf32> -> vector<128x256xf32>
    %cst_160 = arith.constant dense<0.000000e+00> : vector<128xf32>
    %218 = vector.multi_reduction <add>, %217, %cst_160 [1] : vector<128x256xf32> to vector<128xf32>
    %219 = vector.shape_cast %218 : vector<128xf32> to vector<128x1xf32>
    %cst_161 = arith.constant 2.560000e+02 : f32
    %220 = vector.broadcast %cst_161 : f32 to vector<128x1xf32>
    %221 = arith.divf %219, %220 : vector<128x1xf32>
    %cst_162 = arith.constant dense<0xFF800000> : vector<128xf32>
    %222 = vector.multi_reduction <maximumf>, %217, %cst_162 [1] : vector<128x256xf32> to vector<128xf32>
    %223 = vector.shape_cast %222 : vector<128xf32> to vector<128x1xf32>
    %c0_163 = arith.constant 0 : index
    %c0_164 = arith.constant 0 : index
    %c0_165 = arith.constant 0 : index
    %224 = vector.load %arg8[%c0_163, %c0_164, %c0_165] : memref<2x128x128xf32, #tpu.memory_space<vmem>>, vector<1x128x128xf32>
    %225 = vector.shape_cast %224 : vector<1x128x128xf32> to vector<128x128xf32>
    %cst_166 = arith.constant dense<0.000000e+00> : vector<128x1xf32>
    %226 = tpu.matmul %225, %221, %cst_166 {dimension_numbers = #tpu.dot_dimension_numbers<[1], [0], [0], [1], [0, 0, 1, 1], [], []>} : vector<128x128xf32>, vector<128x1xf32>, vector<128x1xf32> -> vector<128x1xf32>
    %c1 = arith.constant 1 : index
    %c0_167 = arith.constant 0 : index
    %c0_168 = arith.constant 0 : index
    %227 = vector.load %arg8[%c1, %c0_167, %c0_168] : memref<2x128x128xf32, #tpu.memory_space<vmem>>, vector<1x128x128xf32>
    %228 = vector.shape_cast %227 : vector<1x128x128xf32> to vector<128x128xf32>
    %cst_169 = arith.constant dense<0.000000e+00> : vector<128x1xf32>
    %229 = tpu.matmul %228, %223, %cst_169 {dimension_numbers = #tpu.dot_dimension_numbers<[1], [0], [0], [1], [0, 0, 1, 1], [], []>} : vector<128x128xf32>, vector<128x1xf32>, vector<128x1xf32> -> vector<128x1xf32>
    %230 = arith.addf %226, %229 : vector<128x1xf32>
    %231 = vector.broadcast %230 : vector<128x1xf32> to vector<128x256xf32>
    %232 = arith.addf %217, %231 : vector<128x256xf32>
    %233 = arith.truncf %232 : vector<128x256xf32> to vector<128x256xbf16>
    %c0_170 = arith.constant 0 : index
    %c0_171 = arith.constant 0 : index
    %234 = vector.load %arg9[%c0_170, %c0_171] : memref<4x128xbf16, #tpu.memory_space<vmem>>, vector<4x128xbf16>
    %cst_172 = arith.constant dense<0.000000e+00> : vector<4x256xf32>
    %235 = tpu.matmul %234, %233, %cst_172 {dimension_numbers = #tpu.dot_dimension_numbers<[1], [0], [0], [1], [0, 0, 1, 1], [], []>} : vector<4x128xbf16>, vector<128x256xbf16>, vector<4x256xf32> -> vector<4x256xf32>
    %c0_173 = arith.constant 0 : index
    %c0_174 = arith.constant 0 : index
    %236 = vector.load %arg10[%c0_173, %c0_174] : memref<4x1xf32, #tpu.memory_space<vmem>>, vector<4x1xf32>
    %237 = vector.broadcast %236 : vector<4x1xf32> to vector<4x256xf32>
    %238 = arith.addf %235, %237 : vector<4x256xf32>
    %cst_175 = arith.constant 0.000000e+00 : f32
    %239 = vector.broadcast %cst_175 : f32 to vector<4x256xf32>
    %240 = arith.maximumf %238, %239 : vector<4x256xf32>
    %c0_176 = arith.constant 0 : index
    %c0_177 = arith.constant 0 : index
    %241 = vector.load %arg11[%c0_176, %c0_177] : memref<2x128xbf16, #tpu.memory_space<vmem>>, vector<2x128xbf16>
    %cst_178 = arith.constant dense<0.000000e+00> : vector<2x256xf32>
    %242 = tpu.matmul %241, %233, %cst_178 {dimension_numbers = #tpu.dot_dimension_numbers<[1], [0], [0], [1], [0, 0, 1, 1], [], []>} : vector<2x128xbf16>, vector<128x256xbf16>, vector<2x256xf32> -> vector<2x256xf32>
    %c0_179 = arith.constant 0 : index
    %c0_180 = arith.constant 0 : index
    %243 = vector.load %arg12[%c0_179, %c0_180] : memref<2x1xf32, #tpu.memory_space<vmem>>, vector<2x1xf32>
    %244 = vector.broadcast %243 : vector<2x1xf32> to vector<2x256xf32>
    %245 = arith.addf %242, %244 : vector<2x256xf32>
    %cst_181 = arith.constant 0.000000e+00 : f32
    %246 = vector.broadcast %cst_181 : f32 to vector<2x256xf32>
    %247 = arith.maximumf %245, %246 : vector<2x256xf32>
    %c0_182 = arith.constant 0 : index
    %c0_183 = arith.constant 0 : index
    %248 = vector.load %arg14[%c0_182, %c0_183] : memref<1x256xf32, #tpu.memory_space<vmem>>, vector<1x256xf32>
    %249 = arith.truncf %240 : vector<4x256xf32> to vector<4x256xbf16>
    %250 = vector.extract_strided_slice %249 {offsets = [0, 0], sizes = [1, 256], strides = [1, 1]} : vector<4x256xbf16> to vector<1x256xbf16>
    %c0_184 = arith.constant 0 : index
    %c0_185 = arith.constant 0 : index
    %c0_186 = arith.constant 0 : index
    %251 = vector.load %arg13[%c0_184, %c0_185, %c0_186] : memref<4x256x256xbf16, #tpu.memory_space<vmem>>, vector<1x256x256xbf16>
    %252 = vector.shape_cast %251 : vector<1x256x256xbf16> to vector<256x256xbf16>
    %cst_187 = arith.constant dense<0.000000e+00> : vector<1x256xf32>
    %253 = tpu.matmul %250, %252, %cst_187 {dimension_numbers = #tpu.dot_dimension_numbers<[1], [0], [0], [1], [0, 0, 1, 1], [], []>} : vector<1x256xbf16>, vector<256x256xbf16>, vector<1x256xf32> -> vector<1x256xf32>
    %254 = arith.addf %248, %253 : vector<1x256xf32>
    %255 = vector.extract_strided_slice %249 {offsets = [1, 0], sizes = [1, 256], strides = [1, 1]} : vector<4x256xbf16> to vector<1x256xbf16>
    %c1_188 = arith.constant 1 : index
    %c0_189 = arith.constant 0 : index
    %c0_190 = arith.constant 0 : index
    %256 = vector.load %arg13[%c1_188, %c0_189, %c0_190] : memref<4x256x256xbf16, #tpu.memory_space<vmem>>, vector<1x256x256xbf16>
    %257 = vector.shape_cast %256 : vector<1x256x256xbf16> to vector<256x256xbf16>
    %cst_191 = arith.constant dense<0.000000e+00> : vector<1x256xf32>
    %258 = tpu.matmul %255, %257, %cst_191 {dimension_numbers = #tpu.dot_dimension_numbers<[1], [0], [0], [1], [0, 0, 1, 1], [], []>} : vector<1x256xbf16>, vector<256x256xbf16>, vector<1x256xf32> -> vector<1x256xf32>
    %259 = arith.addf %254, %258 : vector<1x256xf32>
    %260 = vector.extract_strided_slice %249 {offsets = [2, 0], sizes = [1, 256], strides = [1, 1]} : vector<4x256xbf16> to vector<1x256xbf16>
    %c2 = arith.constant 2 : index
    %c0_192 = arith.constant 0 : index
    %c0_193 = arith.constant 0 : index
    %261 = vector.load %arg13[%c2, %c0_192, %c0_193] : memref<4x256x256xbf16, #tpu.memory_space<vmem>>, vector<1x256x256xbf16>
    %262 = vector.shape_cast %261 : vector<1x256x256xbf16> to vector<256x256xbf16>
    %cst_194 = arith.constant dense<0.000000e+00> : vector<1x256xf32>
    %263 = tpu.matmul %260, %262, %cst_194 {dimension_numbers = #tpu.dot_dimension_numbers<[1], [0], [0], [1], [0, 0, 1, 1], [], []>} : vector<1x256xbf16>, vector<256x256xbf16>, vector<1x256xf32> -> vector<1x256xf32>
    %264 = arith.addf %259, %263 : vector<1x256xf32>
    %265 = vector.extract_strided_slice %249 {offsets = [3, 0], sizes = [1, 256], strides = [1, 1]} : vector<4x256xbf16> to vector<1x256xbf16>
    %c3 = arith.constant 3 : index
    %c0_195 = arith.constant 0 : index
    %c0_196 = arith.constant 0 : index
    %266 = vector.load %arg13[%c3, %c0_195, %c0_196] : memref<4x256x256xbf16, #tpu.memory_space<vmem>>, vector<1x256x256xbf16>
    %267 = vector.shape_cast %266 : vector<1x256x256xbf16> to vector<256x256xbf16>
    %cst_197 = arith.constant dense<0.000000e+00> : vector<1x256xf32>
    %268 = tpu.matmul %265, %267, %cst_197 {dimension_numbers = #tpu.dot_dimension_numbers<[1], [0], [0], [1], [0, 0, 1, 1], [], []>} : vector<1x256xbf16>, vector<256x256xbf16>, vector<1x256xf32> -> vector<1x256xf32>
    %269 = arith.addf %264, %268 : vector<1x256xf32>
    %cst_198 = arith.constant dense<0xFF800000> : vector<1xf32>
    %270 = vector.multi_reduction <maximumf>, %269, %cst_198 [1] : vector<1x256xf32> to vector<1xf32>
    %271 = vector.shape_cast %270 : vector<1xf32> to vector<1x1xf32>
    %272 = vector.broadcast %271 : vector<1x1xf32> to vector<1x256xf32>
    %273 = arith.subf %269, %272 : vector<1x256xf32>
    %274 = math.exp %273 : vector<1x256xf32>
    %cst_199 = arith.constant dense<0.000000e+00> : vector<1xf32>
    %275 = vector.multi_reduction <add>, %274, %cst_199 [1] : vector<1x256xf32> to vector<1xf32>
    %276 = vector.shape_cast %275 : vector<1xf32> to vector<1x1xf32>
    %277 = math.log %276 : vector<1x1xf32>
    %278 = arith.addf %277, %271 : vector<1x1xf32>
    %279 = vector.broadcast %278 : vector<1x1xf32> to vector<1x256xf32>
    %280 = arith.subf %269, %279 : vector<1x256xf32>
    %c0_200 = arith.constant 0 : index
    %c0_201 = arith.constant 0 : index
    %c0_202 = arith.constant 0 : index
    %281 = vector.load %arg19[%c0_200, %c0_201, %c0_202] : memref<1x1x256xf32, #tpu.memory_space<vmem>>, vector<1x1x256xf32>
    %282 = vector.shape_cast %281 : vector<1x1x256xf32> to vector<1x256xf32>
    %283 = vector.shape_cast %280 : vector<1x256xf32> to vector<1x1x256xf32>
    tpu.vector_store %arg19[%c0_200, %c0_201, %c0_202], %283 {strides = array<i32>} : memref<1x1x256xf32, #tpu.memory_space<vmem>>, vector<1x1x256xf32>,
    %c0_203 = arith.constant 0 : index
    %c0_204 = arith.constant 0 : index
    %284 = vector.load %arg16[%c0_203, %c0_204] : memref<1x64xf32, #tpu.memory_space<vmem>>, vector<1x64xf32>
    %285 = arith.truncf %247 : vector<2x256xf32> to vector<2x256xbf16>
    %286 = vector.extract_strided_slice %285 {offsets = [0, 0], sizes = [1, 256], strides = [1, 1]} : vector<2x256xbf16> to vector<1x256xbf16>
    %c0_205 = arith.constant 0 : index
    %c0_206 = arith.constant 0 : index
    %c0_207 = arith.constant 0 : index
    %287 = vector.load %arg15[%c0_205, %c0_206, %c0_207] : memref<2x256x64xbf16, #tpu.memory_space<vmem>>, vector<1x256x64xbf16>
    %288 = vector.shape_cast %287 : vector<1x256x64xbf16> to vector<256x64xbf16>
    %cst_208 = arith.constant dense<0.000000e+00> : vector<1x64xf32>
    %289 = tpu.matmul %286, %288, %cst_208 {dimension_numbers = #tpu.dot_dimension_numbers<[1], [0], [0], [1], [0, 0, 1, 1], [], []>} : vector<1x256xbf16>, vector<256x64xbf16>, vector<1x64xf32> -> vector<1x64xf32>
    %290 = arith.addf %284, %289 : vector<1x64xf32>
    %291 = vector.extract_strided_slice %285 {offsets = [1, 0], sizes = [1, 256], strides = [1, 1]} : vector<2x256xbf16> to vector<1x256xbf16>
    %c1_209 = arith.constant 1 : index
    %c0_210 = arith.constant 0 : index
    %c0_211 = arith.constant 0 : index
    %292 = vector.load %arg15[%c1_209, %c0_210, %c0_211] : memref<2x256x64xbf16, #tpu.memory_space<vmem>>, vector<1x256x64xbf16>
    %293 = vector.shape_cast %292 : vector<1x256x64xbf16> to vector<256x64xbf16>
    %cst_212 = arith.constant dense<0.000000e+00> : vector<1x64xf32>
    %294 = tpu.matmul %291, %293, %cst_212 {dimension_numbers = #tpu.dot_dimension_numbers<[1], [0], [0], [1], [0, 0, 1, 1], [], []>} : vector<1x256xbf16>, vector<256x64xbf16>, vector<1x64xf32> -> vector<1x64xf32>
    %295 = arith.addf %290, %294 : vector<1x64xf32>
    %cst_213 = arith.constant 0.000000e+00 : f32
    %296 = vector.broadcast %cst_213 : f32 to vector<1x64xf32>
    %297 = arith.maximumf %295, %296 : vector<1x64xf32>
    %c0_214 = arith.constant 0 : index
    %c0_215 = arith.constant 0 : index
    %298 = vector.load %arg17[%c0_214, %c0_215] : memref<64x1xf32, #tpu.memory_space<vmem>>, vector<64x1xf32>
    %cst_216 = arith.constant dense<0.000000e+00> : vector<1x1xf32>
    %299 = tpu.matmul %297, %298, %cst_216 {dimension_numbers = #tpu.dot_dimension_numbers<[1], [0], [0], [1], [0, 0, 1, 1], [], []>} : vector<1x64xf32>, vector<64x1xf32>, vector<1x1xf32> -> vector<1x1xf32>
    %c0_217 = arith.constant 0 : index
    %c0_218 = arith.constant 0 : index
    %300 = vector.load %arg18[%c0_217, %c0_218] : memref<1x1xf32, #tpu.memory_space<vmem>>, vector<1x1xf32>
    %301 = arith.addf %299, %300 : vector<1x1xf32>
    %302 = math.tanh %301 : vector<1x1xf32>
    %c0_219 = arith.constant 0 : index
    %c0_220 = arith.constant 0 : index
    %c0_221 = arith.constant 0 : index
    %303 = vector.load %arg20[%c0_219, %c0_220, %c0_221] : memref<1x1x1xf32, #tpu.memory_space<vmem>>, vector<1x1x1xf32>
    %304 = vector.shape_cast %303 : vector<1x1x1xf32> to vector<1x1xf32>
    %305 = vector.shape_cast %302 : vector<1x1xf32> to vector<1x1x1xf32>
    tpu.vector_store %arg20[%c0_219, %c0_220, %c0_221], %305 {strides = array<i32>} : memref<1x1x1xf32, #tpu.memory_space<vmem>>, vector<1x1x1xf32>,
    return
  }
  func.func @transform_0(%arg0: i32) -> (i32, i32, i32) {
    %c0_i32 = arith.constant 0 : i32
    %c0_i32_0 = arith.constant 0 : i32
    %c0_i32_1 = arith.constant 0 : i32
    return %arg0, %c0_i32, %c0_i32_0 : i32, i32, i32
  }
  func.func @transform_1(%arg0: i32) -> (i32, i32) {
    %c0_i32 = arith.constant 0 : i32
    %c0_i32_0 = arith.constant 0 : i32
    %c0_i32_1 = arith.constant 0 : i32
    return %c0_i32, %c0_i32_0 : i32, i32
  }
  func.func @transform_2(%arg0: i32) -> (i32, i32) {
    %c0_i32 = arith.constant 0 : i32
    %c0_i32_0 = arith.constant 0 : i32
    %c0_i32_1 = arith.constant 0 : i32
    return %c0_i32, %c0_i32_0 : i32, i32
  }
  func.func @transform_3(%arg0: i32) -> (i32, i32) {
    %c0_i32 = arith.constant 0 : i32
    %c0_i32_0 = arith.constant 0 : i32
    %c0_i32_1 = arith.constant 0 : i32
    return %c0_i32, %c0_i32_0 : i32, i32
  }
  func.func @transform_4(%arg0: i32) -> (i32, i32) {
    %c0_i32 = arith.constant 0 : i32
    %c0_i32_0 = arith.constant 0 : i32
    %c0_i32_1 = arith.constant 0 : i32
    return %c0_i32, %c0_i32_0 : i32, i32
  }
  func.func @transform_5(%arg0: i32) -> (i32, i32) {
    %c0_i32 = arith.constant 0 : i32
    %c0_i32_0 = arith.constant 0 : i32
    %c0_i32_1 = arith.constant 0 : i32
    return %c0_i32, %c0_i32_0 : i32, i32
  }
  func.func @transform_6(%arg0: i32) -> (i32, i32) {
    %c0_i32 = arith.constant 0 : i32
    %c0_i32_0 = arith.constant 0 : i32
    %c0_i32_1 = arith.constant 0 : i32
    return %c0_i32, %c0_i32_0 : i32, i32
  }
  func.func @transform_7(%arg0: i32) -> (i32, i32, i32) {
    %c0_i32 = arith.constant 0 : i32
    %c0_i32_0 = arith.constant 0 : i32
    %c0_i32_1 = arith.constant 0 : i32
    %c0_i32_2 = arith.constant 0 : i32
    return %c0_i32, %c0_i32_0, %c0_i32_1 : i32, i32, i32
  }
  func.func @transform_8(%arg0: i32) -> (i32, i32) {
    %c0_i32 = arith.constant 0 : i32
    %c0_i32_0 = arith.constant 0 : i32
    %c0_i32_1 = arith.constant 0 : i32
    return %c0_i32, %c0_i32_0 : i32, i32
  }
  func.func @transform_9(%arg0: i32) -> (i32, i32) {
    %c0_i32 = arith.constant 0 : i32
    %c0_i32_0 = arith.constant 0 : i32
    %c0_i32_1 = arith.constant 0 : i32
    return %c0_i32, %c0_i32_0 : i32, i32
  }
  func.func @transform_10(%arg0: i32) -> (i32, i32) {
    %c0_i32 = arith.constant 0 : i32
    %c0_i32_0 = arith.constant 0 : i32
    %c0_i32_1 = arith.constant 0 : i32
    return %c0_i32, %c0_i32_0 : i32, i32
  }
  func.func @transform_11(%arg0: i32) -> (i32, i32) {
    %c0_i32 = arith.constant 0 : i32
    %c0_i32_0 = arith.constant 0 : i32
    %c0_i32_1 = arith.constant 0 : i32
    return %c0_i32, %c0_i32_0 : i32, i32
  }
  func.func @transform_12(%arg0: i32) -> (i32, i32, i32) {
    %c0_i32 = arith.constant 0 : i32
    %c0_i32_0 = arith.constant 0 : i32
    %c0_i32_1 = arith.constant 0 : i32
    %c0_i32_2 = arith.constant 0 : i32
    return %c0_i32, %c0_i32_0, %c0_i32_1 : i32, i32, i32
  }
  func.func @transform_13(%arg0: i32) -> (i32, i32) {
    %c0_i32 = arith.constant 0 : i32
    %c0_i32_0 = arith.constant 0 : i32
    %c0_i32_1 = arith.constant 0 : i32
    return %c0_i32, %c0_i32_0 : i32, i32
  }
  func.func @transform_14(%arg0: i32) -> (i32, i32, i32) {
    %c0_i32 = arith.constant 0 : i32
    %c0_i32_0 = arith.constant 0 : i32
    %c0_i32_1 = arith.constant 0 : i32
    %c0_i32_2 = arith.constant 0 : i32
    return %c0_i32, %c0_i32_0, %c0_i32_1 : i32, i32, i32
  }
  func.func @transform_15(%arg0: i32) -> (i32, i32) {
    %c0_i32 = arith.constant 0 : i32
    %c0_i32_0 = arith.constant 0 : i32
    %c0_i32_1 = arith.constant 0 : i32
    return %c0_i32, %c0_i32_0 : i32, i32
  }
  func.func @transform_16(%arg0: i32) -> (i32, i32) {
    %c0_i32 = arith.constant 0 : i32
    %c0_i32_0 = arith.constant 0 : i32
    %c0_i32_1 = arith.constant 0 : i32
    return %c0_i32, %c0_i32_0 : i32, i32
  }
  func.func @transform_17(%arg0: i32) -> (i32, i32) {
    %c0_i32 = arith.constant 0 : i32
    %c0_i32_0 = arith.constant 0 : i32
    %c0_i32_1 = arith.constant 0 : i32
    return %c0_i32, %c0_i32_0 : i32, i32
  }
  func.func @transform_18(%arg0: i32) -> (i32, i32, i32) {
    %c0_i32 = arith.constant 0 : i32
    %c0_i32_0 = arith.constant 0 : i32
    %c0_i32_1 = arith.constant 0 : i32
    return %arg0, %c0_i32, %c0_i32_0 : i32, i32, i32
  }
  func.func @transform_19(%arg0: i32) -> (i32, i32, i32) {
    %c0_i32 = arith.constant 0 : i32
    %c0_i32_0 = arith.constant 0 : i32
    %c0_i32_1 = arith.constant 0 : i32
    return %arg0, %c0_i32, %c0_i32_0 : i32, i32, i32
  }
}

</mosaic_0001>

<llo_original>
// kernel: forward.1
$region0: #{forward.1}
  #allocation0 [shape = 'u32[]', space=smem, size = 0x4, offset = 0x4, fixed_abs, tag = 'smem constant byte address 0x4 - core index']
  #allocation1 [shape = 'u32[72,128]{1,0:T(1,128)}', space=vmem, size = 0x9000, scoped, tag = 'internal scratch']
  #allocation2 [shape = 'f32[320,4]{1,0:T(8,128)}', space=vmem, size = 0x28000, scoped, tag = 'scratch operand']
  #allocation3 [shape = 'f32[256,36]{1,0:T(8,128)}', space=vmem, size = 0x20000, scoped, tag = 'scratch operand']
  #allocation4 [shape = 'f32[320,32]{1,0:T(8,128)}', space=vmem, size = 0x28000, scoped, tag = 'scratch operand']
  #allocation5 [shape = 'f32[256,288]{1,0:T(8,128)}', space=vmem, size = 0x60000, scoped, tag = 'scratch operand']
  #allocation6 [shape = 'f32[320,64]{1,0:T(8,128)}', space=vmem, size = 0x28000, scoped, tag = 'scratch operand']
  #allocation7 [shape = 'f32[256,576]{1,0:T(8,128)}', space=vmem, size = 0xa0000, scoped, tag = 'scratch operand']
  #allocation8 [shape = 'f32[1,1]{1,0:T(1,128)S(1)}', space=vmem, size = 0x200, scoped, tag = 'scoped memory for forward.1']
  %s0 = inlined_call_operand.vmem [shape: f32[2,256,4], index: 0, kind: input, shape index: {}]
  %s1 = inlined_call_operand.vmem [shape: bf16[36,32], index: 1, kind: input, shape index: {}]
  %s2 = inlined_call_operand.vmem [shape: f32[1,32], index: 2, kind: input, shape index: {}]
  %s3 = inlined_call_operand.vmem [shape: bf16[288,64], index: 3, kind: input, shape index: {}]
  %s4 = inlined_call_operand.vmem [shape: f32[1,64], index: 4, kind: input, shape index: {}]
  %s5 = inlined_call_operand.vmem [shape: bf16[576,128], index: 5, kind: input, shape index: {}]
  %s6 = inlined_call_operand.vmem [shape: f32[1,128], index: 6, kind: input, shape index: {}]
  %s7 = inlined_call_operand.vmem [shape: f32[2,128,128], index: 7, kind: input, shape index: {}]
  %s8 = inlined_call_operand.vmem [shape: bf16[4,128], index: 8, kind: input, shape index: {}]
  %s9 = inlined_call_operand.vmem [shape: f32[4,1], index: 9, kind: input, shape index: {}]
  %s10 = inlined_call_operand.vmem [shape: bf16[2,128], index: 10, kind: input, shape index: {}]
  %s11 = inlined_call_operand.vmem [shape: f32[2,1], index: 11, kind: input, shape index: {}]
  %s12 = inlined_call_operand.hbm [shape: bf16[4,256,256], index: 12, kind: input, shape index: {}]
  %s13 = inlined_call_operand.vmem [shape: f32[1,256], index: 13, kind: input, shape index: {}]
  %s14 = inlined_call_operand.vmem [shape: bf16[2,256,64], index: 14, kind: input, shape index: {}]
  %s15 = inlined_call_operand.vmem [shape: f32[1,64], index: 15, kind: input, shape index: {}]
  %s16 = inlined_call_operand.vmem [shape: f32[64,1], index: 16, kind: input, shape index: {}]
  %s17 = inlined_call_operand.<no memory space> [shape: f32[1,1], index: 17, kind: input, shape index: {}]
  %s18 = inlined_call_operand.vmem [shape: f32[2,1,256], index: 18, kind: output, shape index: {0}]
  %s19 = inlined_call_operand.vmem [shape: f32[2,1,1], index: 19, kind: output, shape index: {1}]
  %20 = xla_tuple %s18, %s19
  %s21 = sld [smem:[#allocation0]]
  $region117: #{forward.1} parent=0
    _
  %s23 = ssub.s32 1, %s21
  %s24 = scalar_select 0, %s23, %s21
  %v25 = vstv %s17
  %26 = vst [vmem:[#allocation8] sm:$0x1] %v25
  $region1: #{forward.1} parent=0
    #allocation9 [shape = 'u8[524288]{0}', space=vmem, size = 0x80000, scoped, tag = 'input window, operand 12, single buffered']
    #allocation10 [shape = 's32[2]{0}', space=sflag, size = 0x8, scoped, tag = 'scoped memory for forward.1']
    %27 = vsyncpa [#allocation10], 0
    loop: start=0, step=1, limit=4
    $region2: #{forward.1} parent=1 // loop_pre_header
      _
    $region3: #{forward.1} parent=1 // loop_header
      %s29 = sphi 0, %s33
      %p30 = scmp.ge.s32.totalorder %s29, 4
      %s39 = sphi 0, %s41
      %s42 = sphi 0, %s39
      %s43 = sphi 0, %s42
      %s59 = sphi 0, %s43
      %s63 = sphi 0, %s63
      %s65 = sphi 0, %s63
      %s66 = sphi 0, %s65
      %s80 = sphi 0, %s66
      %s84 = sphi 0, %s84
      %s86 = sphi 0, %s84
      %s87 = sphi 0, %s86
      %s101 = sphi 0, %s87
      %s105 = sphi 0, %s105
      %s107 = sphi 0, %s105
      %s108 = sphi 0, %s107
      %s122 = sphi 0, %s108
      %s126 = sphi 0, %s126
      %s128 = sphi 0, %s126
      %s129 = sphi 0, %s128
      %s143 = sphi 0, %s129
      %s147 = sphi 0, %s147
      %s149 = sphi 0, %s147
      %s150 = sphi 0, %s149
      %s164 = sphi 0, %s150
      %s168 = sphi 0, %s168
      %s170 = sphi 0, %s168
      %s171 = sphi 0, %s170
      %s185 = sphi 0, %s171
      %s189 = sphi 0, %s189
      %s191 = sphi 0, %s189
      %s192 = sphi 0, %s191
      %s206 = sphi 0, %s192
      %s210 = sphi 0, %s210
      %s212 = sphi 0, %s210
      %s213 = sphi 0, %s212
      %s227 = sphi 0, %s213
      %s231 = sphi 0, %s231
      %s233 = sphi 0, %s231
      %s234 = sphi 0, %s233
      %s248 = sphi 0, %s234
      %s252 = sphi 0, %s252
      %s254 = sphi 0, %s252
      %s255 = sphi 0, %s254
      %s269 = sphi 0, %s255
      %s273 = sphi 0, %s273
      %s275 = sphi 0, %s273
      %s276 = sphi 0, %s275
      %s290 = sphi 0, %s276
      %s294 = sphi 0, %s294
      %s296 = sphi 0, %s294
      %s297 = sphi 0, %s296
      %s311 = sphi 0, %s297
      %s315 = sphi 0, %s315
      %s317 = sphi 0, %s315
      %s318 = sphi 0, %s317
      %s332 = sphi 0, %s318
      %s336 = sphi 0, %s336
      %s338 = sphi 0, %s336
      %s339 = sphi 0, %s338
      %s353 = sphi 0, %s339
      %s357 = sphi 0, %s357
      %s359 = sphi 0, %s357
      %s360 = sphi 0, %s359
      %s374 = sphi 0, %s360
      %s378 = sphi 0, %s378
      %s380 = sphi 0, %s378
      %s381 = sphi 0, %s380
      %s395 = sphi 0, %s381
      %s399 = sphi 0, %s399
      %s401 = sphi 0, %s399
      %s402 = sphi 0, %s401
      %s416 = sphi 0, %s402
      %s422 = sphi 0, %s424
      %s425 = sphi 0, %s422
      %s426 = sphi 0, %s425
      %s442 = sphi 0, %s426
      %s448 = sphi 0, %s450
      %s451 = sphi 0, %s448
      %s452 = sphi 0, %s451
      %s468 = sphi 0, %s452
    $region4: #{forward.1} parent=1 // loop_header_branch
      %32 = sbr.rel (%p30) target = $region8
    $region5: #{forward.1} parent=1 // loop_body
      %s34 = ssub.s32 %s29, 1
      %s35 = ssub.s32 %s29, 2
      %s36 = sadd.s32 %s29, 1
      %s37 = ssub.s32 %s29, %s36
      %p38 = scmp.eq.s32.totalorder %s37, 0
      %s40 = sadd.s32 %s39, 1
      %s41 = scalar_select %p38, %s39, %s40
      %p44 = pneg %p38
      %p45 = scmp.eq.s32.totalorder %s29, 1
      %p46 = por %p44, %p45
      %p47 = scmp.ne.s32.totalorder %s39, %s42
      %p48 = scmp.eq.s32.totalorder %s29, 0
      %p49 = por %p47, %p48
      %p50 = scmp.ne.s32.totalorder %s39, %s42
      %p51 = scmp.eq.s32.totalorder %s34, 1
      %p52 = por %p50, %p51
      %p53 = scmp.ne.s32.totalorder %s42, %s43
      %p54 = scmp.eq.s32.totalorder %s34, 0
      %p55 = por %p53, %p54
      %p56 = scmp.ne.s32.totalorder %s42, %s43
      %p57 = scmp.eq.s32.totalorder %s35, 1
      %p58 = por %p56, %p57
      %p60 = scmp.ne.s32.totalorder %s43, %s59
      %p61 = scmp.eq.s32.totalorder %s35, 0
      %p62 = por %p60, %p61
      %s64 = sadd.s32 %s63, 1
      %p67 = scmp.eq.s32.totalorder %s29, 1
      %p68 = scmp.ne.s32.totalorder %s63, %s65
      %p69 = scmp.eq.s32.totalorder %s29, 0
      %p70 = por %p68, %p69
      %p71 = scmp.ne.s32.totalorder %s63, %s65
      %p72 = scmp.eq.s32.totalorder %s34, 1
      %p73 = por %p71, %p72
      %p74 = scmp.ne.s32.totalorder %s65, %s66
      %p75 = scmp.eq.s32.totalorder %s34, 0
      %p76 = por %p74, %p75
      %p77 = scmp.ne.s32.totalorder %s65, %s66
      %p78 = scmp.eq.s32.totalorder %s35, 1
      %p79 = por %p77, %p78
      %p81 = scmp.ne.s32.totalorder %s66, %s80
      %p82 = scmp.eq.s32.totalorder %s35, 0
      %p83 = por %p81, %p82
      %s85 = sadd.s32 %s84, 1
      %p88 = scmp.eq.s32.totalorder %s29, 1
      %p89 = scmp.ne.s32.totalorder %s84, %s86
      %p90 = scmp.eq.s32.totalorder %s29, 0
      %p91 = por %p89, %p90
      %p92 = scmp.ne.s32.totalorder %s84, %s86
      %p93 = scmp.eq.s32.totalorder %s34, 1
      %p94 = por %p92, %p93
      %p95 = scmp.ne.s32.totalorder %s86, %s87
      %p96 = scmp.eq.s32.totalorder %s34, 0
      %p97 = por %p95, %p96
      %p98 = scmp.ne.s32.totalorder %s86, %s87
      %p99 = scmp.eq.s32.totalorder %s35, 1
      %p100 = por %p98, %p99
      %p102 = scmp.ne.s32.totalorder %s87, %s101
      %p103 = scmp.eq.s32.totalorder %s35, 0
      %p104 = por %p102, %p103
      %s106 = sadd.s32 %s105, 1
      %p109 = scmp.eq.s32.totalorder %s29, 1
      %p110 = scmp.ne.s32.totalorder %s105, %s107
      %p111 = scmp.eq.s32.totalorder %s29, 0
      %p112 = por %p110, %p111
      %p113 = scmp.ne.s32.totalorder %s105, %s107
      %p114 = scmp.eq.s32.totalorder %s34, 1
      %p115 = por %p113, %p114
      %p116 = scmp.ne.s32.totalorder %s107, %s108
      %p117 = scmp.eq.s32.totalorder %s34, 0
      %p118 = por %p116, %p117
      %p119 = scmp.ne.s32.totalorder %s107, %s108
      %p120 = scmp.eq.s32.totalorder %s35, 1
      %p121 = por %p119, %p120
      %p123 = scmp.ne.s32.totalorder %s108, %s122
      %p124 = scmp.eq.s32.totalorder %s35, 0
      %p125 = por %p123, %p124
      %s127 = sadd.s32 %s126, 1
      %p130 = scmp.eq.s32.totalorder %s29, 1
      %p131 = scmp.ne.s32.totalorder %s126, %s128
      %p132 = scmp.eq.s32.totalorder %s29, 0
      %p133 = por %p131, %p132
      %p134 = scmp.ne.s32.totalorder %s126, %s128
      %p135 = scmp.eq.s32.totalorder %s34, 1
      %p136 = por %p134, %p135
      %p137 = scmp.ne.s32.totalorder %s128, %s129
      %p138 = scmp.eq.s32.totalorder %s34, 0
      %p139 = por %p137, %p138
      %p140 = scmp.ne.s32.totalorder %s128, %s129
      %p141 = scmp.eq.s32.totalorder %s35, 1
      %p142 = por %p140, %p141
      %p144 = scmp.ne.s32.totalorder %s129, %s143
      %p145 = scmp.eq.s32.totalorder %s35, 0
      %p146 = por %p144, %p145
      %s148 = sadd.s32 %s147, 1
      %p151 = scmp.eq.s32.totalorder %s29, 1
      %p152 = scmp.ne.s32.totalorder %s147, %s149
      %p153 = scmp.eq.s32.totalorder %s29, 0
      %p154 = por %p152, %p153
      %p155 = scmp.ne.s32.totalorder %s147, %s149
      %p156 = scmp.eq.s32.totalorder %s34, 1
      %p157 = por %p155, %p156
      %p158 = scmp.ne.s32.totalorder %s149, %s150
      %p159 = scmp.eq.s32.totalorder %s34, 0
      %p160 = por %p158, %p159
      %p161 = scmp.ne.s32.totalorder %s149, %s150
      %p162 = scmp.eq.s32.totalorder %s35, 1
      %p163 = por %p161, %p162
      %p165 = scmp.ne.s32.totalorder %s150, %s164
      %p166 = scmp.eq.s32.totalorder %s35, 0
      %p167 = por %p165, %p166
      %s169 = sadd.s32 %s168, 1
      %p172 = scmp.eq.s32.totalorder %s29, 1
      %p173 = scmp.ne.s32.totalorder %s168, %s170
      %p174 = scmp.eq.s32.totalorder %s29, 0
      %p175 = por %p173, %p174
      %p176 = scmp.ne.s32.totalorder %s168, %s170
      %p177 = scmp.eq.s32.totalorder %s34, 1
      %p178 = por %p176, %p177
      %p179 = scmp.ne.s32.totalorder %s170, %s171
      %p180 = scmp.eq.s32.totalorder %s34, 0
      %p181 = por %p179, %p180
      %p182 = scmp.ne.s32.totalorder %s170, %s171
      %p183 = scmp.eq.s32.totalorder %s35, 1
      %p184 = por %p182, %p183
      %p186 = scmp.ne.s32.totalorder %s171, %s185
      %p187 = scmp.eq.s32.totalorder %s35, 0
      %p188 = por %p186, %p187
      %s190 = sadd.s32 %s189, 1
      %p193 = scmp.eq.s32.totalorder %s29, 1
      %p194 = scmp.ne.s32.totalorder %s189, %s191
      %p195 = scmp.eq.s32.totalorder %s29, 0
      %p196 = por %p194, %p195
      %p197 = scmp.ne.s32.totalorder %s189, %s191
      %p198 = scmp.eq.s32.totalorder %s34, 1
      %p199 = por %p197, %p198
      %p200 = scmp.ne.s32.totalorder %s191, %s192
      %p201 = scmp.eq.s32.totalorder %s34, 0
      %p202 = por %p200, %p201
      %p203 = scmp.ne.s32.totalorder %s191, %s192
      %p204 = scmp.eq.s32.totalorder %s35, 1
      %p205 = por %p203, %p204
      %p207 = scmp.ne.s32.totalorder %s192, %s206
      %p208 = scmp.eq.s32.totalorder %s35, 0
      %p209 = por %p207, %p208
      %s211 = sadd.s32 %s210, 1
      %p214 = scmp.eq.s32.totalorder %s29, 1
      %p215 = scmp.ne.s32.totalorder %s210, %s212
      %p216 = scmp.eq.s32.totalorder %s29, 0
      %p217 = por %p215, %p216
      %p218 = scmp.ne.s32.totalorder %s210, %s212
      %p219 = scmp.eq.s32.totalorder %s34, 1
      %p220 = por %p218, %p219
      %p221 = scmp.ne.s32.totalorder %s212, %s213
      %p222 = scmp.eq.s32.totalorder %s34, 0
      %p223 = por %p221, %p222
      %p224 = scmp.ne.s32.totalorder %s212, %s213
      %p225 = scmp.eq.s32.totalorder %s35, 1
      %p226 = por %p224, %p225
      %p228 = scmp.ne.s32.totalorder %s213, %s227
      %p229 = scmp.eq.s32.totalorder %s35, 0
      %p230 = por %p228, %p229
      %s232 = sadd.s32 %s231, 1
      %p235 = scmp.eq.s32.totalorder %s29, 1
      %p236 = scmp.ne.s32.totalorder %s231, %s233
      %p237 = scmp.eq.s32.totalorder %s29, 0
      %p238 = por %p236, %p237
      %p239 = scmp.ne.s32.totalorder %s231, %s233
      %p240 = scmp.eq.s32.totalorder %s34, 1
      %p241 = por %p239, %p240
      %p242 = scmp.ne.s32.totalorder %s233, %s234
      %p243 = scmp.eq.s32.totalorder %s34, 0
      %p244 = por %p242, %p243
      %p245 = scmp.ne.s32.totalorder %s233, %s234
      %p246 = scmp.eq.s32.totalorder %s35, 1
      %p247 = por %p245, %p246
      %p249 = scmp.ne.s32.totalorder %s234, %s248
      %p250 = scmp.eq.s32.totalorder %s35, 0
      %p251 = por %p249, %p250
      %s253 = sadd.s32 %s252, 1
      %p256 = scmp.eq.s32.totalorder %s29, 1
      %p257 = scmp.ne.s32.totalorder %s252, %s254
      %p258 = scmp.eq.s32.totalorder %s29, 0
      %p259 = por %p257, %p258
      %p260 = scmp.ne.s32.totalorder %s252, %s254
      %p261 = scmp.eq.s32.totalorder %s34, 1
      %p262 = por %p260, %p261
      %p263 = scmp.ne.s32.totalorder %s254, %s255
      %p264 = scmp.eq.s32.totalorder %s34, 0
      %p265 = por %p263, %p264
      %p266 = scmp.ne.s32.totalorder %s254, %s255
      %p267 = scmp.eq.s32.totalorder %s35, 1
      %p268 = por %p266, %p267
      %p270 = scmp.ne.s32.totalorder %s255, %s269
      %p271 = scmp.eq.s32.totalorder %s35, 0
      %p272 = por %p270, %p271
      %s274 = sadd.s32 %s273, 1
      %p277 = scmp.eq.s32.totalorder %s29, 1
      %p278 = scmp.ne.s32.totalorder %s273, %s275
      %p279 = scmp.eq.s32.totalorder %s29, 0
      %p280 = por %p278, %p279
      %p281 = scmp.ne.s32.totalorder %s273, %s275
      %p282 = scmp.eq.s32.totalorder %s34, 1
      %p283 = por %p281, %p282
      %p284 = scmp.ne.s32.totalorder %s275, %s276
      %p285 = scmp.eq.s32.totalorder %s34, 0
      %p286 = por %p284, %p285
      %p287 = scmp.ne.s32.totalorder %s275, %s276
      %p288 = scmp.eq.s32.totalorder %s35, 1
      %p289 = por %p287, %p288
      %p291 = scmp.ne.s32.totalorder %s276, %s290
      %p292 = scmp.eq.s32.totalorder %s35, 0
      %p293 = por %p291, %p292
      %s295 = sadd.s32 %s294, 1
      %p298 = scmp.eq.s32.totalorder %s29, 1
      %p299 = scmp.ne.s32.totalorder %s294, %s296
      %p300 = scmp.eq.s32.totalorder %s29, 0
      %p301 = por %p299, %p300
      %p302 = scmp.ne.s32.totalorder %s294, %s296
      %p303 = scmp.eq.s32.totalorder %s34, 1
      %p304 = por %p302, %p303
      %p305 = scmp.ne.s32.totalorder %s296, %s297
      %p306 = scmp.eq.s32.totalorder %s34, 0
      %p307 = por %p305, %p306
      %p308 = scmp.ne.s32.totalorder %s296, %s297
      %p309 = scmp.eq.s32.totalorder %s35, 1
      %p310 = por %p308, %p309
      %p312 = scmp.ne.s32.totalorder %s297, %s311
      %p313 = scmp.eq.s32.totalorder %s35, 0
      %p314 = por %p312, %p313
      %s316 = sadd.s32 %s315, 1
      %p319 = scmp.eq.s32.totalorder %s29, 1
      %p320 = scmp.ne.s32.totalorder %s315, %s317
      %p321 = scmp.eq.s32.totalorder %s29, 0
      %p322 = por %p320, %p321
      %p323 = scmp.ne.s32.totalorder %s315, %s317
      %p324 = scmp.eq.s32.totalorder %s34, 1
      %p325 = por %p323, %p324
      %p326 = scmp.ne.s32.totalorder %s317, %s318
      %p327 = scmp.eq.s32.totalorder %s34, 0
      %p328 = por %p326, %p327
      %p329 = scmp.ne.s32.totalorder %s317, %s318
      %p330 = scmp.eq.s32.totalorder %s35, 1
      %p331 = por %p329, %p330
      %p333 = scmp.ne.s32.totalorder %s318, %s332
      %p334 = scmp.eq.s32.totalorder %s35, 0
      %p335 = por %p333, %p334
      %s337 = sadd.s32 %s336, 1
      %p340 = scmp.eq.s32.totalorder %s29, 1
      %p341 = scmp.ne.s32.totalorder %s336, %s338
      %p342 = scmp.eq.s32.totalorder %s29, 0
      %p343 = por %p341, %p342
      %p344 = scmp.ne.s32.totalorder %s336, %s338
      %p345 = scmp.eq.s32.totalorder %s34, 1
      %p346 = por %p344, %p345
      %p347 = scmp.ne.s32.totalorder %s338, %s339
      %p348 = scmp.eq.s32.totalorder %s34, 0
      %p349 = por %p347, %p348
      %p350 = scmp.ne.s32.totalorder %s338, %s339
      %p351 = scmp.eq.s32.totalorder %s35, 1
      %p352 = por %p350, %p351
      %p354 = scmp.ne.s32.totalorder %s339, %s353
      %p355 = scmp.eq.s32.totalorder %s35, 0
      %p356 = por %p354, %p355
      %s358 = sadd.s32 %s357, 1
      %p361 = scmp.eq.s32.totalorder %s29, 1
      %p362 = scmp.ne.s32.totalorder %s357, %s359
      %p363 = scmp.eq.s32.totalorder %s29, 0
      %p364 = por %p362, %p363
      %p365 = scmp.ne.s32.totalorder %s357, %s359
      %p366 = scmp.eq.s32.totalorder %s34, 1
      %p367 = por %p365, %p366
      %p368 = scmp.ne.s32.totalorder %s359, %s360
      %p369 = scmp.eq.s32.totalorder %s34, 0
      %p370 = por %p368, %p369
      %p371 = scmp.ne.s32.totalorder %s359, %s360
      %p372 = scmp.eq.s32.totalorder %s35, 1
      %p373 = por %p371, %p372
      %p375 = scmp.ne.s32.totalorder %s360, %s374
      %p376 = scmp.eq.s32.totalorder %s35, 0
      %p377 = por %p375, %p376
      %s379 = sadd.s32 %s378, 1
      %p382 = scmp.eq.s32.totalorder %s29, 1
      %p383 = scmp.ne.s32.totalorder %s378, %s380
      %p384 = scmp.eq.s32.totalorder %s29, 0
      %p385 = por %p383, %p384
      %p386 = scmp.ne.s32.totalorder %s378, %s380
      %p387 = scmp.eq.s32.totalorder %s34, 1
      %p388 = por %p386, %p387
      %p389 = scmp.ne.s32.totalorder %s380, %s381
      %p390 = scmp.eq.s32.totalorder %s34, 0
      %p391 = por %p389, %p390
      %p392 = scmp.ne.s32.totalorder %s380, %s381
      %p393 = scmp.eq.s32.totalorder %s35, 1
      %p394 = por %p392, %p393
      %p396 = scmp.ne.s32.totalorder %s381, %s395
      %p397 = scmp.eq.s32.totalorder %s35, 0
      %p398 = por %p396, %p397
      %s400 = sadd.s32 %s399, 1
      %p403 = scmp.eq.s32.totalorder %s29, 1
      %p404 = scmp.ne.s32.totalorder %s399, %s401
      %p405 = scmp.eq.s32.totalorder %s29, 0
      %p406 = por %p404, %p405
      %p407 = scmp.ne.s32.totalorder %s399, %s401
      %p408 = scmp.eq.s32.totalorder %s34, 1
      %p409 = por %p407, %p408
      %p410 = scmp.ne.s32.totalorder %s401, %s402
      %p411 = scmp.eq.s32.totalorder %s34, 0
      %p412 = por %p410, %p411
      %p413 = scmp.ne.s32.totalorder %s401, %s402
      %p414 = scmp.eq.s32.totalorder %s35, 1
      %p415 = por %p413, %p414
      %p417 = scmp.ne.s32.totalorder %s402, %s416
      %p418 = scmp.eq.s32.totalorder %s35, 0
      %p419 = por %p417, %p418
      %s420 = ssub.s32 %s29, %s36
      %p421 = scmp.eq.s32.totalorder %s420, 0
      %s423 = sadd.s32 %s422, 1
      %s424 = scalar_select %p421, %s422, %s423
      %p427 = pneg %p421
      %p428 = scmp.eq.s32.totalorder %s29, 1
      %p429 = por %p427, %p428
      %p430 = scmp.ne.s32.totalorder %s422, %s425
      %p431 = scmp.eq.s32.totalorder %s29, 0
      %p432 = por %p430, %p431
      %p433 = scmp.ne.s32.totalorder %s422, %s425
      %p434 = scmp.eq.s32.totalorder %s34, 1
      %p435 = por %p433, %p434
      %p436 = scmp.ne.s32.totalorder %s425, %s426
      %p437 = scmp.eq.s32.totalorder %s34, 0
      %p438 = por %p436, %p437
      %p439 = scmp.ne.s32.totalorder %s425, %s426
      %p440 = scmp.eq.s32.totalorder %s35, 1
      %p441 = por %p439, %p440
      %p443 = scmp.ne.s32.totalorder %s426, %s442
      %p444 = scmp.eq.s32.totalorder %s35, 0
      %p445 = por %p443, %p444
      %s446 = ssub.s32 %s29, %s36
      %p447 = scmp.eq.s32.totalorder %s446, 0
      %s449 = sadd.s32 %s448, 1
      %s450 = scalar_select %p447, %s448, %s449
      %p453 = pneg %p447
      %p454 = scmp.eq.s32.totalorder %s29, 1
      %p455 = por %p453, %p454
      %p456 = scmp.ne.s32.totalorder %s448, %s451
      %p457 = scmp.eq.s32.totalorder %s29, 0
      %p458 = por %p456, %p457
      %p459 = scmp.ne.s32.totalorder %s448, %s451
      %p460 = scmp.eq.s32.totalorder %s34, 1
      %p461 = por %p459, %p460
      %p462 = scmp.ne.s32.totalorder %s451, %s452
      %p463 = scmp.eq.s32.totalorder %s34, 0
      %p464 = por %p462, %p463
      %p465 = scmp.ne.s32.totalorder %s451, %s452
      %p466 = scmp.eq.s32.totalorder %s35, 1
      %p467 = por %p465, %p466
      %p469 = scmp.ne.s32.totalorder %s452, %s468
      %p470 = scmp.eq.s32.totalorder %s35, 0
      %p471 = por %p469, %p470
      %p472 = scmp.le.s32.totalorder 1, %s29
      %p473 = scmp.lt.s32.totalorder %s29, 3
      %p474 = pnand %p472, %p473
      %p475 = pneg %p474
      // Predicated region
      $region9: #{forward.1} parent=5 // pred_check
        _
      $region10: #{forward.1} parent=5 // pred_check_branch
        %477 = sbr.rel (%p474) target = $region12
      $region11: #{forward.1} parent=5 // pred_region
        %s478 = ssub.s32 %s29, 1
        // Predicated region
        $region13: #{forward.1} parent=11 // pred_check
          %p479 = pneg %p76
        $region14: #{forward.1} parent=11 // pred_check_branch
          %481 = sbr.rel (%p479) target = $region16
        $region15: #{forward.1} parent=11 // pred_region
          _
        $region16: #{forward.1} parent=11 // pred_fallthru
          _
        // Predicated region
        $region17: #{forward.1} parent=11 // pred_check
          %p482 = pneg %p97
        $region18: #{forward.1} parent=11 // pred_check_branch
          %484 = sbr.rel (%p482) target = $region20
        $region19: #{forward.1} parent=11 // pred_region
          _
        $region20: #{forward.1} parent=11 // pred_fallthru
          _
        // Predicated region
        $region21: #{forward.1} parent=11 // pred_check
          %p485 = pneg %p118
        $region22: #{forward.1} parent=11 // pred_check_branch
          %487 = sbr.rel (%p485) target = $region24
        $region23: #{forward.1} parent=11 // pred_region
          _
        $region24: #{forward.1} parent=11 // pred_fallthru
          _
        // Predicated region
        $region25: #{forward.1} parent=11 // pred_check
          %p488 = pneg %p139
        $region26: #{forward.1} parent=11 // pred_check_branch
          %490 = sbr.rel (%p488) target = $region28
        $region27: #{forward.1} parent=11 // pred_region
          _
        $region28: #{forward.1} parent=11 // pred_fallthru
          _
        // Predicated region
        $region29: #{forward.1} parent=11 // pred_check
          %p491 = pneg %p160
        $region30: #{forward.1} parent=11 // pred_check_branch
          %493 = sbr.rel (%p491) target = $region32
        $region31: #{forward.1} parent=11 // pred_region
          _
        $region32: #{forward.1} parent=11 // pred_fallthru
          _
        // Predicated region
        $region33: #{forward.1} parent=11 // pred_check
          %p494 = pneg %p181
        $region34: #{forward.1} parent=11 // pred_check_branch
          %496 = sbr.rel (%p494) target = $region36
        $region35: #{forward.1} parent=11 // pred_region
          _
        $region36: #{forward.1} parent=11 // pred_fallthru
          _
        // Predicated region
        $region37: #{forward.1} parent=11 // pred_check
          %p497 = pneg %p202
        $region38: #{forward.1} parent=11 // pred_check_branch
          %499 = sbr.rel (%p497) target = $region40
        $region39: #{forward.1} parent=11 // pred_region
          _
        $region40: #{forward.1} parent=11 // pred_fallthru
          _
        // Predicated region
        $region41: #{forward.1} parent=11 // pred_check
          %p500 = pneg %p223
        $region42: #{forward.1} parent=11 // pred_check_branch
          %502 = sbr.rel (%p500) target = $region44
        $region43: #{forward.1} parent=11 // pred_region
          _
        $region44: #{forward.1} parent=11 // pred_fallthru
          _
        // Predicated region
        $region45: #{forward.1} parent=11 // pred_check
          %p503 = pneg %p244
        $region46: #{forward.1} parent=11 // pred_check_branch
          %505 = sbr.rel (%p503) target = $region48
        $region47: #{forward.1} parent=11 // pred_region
          _
        $region48: #{forward.1} parent=11 // pred_fallthru
          _
        // Predicated region
        $region49: #{forward.1} parent=11 // pred_check
          %p506 = pneg %p265
        $region50: #{forward.1} parent=11 // pred_check_branch
          %508 = sbr.rel (%p506) target = $region52
        $region51: #{forward.1} parent=11 // pred_region
          _
        $region52: #{forward.1} parent=11 // pred_fallthru
          _
        // Predicated region
        $region53: #{forward.1} parent=11 // pred_check
          %p509 = pneg %p286
        $region54: #{forward.1} parent=11 // pred_check_branch
          %511 = sbr.rel (%p509) target = $region56
        $region55: #{forward.1} parent=11 // pred_region
          _
        $region56: #{forward.1} parent=11 // pred_fallthru
          _
        // Predicated region
        $region57: #{forward.1} parent=11 // pred_check
          %p512 = pneg %p307
        $region58: #{forward.1} parent=11 // pred_check_branch
          %514 = sbr.rel (%p512) target = $region60
        $region59: #{forward.1} parent=11 // pred_region
          %516 = vsyncadd [#allocation10], 0
          %s517 = sshll.u32 %s12, 4
          %s518 = int_to_ptr.hbm [resolvable:$true] %s517
          %s519 = sshll.u32 [#allocation9], 4
          %s520 = int_to_ptr.vmem [resolvable:$true] %s519
          %525 = dma.hbm_to_vmem [thread:$0]  %s518, 16384, %s520, [#allocation10], 128, 128, 8
        $region60: #{forward.1} parent=11 // pred_fallthru
          _
        // Predicated region
        $region61: #{forward.1} parent=11 // pred_check
          %p526 = pneg %p328
        $region62: #{forward.1} parent=11 // pred_check_branch
          %528 = sbr.rel (%p526) target = $region64
        $region63: #{forward.1} parent=11 // pred_region
          _
        $region64: #{forward.1} parent=11 // pred_fallthru
          _
        // Predicated region
        $region65: #{forward.1} parent=11 // pred_check
          %p529 = pneg %p349
        $region66: #{forward.1} parent=11 // pred_check_branch
          %531 = sbr.rel (%p529) target = $region68
        $region67: #{forward.1} parent=11 // pred_region
          _
        $region68: #{forward.1} parent=11 // pred_fallthru
          _
        // Predicated region
        $region69: #{forward.1} parent=11 // pred_check
          %p532 = pneg %p370
        $region70: #{forward.1} parent=11 // pred_check_branch
          %534 = sbr.rel (%p532) target = $region72
        $region71: #{forward.1} parent=11 // pred_region
          _
        $region72: #{forward.1} parent=11 // pred_fallthru
          _
        // Predicated region
        $region73: #{forward.1} parent=11 // pred_check
          %p535 = pneg %p391
        $region74: #{forward.1} parent=11 // pred_check_branch
          %537 = sbr.rel (%p535) target = $region76
        $region75: #{forward.1} parent=11 // pred_region
          _
        $region76: #{forward.1} parent=11 // pred_fallthru
          _
        // Predicated region
        $region77: #{forward.1} parent=11 // pred_check
          %p538 = pneg %p412
        $region78: #{forward.1} parent=11 // pred_check_branch
          %540 = sbr.rel (%p538) target = $region80
        $region79: #{forward.1} parent=11 // pred_region
          _
        $region80: #{forward.1} parent=11 // pred_fallthru
          _
      $region12: #{forward.1} parent=5 // pred_fallthru
        _
      %p541 = scmp.lt.s32.totalorder %s29, 2
      // Predicated region
      $region81: #{forward.1} parent=5 // pred_check
        %p542 = pneg %p541
      $region82: #{forward.1} parent=5 // pred_check_branch
        %544 = sbr.rel (%p542) target = $region84
      $region83: #{forward.1} parent=5 // pred_region
        // Predicated region
        $region85: #{forward.1} parent=83 // pred_check
          %p545 = pneg %p49
        $region86: #{forward.1} parent=83 // pred_check_branch
          %547 = sbr.rel (%p545) target = $region88
        $region87: #{forward.1} parent=83 // pred_region
          %p548 = scmp.lt.s32.totalorder %s29, 1
          %s549 = scalar_select %p548, %s29, 1
          %s550 = smul.addr %s549, 32
          %s551 = smul.addr %s550, 8
          %s552 = scalar_lea.vmem %s0, %s551
        $region88: #{forward.1} parent=83 // pred_fallthru
          _
      $region84: #{forward.1} parent=5 // pred_fallthru
        _
      %p553 = scmp.le.s32.totalorder 1, %s29
      %p554 = scmp.lt.s32.totalorder %s29, 3
      %p555 = pnand %p553, %p554
      %p556 = pneg %p555
      // Predicated region
      $region89: #{forward.1} parent=5 // pred_check
        _
      $region90: #{forward.1} parent=5 // pred_check_branch
        %558 = sbr.rel (%p555) target = $region92
      $region91: #{forward.1} parent=5 // pred_region
        %s559 = ssub.s32 %s29, 1
        // Predicated region
        $region93: #{forward.1} parent=91 // pred_check
          %p560 = pneg %p307
        $region94: #{forward.1} parent=91 // pred_check_branch
          %562 = sbr.rel (%p560) target = $region96
        $region95: #{forward.1} parent=91 // pred_region
          %564 = dma.done [#allocation10], 16384
        $region96: #{forward.1} parent=91 // pred_fallthru
          _
        %p565 = scmp.lt.s32.totalorder %s34, 1
        %s566 = scalar_select %p565, %s34, 1
        %s567 = smul.addr %s566, 32
        %s568 = smul.addr %s567, 8
        %s569 = scalar_lea.vmem %s0, %s568
        %p570 = pneg %p55
        %p571 = pneg %p52
        %p572 = pneg %p76
        %p573 = pneg %p73
        %p574 = pneg %p97
        %p575 = pneg %p94
        %p576 = pneg %p118
        %p577 = pneg %p115
        %p578 = pneg %p139
        %p579 = pneg %p136
        %p580 = pneg %p160
        %p581 = pneg %p157
        %p582 = pneg %p181
        %p583 = pneg %p178
        %p584 = pneg %p202
        %p585 = pneg %p199
        %p586 = pneg %p223
        %p587 = pneg %p220
        %p588 = pneg %p244
        %p589 = pneg %p241
        %p590 = pneg %p265
        %p591 = pneg %p262
        %p592 = pneg %p286
        %p593 = pneg %p283
        %p594 = pneg %p307
        %p595 = pneg %p304
        %p596 = pneg %p328
        %p597 = pneg %p325
        %p598 = pneg %p349
        %p599 = pneg %p346
        %p600 = pneg %p370
        %p601 = pneg %p367
        %p602 = pneg %p391
        %p603 = pneg %p388
        %p604 = pneg %p412
        %p605 = pneg %p409
        %p606 = pneg %p438
        %p607 = pneg %p435
        %p608 = scmp.lt.s32.totalorder %s34, 1
        %s609 = scalar_select %p608, %s34, 1
        %s610 = smul.addr %s609, 2
        %s611 = scalar_lea.vmem %s18, %s610
        %p612 = pneg %p464
        %p613 = pneg %p461
        %p614 = scmp.lt.s32.totalorder %s34, 1
        %s615 = scalar_select %p614, %s34, 1
        %s616 = scalar_lea.vmem %s19, %s615
        %p617 = scmp.lt.s32.totalorder %s34, 1
        %s618 = scalar_select %p617, %s34, 1
        %s619 = smul.addr %s618, 32
        %s620 = smul.addr %s619, 8
        %s621 = scalar_lea.vmem %s0, %s620
        %p622 = scmp.lt.s32.totalorder %s34, 1
        %s623 = scalar_select %p622, %s34, 1
        %s624 = smul.addr %s623, 2
        %s625 = scalar_lea.vmem %s18, %s624
        %p626 = scmp.lt.s32.totalorder %s34, 1
        %s627 = scalar_select %p626, %s34, 1
        %s628 = scalar_lea.vmem %s19, %s627
        %v630 = vlaneseq
        %v631 = vshrl.u32 %v630, 7
        %v632 = vadd.s32 %v631, 8
        %v633 = vadd.s32 %v631, 16
        %v634 = vadd.s32 %v631, 24
        %v635 = vadd.s32 %v631, 32
        %v636 = vadd.s32 %v631, 40
        %v637 = vadd.s32 %v631, 48
        %v638 = vadd.s32 %v631, 56
        %v639 = vadd.s32 %v631, 64
        %v640 = vadd.s32 %v631, 72
        %v641 = vadd.s32 %v631, 80
        %v642 = vadd.s32 %v631, 88
        %v643 = vadd.s32 %v631, 96
        %v644 = vadd.s32 %v631, 104
        %v645 = vadd.s32 %v631, 112
        %v646 = vadd.s32 %v631, 120
        %v647 = vadd.s32 %v631, 128
        %v648 = vadd.s32 %v631, 136
        %v649 = vadd.s32 %v631, 144
        %v650 = vadd.s32 %v631, 152
        %v651 = vadd.s32 %v631, 160
        %v652 = vadd.s32 %v631, 168
        %v653 = vadd.s32 %v631, 176
        %v654 = vadd.s32 %v631, 184
        %v655 = vadd.s32 %v631, 192
        %v656 = vadd.s32 %v631, 200
        %v657 = vadd.s32 %v631, 208
        %v658 = vadd.s32 %v631, 216
        %v659 = vadd.s32 %v631, 224
        %v660 = vadd.s32 %v631, 232
        %v661 = vadd.s32 %v631, 240
        %v662 = vadd.s32 %v631, 248
        %vm663 = vcmp.lt.s32.totalorder %v631, 0
        %v664 = vsub.s32 0, %v631
        %v665 = vsel %vm663, %v664, %v631
        %v666 = vshrl.u32 %v665, 4
        %v667 = vand.u32 %v665, 15
        %v668 = vsub.s32 0, %v667
        %v669 = vsel %vm663, %v668, %v667
        %vm670 = vcmp.lt.s32.totalorder %v632, 0
        %v671 = vsub.s32 0, %v632
        %v672 = vsel %vm670, %v671, %v632
        %v673 = vshrl.u32 %v672, 4
        %v674 = vand.u32 %v672, 15
        %v675 = vsub.s32 0, %v674
        %v676 = vsel %vm670, %v675, %v674
        %vm677 = vcmp.lt.s32.totalorder %v633, 0
        %v678 = vsub.s32 0, %v633
        %v679 = vsel %vm677, %v678, %v633
        %v680 = vshrl.u32 %v679, 4
        %v681 = vand.u32 %v679, 15
        %v682 = vsub.s32 0, %v681
        %v683 = vsel %vm677, %v682, %v681
        %vm684 = vcmp.lt.s32.totalorder %v634, 0
        %v685 = vsub.s32 0, %v634
        %v686 = vsel %vm684, %v685, %v634
        %v687 = vshrl.u32 %v686, 4
        %v688 = vand.u32 %v686, 15
        %v689 = vsub.s32 0, %v688
        %v690 = vsel %vm684, %v689, %v688
        %vm691 = vcmp.lt.s32.totalorder %v635, 0
        %v692 = vsub.s32 0, %v635
        %v693 = vsel %vm691, %v692, %v635
        %v694 = vshrl.u32 %v693, 4
        %v695 = vand.u32 %v693, 15
        %v696 = vsub.s32 0, %v695
        %v697 = vsel %vm691, %v696, %v695
        %vm698 = vcmp.lt.s32.totalorder %v636, 0
        %v699 = vsub.s32 0, %v636
        %v700 = vsel %vm698, %v699, %v636
        %v701 = vshrl.u32 %v700, 4
        %v702 = vand.u32 %v700, 15
        %v703 = vsub.s32 0, %v702
        %v704 = vsel %vm698, %v703, %v702
        %vm705 = vcmp.lt.s32.totalorder %v637, 0
        %v706 = vsub.s32 0, %v637
        %v707 = vsel %vm705, %v706, %v637
        %v708 = vshrl.u32 %v707, 4
        %v709 = vand.u32 %v707, 15
        %v710 = vsub.s32 0, %v709
        %v711 = vsel %vm705, %v710, %v709
        %vm712 = vcmp.lt.s32.totalorder %v638, 0
        %v713 = vsub.s32 0, %v638
        %v714 = vsel %vm712, %v713, %v638
        %v715 = vshrl.u32 %v714, 4
        %v716 = vand.u32 %v714, 15
        %v717 = vsub.s32 0, %v716
        %v718 = vsel %vm712, %v717, %v716
        %vm719 = vcmp.lt.s32.totalorder %v639, 0
        %v720 = vsub.s32 0, %v639
        %v721 = vsel %vm719, %v720, %v639
        %v722 = vshrl.u32 %v721, 4
        %v723 = vand.u32 %v721, 15
        %v724 = vsub.s32 0, %v723
        %v725 = vsel %vm719, %v724, %v723
        %vm726 = vcmp.lt.s32.totalorder %v640, 0
        %v727 = vsub.s32 0, %v640
        %v728 = vsel %vm726, %v727, %v640
        %v729 = vshrl.u32 %v728, 4
        %v730 = vand.u32 %v728, 15
        %v731 = vsub.s32 0, %v730
        %v732 = vsel %vm726, %v731, %v730
        %vm733 = vcmp.lt.s32.totalorder %v641, 0
        %v734 = vsub.s32 0, %v641
        %v735 = vsel %vm733, %v734, %v641
        %v736 = vshrl.u32 %v735, 4
        %v737 = vand.u32 %v735, 15
        %v738 = vsub.s32 0, %v737
        %v739 = vsel %vm733, %v738, %v737
        %vm740 = vcmp.lt.s32.totalorder %v642, 0
        %v741 = vsub.s32 0, %v642
        %v742 = vsel %vm740, %v741, %v642
        %v743 = vshrl.u32 %v742, 4
        %v744 = vand.u32 %v742, 15
        %v745 = vsub.s32 0, %v744
        %v746 = vsel %vm740, %v745, %v744
        %vm747 = vcmp.lt.s32.totalorder %v643, 0
        %v748 = vsub.s32 0, %v643
        %v749 = vsel %vm747, %v748, %v643
        %v750 = vshrl.u32 %v749, 4
        %v751 = vand.u32 %v749, 15
        %v752 = vsub.s32 0, %v751
        %v753 = vsel %vm747, %v752, %v751
        %vm754 = vcmp.lt.s32.totalorder %v644, 0
        %v755 = vsub.s32 0, %v644
        %v756 = vsel %vm754, %v755, %v644
        %v757 = vshrl.u32 %v756, 4
        %v758 = vand.u32 %v756, 15
        %v759 = vsub.s32 0, %v758
        %v760 = vsel %vm754, %v759, %v758
        %vm761 = vcmp.lt.s32.totalorder %v645, 0
        %v762 = vsub.s32 0, %v645
        %v763 = vsel %vm761, %v762, %v645
        %v764 = vshrl.u32 %v763, 4
        %v765 = vand.u32 %v763, 15
        %v766 = vsub.s32 0, %v765
        %v767 = vsel %vm761, %v766, %v765
        %vm768 = vcmp.lt.s32.totalorder %v646, 0
        %v769 = vsub.s32 0, %v646
        %v770 = vsel %vm768, %v769, %v646
        %v771 = vshrl.u32 %v770, 4
        %v772 = vand.u32 %v770, 15
        %v773 = vsub.s32 0, %v772
        %v774 = vsel %vm768, %v773, %v772
        %vm775 = vcmp.lt.s32.totalorder %v647, 0
        %v776 = vsub.s32 0, %v647
        %v777 = vsel %vm775, %v776, %v647
        %v778 = vshrl.u32 %v777, 4
        %v779 = vand.u32 %v777, 15
        %v780 = vsub.s32 0, %v779
        %v781 = vsel %vm775, %v780, %v779
        %vm782 = vcmp.lt.s32.totalorder %v648, 0
        %v783 = vsub.s32 0, %v648
        %v784 = vsel %vm782, %v783, %v648
        %v785 = vshrl.u32 %v784, 4
        %v786 = vand.u32 %v784, 15
        %v787 = vsub.s32 0, %v786
        %v788 = vsel %vm782, %v787, %v786
        %vm789 = vcmp.lt.s32.totalorder %v649, 0
        %v790 = vsub.s32 0, %v649
        %v791 = vsel %vm789, %v790, %v649
        %v792 = vshrl.u32 %v791, 4
        %v793 = vand.u32 %v791, 15
        %v794 = vsub.s32 0, %v793
        %v795 = vsel %vm789, %v794, %v793
        %vm796 = vcmp.lt.s32.totalorder %v650, 0
        %v797 = vsub.s32 0, %v650
        %v798 = vsel %vm796, %v797, %v650
        %v799 = vshrl.u32 %v798, 4
        %v800 = vand.u32 %v798, 15
        %v801 = vsub.s32 0, %v800
        %v802 = vsel %vm796, %v801, %v800
        %vm803 = vcmp.lt.s32.totalorder %v651, 0
        %v804 = vsub.s32 0, %v651
        %v805 = vsel %vm803, %v804, %v651
        %v806 = vshrl.u32 %v805, 4
        %v807 = vand.u32 %v805, 15
        %v808 = vsub.s32 0, %v807
        %v809 = vsel %vm803, %v808, %v807
        %vm810 = vcmp.lt.s32.totalorder %v652, 0
        %v811 = vsub.s32 0, %v652
        %v812 = vsel %vm810, %v811, %v652
        %v813 = vshrl.u32 %v812, 4
        %v814 = vand.u32 %v812, 15
        %v815 = vsub.s32 0, %v814
        %v816 = vsel %vm810, %v815, %v814
        %vm817 = vcmp.lt.s32.totalorder %v653, 0
        %v818 = vsub.s32 0, %v653
        %v819 = vsel %vm817, %v818, %v653
        %v820 = vshrl.u32 %v819, 4
        %v821 = vand.u32 %v819, 15
        %v822 = vsub.s32 0, %v821
        %v823 = vsel %vm817, %v822, %v821
        %vm824 = vcmp.lt.s32.totalorder %v654, 0
        %v825 = vsub.s32 0, %v654
        %v826 = vsel %vm824, %v825, %v654
        %v827 = vshrl.u32 %v826, 4
        %v828 = vand.u32 %v826, 15
        %v829 = vsub.s32 0, %v828
        %v830 = vsel %vm824, %v829, %v828
        %vm831 = vcmp.lt.s32.totalorder %v655, 0
        %v832 = vsub.s32 0, %v655
        %v833 = vsel %vm831, %v832, %v655
        %v834 = vshrl.u32 %v833, 4
        %v835 = vand.u32 %v833, 15
        %v836 = vsub.s32 0, %v835
        %v837 = vsel %vm831, %v836, %v835
        %vm838 = vcmp.lt.s32.totalorder %v656, 0
        %v839 = vsub.s32 0, %v656
        %v840 = vsel %vm838, %v839, %v656
        %v841 = vshrl.u32 %v840, 4
        %v842 = vand.u32 %v840, 15
        %v843 = vsub.s32 0, %v842
        %v844 = vsel %vm838, %v843, %v842
        %vm845 = vcmp.lt.s32.totalorder %v657, 0
        %v846 = vsub.s32 0, %v657
        %v847 = vsel %vm845, %v846, %v657
        %v848 = vshrl.u32 %v847, 4
        %v849 = vand.u32 %v847, 15
        %v850 = vsub.s32 0, %v849
        %v851 = vsel %vm845, %v850, %v849
        %vm852 = vcmp.lt.s32.totalorder %v658, 0
        %v853 = vsub.s32 0, %v658
        %v854 = vsel %vm852, %v853, %v658
        %v855 = vshrl.u32 %v854, 4
        %v856 = vand.u32 %v854, 15
        %v857 = vsub.s32 0, %v856
        %v858 = vsel %vm852, %v857, %v856
        %vm859 = vcmp.lt.s32.totalorder %v659, 0
        %v860 = vsub.s32 0, %v659
        %v861 = vsel %vm859, %v860, %v659
        %v862 = vshrl.u32 %v861, 4
        %v863 = vand.u32 %v861, 15
        %v864 = vsub.s32 0, %v863
        %v865 = vsel %vm859, %v864, %v863
        %vm866 = vcmp.lt.s32.totalorder %v660, 0
        %v867 = vsub.s32 0, %v660
        %v868 = vsel %vm866, %v867, %v660
        %v869 = vshrl.u32 %v868, 4
        %v870 = vand.u32 %v868, 15
        %v871 = vsub.s32 0, %v870
        %v872 = vsel %vm866, %v871, %v870
        %vm873 = vcmp.lt.s32.totalorder %v661, 0
        %v874 = vsub.s32 0, %v661
        %v875 = vsel %vm873, %v874, %v661
        %v876 = vshrl.u32 %v875, 4
        %v877 = vand.u32 %v875, 15
        %v878 = vsub.s32 0, %v877
        %v879 = vsel %vm873, %v878, %v877
        %vm880 = vcmp.lt.s32.totalorder %v662, 0
        %v881 = vsub.s32 0, %v662
        %v882 = vsel %vm880, %v881, %v662
        %v883 = vshrl.u32 %v882, 4
        %v884 = vand.u32 %v882, 15
        %v885 = vsub.s32 0, %v884
        %v886 = vsel %vm880, %v885, %v884
        %vm887 = vcmp.ne.s32.totalorder %v669, 0
        %vm888 = vcmp.ne.s32.totalorder %v676, 0
        %vm889 = vcmp.ne.s32.totalorder %v683, 0
        %vm890 = vcmp.ne.s32.totalorder %v690, 0
        %vm891 = vcmp.ne.s32.totalorder %v697, 0
        %vm892 = vcmp.ne.s32.totalorder %v704, 0
        %vm893 = vcmp.ne.s32.totalorder %v711, 0
        %vm894 = vcmp.ne.s32.totalorder %v718, 0
        %vm895 = vcmp.ne.s32.totalorder %v725, 0
        %vm896 = vcmp.ne.s32.totalorder %v732, 0
        %vm897 = vcmp.ne.s32.totalorder %v739, 0
        %vm898 = vcmp.ne.s32.totalorder %v746, 0
        %vm899 = vcmp.ne.s32.totalorder %v753, 0
        %vm900 = vcmp.ne.s32.totalorder %v760, 0
        %vm901 = vcmp.ne.s32.totalorder %v767, 0
        %vm902 = vcmp.ne.s32.totalorder %v774, 0
        %vm903 = vcmp.ne.s32.totalorder %v781, 0
        %vm904 = vcmp.ne.s32.totalorder %v788, 0
        %vm905 = vcmp.ne.s32.totalorder %v795, 0
        %vm906 = vcmp.ne.s32.totalorder %v802, 0
        %vm907 = vcmp.ne.s32.totalorder %v809, 0
        %vm908 = vcmp.ne.s32.totalorder %v816, 0
        %vm909 = vcmp.ne.s32.totalorder %v823, 0
        %vm910 = vcmp.ne.s32.totalorder %v830, 0
        %vm911 = vcmp.ne.s32.totalorder %v837, 0
        %vm912 = vcmp.ne.s32.totalorder %v844, 0
        %vm913 = vcmp.ne.s32.totalorder %v851, 0
        %vm914 = vcmp.ne.s32.totalorder %v858, 0
        %vm915 = vcmp.ne.s32.totalorder %v865, 0
        %vm916 = vcmp.ne.s32.totalorder %v872, 0
        %vm917 = vcmp.ne.s32.totalorder %v879, 0
        %vm918 = vcmp.ne.s32.totalorder %v886, 0
        %vm919 = vcmp.lt.s32.totalorder %v669, 0
        %vm920 = vcmp.lt.s32.totalorder %v676, 0
        %vm921 = vcmp.lt.s32.totalorder %v683, 0
        %vm922 = vcmp.lt.s32.totalorder %v690, 0
        %vm923 = vcmp.lt.s32.totalorder %v697, 0
        %vm924 = vcmp.lt.s32.totalorder %v704, 0
        %vm925 = vcmp.lt.s32.totalorder %v711, 0
        %vm926 = vcmp.lt.s32.totalorder %v718, 0
        %vm927 = vcmp.lt.s32.totalorder %v725, 0
        %vm928 = vcmp.lt.s32.totalorder %v732, 0
        %vm929 = vcmp.lt.s32.totalorder %v739, 0
        %vm930 = vcmp.lt.s32.totalorder %v746, 0
        %vm931 = vcmp.lt.s32.totalorder %v753, 0
        %vm932 = vcmp.lt.s32.totalorder %v760, 0
        %vm933 = vcmp.lt.s32.totalorder %v767, 0
        %vm934 = vcmp.lt.s32.totalorder %v774, 0
        %vm935 = vcmp.lt.s32.totalorder %v781, 0
        %vm936 = vcmp.lt.s32.totalorder %v788, 0
        %vm937 = vcmp.lt.s32.totalorder %v795, 0
        %vm938 = vcmp.lt.s32.totalorder %v802, 0
        %vm939 = vcmp.lt.s32.totalorder %v809, 0
        %vm940 = vcmp.lt.s32.totalorder %v816, 0
        %vm941 = vcmp.lt.s32.totalorder %v823, 0
        %vm942 = vcmp.lt.s32.totalorder %v830, 0
        %vm943 = vcmp.lt.s32.totalorder %v837, 0
        %vm944 = vcmp.lt.s32.totalorder %v844, 0
        %vm945 = vcmp.lt.s32.totalorder %v851, 0
        %vm946 = vcmp.lt.s32.totalorder %v858, 0
        %vm947 = vcmp.lt.s32.totalorder %v865, 0
        %vm948 = vcmp.lt.s32.totalorder %v872, 0
        %vm949 = vcmp.lt.s32.totalorder %v879, 0
        %vm950 = vcmp.lt.s32.totalorder %v886, 0
        %vm951 = vmand %vm919, %vm887
        %vm952 = vmand %vm920, %vm888
        %vm953 = vmand %vm921, %vm889
        %vm954 = vmand %vm922, %vm890
        %vm955 = vmand %vm923, %vm891
        %vm956 = vmand %vm924, %vm892
        %vm957 = vmand %vm925, %vm893
        %vm958 = vmand %vm926, %vm894
        %vm959 = vmand %vm927, %vm895
        %vm960 = vmand %vm928, %vm896
        %vm961 = vmand %vm929, %vm897
        %vm962 = vmand %vm930, %vm898
        %vm963 = vmand %vm931, %vm899
        %vm964 = vmand %vm932, %vm900
        %vm965 = vmand %vm933, %vm901
        %vm966 = vmand %vm934, %vm902
        %vm967 = vmand %vm935, %vm903
        %vm968 = vmand %vm936, %vm904
        %vm969 = vmand %vm937, %vm905
        %vm970 = vmand %vm938, %vm906
        %vm971 = vmand %vm939, %vm907
        %vm972 = vmand %vm940, %vm908
        %vm973 = vmand %vm941, %vm909
        %vm974 = vmand %vm942, %vm910
        %vm975 = vmand %vm943, %vm911
        %vm976 = vmand %vm944, %vm912
        %vm977 = vmand %vm945, %vm913
        %vm978 = vmand %vm946, %vm914
        %vm979 = vmand %vm947, %vm915
        %vm980 = vmand %vm948, %vm916
        %vm981 = vmand %vm949, %vm917
        %vm982 = vmand %vm950, %vm918
        %v983 = vadd.s32 %v669, 16
        %v984 = vadd.s32 %v676, 16
        %v985 = vadd.s32 %v683, 16
        %v986 = vadd.s32 %v690, 16
        %v987 = vadd.s32 %v697, 16
        %v988 = vadd.s32 %v704, 16
        %v989 = vadd.s32 %v711, 16
        %v990 = vadd.s32 %v718, 16
        %v991 = vadd.s32 %v725, 16
        %v992 = vadd.s32 %v732, 16
        %v993 = vadd.s32 %v739, 16
        %v994 = vadd.s32 %v746, 16
        %v995 = vadd.s32 %v753, 16
        %v996 = vadd.s32 %v760, 16
        %v997 = vadd.s32 %v767, 16
        %v998 = vadd.s32 %v774, 16
        %v999 = vadd.s32 %v781, 16
        %v1000 = vadd.s32 %v788, 16
        %v1001 = vadd.s32 %v795, 16
        %v1002 = vadd.s32 %v802, 16
        %v1003 = vadd.s32 %v809, 16
        %v1004 = vadd.s32 %v816, 16
        %v1005 = vadd.s32 %v823, 16
        %v1006 = vadd.s32 %v830, 16
        %v1007 = vadd.s32 %v837, 16
        %v1008 = vadd.s32 %v844, 16
        %v1009 = vadd.s32 %v851, 16
        %v1010 = vadd.s32 %v858, 16
        %v1011 = vadd.s32 %v865, 16
        %v1012 = vadd.s32 %v872, 16
        %v1013 = vadd.s32 %v879, 16
        %v1014 = vadd.s32 %v886, 16
        %v1015 = vsel %vm951, %v983, %v669
        %v1016 = vsel %vm952, %v984, %v676
        %v1017 = vsel %vm953, %v985, %v683
        %v1018 = vsel %vm954, %v986, %v690
        %v1019 = vsel %vm955, %v987, %v697
        %v1020 = vsel %vm956, %v988, %v704
        %v1021 = vsel %vm957, %v989, %v711
        %v1022 = vsel %vm958, %v990, %v718
        %v1023 = vsel %vm959, %v991, %v725
        %v1024 = vsel %vm960, %v992, %v732
        %v1025 = vsel %vm961, %v993, %v739
        %v1026 = vsel %vm962, %v994, %v746
        %v1027 = vsel %vm963, %v995, %v753
        %v1028 = vsel %vm964, %v996, %v760
        %v1029 = vsel %vm965, %v997, %v767
        %v1030 = vsel %vm966, %v998, %v774
        %v1031 = vsel %vm967, %v999, %v781
        %v1032 = vsel %vm968, %v1000, %v788
        %v1033 = vsel %vm969, %v1001, %v795
        %v1034 = vsel %vm970, %v1002, %v802
        %v1035 = vsel %vm971, %v1003, %v809
        %v1036 = vsel %vm972, %v1004, %v816
        %v1037 = vsel %vm973, %v1005, %v823
        %v1038 = vsel %vm974, %v1006, %v830
        %v1039 = vsel %vm975, %v1007, %v837
        %v1040 = vsel %vm976, %v1008, %v844
        %v1041 = vsel %vm977, %v1009, %v851
        %v1042 = vsel %vm978, %v1010, %v858
        %v1043 = vsel %vm979, %v1011, %v865
        %v1044 = vsel %vm980, %v1012, %v872
        %v1045 = vsel %vm981, %v1013, %v879
        %v1046 = vsel %vm982, %v1014, %v886
        %v1047 = vld [vmem:[%s621] sm:$0xff]
        %v1048 = vld [vmem:[%s621 + $0x8] sm:$0xff]
        %v1049 = vld [vmem:[%s621 + $0x10] sm:$0xff]
        %v1050 = vld [vmem:[%s621 + $0x18] sm:$0xff]
        %v1051 = vld [vmem:[%s621 + $0x20] sm:$0xff]
        %v1052 = vld [vmem:[%s621 + $0x28] sm:$0xff]
        %v1053 = vld [vmem:[%s621 + $0x30] sm:$0xff]
        %v1054 = vld [vmem:[%s621 + $0x38] sm:$0xff]
        %v1055 = vld [vmem:[%s621 + $0x40] sm:$0xff]
        %v1056 = vld [vmem:[%s621 + $0x48] sm:$0xff]
        %v1057 = vld [vmem:[%s621 + $0x50] sm:$0xff]
        %v1058 = vld [vmem:[%s621 + $0x58] sm:$0xff]
        %v1059 = vld [vmem:[%s621 + $0x60] sm:$0xff]
        %v1060 = vld [vmem:[%s621 + $0x68] sm:$0xff]
        %v1061 = vld [vmem:[%s621 + $0x70] sm:$0xff]
        %v1062 = vld [vmem:[%s621 + $0x78] sm:$0xff]
        %v1063 = vld [vmem:[%s621 + $0x80] sm:$0xff]
        %v1064 = vld [vmem:[%s621 + $0x88] sm:$0xff]
        %v1065 = vld [vmem:[%s621 + $0x90] sm:$0xff]
        %v1066 = vld [vmem:[%s621 + $0x98] sm:$0xff]
        %v1067 = vld [vmem:[%s621 + $0xa0] sm:$0xff]
        %v1068 = vld [vmem:[%s621 + $0xa8] sm:$0xff]
        %v1069 = vld [vmem:[%s621 + $0xb0] sm:$0xff]
        %v1070 = vld [vmem:[%s621 + $0xb8] sm:$0xff]
        %v1071 = vld [vmem:[%s621 + $0xc0] sm:$0xff]
        %v1072 = vld [vmem:[%s621 + $0xc8] sm:$0xff]
        %v1073 = vld [vmem:[%s621 + $0xd0] sm:$0xff]
        %v1074 = vld [vmem:[%s621 + $0xd8] sm:$0xff]
        %v1075 = vld [vmem:[%s621 + $0xe0] sm:$0xff]
        %v1076 = vld [vmem:[%s621 + $0xe8] sm:$0xff]
        %v1077 = vld [vmem:[%s621 + $0xf0] sm:$0xff]
        %v1078 = vld [vmem:[%s621 + $0xf8] sm:$0xff]
        %vm1079 = vcmask 31744
        %1080 = vst.msk [vmem:[#allocation2] sm:$0xff] %vm1079, 0.0
        %1081 = vst.msk [vmem:[#allocation2 + $0x8] sm:$0xff] %vm1079, 0.0
        %1082 = vst.msk [vmem:[#allocation2 + $0x10] sm:$0xff] %vm1079, 0.0
        %1083 = vst.msk [vmem:[#allocation2 + $0x18] sm:$0xff] %vm1079, 0.0
        %1084 = vst.msk [vmem:[#allocation2 + $0x20] sm:$0xff] %vm1079, 0.0
        %1085 = vst.msk [vmem:[#allocation2 + $0x28] sm:$0xff] %vm1079, 0.0
        %1086 = vst.msk [vmem:[#allocation2 + $0x30] sm:$0xff] %vm1079, 0.0
        %1087 = vst.msk [vmem:[#allocation2 + $0x38] sm:$0xff] %vm1079, 0.0
        %1088 = vst.msk [vmem:[#allocation2 + $0x40] sm:$0xff] %vm1079, 0.0
        %1089 = vst.msk [vmem:[#allocation2 + $0x48] sm:$0xff] %vm1079, 0.0
        %1090 = vst.msk [vmem:[#allocation2 + $0x50] sm:$0xff] %vm1079, 0.0
        %1091 = vst.msk [vmem:[#allocation2 + $0x58] sm:$0xff] %vm1079, 0.0
        %1092 = vst.msk [vmem:[#allocation2 + $0x60] sm:$0xff] %vm1079, 0.0
        %1093 = vst.msk [vmem:[#allocation2 + $0x68] sm:$0xff] %vm1079, 0.0
        %1094 = vst.msk [vmem:[#allocation2 + $0x70] sm:$0xff] %vm1079, 0.0
        %1095 = vst.msk [vmem:[#allocation2 + $0x78] sm:$0xff] %vm1079, 0.0
        %1096 = vst.msk [vmem:[#allocation2 + $0x80] sm:$0xff] %vm1079, 0.0
        %1097 = vst.msk [vmem:[#allocation2 + $0x88] sm:$0xff] %vm1079, 0.0
        %1098 = vst.msk [vmem:[#allocation2 + $0x90] sm:$0xff] %vm1079, 0.0
        %1099 = vst.msk [vmem:[#allocation2 + $0x98] sm:$0xff] %vm1079, 0.0
        %1100 = vst.msk [vmem:[#allocation2 + $0xa0] sm:$0xff] %vm1079, 0.0
        %1101 = vst.msk [vmem:[#allocation2 + $0xa8] sm:$0xff] %vm1079, 0.0
        %1102 = vst.msk [vmem:[#allocation2 + $0xb0] sm:$0xff] %vm1079, 0.0
        %1103 = vst.msk [vmem:[#allocation2 + $0xb8] sm:$0xff] %vm1079, 0.0
        %1104 = vst.msk [vmem:[#allocation2 + $0xc0] sm:$0xff] %vm1079, 0.0
        %1105 = vst.msk [vmem:[#allocation2 + $0xc8] sm:$0xff] %vm1079, 0.0
        %1106 = vst.msk [vmem:[#allocation2 + $0xd0] sm:$0xff] %vm1079, 0.0
        %1107 = vst.msk [vmem:[#allocation2 + $0xd8] sm:$0xff] %vm1079, 0.0
        %1108 = vst.msk [vmem:[#allocation2 + $0xe0] sm:$0xff] %vm1079, 0.0
        %1109 = vst.msk [vmem:[#allocation2 + $0xe8] sm:$0xff] %vm1079, 0.0
        %1110 = vst.msk [vmem:[#allocation2 + $0xf0] sm:$0xff] %vm1079, 0.0
        %1111 = vst.msk [vmem:[#allocation2 + $0xf8] sm:$0xff] %vm1079, 0.0
        %1112 = vst.msk [vmem:[#allocation2 + $0x100] sm:$0xff] %vm1079, 0.0
        %1113 = vst.msk [vmem:[#allocation2 + $0x108] sm:$0xff] %vm1079, 0.0
        %1114 = vst.msk [vmem:[#allocation2 + $0x110] sm:$0xff] %vm1079, 0.0
        %1115 = vst.msk [vmem:[#allocation2 + $0x118] sm:$0xff] %vm1079, 0.0
        %1116 = vst.msk [vmem:[#allocation2 + $0x120] sm:$0xff] %vm1079, 0.0
        %1117 = vst.msk [vmem:[#allocation2 + $0x128] sm:$0xff] %vm1079, 0.0
        %1118 = vst.msk [vmem:[#allocation2 + $0x130] sm:$0xff] %vm1079, 0.0
        %1119 = vst.msk [vmem:[#allocation2 + $0x138] sm:$0xff] %vm1079, 0.0
        %1120 = vst.msk [vmem:[#allocation2 + $0x20] sm:$0xff] %vm1079, %v1047
        %1121 = vst.msk [vmem:[#allocation2 + $0x28] sm:$0xff] %vm1079, %v1048
        %1122 = vst.msk [vmem:[#allocation2 + $0x30] sm:$0xff] %vm1079, %v1049
        %1123 = vst.msk [vmem:[#allocation2 + $0x38] sm:$0xff] %vm1079, %v1050
        %1124 = vst.msk [vmem:[#allocation2 + $0x40] sm:$0xff] %vm1079, %v1051
        %1125 = vst.msk [vmem:[#allocation2 + $0x48] sm:$0xff] %vm1079, %v1052
        %1126 = vst.msk [vmem:[#allocation2 + $0x50] sm:$0xff] %vm1079, %v1053
        %1127 = vst.msk [vmem:[#allocation2 + $0x58] sm:$0xff] %vm1079, %v1054
        %1128 = vst.msk [vmem:[#allocation2 + $0x60] sm:$0xff] %vm1079, %v1055
        %1129 = vst.msk [vmem:[#allocation2 + $0x68] sm:$0xff] %vm1079, %v1056
        %1130 = vst.msk [vmem:[#allocation2 + $0x70] sm:$0xff] %vm1079, %v1057
        %1131 = vst.msk [vmem:[#allocation2 + $0x78] sm:$0xff] %vm1079, %v1058
        %1132 = vst.msk [vmem:[#allocation2 + $0x80] sm:$0xff] %vm1079, %v1059
        %1133 = vst.msk [vmem:[#allocation2 + $0x88] sm:$0xff] %vm1079, %v1060
        %1134 = vst.msk [vmem:[#allocation2 + $0x90] sm:$0xff] %vm1079, %v1061
        %1135 = vst.msk [vmem:[#allocation2 + $0x98] sm:$0xff] %vm1079, %v1062
        %1136 = vst.msk [vmem:[#allocation2 + $0xa0] sm:$0xff] %vm1079, %v1063
        %1137 = vst.msk [vmem:[#allocation2 + $0xa8] sm:$0xff] %vm1079, %v1064
        %1138 = vst.msk [vmem:[#allocation2 + $0xb0] sm:$0xff] %vm1079, %v1065
        %1139 = vst.msk [vmem:[#allocation2 + $0xb8] sm:$0xff] %vm1079, %v1066
        %1140 = vst.msk [vmem:[#allocation2 + $0xc0] sm:$0xff] %vm1079, %v1067
        %1141 = vst.msk [vmem:[#allocation2 + $0xc8] sm:$0xff] %vm1079, %v1068
        %1142 = vst.msk [vmem:[#allocation2 + $0xd0] sm:$0xff] %vm1079, %v1069
        %1143 = vst.msk [vmem:[#allocation2 + $0xd8] sm:$0xff] %vm1079, %v1070
        %1144 = vst.msk [vmem:[#allocation2 + $0xe0] sm:$0xff] %vm1079, %v1071
        %1145 = vst.msk [vmem:[#allocation2 + $0xe8] sm:$0xff] %vm1079, %v1072
        %1146 = vst.msk [vmem:[#allocation2 + $0xf0] sm:$0xff] %vm1079, %v1073
        %1147 = vst.msk [vmem:[#allocation2 + $0xf8] sm:$0xff] %vm1079, %v1074
        %1148 = vst.msk [vmem:[#allocation2 + $0x100] sm:$0xff] %vm1079, %v1075
        %1149 = vst.msk [vmem:[#allocation2 + $0x108] sm:$0xff] %vm1079, %v1076
        %1150 = vst.msk [vmem:[#allocation2 + $0x110] sm:$0xff] %vm1079, %v1077
        %1151 = vst.msk [vmem:[#allocation2 + $0x118] sm:$0xff] %vm1079, %v1078
        %v1152 = vld [vmem:[#allocation2 + $0xf] sm:$0xff]
        %v1153 = vld [vmem:[#allocation2 + $0x17] sm:$0xff]
        %v1154 = vld [vmem:[#allocation2 + $0x1f] sm:$0xff]
        %v1155 = vld [vmem:[#allocation2 + $0x27] sm:$0xff]
        %v1156 = vld [vmem:[#allocation2 + $0x2f] sm:$0xff]
        %v1157 = vld [vmem:[#allocation2 + $0x37] sm:$0xff]
        %v1158 = vld [vmem:[#allocation2 + $0x3f] sm:$0xff]
        %v1159 = vld [vmem:[#allocation2 + $0x47] sm:$0xff]
        %v1160 = vld [vmem:[#allocation2 + $0x4f] sm:$0xff]
        %v1161 = vld [vmem:[#allocation2 + $0x57] sm:$0xff]
        %v1162 = vld [vmem:[#allocation2 + $0x5f] sm:$0xff]
        %v1163 = vld [vmem:[#allocation2 + $0x67] sm:$0xff]
        %v1164 = vld [vmem:[#allocation2 + $0x6f] sm:$0xff]
        %v1165 = vld [vmem:[#allocation2 + $0x77] sm:$0xff]
        %v1166 = vld [vmem:[#allocation2 + $0x7f] sm:$0xff]
        %v1167 = vld [vmem:[#allocation2 + $0x87] sm:$0xff]
        %v1168 = vld [vmem:[#allocation2 + $0x8f] sm:$0xff]
        %v1169 = vld [vmem:[#allocation2 + $0x97] sm:$0xff]
        %v1170 = vld [vmem:[#allocation2 + $0x9f] sm:$0xff]
        %v1171 = vld [vmem:[#allocation2 + $0xa7] sm:$0xff]
        %v1172 = vld [vmem:[#allocation2 + $0xaf] sm:$0xff]
        %v1173 = vld [vmem:[#allocation2 + $0xb7] sm:$0xff]
        %v1174 = vld [vmem:[#allocation2 + $0xbf] sm:$0xff]
        %v1175 = vld [vmem:[#allocation2 + $0xc7] sm:$0xff]
        %v1176 = vld [vmem:[#allocation2 + $0xcf] sm:$0xff]
        %v1177 = vld [vmem:[#allocation2 + $0xd7] sm:$0xff]
        %v1178 = vld [vmem:[#allocation2 + $0xdf] sm:$0xff]
        %v1179 = vld [vmem:[#allocation2 + $0xe7] sm:$0xff]
        %v1180 = vld [vmem:[#allocation2 + $0xef] sm:$0xff]
        %v1181 = vld [vmem:[#allocation2 + $0xf7] sm:$0xff]
        %v1182 = vld [vmem:[#allocation2 + $0xff] sm:$0xff]
        %v1183 = vld [vmem:[#allocation2 + $0x107] sm:$0xff]
        %vm1184 = vcmp.gt.s32.totalorder %v1015, 0
        %vm1185 = vcmp.gt.s32.totalorder %v1016, 0
        %vm1186 = vcmp.gt.s32.totalorder %v1017, 0
        %vm1187 = vcmp.gt.s32.totalorder %v1018, 0
        %vm1188 = vcmp.gt.s32.totalorder %v1019, 0
        %vm1189 = vcmp.gt.s32.totalorder %v1020, 0
        %vm1190 = vcmp.gt.s32.totalorder %v1021, 0
        %vm1191 = vcmp.gt.s32.totalorder %v1022, 0
        %vm1192 = vcmp.gt.s32.totalorder %v1023, 0
        %vm1193 = vcmp.gt.s32.totalorder %v1024, 0
        %vm1194 = vcmp.gt.s32.totalorder %v1025, 0
        %vm1195 = vcmp.gt.s32.totalorder %v1026, 0
        %vm1196 = vcmp.gt.s32.totalorder %v1027, 0
        %vm1197 = vcmp.gt.s32.totalorder %v1028, 0
        %vm1198 = vcmp.gt.s32.totalorder %v1029, 0
        %vm1199 = vcmp.gt.s32.totalorder %v1030, 0
        %vm1200 = vcmp.gt.s32.totalorder %v1031, 0
        %vm1201 = vcmp.gt.s32.totalorder %v1032, 0
        %vm1202 = vcmp.gt.s32.totalorder %v1033, 0
        %vm1203 = vcmp.gt.s32.totalorder %v1034, 0
        %vm1204 = vcmp.gt.s32.totalorder %v1035, 0
        %vm1205 = vcmp.gt.s32.totalorder %v1036, 0
        %vm1206 = vcmp.gt.s32.totalorder %v1037, 0
        %vm1207 = vcmp.gt.s32.totalorder %v1038, 0
        %vm1208 = vcmp.gt.s32.totalorder %v1039, 0
        %vm1209 = vcmp.gt.s32.totalorder %v1040, 0
        %vm1210 = vcmp.gt.s32.totalorder %v1041, 0
        %vm1211 = vcmp.gt.s32.totalorder %v1042, 0
        %vm1212 = vcmp.gt.s32.totalorder %v1043, 0
        %vm1213 = vcmp.gt.s32.totalorder %v1044, 0
        %vm1214 = vcmp.gt.s32.totalorder %v1045, 0
        %vm1215 = vcmp.gt.s32.totalorder %v1046, 0
        %v1216 = vsel %vm1184, 1, 0
        %v1217 = vsel %vm1185, 1, 0
        %v1218 = vsel %vm1186, 1, 0
        %v1219 = vsel %vm1187, 1, 0
        %v1220 = vsel %vm1188, 1, 0
        %v1221 = vsel %vm1189, 1, 0
        %v1222 = vsel %vm1190, 1, 0
        %v1223 = vsel %vm1191, 1, 0
        %v1224 = vsel %vm1192, 1, 0
        %v1225 = vsel %vm1193, 1, 0
        %v1226 = vsel %vm1194, 1, 0
        %v1227 = vsel %vm1195, 1, 0
        %v1228 = vsel %vm1196, 1, 0
        %v1229 = vsel %vm1197, 1, 0
        %v1230 = vsel %vm1198, 1, 0
        %v1231 = vsel %vm1199, 1, 0
        %v1232 = vsel %vm1200, 1, 0
        %v1233 = vsel %vm1201, 1, 0
        %v1234 = vsel %vm1202, 1, 0
        %v1235 = vsel %vm1203, 1, 0
        %v1236 = vsel %vm1204, 1, 0
        %v1237 = vsel %vm1205, 1, 0
        %v1238 = vsel %vm1206, 1, 0
        %v1239 = vsel %vm1207, 1, 0
        %v1240 = vsel %vm1208, 1, 0
        %v1241 = vsel %vm1209, 1, 0
        %v1242 = vsel %vm1210, 1, 0
        %v1243 = vsel %vm1211, 1, 0
        %v1244 = vsel %vm1212, 1, 0
        %v1245 = vsel %vm1213, 1, 0
        %v1246 = vsel %vm1214, 1, 0
        %v1247 = vsel %vm1215, 1, 0
        %vm1248 = vcmp.eq.s32.totalorder %v1216, 1
        %vm1249 = vcmp.eq.s32.totalorder %v1217, 1
        %vm1250 = vcmp.eq.s32.totalorder %v1218, 1
        %vm1251 = vcmp.eq.s32.totalorder %v1219, 1
        %vm1252 = vcmp.eq.s32.totalorder %v1220, 1
        %vm1253 = vcmp.eq.s32.totalorder %v1221, 1
        %vm1254 = vcmp.eq.s32.totalorder %v1222, 1
        %vm1255 = vcmp.eq.s32.totalorder %v1223, 1
        %vm1256 = vcmp.eq.s32.totalorder %v1224, 1
        %vm1257 = vcmp.eq.s32.totalorder %v1225, 1
        %vm1258 = vcmp.eq.s32.totalorder %v1226, 1
        %vm1259 = vcmp.eq.s32.totalorder %v1227, 1
        %vm1260 = vcmp.eq.s32.totalorder %v1228, 1
        %vm1261 = vcmp.eq.s32.totalorder %v1229, 1
        %vm1262 = vcmp.eq.s32.totalorder %v1230, 1
        %vm1263 = vcmp.eq.s32.totalorder %v1231, 1
        %vm1264 = vcmp.eq.s32.totalorder %v1232, 1
        %vm1265 = vcmp.eq.s32.totalorder %v1233, 1
        %vm1266 = vcmp.eq.s32.totalorder %v1234, 1
        %vm1267 = vcmp.eq.s32.totalorder %v1235, 1
        %vm1268 = vcmp.eq.s32.totalorder %v1236, 1
        %vm1269 = vcmp.eq.s32.totalorder %v1237, 1
        %vm1270 = vcmp.eq.s32.totalorder %v1238, 1
        %vm1271 = vcmp.eq.s32.totalorder %v1239, 1
        %vm1272 = vcmp.eq.s32.totalorder %v1240, 1
        %vm1273 = vcmp.eq.s32.totalorder %v1241, 1
        %vm1274 = vcmp.eq.s32.totalorder %v1242, 1
        %vm1275 = vcmp.eq.s32.totalorder %v1243, 1
        %vm1276 = vcmp.eq.s32.totalorder %v1244, 1
        %vm1277 = vcmp.eq.s32.totalorder %v1245, 1
        %vm1278 = vcmp.eq.s32.totalorder %v1246, 1
        %vm1279 = vcmp.eq.s32.totalorder %v1247, 1
        %v1280 = vsel %vm1248, %v1152, 0.0
        %v1281 = vsel %vm1249, %v1153, 0.0
        %v1282 = vsel %vm1250, %v1154, 0.0
        %v1283 = vsel %vm1251, %v1155, 0.0
        %v1284 = vsel %vm1252, %v1156, 0.0
        %v1285 = vsel %vm1253, %v1157, 0.0
        %v1286 = vsel %vm1254, %v1158, 0.0
        %v1287 = vsel %vm1255, %v1159, 0.0
        %v1288 = vsel %vm1256, %v1160, 0.0
        %v1289 = vsel %vm1257, %v1161, 0.0
        %v1290 = vsel %vm1258, %v1162, 0.0
        %v1291 = vsel %vm1259, %v1163, 0.0
        %v1292 = vsel %vm1260, %v1164, 0.0
        %v1293 = vsel %vm1261, %v1165, 0.0
        %v1294 = vsel %vm1262, %v1166, 0.0
        %v1295 = vsel %vm1263, %v1167, 0.0
        %v1296 = vsel %vm1264, %v1168, 0.0
        %v1297 = vsel %vm1265, %v1169, 0.0
        %v1298 = vsel %vm1266, %v1170, 0.0
        %v1299 = vsel %vm1267, %v1171, 0.0
        %v1300 = vsel %vm1268, %v1172, 0.0
        %v1301 = vsel %vm1269, %v1173, 0.0
        %v1302 = vsel %vm1270, %v1174, 0.0
        %v1303 = vsel %vm1271, %v1175, 0.0
        %v1304 = vsel %vm1272, %v1176, 0.0
        %v1305 = vsel %vm1273, %v1177, 0.0
        %v1306 = vsel %vm1274, %v1178, 0.0
        %v1307 = vsel %vm1275, %v1179, 0.0
        %v1308 = vsel %vm1276, %v1180, 0.0
        %v1309 = vsel %vm1277, %v1181, 0.0
        %v1310 = vsel %vm1278, %v1182, 0.0
        %v1311 = vsel %vm1279, %v1183, 0.0
        %1312 = vst.msk [vmem:[#allocation3] sm:$0xff] %vm1079, %v1280
        %1313 = vst.msk [vmem:[#allocation3 + $0x8] sm:$0xff] %vm1079, %v1281
        %1314 = vst.msk [vmem:[#allocation3 + $0x10] sm:$0xff] %vm1079, %v1282
        %1315 = vst.msk [vmem:[#allocation3 + $0x18] sm:$0xff] %vm1079, %v1283
        %1316 = vst.msk [vmem:[#allocation3 + $0x20] sm:$0xff] %vm1079, %v1284
        %1317 = vst.msk [vmem:[#allocation3 + $0x28] sm:$0xff] %vm1079, %v1285
        %1318 = vst.msk [vmem:[#allocation3 + $0x30] sm:$0xff] %vm1079, %v1286
        %1319 = vst.msk [vmem:[#allocation3 + $0x38] sm:$0xff] %vm1079, %v1287
        %1320 = vst.msk [vmem:[#allocation3 + $0x40] sm:$0xff] %vm1079, %v1288
        %1321 = vst.msk [vmem:[#allocation3 + $0x48] sm:$0xff] %vm1079, %v1289
        %1322 = vst.msk [vmem:[#allocation3 + $0x50] sm:$0xff] %vm1079, %v1290
        %1323 = vst.msk [vmem:[#allocation3 + $0x58] sm:$0xff] %vm1079, %v1291
        %1324 = vst.msk [vmem:[#allocation3 + $0x60] sm:$0xff] %vm1079, %v1292
        %1325 = vst.msk [vmem:[#allocation3 + $0x68] sm:$0xff] %vm1079, %v1293
        %1326 = vst.msk [vmem:[#allocation3 + $0x70] sm:$0xff] %vm1079, %v1294
        %1327 = vst.msk [vmem:[#allocation3 + $0x78] sm:$0xff] %vm1079, %v1295
        %1328 = vst.msk [vmem:[#allocation3 + $0x80] sm:$0xff] %vm1079, %v1296
        %1329 = vst.msk [vmem:[#allocation3 + $0x88] sm:$0xff] %vm1079, %v1297
        %1330 = vst.msk [vmem:[#allocation3 + $0x90] sm:$0xff] %vm1079, %v1298
        %1331 = vst.msk [vmem:[#allocation3 + $0x98] sm:$0xff] %vm1079, %v1299
        %1332 = vst.msk [vmem:[#allocation3 + $0xa0] sm:$0xff] %vm1079, %v1300
        %1333 = vst.msk [vmem:[#allocation3 + $0xa8] sm:$0xff] %vm1079, %v1301
        %1334 = vst.msk [vmem:[#allocation3 + $0xb0] sm:$0xff] %vm1079, %v1302
        %1335 = vst.msk [vmem:[#allocation3 + $0xb8] sm:$0xff] %vm1079, %v1303
        %1336 = vst.msk [vmem:[#allocation3 + $0xc0] sm:$0xff] %vm1079, %v1304
        %1337 = vst.msk [vmem:[#allocation3 + $0xc8] sm:$0xff] %vm1079, %v1305
        %1338 = vst.msk [vmem:[#allocation3 + $0xd0] sm:$0xff] %vm1079, %v1306
        %1339 = vst.msk [vmem:[#allocation3 + $0xd8] sm:$0xff] %vm1079, %v1307
        %1340 = vst.msk [vmem:[#allocation3 + $0xe0] sm:$0xff] %vm1079, %v1308
        %1341 = vst.msk [vmem:[#allocation3 + $0xe8] sm:$0xff] %vm1079, %v1309
        %1342 = vst.msk [vmem:[#allocation3 + $0xf0] sm:$0xff] %vm1079, %v1310
        %1343 = vst.msk [vmem:[#allocation3 + $0xf8] sm:$0xff] %vm1079, %v1311
        %v1344 = vld [vmem:[#allocation2 + $0x10] sm:$0xff]
        %v1345 = vld [vmem:[#allocation2 + $0x18] sm:$0xff]
        %v1346 = vld [vmem:[#allocation2 + $0x20] sm:$0xff]
        %v1347 = vld [vmem:[#allocation2 + $0x28] sm:$0xff]
        %v1348 = vld [vmem:[#allocation2 + $0x30] sm:$0xff]
        %v1349 = vld [vmem:[#allocation2 + $0x38] sm:$0xff]
        %v1350 = vld [vmem:[#allocation2 + $0x40] sm:$0xff]
        %v1351 = vld [vmem:[#allocation2 + $0x48] sm:$0xff]
        %v1352 = vld [vmem:[#allocation2 + $0x50] sm:$0xff]
        %v1353 = vld [vmem:[#allocation2 + $0x58] sm:$0xff]
        %v1354 = vld [vmem:[#allocation2 + $0x60] sm:$0xff]
        %v1355 = vld [vmem:[#allocation2 + $0x68] sm:$0xff]
        %v1356 = vld [vmem:[#allocation2 + $0x70] sm:$0xff]
        %v1357 = vld [vmem:[#allocation2 + $0x78] sm:$0xff]
        %v1358 = vld [vmem:[#allocation2 + $0x80] sm:$0xff]
        %v1359 = vld [vmem:[#allocation2 + $0x88] sm:$0xff]
        %v1360 = vld [vmem:[#allocation2 + $0x90] sm:$0xff]
        %v1361 = vld [vmem:[#allocation2 + $0x98] sm:$0xff]
        %v1362 = vld [vmem:[#allocation2 + $0xa0] sm:$0xff]
        %v1363 = vld [vmem:[#allocation2 + $0xa8] sm:$0xff]
        %v1364 = vld [vmem:[#allocation2 + $0xb0] sm:$0xff]
        %v1365 = vld [vmem:[#allocation2 + $0xb8] sm:$0xff]
        %v1366 = vld [vmem:[#allocation2 + $0xc0] sm:$0xff]
        %v1367 = vld [vmem:[#allocation2 + $0xc8] sm:$0xff]
        %v1368 = vld [vmem:[#allocation2 + $0xd0] sm:$0xff]
        %v1369 = vld [vmem:[#allocation2 + $0xd8] sm:$0xff]
        %v1370 = vld [vmem:[#allocation2 + $0xe0] sm:$0xff]
        %v1371 = vld [vmem:[#allocation2 + $0xe8] sm:$0xff]
        %v1372 = vld [vmem:[#allocation2 + $0xf0] sm:$0xff]
        %v1373 = vld [vmem:[#allocation2 + $0xf8] sm:$0xff]
        %v1374 = vld [vmem:[#allocation2 + $0x100] sm:$0xff]
        %v1375 = vld [vmem:[#allocation2 + $0x108] sm:$0xff]
        %1408 = vrot.lane.b32.xlu0 %v1344, 4
        %v1409 = vpop.permute.xlu0 %1408
        %1410 = vrot.lane.b32.xlu0 %v1345, 4
        %v1411 = vpop.permute.xlu0 %1410
        %1412 = vrot.lane.b32.xlu0 %v1346, 4
        %v1413 = vpop.permute.xlu0 %1412
        %1414 = vrot.lane.b32.xlu0 %v1347, 4
        %v1415 = vpop.permute.xlu0 %1414
        %1416 = vrot.lane.b32.xlu0 %v1348, 4
        %v1417 = vpop.permute.xlu0 %1416
        %1418 = vrot.lane.b32.xlu0 %v1349, 4
        %v1419 = vpop.permute.xlu0 %1418
        %1420 = vrot.lane.b32.xlu0 %v1350, 4
        %v1421 = vpop.permute.xlu0 %1420
        %1422 = vrot.lane.b32.xlu0 %v1351, 4
        %v1423 = vpop.permute.xlu0 %1422
        %1424 = vrot.lane.b32.xlu0 %v1352, 4
        %v1425 = vpop.permute.xlu0 %1424
        %1426 = vrot.lane.b32.xlu0 %v1353, 4
        %v1427 = vpop.permute.xlu0 %1426
        %1428 = vrot.lane.b32.xlu0 %v1354, 4
        %v1429 = vpop.permute.xlu0 %1428
        %1430 = vrot.lane.b32.xlu0 %v1355, 4
        %v1431 = vpop.permute.xlu0 %1430
        %1432 = vrot.lane.b32.xlu0 %v1356, 4
        %v1433 = vpop.permute.xlu0 %1432
        %1434 = vrot.lane.b32.xlu0 %v1357, 4
        %v1435 = vpop.permute.xlu0 %1434
        %1436 = vrot.lane.b32.xlu0 %v1358, 4
        %v1437 = vpop.permute.xlu0 %1436
        %1438 = vrot.lane.b32.xlu0 %v1359, 4
        %v1439 = vpop.permute.xlu0 %1438
        %1440 = vrot.lane.b32.xlu0 %v1360, 4
        %v1441 = vpop.permute.xlu0 %1440
        %1442 = vrot.lane.b32.xlu0 %v1361, 4
        %v1443 = vpop.permute.xlu0 %1442
        %1444 = vrot.lane.b32.xlu0 %v1362, 4
        %v1445 = vpop.permute.xlu0 %1444
        %1446 = vrot.lane.b32.xlu0 %v1363, 4
        %v1447 = vpop.permute.xlu0 %1446
        %1448 = vrot.lane.b32.xlu0 %v1364, 4
        %v1449 = vpop.permute.xlu0 %1448
        %1450 = vrot.lane.b32.xlu0 %v1365, 4
        %v1451 = vpop.permute.xlu0 %1450
        %1452 = vrot.lane.b32.xlu0 %v1366, 4
        %v1453 = vpop.permute.xlu0 %1452
        %1454 = vrot.lane.b32.xlu0 %v1367, 4
        %v1455 = vpop.permute.xlu0 %1454
        %1456 = vrot.lane.b32.xlu0 %v1368, 4
        %v1457 = vpop.permute.xlu0 %1456
        %1458 = vrot.lane.b32.xlu0 %v1369, 4
        %v1459 = vpop.permute.xlu0 %1458
        %1460 = vrot.lane.b32.xlu0 %v1370, 4
        %v1461 = vpop.permute.xlu0 %1460
        %1462 = vrot.lane.b32.xlu0 %v1371, 4
        %v1463 = vpop.permute.xlu0 %1462
        %1464 = vrot.lane.b32.xlu0 %v1372, 4
        %v1465 = vpop.permute.xlu0 %1464
        %1466 = vrot.lane.b32.xlu0 %v1373, 4
        %v1467 = vpop.permute.xlu0 %1466
        %1468 = vrot.lane.b32.xlu0 %v1374, 4
        %v1469 = vpop.permute.xlu0 %1468
        %1470 = vrot.lane.b32.xlu0 %v1375, 4
        %v1471 = vpop.permute.xlu0 %1470
        %vm1504 = vcmask 64544
        %1505 = vst.msk [vmem:[#allocation3] sm:$0xff] %vm1504, %v1409
        %1506 = vst.msk [vmem:[#allocation3 + $0x8] sm:$0xff] %vm1504, %v1411
        %1507 = vst.msk [vmem:[#allocation3 + $0x10] sm:$0xff] %vm1504, %v1413
        %1508 = vst.msk [vmem:[#allocation3 + $0x18] sm:$0xff] %vm1504, %v1415
        %1509 = vst.msk [vmem:[#allocation3 + $0x20] sm:$0xff] %vm1504, %v1417
        %1510 = vst.msk [vmem:[#allocation3 + $0x28] sm:$0xff] %vm1504, %v1419
        %1511 = vst.msk [vmem:[#allocation3 + $0x30] sm:$0xff] %vm1504, %v1421
        %1512 = vst.msk [vmem:[#allocation3 + $0x38] sm:$0xff] %vm1504, %v1423
        %1513 = vst.msk [vmem:[#allocation3 + $0x40] sm:$0xff] %vm1504, %v1425
        %1514 = vst.msk [vmem:[#allocation3 + $0x48] sm:$0xff] %vm1504, %v1427
        %1515 = vst.msk [vmem:[#allocation3 + $0x50] sm:$0xff] %vm1504, %v1429
        %1516 = vst.msk [vmem:[#allocation3 + $0x58] sm:$0xff] %vm1504, %v1431
        %1517 = vst.msk [vmem:[#allocation3 + $0x60] sm:$0xff] %vm1504, %v1433
        %1518 = vst.msk [vmem:[#allocation3 + $0x68] sm:$0xff] %vm1504, %v1435
        %1519 = vst.msk [vmem:[#allocation3 + $0x70] sm:$0xff] %vm1504, %v1437
        %1520 = vst.msk [vmem:[#allocation3 + $0x78] sm:$0xff] %vm1504, %v1439
        %1521 = vst.msk [vmem:[#allocation3 + $0x80] sm:$0xff] %vm1504, %v1441
        %1522 = vst.msk [vmem:[#allocation3 + $0x88] sm:$0xff] %vm1504, %v1443
        %1523 = vst.msk [vmem:[#allocation3 + $0x90] sm:$0xff] %vm1504, %v1445
        %1524 = vst.msk [vmem:[#allocation3 + $0x98] sm:$0xff] %vm1504, %v1447
        %1525 = vst.msk [vmem:[#allocation3 + $0xa0] sm:$0xff] %vm1504, %v1449
        %1526 = vst.msk [vmem:[#allocation3 + $0xa8] sm:$0xff] %vm1504, %v1451
        %1527 = vst.msk [vmem:[#allocation3 + $0xb0] sm:$0xff] %vm1504, %v1453
        %1528 = vst.msk [vmem:[#allocation3 + $0xb8] sm:$0xff] %vm1504, %v1455
        %1529 = vst.msk [vmem:[#allocation3 + $0xc0] sm:$0xff] %vm1504, %v1457
        %1530 = vst.msk [vmem:[#allocation3 + $0xc8] sm:$0xff] %vm1504, %v1459
        %1531 = vst.msk [vmem:[#allocation3 + $0xd0] sm:$0xff] %vm1504, %v1461
        %1532 = vst.msk [vmem:[#allocation3 + $0xd8] sm:$0xff] %vm1504, %v1463
        %1533 = vst.msk [vmem:[#allocation3 + $0xe0] sm:$0xff] %vm1504, %v1465
        %1534 = vst.msk [vmem:[#allocation3 + $0xe8] sm:$0xff] %vm1504, %v1467
        %1535 = vst.msk [vmem:[#allocation3 + $0xf0] sm:$0xff] %vm1504, %v1469
        %1536 = vst.msk [vmem:[#allocation3 + $0xf8] sm:$0xff] %vm1504, %v1471
        %v1537 = vld [vmem:[#allocation2 + $0x11] sm:$0xff]
        %v1538 = vld [vmem:[#allocation2 + $0x19] sm:$0xff]
        %v1539 = vld [vmem:[#allocation2 + $0x21] sm:$0xff]
        %v1540 = vld [vmem:[#allocation2 + $0x29] sm:$0xff]
        %v1541 = vld [vmem:[#allocation2 + $0x31] sm:$0xff]
        %v1542 = vld [vmem:[#allocation2 + $0x39] sm:$0xff]
        %v1543 = vld [vmem:[#allocation2 + $0x41] sm:$0xff]
        %v1544 = vld [vmem:[#allocation2 + $0x49] sm:$0xff]
        %v1545 = vld [vmem:[#allocation2 + $0x51] sm:$0xff]
        %v1546 = vld [vmem:[#allocation2 + $0x59] sm:$0xff]
        %v1547 = vld [vmem:[#allocation2 + $0x61] sm:$0xff]
        %v1548 = vld [vmem:[#allocation2 + $0x69] sm:$0xff]
        %v1549 = vld [vmem:[#allocation2 + $0x71] sm:$0xff]
        %v1550 = vld [vmem:[#allocation2 + $0x79] sm:$0xff]
        %v1551 = vld [vmem:[#allocation2 + $0x81] sm:$0xff]
        %v1552 = vld [vmem:[#allocation2 + $0x89] sm:$0xff]
        %v1553 = vld [vmem:[#allocation2 + $0x91] sm:$0xff]
        %v1554 = vld [vmem:[#allocation2 + $0x99] sm:$0xff]
        %v1555 = vld [vmem:[#allocation2 + $0xa1] sm:$0xff]
        %v1556 = vld [vmem:[#allocation2 + $0xa9] sm:$0xff]
        %v1557 = vld [vmem:[#allocation2 + $0xb1] sm:$0xff]
        %v1558 = vld [vmem:[#allocation2 + $0xb9] sm:$0xff]
        %v1559 = vld [vmem:[#allocation2 + $0xc1] sm:$0xff]
        %v1560 = vld [vmem:[#allocation2 + $0xc9] sm:$0xff]
        %v1561 = vld [vmem:[#allocation2 + $0xd1] sm:$0xff]
        %v1562 = vld [vmem:[#allocation2 + $0xd9] sm:$0xff]
        %v1563 = vld [vmem:[#allocation2 + $0xe1] sm:$0xff]
        %v1564 = vld [vmem:[#allocation2 + $0xe9] sm:$0xff]
        %v1565 = vld [vmem:[#allocation2 + $0xf1] sm:$0xff]
        %v1566 = vld [vmem:[#allocation2 + $0xf9] sm:$0xff]
        %v1567 = vld [vmem:[#allocation2 + $0x101] sm:$0xff]
        %v1568 = vld [vmem:[#allocation2 + $0x109] sm:$0xff]
        %vm1569 = vcmp.lt.s32.totalorder %v1015, 15
        %vm1570 = vcmp.lt.s32.totalorder %v1016, 15
        %vm1571 = vcmp.lt.s32.totalorder %v1017, 15
        %vm1572 = vcmp.lt.s32.totalorder %v1018, 15
        %vm1573 = vcmp.lt.s32.totalorder %v1019, 15
        %vm1574 = vcmp.lt.s32.totalorder %v1020, 15
        %vm1575 = vcmp.lt.s32.totalorder %v1021, 15
        %vm1576 = vcmp.lt.s32.totalorder %v1022, 15
        %vm1577 = vcmp.lt.s32.totalorder %v1023, 15
        %vm1578 = vcmp.lt.s32.totalorder %v1024, 15
        %vm1579 = vcmp.lt.s32.totalorder %v1025, 15
        %vm1580 = vcmp.lt.s32.totalorder %v1026, 15
        %vm1581 = vcmp.lt.s32.totalorder %v1027, 15
        %vm1582 = vcmp.lt.s32.totalorder %v1028, 15
        %vm1583 = vcmp.lt.s32.totalorder %v1029, 15
        %vm1584 = vcmp.lt.s32.totalorder %v1030, 15
        %vm1585 = vcmp.lt.s32.totalorder %v1031, 15
        %vm1586 = vcmp.lt.s32.totalorder %v1032, 15
        %vm1587 = vcmp.lt.s32.totalorder %v1033, 15
        %vm1588 = vcmp.lt.s32.totalorder %v1034, 15
        %vm1589 = vcmp.lt.s32.totalorder %v1035, 15
        %vm1590 = vcmp.lt.s32.totalorder %v1036, 15
        %vm1591 = vcmp.lt.s32.totalorder %v1037, 15
        %vm1592 = vcmp.lt.s32.totalorder %v1038, 15
        %vm1593 = vcmp.lt.s32.totalorder %v1039, 15
        %vm1594 = vcmp.lt.s32.totalorder %v1040, 15
        %vm1595 = vcmp.lt.s32.totalorder %v1041, 15
        %vm1596 = vcmp.lt.s32.totalorder %v1042, 15
        %vm1597 = vcmp.lt.s32.totalorder %v1043, 15
        %vm1598 = vcmp.lt.s32.totalorder %v1044, 15
        %vm1599 = vcmp.lt.s32.totalorder %v1045, 15
        %vm1600 = vcmp.lt.s32.totalorder %v1046, 15
        %v1601 = vsel %vm1569, 1, 0
        %v1602 = vsel %vm1570, 1, 0
        %v1603 = vsel %vm1571, 1, 0
        %v1604 = vsel %vm1572, 1, 0
        %v1605 = vsel %vm1573, 1, 0
        %v1606 = vsel %vm1574, 1, 0
        %v1607 = vsel %vm1575, 1, 0
        %v1608 = vsel %vm1576, 1, 0
        %v1609 = vsel %vm1577, 1, 0
        %v1610 = vsel %vm1578, 1, 0
        %v1611 = vsel %vm1579, 1, 0
        %v1612 = vsel %vm1580, 1, 0
        %v1613 = vsel %vm1581, 1, 0
        %v1614 = vsel %vm1582, 1, 0
        %v1615 = vsel %vm1583, 1, 0
        %v1616 = vsel %vm1584, 1, 0
        %v1617 = vsel %vm1585, 1, 0
        %v1618 = vsel %vm1586, 1, 0
        %v1619 = vsel %vm1587, 1, 0
        %v1620 = vsel %vm1588, 1, 0
        %v1621 = vsel %vm1589, 1, 0
        %v1622 = vsel %vm1590, 1, 0
        %v1623 = vsel %vm1591, 1, 0
        %v1624 = vsel %vm1592, 1, 0
        %v1625 = vsel %vm1593, 1, 0
        %v1626 = vsel %vm1594, 1, 0
        %v1627 = vsel %vm1595, 1, 0
        %v1628 = vsel %vm1596, 1, 0
        %v1629 = vsel %vm1597, 1, 0
        %v1630 = vsel %vm1598, 1, 0
        %v1631 = vsel %vm1599, 1, 0
        %v1632 = vsel %vm1600, 1, 0
        %vm1633 = vcmp.eq.s32.totalorder %v1601, 1
        %vm1634 = vcmp.eq.s32.totalorder %v1602, 1
        %vm1635 = vcmp.eq.s32.totalorder %v1603, 1
        %vm1636 = vcmp.eq.s32.totalorder %v1604, 1
        %vm1637 = vcmp.eq.s32.totalorder %v1605, 1
        %vm1638 = vcmp.eq.s32.totalorder %v1606, 1
        %vm1639 = vcmp.eq.s32.totalorder %v1607, 1
        %vm1640 = vcmp.eq.s32.totalorder %v1608, 1
        %vm1641 = vcmp.eq.s32.totalorder %v1609, 1
        %vm1642 = vcmp.eq.s32.totalorder %v1610, 1
        %vm1643 = vcmp.eq.s32.totalorder %v1611, 1
        %vm1644 = vcmp.eq.s32.totalorder %v1612, 1
        %vm1645 = vcmp.eq.s32.totalorder %v1613, 1
        %vm1646 = vcmp.eq.s32.totalorder %v1614, 1
        %vm1647 = vcmp.eq.s32.totalorder %v1615, 1
        %vm1648 = vcmp.eq.s32.totalorder %v1616, 1
        %vm1649 = vcmp.eq.s32.totalorder %v1617, 1
        %vm1650 = vcmp.eq.s32.totalorder %v1618, 1
        %vm1651 = vcmp.eq.s32.totalorder %v1619, 1
        %vm1652 = vcmp.eq.s32.totalorder %v1620, 1
        %vm1653 = vcmp.eq.s32.totalorder %v1621, 1
        %vm1654 = vcmp.eq.s32.totalorder %v1622, 1
        %vm1655 = vcmp.eq.s32.totalorder %v1623, 1
        %vm1656 = vcmp.eq.s32.totalorder %v1624, 1
        %vm1657 = vcmp.eq.s32.totalorder %v1625, 1
        %vm1658 = vcmp.eq.s32.totalorder %v1626, 1
        %vm1659 = vcmp.eq.s32.totalorder %v1627, 1
        %vm1660 = vcmp.eq.s32.totalorder %v1628, 1
        %vm1661 = vcmp.eq.s32.totalorder %v1629, 1
        %vm1662 = vcmp.eq.s32.totalorder %v1630, 1
        %vm1663 = vcmp.eq.s32.totalorder %v1631, 1
        %vm1664 = vcmp.eq.s32.totalorder %v1632, 1
        %v1665 = vsel %vm1633, %v1537, 0.0
        %v1666 = vsel %vm1634, %v1538, 0.0
        %v1667 = vsel %vm1635, %v1539, 0.0
        %v1668 = vsel %vm1636, %v1540, 0.0
        %v1669 = vsel %vm1637, %v1541, 0.0
        %v1670 = vsel %vm1638, %v1542, 0.0
        %v1671 = vsel %vm1639, %v1543, 0.0
        %v1672 = vsel %vm1640, %v1544, 0.0
        %v1673 = vsel %vm1641, %v1545, 0.0
        %v1674 = vsel %vm1642, %v1546, 0.0
        %v1675 = vsel %vm1643, %v1547, 0.0
        %v1676 = vsel %vm1644, %v1548, 0.0
        %v1677 = vsel %vm1645, %v1549, 0.0
        %v1678 = vsel %vm1646, %v1550, 0.0
        %v1679 = vsel %vm1647, %v1551, 0.0
        %v1680 = vsel %vm1648, %v1552, 0.0
        %v1681 = vsel %vm1649, %v1553, 0.0
        %v1682 = vsel %vm1650, %v1554, 0.0
        %v1683 = vsel %vm1651, %v1555, 0.0
        %v1684 = vsel %vm1652, %v1556, 0.0
        %v1685 = vsel %vm1653, %v1557, 0.0
        %v1686 = vsel %vm1654, %v1558, 0.0
        %v1687 = vsel %vm1655, %v1559, 0.0
        %v1688 = vsel %vm1656, %v1560, 0.0
        %v1689 = vsel %vm1657, %v1561, 0.0
        %v1690 = vsel %vm1658, %v1562, 0.0
        %v1691 = vsel %vm1659, %v1563, 0.0
        %v1692 = vsel %vm1660, %v1564, 0.0
        %v1693 = vsel %vm1661, %v1565, 0.0
        %v1694 = vsel %vm1662, %v1566, 0.0
        %v1695 = vsel %vm1663, %v1567, 0.0
        %v1696 = vsel %vm1664, %v1568, 0.0
        %1729 = vrot.lane.b32.xlu0 %v1665, 8
        %v1730 = vpop.permute.xlu0 %1729
        %1731 = vrot.lane.b32.xlu0 %v1666, 8
        %v1732 = vpop.permute.xlu0 %1731
        %1733 = vrot.lane.b32.xlu0 %v1667, 8
        %v1734 = vpop.permute.xlu0 %1733
        %1735 = vrot.lane.b32.xlu0 %v1668, 8
        %v1736 = vpop.permute.xlu0 %1735
        %1737 = vrot.lane.b32.xlu0 %v1669, 8
        %v1738 = vpop.permute.xlu0 %1737
        %1739 = vrot.lane.b32.xlu0 %v1670, 8
        %v1740 = vpop.permute.xlu0 %1739
        %1741 = vrot.lane.b32.xlu0 %v1671, 8
        %v1742 = vpop.permute.xlu0 %1741
        %1743 = vrot.lane.b32.xlu0 %v1672, 8
        %v1744 = vpop.permute.xlu0 %1743
        %1745 = vrot.lane.b32.xlu0 %v1673, 8
        %v1746 = vpop.permute.xlu0 %1745
        %1747 = vrot.lane.b32.xlu0 %v1674, 8
        %v1748 = vpop.permute.xlu0 %1747
        %1749 = vrot.lane.b32.xlu0 %v1675, 8
        %v1750 = vpop.permute.xlu0 %1749
        %1751 = vrot.lane.b32.xlu0 %v1676, 8
        %v1752 = vpop.permute.xlu0 %1751
        %1753 = vrot.lane.b32.xlu0 %v1677, 8
        %v1754 = vpop.permute.xlu0 %1753
        %1755 = vrot.lane.b32.xlu0 %v1678, 8
        %v1756 = vpop.permute.xlu0 %1755
        %1757 = vrot.lane.b32.xlu0 %v1679, 8
        %v1758 = vpop.permute.xlu0 %1757
        %1759 = vrot.lane.b32.xlu0 %v1680, 8
        %v1760 = vpop.permute.xlu0 %1759
        %1761 = vrot.lane.b32.xlu0 %v1681, 8
        %v1762 = vpop.permute.xlu0 %1761
        %1763 = vrot.lane.b32.xlu0 %v1682, 8
        %v1764 = vpop.permute.xlu0 %1763
        %1765 = vrot.lane.b32.xlu0 %v1683, 8
        %v1766 = vpop.permute.xlu0 %1765
        %1767 = vrot.lane.b32.xlu0 %v1684, 8
        %v1768 = vpop.permute.xlu0 %1767
        %1769 = vrot.lane.b32.xlu0 %v1685, 8
        %v1770 = vpop.permute.xlu0 %1769
        %1771 = vrot.lane.b32.xlu0 %v1686, 8
        %v1772 = vpop.permute.xlu0 %1771
        %1773 = vrot.lane.b32.xlu0 %v1687, 8
        %v1774 = vpop.permute.xlu0 %1773
        %1775 = vrot.lane.b32.xlu0 %v1688, 8
        %v1776 = vpop.permute.xlu0 %1775
        %1777 = vrot.lane.b32.xlu0 %v1689, 8
        %v1778 = vpop.permute.xlu0 %1777
        %1779 = vrot.lane.b32.xlu0 %v1690, 8
        %v1780 = vpop.permute.xlu0 %1779
        %1781 = vrot.lane.b32.xlu0 %v1691, 8
        %v1782 = vpop.permute.xlu0 %1781
        %1783 = vrot.lane.b32.xlu0 %v1692, 8
        %v1784 = vpop.permute.xlu0 %1783
        %1785 = vrot.lane.b32.xlu0 %v1693, 8
        %v1786 = vpop.permute.xlu0 %1785
        %1787 = vrot.lane.b32.xlu0 %v1694, 8
        %v1788 = vpop.permute.xlu0 %1787
        %1789 = vrot.lane.b32.xlu0 %v1695, 8
        %v1790 = vpop.permute.xlu0 %1789
        %1791 = vrot.lane.b32.xlu0 %v1696, 8
        %v1792 = vpop.permute.xlu0 %1791
        %vm1825 = vcmask 97344
        %1826 = vst.msk [vmem:[#allocation3] sm:$0xff] %vm1825, %v1730
        %1827 = vst.msk [vmem:[#allocation3 + $0x8] sm:$0xff] %vm1825, %v1732
        %1828 = vst.msk [vmem:[#allocation3 + $0x10] sm:$0xff] %vm1825, %v1734
        %1829 = vst.msk [vmem:[#allocation3 + $0x18] sm:$0xff] %vm1825, %v1736
        %1830 = vst.msk [vmem:[#allocation3 + $0x20] sm:$0xff] %vm1825, %v1738
        %1831 = vst.msk [vmem:[#allocation3 + $0x28] sm:$0xff] %vm1825, %v1740
        %1832 = vst.msk [vmem:[#allocation3 + $0x30] sm:$0xff] %vm1825, %v1742
        %1833 = vst.msk [vmem:[#allocation3 + $0x38] sm:$0xff] %vm1825, %v1744
        %1834 = vst.msk [vmem:[#allocation3 + $0x40] sm:$0xff] %vm1825, %v1746
        %1835 = vst.msk [vmem:[#allocation3 + $0x48] sm:$0xff] %vm1825, %v1748
        %1836 = vst.msk [vmem:[#allocation3 + $0x50] sm:$0xff] %vm1825, %v1750
        %1837 = vst.msk [vmem:[#allocation3 + $0x58] sm:$0xff] %vm1825, %v1752
        %1838 = vst.msk [vmem:[#allocation3 + $0x60] sm:$0xff] %vm1825, %v1754
        %1839 = vst.msk [vmem:[#allocation3 + $0x68] sm:$0xff] %vm1825, %v1756
        %1840 = vst.msk [vmem:[#allocation3 + $0x70] sm:$0xff] %vm1825, %v1758
        %1841 = vst.msk [vmem:[#allocation3 + $0x78] sm:$0xff] %vm1825, %v1760
        %1842 = vst.msk [vmem:[#allocation3 + $0x80] sm:$0xff] %vm1825, %v1762
        %1843 = vst.msk [vmem:[#allocation3 + $0x88] sm:$0xff] %vm1825, %v1764
        %1844 = vst.msk [vmem:[#allocation3 + $0x90] sm:$0xff] %vm1825, %v1766
        %1845 = vst.msk [vmem:[#allocation3 + $0x98] sm:$0xff] %vm1825, %v1768
        %1846 = vst.msk [vmem:[#allocation3 + $0xa0] sm:$0xff] %vm1825, %v1770
        %1847 = vst.msk [vmem:[#allocation3 + $0xa8] sm:$0xff] %vm1825, %v1772
        %1848 = vst.msk [vmem:[#allocation3 + $0xb0] sm:$0xff] %vm1825, %v1774
        %1849 = vst.msk [vmem:[#allocation3 + $0xb8] sm:$0xff] %vm1825, %v1776
        %1850 = vst.msk [vmem:[#allocation3 + $0xc0] sm:$0xff] %vm1825, %v1778
        %1851 = vst.msk [vmem:[#allocation3 + $0xc8] sm:$0xff] %vm1825, %v1780
        %1852 = vst.msk [vmem:[#allocation3 + $0xd0] sm:$0xff] %vm1825, %v1782
        %1853 = vst.msk [vmem:[#allocation3 + $0xd8] sm:$0xff] %vm1825, %v1784
        %1854 = vst.msk [vmem:[#allocation3 + $0xe0] sm:$0xff] %vm1825, %v1786
        %1855 = vst.msk [vmem:[#allocation3 + $0xe8] sm:$0xff] %vm1825, %v1788
        %1856 = vst.msk [vmem:[#allocation3 + $0xf0] sm:$0xff] %vm1825, %v1790
        %1857 = vst.msk [vmem:[#allocation3 + $0xf8] sm:$0xff] %vm1825, %v1792
        %v1858 = vld [vmem:[#allocation2 + $0x1f] sm:$0xff]
        %v1859 = vld [vmem:[#allocation2 + $0x27] sm:$0xff]
        %v1860 = vld [vmem:[#allocation2 + $0x2f] sm:$0xff]
        %v1861 = vld [vmem:[#allocation2 + $0x37] sm:$0xff]
        %v1862 = vld [vmem:[#allocation2 + $0x3f] sm:$0xff]
        %v1863 = vld [vmem:[#allocation2 + $0x47] sm:$0xff]
        %v1864 = vld [vmem:[#allocation2 + $0x4f] sm:$0xff]
        %v1865 = vld [vmem:[#allocation2 + $0x57] sm:$0xff]
        %v1866 = vld [vmem:[#allocation2 + $0x5f] sm:$0xff]
        %v1867 = vld [vmem:[#allocation2 + $0x67] sm:$0xff]
        %v1868 = vld [vmem:[#allocation2 + $0x6f] sm:$0xff]
        %v1869 = vld [vmem:[#allocation2 + $0x77] sm:$0xff]
        %v1870 = vld [vmem:[#allocation2 + $0x7f] sm:$0xff]
        %v1871 = vld [vmem:[#allocation2 + $0x87] sm:$0xff]
        %v1872 = vld [vmem:[#allocation2 + $0x8f] sm:$0xff]
        %v1873 = vld [vmem:[#allocation2 + $0x97] sm:$0xff]
        %v1874 = vld [vmem:[#allocation2 + $0x9f] sm:$0xff]
        %v1875 = vld [vmem:[#allocation2 + $0xa7] sm:$0xff]
        %v1876 = vld [vmem:[#allocation2 + $0xaf] sm:$0xff]
        %v1877 = vld [vmem:[#allocation2 + $0xb7] sm:$0xff]
        %v1878 = vld [vmem:[#allocation2 + $0xbf] sm:$0xff]
        %v1879 = vld [vmem:[#allocation2 + $0xc7] sm:$0xff]
        %v1880 = vld [vmem:[#allocation2 + $0xcf] sm:$0xff]
        %v1881 = vld [vmem:[#allocation2 + $0xd7] sm:$0xff]
        %v1882 = vld [vmem:[#allocation2 + $0xdf] sm:$0xff]
        %v1883 = vld [vmem:[#allocation2 + $0xe7] sm:$0xff]
        %v1884 = vld [vmem:[#allocation2 + $0xef] sm:$0xff]
        %v1885 = vld [vmem:[#allocation2 + $0xf7] sm:$0xff]
        %v1886 = vld [vmem:[#allocation2 + $0xff] sm:$0xff]
        %v1887 = vld [vmem:[#allocation2 + $0x107] sm:$0xff]
        %v1888 = vld [vmem:[#allocation2 + $0x10f] sm:$0xff]
        %v1889 = vld [vmem:[#allocation2 + $0x117] sm:$0xff]
        %v1890 = vsel %vm1248, %v1858, 0.0
        %v1891 = vsel %vm1249, %v1859, 0.0
        %v1892 = vsel %vm1250, %v1860, 0.0
        %v1893 = vsel %vm1251, %v1861, 0.0
        %v1894 = vsel %vm1252, %v1862, 0.0
        %v1895 = vsel %vm1253, %v1863, 0.0
        %v1896 = vsel %vm1254, %v1864, 0.0
        %v1897 = vsel %vm1255, %v1865, 0.0
        %v1898 = vsel %vm1256, %v1866, 0.0
        %v1899 = vsel %vm1257, %v1867, 0.0
        %v1900 = vsel %vm1258, %v1868, 0.0
        %v1901 = vsel %vm1259, %v1869, 0.0
        %v1902 = vsel %vm1260, %v1870, 0.0
        %v1903 = vsel %vm1261, %v1871, 0.0
        %v1904 = vsel %vm1262, %v1872, 0.0
        %v1905 = vsel %vm1263, %v1873, 0.0
        %v1906 = vsel %vm1264, %v1874, 0.0
        %v1907 = vsel %vm1265, %v1875, 0.0
        %v1908 = vsel %vm1266, %v1876, 0.0
        %v1909 = vsel %vm1267, %v1877, 0.0
        %v1910 = vsel %vm1268, %v1878, 0.0
        %v1911 = vsel %vm1269, %v1879, 0.0
        %v1912 = vsel %vm1270, %v1880, 0.0
        %v1913 = vsel %vm1271, %v1881, 0.0
        %v1914 = vsel %vm1272, %v1882, 0.0
        %v1915 = vsel %vm1273, %v1883, 0.0
        %v1916 = vsel %vm1274, %v1884, 0.0
        %v1917 = vsel %vm1275, %v1885, 0.0
        %v1918 = vsel %vm1276, %v1886, 0.0
        %v1919 = vsel %vm1277, %v1887, 0.0
        %v1920 = vsel %vm1278, %v1888, 0.0
        %v1921 = vsel %vm1279, %v1889, 0.0
        %1954 = vrot.lane.b32.xlu0 %v1890, 12
        %v1955 = vpop.permute.xlu0 %1954
        %1956 = vrot.lane.b32.xlu0 %v1891, 12
        %v1957 = vpop.permute.xlu0 %1956
        %1958 = vrot.lane.b32.xlu0 %v1892, 12
        %v1959 = vpop.permute.xlu0 %1958
        %1960 = vrot.lane.b32.xlu0 %v1893, 12
        %v1961 = vpop.permute.xlu0 %1960
        %1962 = vrot.lane.b32.xlu0 %v1894, 12
        %v1963 = vpop.permute.xlu0 %1962
        %1964 = vrot.lane.b32.xlu0 %v1895, 12
        %v1965 = vpop.permute.xlu0 %1964
        %1966 = vrot.lane.b32.xlu0 %v1896, 12
        %v1967 = vpop.permute.xlu0 %1966
        %1968 = vrot.lane.b32.xlu0 %v1897, 12
        %v1969 = vpop.permute.xlu0 %1968
        %1970 = vrot.lane.b32.xlu0 %v1898, 12
        %v1971 = vpop.permute.xlu0 %1970
        %1972 = vrot.lane.b32.xlu0 %v1899, 12
        %v1973 = vpop.permute.xlu0 %1972
        %1974 = vrot.lane.b32.xlu0 %v1900, 12
        %v1975 = vpop.permute.xlu0 %1974
        %1976 = vrot.lane.b32.xlu0 %v1901, 12
        %v1977 = vpop.permute.xlu0 %1976
        %1978 = vrot.lane.b32.xlu0 %v1902, 12
        %v1979 = vpop.permute.xlu0 %1978
        %1980 = vrot.lane.b32.xlu0 %v1903, 12
        %v1981 = vpop.permute.xlu0 %1980
        %1982 = vrot.lane.b32.xlu0 %v1904, 12
        %v1983 = vpop.permute.xlu0 %1982
        %1984 = vrot.lane.b32.xlu0 %v1905, 12
        %v1985 = vpop.permute.xlu0 %1984
        %1986 = vrot.lane.b32.xlu0 %v1906, 12
        %v1987 = vpop.permute.xlu0 %1986
        %1988 = vrot.lane.b32.xlu0 %v1907, 12
        %v1989 = vpop.permute.xlu0 %1988
        %1990 = vrot.lane.b32.xlu0 %v1908, 12
        %v1991 = vpop.permute.xlu0 %1990
        %1992 = vrot.lane.b32.xlu0 %v1909, 12
        %v1993 = vpop.permute.xlu0 %1992
        %1994 = vrot.lane.b32.xlu0 %v1910, 12
        %v1995 = vpop.permute.xlu0 %1994
        %1996 = vrot.lane.b32.xlu0 %v1911, 12
        %v1997 = vpop.permute.xlu0 %1996
        %1998 = vrot.lane.b32.xlu0 %v1912, 12
        %v1999 = vpop.permute.xlu0 %1998
        %2000 = vrot.lane.b32.xlu0 %v1913, 12
        %v2001 = vpop.permute.xlu0 %2000
        %2002 = vrot.lane.b32.xlu0 %v1914, 12
        %v2003 = vpop.permute.xlu0 %2002
        %2004 = vrot.lane.b32.xlu0 %v1915, 12
        %v2005 = vpop.permute.xlu0 %2004
        %2006 = vrot.lane.b32.xlu0 %v1916, 12
        %v2007 = vpop.permute.xlu0 %2006
        %2008 = vrot.lane.b32.xlu0 %v1917, 12
        %v2009 = vpop.permute.xlu0 %2008
        %2010 = vrot.lane.b32.xlu0 %v1918, 12
        %v2011 = vpop.permute.xlu0 %2010
        %2012 = vrot.lane.b32.xlu0 %v1919, 12
        %v2013 = vpop.permute.xlu0 %2012
        %2014 = vrot.lane.b32.xlu0 %v1920, 12
        %v2015 = vpop.permute.xlu0 %2014
        %2016 = vrot.lane.b32.xlu0 %v1921, 12
        %v2017 = vpop.permute.xlu0 %2016
        %vm2050 = vcmask 130144
        %2051 = vst.msk [vmem:[#allocation3] sm:$0xff] %vm2050, %v1955
        %2052 = vst.msk [vmem:[#allocation3 + $0x8] sm:$0xff] %vm2050, %v1957
        %2053 = vst.msk [vmem:[#allocation3 + $0x10] sm:$0xff] %vm2050, %v1959
        %2054 = vst.msk [vmem:[#allocation3 + $0x18] sm:$0xff] %vm2050, %v1961
        %2055 = vst.msk [vmem:[#allocation3 + $0x20] sm:$0xff] %vm2050, %v1963
        %2056 = vst.msk [vmem:[#allocation3 + $0x28] sm:$0xff] %vm2050, %v1965
        %2057 = vst.msk [vmem:[#allocation3 + $0x30] sm:$0xff] %vm2050, %v1967
        %2058 = vst.msk [vmem:[#allocation3 + $0x38] sm:$0xff] %vm2050, %v1969
        %2059 = vst.msk [vmem:[#allocation3 + $0x40] sm:$0xff] %vm2050, %v1971
        %2060 = vst.msk [vmem:[#allocation3 + $0x48] sm:$0xff] %vm2050, %v1973
        %2061 = vst.msk [vmem:[#allocation3 + $0x50] sm:$0xff] %vm2050, %v1975
        %2062 = vst.msk [vmem:[#allocation3 + $0x58] sm:$0xff] %vm2050, %v1977
        %2063 = vst.msk [vmem:[#allocation3 + $0x60] sm:$0xff] %vm2050, %v1979
        %2064 = vst.msk [vmem:[#allocation3 + $0x68] sm:$0xff] %vm2050, %v1981
        %2065 = vst.msk [vmem:[#allocation3 + $0x70] sm:$0xff] %vm2050, %v1983
        %2066 = vst.msk [vmem:[#allocation3 + $0x78] sm:$0xff] %vm2050, %v1985
        %2067 = vst.msk [vmem:[#allocation3 + $0x80] sm:$0xff] %vm2050, %v1987
        %2068 = vst.msk [vmem:[#allocation3 + $0x88] sm:$0xff] %vm2050, %v1989
        %2069 = vst.msk [vmem:[#allocation3 + $0x90] sm:$0xff] %vm2050, %v1991
        %2070 = vst.msk [vmem:[#allocation3 + $0x98] sm:$0xff] %vm2050, %v1993
        %2071 = vst.msk [vmem:[#allocation3 + $0xa0] sm:$0xff] %vm2050, %v1995
        %2072 = vst.msk [vmem:[#allocation3 + $0xa8] sm:$0xff] %vm2050, %v1997
        %2073 = vst.msk [vmem:[#allocation3 + $0xb0] sm:$0xff] %vm2050, %v1999
        %2074 = vst.msk [vmem:[#allocation3 + $0xb8] sm:$0xff] %vm2050, %v2001
        %2075 = vst.msk [vmem:[#allocation3 + $0xc0] sm:$0xff] %vm2050, %v2003
        %2076 = vst.msk [vmem:[#allocation3 + $0xc8] sm:$0xff] %vm2050, %v2005
        %2077 = vst.msk [vmem:[#allocation3 + $0xd0] sm:$0xff] %vm2050, %v2007
        %2078 = vst.msk [vmem:[#allocation3 + $0xd8] sm:$0xff] %vm2050, %v2009
        %2079 = vst.msk [vmem:[#allocation3 + $0xe0] sm:$0xff] %vm2050, %v2011
        %2080 = vst.msk [vmem:[#allocation3 + $0xe8] sm:$0xff] %vm2050, %v2013
        %2081 = vst.msk [vmem:[#allocation3 + $0xf0] sm:$0xff] %vm2050, %v2015
        %2082 = vst.msk [vmem:[#allocation3 + $0xf8] sm:$0xff] %vm2050, %v2017
        %v2083 = vld [vmem:[#allocation2 + $0x20] sm:$0xff]
        %v2084 = vld [vmem:[#allocation2 + $0x28] sm:$0xff]
        %v2085 = vld [vmem:[#allocation2 + $0x30] sm:$0xff]
        %v2086 = vld [vmem:[#allocation2 + $0x38] sm:$0xff]
        %v2087 = vld [vmem:[#allocation2 + $0x40] sm:$0xff]
        %v2088 = vld [vmem:[#allocation2 + $0x48] sm:$0xff]
        %v2089 = vld [vmem:[#allocation2 + $0x50] sm:$0xff]
        %v2090 = vld [vmem:[#allocation2 + $0x58] sm:$0xff]
        %v2091 = vld [vmem:[#allocation2 + $0x60] sm:$0xff]
        %v2092 = vld [vmem:[#allocation2 + $0x68] sm:$0xff]
        %v2093 = vld [vmem:[#allocation2 + $0x70] sm:$0xff]
        %v2094 = vld [vmem:[#allocation2 + $0x78] sm:$0xff]
        %v2095 = vld [vmem:[#allocation2 + $0x80] sm:$0xff]
        %v2096 = vld [vmem:[#allocation2 + $0x88] sm:$0xff]
        %v2097 = vld [vmem:[#allocation2 + $0x90] sm:$0xff]
        %v2098 = vld [vmem:[#allocation2 + $0x98] sm:$0xff]
        %v2099 = vld [vmem:[#allocation2 + $0xa0] sm:$0xff]
        %v2100 = vld [vmem:[#allocation2 + $0xa8] sm:$0xff]
        %v2101 = vld [vmem:[#allocation2 + $0xb0] sm:$0xff]
        %v2102 = vld [vmem:[#allocation2 + $0xb8] sm:$0xff]
        %v2103 = vld [vmem:[#allocation2 + $0xc0] sm:$0xff]
        %v2104 = vld [vmem:[#allocation2 + $0xc8] sm:$0xff]
        %v2105 = vld [vmem:[#allocation2 + $0xd0] sm:$0xff]
        %v2106 = vld [vmem:[#allocation2 + $0xd8] sm:$0xff]
        %v2107 = vld [vmem:[#allocation2 + $0xe0] sm:$0xff]
        %v2108 = vld [vmem:[#allocation2 + $0xe8] sm:$0xff]
        %v2109 = vld [vmem:[#allocation2 + $0xf0] sm:$0xff]
        %v2110 = vld [vmem:[#allocation2 + $0xf8] sm:$0xff]
        %v2111 = vld [vmem:[#allocation2 + $0x100] sm:$0xff]
        %v2112 = vld [vmem:[#allocation2 + $0x108] sm:$0xff]
        %v2113 = vld [vmem:[#allocation2 + $0x110] sm:$0xff]
        %v2114 = vld [vmem:[#allocation2 + $0x118] sm:$0xff]
        %2147 = vrot.lane.b32.xlu0 %v2083, 16
        %v2148 = vpop.permute.xlu0 %2147
        %2149 = vrot.lane.b32.xlu0 %v2084, 16
        %v2150 = vpop.permute.xlu0 %2149
        %2151 = vrot.lane.b32.xlu0 %v2085, 16
        %v2152 = vpop.permute.xlu0 %2151
        %2153 = vrot.lane.b32.xlu0 %v2086, 16
        %v2154 = vpop.permute.xlu0 %2153
        %2155 = vrot.lane.b32.xlu0 %v2087, 16
        %v2156 = vpop.permute.xlu0 %2155
        %2157 = vrot.lane.b32.xlu0 %v2088, 16
        %v2158 = vpop.permute.xlu0 %2157
        %2159 = vrot.lane.b32.xlu0 %v2089, 16
        %v2160 = vpop.permute.xlu0 %2159
        %2161 = vrot.lane.b32.xlu0 %v2090, 16
        %v2162 = vpop.permute.xlu0 %2161
        %2163 = vrot.lane.b32.xlu0 %v2091, 16
        %v2164 = vpop.permute.xlu0 %2163
        %2165 = vrot.lane.b32.xlu0 %v2092, 16
        %v2166 = vpop.permute.xlu0 %2165
        %2167 = vrot.lane.b32.xlu0 %v2093, 16
        %v2168 = vpop.permute.xlu0 %2167
        %2169 = vrot.lane.b32.xlu0 %v2094, 16
        %v2170 = vpop.permute.xlu0 %2169
        %2171 = vrot.lane.b32.xlu0 %v2095, 16
        %v2172 = vpop.permute.xlu0 %2171
        %2173 = vrot.lane.b32.xlu0 %v2096, 16
        %v2174 = vpop.permute.xlu0 %2173
        %2175 = vrot.lane.b32.xlu0 %v2097, 16
        %v2176 = vpop.permute.xlu0 %2175
        %2177 = vrot.lane.b32.xlu0 %v2098, 16
        %v2178 = vpop.permute.xlu0 %2177
        %2179 = vrot.lane.b32.xlu0 %v2099, 16
        %v2180 = vpop.permute.xlu0 %2179
        %2181 = vrot.lane.b32.xlu0 %v2100, 16
        %v2182 = vpop.permute.xlu0 %2181
        %2183 = vrot.lane.b32.xlu0 %v2101, 16
        %v2184 = vpop.permute.xlu0 %2183
        %2185 = vrot.lane.b32.xlu0 %v2102, 16
        %v2186 = vpop.permute.xlu0 %2185
        %2187 = vrot.lane.b32.xlu0 %v2103, 16
        %v2188 = vpop.permute.xlu0 %2187
        %2189 = vrot.lane.b32.xlu0 %v2104, 16
        %v2190 = vpop.permute.xlu0 %2189
        %2191 = vrot.lane.b32.xlu0 %v2105, 16
        %v2192 = vpop.permute.xlu0 %2191
        %2193 = vrot.lane.b32.xlu0 %v2106, 16
        %v2194 = vpop.permute.xlu0 %2193
        %2195 = vrot.lane.b32.xlu0 %v2107, 16
        %v2196 = vpop.permute.xlu0 %2195
        %2197 = vrot.lane.b32.xlu0 %v2108, 16
        %v2198 = vpop.permute.xlu0 %2197
        %2199 = vrot.lane.b32.xlu0 %v2109, 16
        %v2200 = vpop.permute.xlu0 %2199
        %2201 = vrot.lane.b32.xlu0 %v2110, 16
        %v2202 = vpop.permute.xlu0 %2201
        %2203 = vrot.lane.b32.xlu0 %v2111, 16
        %v2204 = vpop.permute.xlu0 %2203
        %2205 = vrot.lane.b32.xlu0 %v2112, 16
        %v2206 = vpop.permute.xlu0 %2205
        %2207 = vrot.lane.b32.xlu0 %v2113, 16
        %v2208 = vpop.permute.xlu0 %2207
        %2209 = vrot.lane.b32.xlu0 %v2114, 16
        %v2210 = vpop.permute.xlu0 %2209
        %vm2243 = vcmask 162944
        %2244 = vst.msk [vmem:[#allocation3] sm:$0xff] %vm2243, %v2148
        %2245 = vst.msk [vmem:[#allocation3 + $0x8] sm:$0xff] %vm2243, %v2150
        %2246 = vst.msk [vmem:[#allocation3 + $0x10] sm:$0xff] %vm2243, %v2152
        %2247 = vst.msk [vmem:[#allocation3 + $0x18] sm:$0xff] %vm2243, %v2154
        %2248 = vst.msk [vmem:[#allocation3 + $0x20] sm:$0xff] %vm2243, %v2156
        %2249 = vst.msk [vmem:[#allocation3 + $0x28] sm:$0xff] %vm2243, %v2158
        %2250 = vst.msk [vmem:[#allocation3 + $0x30] sm:$0xff] %vm2243, %v2160
        %2251 = vst.msk [vmem:[#allocation3 + $0x38] sm:$0xff] %vm2243, %v2162
        %2252 = vst.msk [vmem:[#allocation3 + $0x40] sm:$0xff] %vm2243, %v2164
        %2253 = vst.msk [vmem:[#allocation3 + $0x48] sm:$0xff] %vm2243, %v2166
        %2254 = vst.msk [vmem:[#allocation3 + $0x50] sm:$0xff] %vm2243, %v2168
        %2255 = vst.msk [vmem:[#allocation3 + $0x58] sm:$0xff] %vm2243, %v2170
        %2256 = vst.msk [vmem:[#allocation3 + $0x60] sm:$0xff] %vm2243, %v2172
        %2257 = vst.msk [vmem:[#allocation3 + $0x68] sm:$0xff] %vm2243, %v2174
        %2258 = vst.msk [vmem:[#allocation3 + $0x70] sm:$0xff] %vm2243, %v2176
        %2259 = vst.msk [vmem:[#allocation3 + $0x78] sm:$0xff] %vm2243, %v2178
        %2260 = vst.msk [vmem:[#allocation3 + $0x80] sm:$0xff] %vm2243, %v2180
        %2261 = vst.msk [vmem:[#allocation3 + $0x88] sm:$0xff] %vm2243, %v2182
        %2262 = vst.msk [vmem:[#allocation3 + $0x90] sm:$0xff] %vm2243, %v2184
        %2263 = vst.msk [vmem:[#allocation3 + $0x98] sm:$0xff] %vm2243, %v2186
        %2264 = vst.msk [vmem:[#allocation3 + $0xa0] sm:$0xff] %vm2243, %v2188
        %2265 = vst.msk [vmem:[#allocation3 + $0xa8] sm:$0xff] %vm2243, %v2190
        %2266 = vst.msk [vmem:[#allocation3 + $0xb0] sm:$0xff] %vm2243, %v2192
        %2267 = vst.msk [vmem:[#allocation3 + $0xb8] sm:$0xff] %vm2243, %v2194
        %2268 = vst.msk [vmem:[#allocation3 + $0xc0] sm:$0xff] %vm2243, %v2196
        %2269 = vst.msk [vmem:[#allocation3 + $0xc8] sm:$0xff] %vm2243, %v2198
        %2270 = vst.msk [vmem:[#allocation3 + $0xd0] sm:$0xff] %vm2243, %v2200
        %2271 = vst.msk [vmem:[#allocation3 + $0xd8] sm:$0xff] %vm2243, %v2202
        %2272 = vst.msk [vmem:[#allocation3 + $0xe0] sm:$0xff] %vm2243, %v2204
        %2273 = vst.msk [vmem:[#allocation3 + $0xe8] sm:$0xff] %vm2243, %v2206
        %2274 = vst.msk [vmem:[#allocation3 + $0xf0] sm:$0xff] %vm2243, %v2208
        %2275 = vst.msk [vmem:[#allocation3 + $0xf8] sm:$0xff] %vm2243, %v2210
        %v2276 = vld [vmem:[#allocation2 + $0x21] sm:$0xff]
        %v2277 = vld [vmem:[#allocation2 + $0x29] sm:$0xff]
        %v2278 = vld [vmem:[#allocation2 + $0x31] sm:$0xff]
        %v2279 = vld [vmem:[#allocation2 + $0x39] sm:$0xff]
        %v2280 = vld [vmem:[#allocation2 + $0x41] sm:$0xff]
        %v2281 = vld [vmem:[#allocation2 + $0x49] sm:$0xff]
        %v2282 = vld [vmem:[#allocation2 + $0x51] sm:$0xff]
        %v2283 = vld [vmem:[#allocation2 + $0x59] sm:$0xff]
        %v2284 = vld [vmem:[#allocation2 + $0x61] sm:$0xff]
        %v2285 = vld [vmem:[#allocation2 + $0x69] sm:$0xff]
        %v2286 = vld [vmem:[#allocation2 + $0x71] sm:$0xff]
        %v2287 = vld [vmem:[#allocation2 + $0x79] sm:$0xff]
        %v2288 = vld [vmem:[#allocation2 + $0x81] sm:$0xff]
        %v2289 = vld [vmem:[#allocation2 + $0x89] sm:$0xff]
        %v2290 = vld [vmem:[#allocation2 + $0x91] sm:$0xff]
        %v2291 = vld [vmem:[#allocation2 + $0x99] sm:$0xff]
        %v2292 = vld [vmem:[#allocation2 + $0xa1] sm:$0xff]
        %v2293 = vld [vmem:[#allocation2 + $0xa9] sm:$0xff]
        %v2294 = vld [vmem:[#allocation2 + $0xb1] sm:$0xff]
        %v2295 = vld [vmem:[#allocation2 + $0xb9] sm:$0xff]
        %v2296 = vld [vmem:[#allocation2 + $0xc1] sm:$0xff]
        %v2297 = vld [vmem:[#allocation2 + $0xc9] sm:$0xff]
        %v2298 = vld [vmem:[#allocation2 + $0xd1] sm:$0xff]
        %v2299 = vld [vmem:[#allocation2 + $0xd9] sm:$0xff]
        %v2300 = vld [vmem:[#allocation2 + $0xe1] sm:$0xff]
        %v2301 = vld [vmem:[#allocation2 + $0xe9] sm:$0xff]
        %v2302 = vld [vmem:[#allocation2 + $0xf1] sm:$0xff]
        %v2303 = vld [vmem:[#allocation2 + $0xf9] sm:$0xff]
        %v2304 = vld [vmem:[#allocation2 + $0x101] sm:$0xff]
        %v2305 = vld [vmem:[#allocation2 + $0x109] sm:$0xff]
        %v2306 = vld [vmem:[#allocation2 + $0x111] sm:$0xff]
        %v2307 = vld [vmem:[#allocation2 + $0x119] sm:$0xff]
        %v2308 = vsel %vm1633, %v2276, 0.0
        %v2309 = vsel %vm1634, %v2277, 0.0
        %v2310 = vsel %vm1635, %v2278, 0.0
        %v2311 = vsel %vm1636, %v2279, 0.0
        %v2312 = vsel %vm1637, %v2280, 0.0
        %v2313 = vsel %vm1638, %v2281, 0.0
        %v2314 = vsel %vm1639, %v2282, 0.0
        %v2315 = vsel %vm1640, %v2283, 0.0
        %v2316 = vsel %vm1641, %v2284, 0.0
        %v2317 = vsel %vm1642, %v2285, 0.0
        %v2318 = vsel %vm1643, %v2286, 0.0
        %v2319 = vsel %vm1644, %v2287, 0.0
        %v2320 = vsel %vm1645, %v2288, 0.0
        %v2321 = vsel %vm1646, %v2289, 0.0
        %v2322 = vsel %vm1647, %v2290, 0.0
        %v2323 = vsel %vm1648, %v2291, 0.0
        %v2324 = vsel %vm1649, %v2292, 0.0
        %v2325 = vsel %vm1650, %v2293, 0.0
        %v2326 = vsel %vm1651, %v2294, 0.0
        %v2327 = vsel %vm1652, %v2295, 0.0
        %v2328 = vsel %vm1653, %v2296, 0.0
        %v2329 = vsel %vm1654, %v2297, 0.0
        %v2330 = vsel %vm1655, %v2298, 0.0
        %v2331 = vsel %vm1656, %v2299, 0.0
        %v2332 = vsel %vm1657, %v2300, 0.0
        %v2333 = vsel %vm1658, %v2301, 0.0
        %v2334 = vsel %vm1659, %v2302, 0.0
        %v2335 = vsel %vm1660, %v2303, 0.0
        %v2336 = vsel %vm1661, %v2304, 0.0
        %v2337 = vsel %vm1662, %v2305, 0.0
        %v2338 = vsel %vm1663, %v2306, 0.0
        %v2339 = vsel %vm1664, %v2307, 0.0
        %2372 = vrot.lane.b32.xlu0 %v2308, 20
        %v2373 = vpop.permute.xlu0 %2372
        %2374 = vrot.lane.b32.xlu0 %v2309, 20
        %v2375 = vpop.permute.xlu0 %2374
        %2376 = vrot.lane.b32.xlu0 %v2310, 20
        %v2377 = vpop.permute.xlu0 %2376
        %2378 = vrot.lane.b32.xlu0 %v2311, 20
        %v2379 = vpop.permute.xlu0 %2378
        %2380 = vrot.lane.b32.xlu0 %v2312, 20
        %v2381 = vpop.permute.xlu0 %2380
        %2382 = vrot.lane.b32.xlu0 %v2313, 20
        %v2383 = vpop.permute.xlu0 %2382
        %2384 = vrot.lane.b32.xlu0 %v2314, 20
        %v2385 = vpop.permute.xlu0 %2384
        %2386 = vrot.lane.b32.xlu0 %v2315, 20
        %v2387 = vpop.permute.xlu0 %2386
        %2388 = vrot.lane.b32.xlu0 %v2316, 20
        %v2389 = vpop.permute.xlu0 %2388
        %2390 = vrot.lane.b32.xlu0 %v2317, 20
        %v2391 = vpop.permute.xlu0 %2390
        %2392 = vrot.lane.b32.xlu0 %v2318, 20
        %v2393 = vpop.permute.xlu0 %2392
        %2394 = vrot.lane.b32.xlu0 %v2319, 20
        %v2395 = vpop.permute.xlu0 %2394
        %2396 = vrot.lane.b32.xlu0 %v2320, 20
        %v2397 = vpop.permute.xlu0 %2396
        %2398 = vrot.lane.b32.xlu0 %v2321, 20
        %v2399 = vpop.permute.xlu0 %2398
        %2400 = vrot.lane.b32.xlu0 %v2322, 20
        %v2401 = vpop.permute.xlu0 %2400
        %2402 = vrot.lane.b32.xlu0 %v2323, 20
        %v2403 = vpop.permute.xlu0 %2402
        %2404 = vrot.lane.b32.xlu0 %v2324, 20
        %v2405 = vpop.permute.xlu0 %2404
        %2406 = vrot.lane.b32.xlu0 %v2325, 20
        %v2407 = vpop.permute.xlu0 %2406
        %2408 = vrot.lane.b32.xlu0 %v2326, 20
        %v2409 = vpop.permute.xlu0 %2408
        %2410 = vrot.lane.b32.xlu0 %v2327, 20
        %v2411 = vpop.permute.xlu0 %2410
        %2412 = vrot.lane.b32.xlu0 %v2328, 20
        %v2413 = vpop.permute.xlu0 %2412
        %2414 = vrot.lane.b32.xlu0 %v2329, 20
        %v2415 = vpop.permute.xlu0 %2414
        %2416 = vrot.lane.b32.xlu0 %v2330, 20
        %v2417 = vpop.permute.xlu0 %2416
        %2418 = vrot.lane.b32.xlu0 %v2331, 20
        %v2419 = vpop.permute.xlu0 %2418
        %2420 = vrot.lane.b32.xlu0 %v2332, 20
        %v2421 = vpop.permute.xlu0 %2420
        %2422 = vrot.lane.b32.xlu0 %v2333, 20
        %v2423 = vpop.permute.xlu0 %2422
        %2424 = vrot.lane.b32.xlu0 %v2334, 20
        %v2425 = vpop.permute.xlu0 %2424
        %2426 = vrot.lane.b32.xlu0 %v2335, 20
        %v2427 = vpop.permute.xlu0 %2426
        %2428 = vrot.lane.b32.xlu0 %v2336, 20
        %v2429 = vpop.permute.xlu0 %2428
        %2430 = vrot.lane.b32.xlu0 %v2337, 20
        %v2431 = vpop.permute.xlu0 %2430
        %2432 = vrot.lane.b32.xlu0 %v2338, 20
        %v2433 = vpop.permute.xlu0 %2432
        %2434 = vrot.lane.b32.xlu0 %v2339, 20
        %v2435 = vpop.permute.xlu0 %2434
        %vm2468 = vcmask 195744
        %2469 = vst.msk [vmem:[#allocation3] sm:$0xff] %vm2468, %v2373
        %2470 = vst.msk [vmem:[#allocation3 + $0x8] sm:$0xff] %vm2468, %v2375
        %2471 = vst.msk [vmem:[#allocation3 + $0x10] sm:$0xff] %vm2468, %v2377
        %2472 = vst.msk [vmem:[#allocation3 + $0x18] sm:$0xff] %vm2468, %v2379
        %2473 = vst.msk [vmem:[#allocation3 + $0x20] sm:$0xff] %vm2468, %v2381
        %2474 = vst.msk [vmem:[#allocation3 + $0x28] sm:$0xff] %vm2468, %v2383
        %2475 = vst.msk [vmem:[#allocation3 + $0x30] sm:$0xff] %vm2468, %v2385
        %2476 = vst.msk [vmem:[#allocation3 + $0x38] sm:$0xff] %vm2468, %v2387
        %2477 = vst.msk [vmem:[#allocation3 + $0x40] sm:$0xff] %vm2468, %v2389
        %2478 = vst.msk [vmem:[#allocation3 + $0x48] sm:$0xff] %vm2468, %v2391
        %2479 = vst.msk [vmem:[#allocation3 + $0x50] sm:$0xff] %vm2468, %v2393
        %2480 = vst.msk [vmem:[#allocation3 + $0x58] sm:$0xff] %vm2468, %v2395
        %2481 = vst.msk [vmem:[#allocation3 + $0x60] sm:$0xff] %vm2468, %v2397
        %2482 = vst.msk [vmem:[#allocation3 + $0x68] sm:$0xff] %vm2468, %v2399
        %2483 = vst.msk [vmem:[#allocation3 + $0x70] sm:$0xff] %vm2468, %v2401
        %2484 = vst.msk [vmem:[#allocation3 + $0x78] sm:$0xff] %vm2468, %v2403
        %2485 = vst.msk [vmem:[#allocation3 + $0x80] sm:$0xff] %vm2468, %v2405
        %2486 = vst.msk [vmem:[#allocation3 + $0x88] sm:$0xff] %vm2468, %v2407
        %2487 = vst.msk [vmem:[#allocation3 + $0x90] sm:$0xff] %vm2468, %v2409
        %2488 = vst.msk [vmem:[#allocation3 + $0x98] sm:$0xff] %vm2468, %v2411
        %2489 = vst.msk [vmem:[#allocation3 + $0xa0] sm:$0xff] %vm2468, %v2413
        %2490 = vst.msk [vmem:[#allocation3 + $0xa8] sm:$0xff] %vm2468, %v2415
        %2491 = vst.msk [vmem:[#allocation3 + $0xb0] sm:$0xff] %vm2468, %v2417
        %2492 = vst.msk [vmem:[#allocation3 + $0xb8] sm:$0xff] %vm2468, %v2419
        %2493 = vst.msk [vmem:[#allocation3 + $0xc0] sm:$0xff] %vm2468, %v2421
        %2494 = vst.msk [vmem:[#allocation3 + $0xc8] sm:$0xff] %vm2468, %v2423
        %2495 = vst.msk [vmem:[#allocation3 + $0xd0] sm:$0xff] %vm2468, %v2425
        %2496 = vst.msk [vmem:[#allocation3 + $0xd8] sm:$0xff] %vm2468, %v2427
        %2497 = vst.msk [vmem:[#allocation3 + $0xe0] sm:$0xff] %vm2468, %v2429
        %2498 = vst.msk [vmem:[#allocation3 + $0xe8] sm:$0xff] %vm2468, %v2431
        %2499 = vst.msk [vmem:[#allocation3 + $0xf0] sm:$0xff] %vm2468, %v2433
        %2500 = vst.msk [vmem:[#allocation3 + $0xf8] sm:$0xff] %vm2468, %v2435
        %v2501 = vld [vmem:[#allocation2 + $0x2f] sm:$0xff]
        %v2502 = vld [vmem:[#allocation2 + $0x37] sm:$0xff]
        %v2503 = vld [vmem:[#allocation2 + $0x3f] sm:$0xff]
        %v2504 = vld [vmem:[#allocation2 + $0x47] sm:$0xff]
        %v2505 = vld [vmem:[#allocation2 + $0x4f] sm:$0xff]
        %v2506 = vld [vmem:[#allocation2 + $0x57] sm:$0xff]
        %v2507 = vld [vmem:[#allocation2 + $0x5f] sm:$0xff]
        %v2508 = vld [vmem:[#allocation2 + $0x67] sm:$0xff]
        %v2509 = vld [vmem:[#allocation2 + $0x6f] sm:$0xff]
        %v2510 = vld [vmem:[#allocation2 + $0x77] sm:$0xff]
        %v2511 = vld [vmem:[#allocation2 + $0x7f] sm:$0xff]
        %v2512 = vld [vmem:[#allocation2 + $0x87] sm:$0xff]
        %v2513 = vld [vmem:[#allocation2 + $0x8f] sm:$0xff]
        %v2514 = vld [vmem:[#allocation2 + $0x97] sm:$0xff]
        %v2515 = vld [vmem:[#allocation2 + $0x9f] sm:$0xff]
        %v2516 = vld [vmem:[#allocation2 + $0xa7] sm:$0xff]
        %v2517 = vld [vmem:[#allocation2 + $0xaf] sm:$0xff]
        %v2518 = vld [vmem:[#allocation2 + $0xb7] sm:$0xff]
        %v2519 = vld [vmem:[#allocation2 + $0xbf] sm:$0xff]
        %v2520 = vld [vmem:[#allocation2 + $0xc7] sm:$0xff]
        %v2521 = vld [vmem:[#allocation2 + $0xcf] sm:$0xff]
        %v2522 = vld [vmem:[#allocation2 + $0xd7] sm:$0xff]
        %v2523 = vld [vmem:[#allocation2 + $0xdf] sm:$0xff]
        %v2524 = vld [vmem:[#allocation2 + $0xe7] sm:$0xff]
        %v2525 = vld [vmem:[#allocation2 + $0xef] sm:$0xff]
        %v2526 = vld [vmem:[#allocation2 + $0xf7] sm:$0xff]
        %v2527 = vld [vmem:[#allocation2 + $0xff] sm:$0xff]
        %v2528 = vld [vmem:[#allocation2 + $0x107] sm:$0xff]
        %v2529 = vld [vmem:[#allocation2 + $0x10f] sm:$0xff]
        %v2530 = vld [vmem:[#allocation2 + $0x117] sm:$0xff]
        %v2531 = vld [vmem:[#allocation2 + $0x11f] sm:$0xff]
        %v2532 = vld [vmem:[#allocation2 + $0x127] sm:$0xff]
        %v2533 = vsel %vm1248, %v2501, 0.0
        %v2534 = vsel %vm1249, %v2502, 0.0
        %v2535 = vsel %vm1250, %v2503, 0.0
        %v2536 = vsel %vm1251, %v2504, 0.0
        %v2537 = vsel %vm1252, %v2505, 0.0
        %v2538 = vsel %vm1253, %v2506, 0.0
        %v2539 = vsel %vm1254, %v2507, 0.0
        %v2540 = vsel %vm1255, %v2508, 0.0
        %v2541 = vsel %vm1256, %v2509, 0.0
        %v2542 = vsel %vm1257, %v2510, 0.0
        %v2543 = vsel %vm1258, %v2511, 0.0
        %v2544 = vsel %vm1259, %v2512, 0.0
        %v2545 = vsel %vm1260, %v2513, 0.0
        %v2546 = vsel %vm1261, %v2514, 0.0
        %v2547 = vsel %vm1262, %v2515, 0.0
        %v2548 = vsel %vm1263, %v2516, 0.0
        %v2549 = vsel %vm1264, %v2517, 0.0
        %v2550 = vsel %vm1265, %v2518, 0.0
        %v2551 = vsel %vm1266, %v2519, 0.0
        %v2552 = vsel %vm1267, %v2520, 0.0
        %v2553 = vsel %vm1268, %v2521, 0.0
        %v2554 = vsel %vm1269, %v2522, 0.0
        %v2555 = vsel %vm1270, %v2523, 0.0
        %v2556 = vsel %vm1271, %v2524, 0.0
        %v2557 = vsel %vm1272, %v2525, 0.0
        %v2558 = vsel %vm1273, %v2526, 0.0
        %v2559 = vsel %vm1274, %v2527, 0.0
        %v2560 = vsel %vm1275, %v2528, 0.0
        %v2561 = vsel %vm1276, %v2529, 0.0
        %v2562 = vsel %vm1277, %v2530, 0.0
        %v2563 = vsel %vm1278, %v2531, 0.0
        %v2564 = vsel %vm1279, %v2532, 0.0
        %2597 = vrot.lane.b32.xlu0 %v2533, 24
        %v2598 = vpop.permute.xlu0 %2597
        %2599 = vrot.lane.b32.xlu0 %v2534, 24
        %v2600 = vpop.permute.xlu0 %2599
        %2601 = vrot.lane.b32.xlu0 %v2535, 24
        %v2602 = vpop.permute.xlu0 %2601
        %2603 = vrot.lane.b32.xlu0 %v2536, 24
        %v2604 = vpop.permute.xlu0 %2603
        %2605 = vrot.lane.b32.xlu0 %v2537, 24
        %v2606 = vpop.permute.xlu0 %2605
        %2607 = vrot.lane.b32.xlu0 %v2538, 24
        %v2608 = vpop.permute.xlu0 %2607
        %2609 = vrot.lane.b32.xlu0 %v2539, 24
        %v2610 = vpop.permute.xlu0 %2609
        %2611 = vrot.lane.b32.xlu0 %v2540, 24
        %v2612 = vpop.permute.xlu0 %2611
        %2613 = vrot.lane.b32.xlu0 %v2541, 24
        %v2614 = vpop.permute.xlu0 %2613
        %2615 = vrot.lane.b32.xlu0 %v2542, 24
        %v2616 = vpop.permute.xlu0 %2615
        %2617 = vrot.lane.b32.xlu0 %v2543, 24
        %v2618 = vpop.permute.xlu0 %2617
        %2619 = vrot.lane.b32.xlu0 %v2544, 24
        %v2620 = vpop.permute.xlu0 %2619
        %2621 = vrot.lane.b32.xlu0 %v2545, 24
        %v2622 = vpop.permute.xlu0 %2621
        %2623 = vrot.lane.b32.xlu0 %v2546, 24
        %v2624 = vpop.permute.xlu0 %2623
        %2625 = vrot.lane.b32.xlu0 %v2547, 24
        %v2626 = vpop.permute.xlu0 %2625
        %2627 = vrot.lane.b32.xlu0 %v2548, 24
        %v2628 = vpop.permute.xlu0 %2627
        %2629 = vrot.lane.b32.xlu0 %v2549, 24
        %v2630 = vpop.permute.xlu0 %2629
        %2631 = vrot.lane.b32.xlu0 %v2550, 24
        %v2632 = vpop.permute.xlu0 %2631
        %2633 = vrot.lane.b32.xlu0 %v2551, 24
        %v2634 = vpop.permute.xlu0 %2633
        %2635 = vrot.lane.b32.xlu0 %v2552, 24
        %v2636 = vpop.permute.xlu0 %2635
        %2637 = vrot.lane.b32.xlu0 %v2553, 24
        %v2638 = vpop.permute.xlu0 %2637
        %2639 = vrot.lane.b32.xlu0 %v2554, 24
        %v2640 = vpop.permute.xlu0 %2639
        %2641 = vrot.lane.b32.xlu0 %v2555, 24
        %v2642 = vpop.permute.xlu0 %2641
        %2643 = vrot.lane.b32.xlu0 %v2556, 24
        %v2644 = vpop.permute.xlu0 %2643
        %2645 = vrot.lane.b32.xlu0 %v2557, 24
        %v2646 = vpop.permute.xlu0 %2645
        %2647 = vrot.lane.b32.xlu0 %v2558, 24
        %v2648 = vpop.permute.xlu0 %2647
        %2649 = vrot.lane.b32.xlu0 %v2559, 24
        %v2650 = vpop.permute.xlu0 %2649
        %2651 = vrot.lane.b32.xlu0 %v2560, 24
        %v2652 = vpop.permute.xlu0 %2651
        %2653 = vrot.lane.b32.xlu0 %v2561, 24
        %v2654 = vpop.permute.xlu0 %2653
        %2655 = vrot.lane.b32.xlu0 %v2562, 24
        %v2656 = vpop.permute.xlu0 %2655
        %2657 = vrot.lane.b32.xlu0 %v2563, 24
        %v2658 = vpop.permute.xlu0 %2657
        %2659 = vrot.lane.b32.xlu0 %v2564, 24
        %v2660 = vpop.permute.xlu0 %2659
        %vm2693 = vcmask 228544
        %2694 = vst.msk [vmem:[#allocation3] sm:$0xff] %vm2693, %v2598
        %2695 = vst.msk [vmem:[#allocation3 + $0x8] sm:$0xff] %vm2693, %v2600
        %2696 = vst.msk [vmem:[#allocation3 + $0x10] sm:$0xff] %vm2693, %v2602
        %2697 = vst.msk [vmem:[#allocation3 + $0x18] sm:$0xff] %vm2693, %v2604
        %2698 = vst.msk [vmem:[#allocation3 + $0x20] sm:$0xff] %vm2693, %v2606
        %2699 = vst.msk [vmem:[#allocation3 + $0x28] sm:$0xff] %vm2693, %v2608
        %2700 = vst.msk [vmem:[#allocation3 + $0x30] sm:$0xff] %vm2693, %v2610
        %2701 = vst.msk [vmem:[#allocation3 + $0x38] sm:$0xff] %vm2693, %v2612
        %2702 = vst.msk [vmem:[#allocation3 + $0x40] sm:$0xff] %vm2693, %v2614
        %2703 = vst.msk [vmem:[#allocation3 + $0x48] sm:$0xff] %vm2693, %v2616
        %2704 = vst.msk [vmem:[#allocation3 + $0x50] sm:$0xff] %vm2693, %v2618
        %2705 = vst.msk [vmem:[#allocation3 + $0x58] sm:$0xff] %vm2693, %v2620
        %2706 = vst.msk [vmem:[#allocation3 + $0x60] sm:$0xff] %vm2693, %v2622
        %2707 = vst.msk [vmem:[#allocation3 + $0x68] sm:$0xff] %vm2693, %v2624
        %2708 = vst.msk [vmem:[#allocation3 + $0x70] sm:$0xff] %vm2693, %v2626
        %2709 = vst.msk [vmem:[#allocation3 + $0x78] sm:$0xff] %vm2693, %v2628
        %2710 = vst.msk [vmem:[#allocation3 + $0x80] sm:$0xff] %vm2693, %v2630
        %2711 = vst.msk [vmem:[#allocation3 + $0x88] sm:$0xff] %vm2693, %v2632
        %2712 = vst.msk [vmem:[#allocation3 + $0x90] sm:$0xff] %vm2693, %v2634
        %2713 = vst.msk [vmem:[#allocation3 + $0x98] sm:$0xff] %vm2693, %v2636
        %2714 = vst.msk [vmem:[#allocation3 + $0xa0] sm:$0xff] %vm2693, %v2638
        %2715 = vst.msk [vmem:[#allocation3 + $0xa8] sm:$0xff] %vm2693, %v2640
        %2716 = vst.msk [vmem:[#allocation3 + $0xb0] sm:$0xff] %vm2693, %v2642
        %2717 = vst.msk [vmem:[#allocation3 + $0xb8] sm:$0xff] %vm2693, %v2644
        %2718 = vst.msk [vmem:[#allocation3 + $0xc0] sm:$0xff] %vm2693, %v2646
        %2719 = vst.msk [vmem:[#allocation3 + $0xc8] sm:$0xff] %vm2693, %v2648
        %2720 = vst.msk [vmem:[#allocation3 + $0xd0] sm:$0xff] %vm2693, %v2650
        %2721 = vst.msk [vmem:[#allocation3 + $0xd8] sm:$0xff] %vm2693, %v2652
        %2722 = vst.msk [vmem:[#allocation3 + $0xe0] sm:$0xff] %vm2693, %v2654
        %2723 = vst.msk [vmem:[#allocation3 + $0xe8] sm:$0xff] %vm2693, %v2656
        %2724 = vst.msk [vmem:[#allocation3 + $0xf0] sm:$0xff] %vm2693, %v2658
        %2725 = vst.msk [vmem:[#allocation3 + $0xf8] sm:$0xff] %vm2693, %v2660
        %v2726 = vld [vmem:[#allocation2 + $0x30] sm:$0xff]
        %v2727 = vld [vmem:[#allocation2 + $0x38] sm:$0xff]
        %v2728 = vld [vmem:[#allocation2 + $0x40] sm:$0xff]
        %v2729 = vld [vmem:[#allocation2 + $0x48] sm:$0xff]
        %v2730 = vld [vmem:[#allocation2 + $0x50] sm:$0xff]
        %v2731 = vld [vmem:[#allocation2 + $0x58] sm:$0xff]
        %v2732 = vld [vmem:[#allocation2 + $0x60] sm:$0xff]
        %v2733 = vld [vmem:[#allocation2 + $0x68] sm:$0xff]
        %v2734 = vld [vmem:[#allocation2 + $0x70] sm:$0xff]
        %v2735 = vld [vmem:[#allocation2 + $0x78] sm:$0xff]
        %v2736 = vld [vmem:[#allocation2 + $0x80] sm:$0xff]
        %v2737 = vld [vmem:[#allocation2 + $0x88] sm:$0xff]
        %v2738 = vld [vmem:[#allocation2 + $0x90] sm:$0xff]
        %v2739 = vld [vmem:[#allocation2 + $0x98] sm:$0xff]
        %v2740 = vld [vmem:[#allocation2 + $0xa0] sm:$0xff]
        %v2741 = vld [vmem:[#allocation2 + $0xa8] sm:$0xff]
        %v2742 = vld [vmem:[#allocation2 + $0xb0] sm:$0xff]
        %v2743 = vld [vmem:[#allocation2 + $0xb8] sm:$0xff]
        %v2744 = vld [vmem:[#allocation2 + $0xc0] sm:$0xff]
        %v2745 = vld [vmem:[#allocation2 + $0xc8] sm:$0xff]
        %v2746 = vld [vmem:[#allocation2 + $0xd0] sm:$0xff]
        %v2747 = vld [vmem:[#allocation2 + $0xd8] sm:$0xff]
        %v2748 = vld [vmem:[#allocation2 + $0xe0] sm:$0xff]
        %v2749 = vld [vmem:[#allocation2 + $0xe8] sm:$0xff]
        %v2750 = vld [vmem:[#allocation2 + $0xf0] sm:$0xff]
        %v2751 = vld [vmem:[#allocation2 + $0xf8] sm:$0xff]
        %v2752 = vld [vmem:[#allocation2 + $0x100] sm:$0xff]
        %v2753 = vld [vmem:[#allocation2 + $0x108] sm:$0xff]
        %v2754 = vld [vmem:[#allocation2 + $0x110] sm:$0xff]
        %v2755 = vld [vmem:[#allocation2 + $0x118] sm:$0xff]
        %v2756 = vld [vmem:[#allocation2 + $0x120] sm:$0xff]
        %v2757 = vld [vmem:[#allocation2 + $0x128] sm:$0xff]
        %2790 = vrot.lane.b32.xlu0 %v2726, 28
        %v2791 = vpop.permute.xlu0 %2790
        %2792 = vrot.lane.b32.xlu0 %v2727, 28
        %v2793 = vpop.permute.xlu0 %2792
        %2794 = vrot.lane.b32.xlu0 %v2728, 28
        %v2795 = vpop.permute.xlu0 %2794
        %2796 = vrot.lane.b32.xlu0 %v2729, 28
        %v2797 = vpop.permute.xlu0 %2796
        %2798 = vrot.lane.b32.xlu0 %v2730, 28
        %v2799 = vpop.permute.xlu0 %2798
        %2800 = vrot.lane.b32.xlu0 %v2731, 28
        %v2801 = vpop.permute.xlu0 %2800
        %2802 = vrot.lane.b32.xlu0 %v2732, 28
        %v2803 = vpop.permute.xlu0 %2802
        %2804 = vrot.lane.b32.xlu0 %v2733, 28
        %v2805 = vpop.permute.xlu0 %2804
        %2806 = vrot.lane.b32.xlu0 %v2734, 28
        %v2807 = vpop.permute.xlu0 %2806
        %2808 = vrot.lane.b32.xlu0 %v2735, 28
        %v2809 = vpop.permute.xlu0 %2808
        %2810 = vrot.lane.b32.xlu0 %v2736, 28
        %v2811 = vpop.permute.xlu0 %2810
        %2812 = vrot.lane.b32.xlu0 %v2737, 28
        %v2813 = vpop.permute.xlu0 %2812
        %2814 = vrot.lane.b32.xlu0 %v2738, 28
        %v2815 = vpop.permute.xlu0 %2814
        %2816 = vrot.lane.b32.xlu0 %v2739, 28
        %v2817 = vpop.permute.xlu0 %2816
        %2818 = vrot.lane.b32.xlu0 %v2740, 28
        %v2819 = vpop.permute.xlu0 %2818
        %2820 = vrot.lane.b32.xlu0 %v2741, 28
        %v2821 = vpop.permute.xlu0 %2820
        %2822 = vrot.lane.b32.xlu0 %v2742, 28
        %v2823 = vpop.permute.xlu0 %2822
        %2824 = vrot.lane.b32.xlu0 %v2743, 28
        %v2825 = vpop.permute.xlu0 %2824
        %2826 = vrot.lane.b32.xlu0 %v2744, 28
        %v2827 = vpop.permute.xlu0 %2826
        %2828 = vrot.lane.b32.xlu0 %v2745, 28
        %v2829 = vpop.permute.xlu0 %2828
        %2830 = vrot.lane.b32.xlu0 %v2746, 28
        %v2831 = vpop.permute.xlu0 %2830
        %2832 = vrot.lane.b32.xlu0 %v2747, 28
        %v2833 = vpop.permute.xlu0 %2832
        %2834 = vrot.lane.b32.xlu0 %v2748, 28
        %v2835 = vpop.permute.xlu0 %2834
        %2836 = vrot.lane.b32.xlu0 %v2749, 28
        %v2837 = vpop.permute.xlu0 %2836
        %2838 = vrot.lane.b32.xlu0 %v2750, 28
        %v2839 = vpop.permute.xlu0 %2838
        %2840 = vrot.lane.b32.xlu0 %v2751, 28
        %v2841 = vpop.permute.xlu0 %2840
        %2842 = vrot.lane.b32.xlu0 %v2752, 28
        %v2843 = vpop.permute.xlu0 %2842
        %2844 = vrot.lane.b32.xlu0 %v2753, 28
        %v2845 = vpop.permute.xlu0 %2844
        %2846 = vrot.lane.b32.xlu0 %v2754, 28
        %v2847 = vpop.permute.xlu0 %2846
        %2848 = vrot.lane.b32.xlu0 %v2755, 28
        %v2849 = vpop.permute.xlu0 %2848
        %2850 = vrot.lane.b32.xlu0 %v2756, 28
        %v2851 = vpop.permute.xlu0 %2850
        %2852 = vrot.lane.b32.xlu0 %v2757, 28
        %v2853 = vpop.permute.xlu0 %2852
        %vm2886 = vcmask 261344
        %2887 = vst.msk [vmem:[#allocation3] sm:$0xff] %vm2886, %v2791
        %2888 = vst.msk [vmem:[#allocation3 + $0x8] sm:$0xff] %vm2886, %v2793
        %2889 = vst.msk [vmem:[#allocation3 + $0x10] sm:$0xff] %vm2886, %v2795
        %2890 = vst.msk [vmem:[#allocation3 + $0x18] sm:$0xff] %vm2886, %v2797
        %2891 = vst.msk [vmem:[#allocation3 + $0x20] sm:$0xff] %vm2886, %v2799
        %2892 = vst.msk [vmem:[#allocation3 + $0x28] sm:$0xff] %vm2886, %v2801
        %2893 = vst.msk [vmem:[#allocation3 + $0x30] sm:$0xff] %vm2886, %v2803
        %2894 = vst.msk [vmem:[#allocation3 + $0x38] sm:$0xff] %vm2886, %v2805
        %2895 = vst.msk [vmem:[#allocation3 + $0x40] sm:$0xff] %vm2886, %v2807
        %2896 = vst.msk [vmem:[#allocation3 + $0x48] sm:$0xff] %vm2886, %v2809
        %2897 = vst.msk [vmem:[#allocation3 + $0x50] sm:$0xff] %vm2886, %v2811
        %2898 = vst.msk [vmem:[#allocation3 + $0x58] sm:$0xff] %vm2886, %v2813
        %2899 = vst.msk [vmem:[#allocation3 + $0x60] sm:$0xff] %vm2886, %v2815
        %2900 = vst.msk [vmem:[#allocation3 + $0x68] sm:$0xff] %vm2886, %v2817
        %2901 = vst.msk [vmem:[#allocation3 + $0x70] sm:$0xff] %vm2886, %v2819
        %2902 = vst.msk [vmem:[#allocation3 + $0x78] sm:$0xff] %vm2886, %v2821
        %2903 = vst.msk [vmem:[#allocation3 + $0x80] sm:$0xff] %vm2886, %v2823
        %2904 = vst.msk [vmem:[#allocation3 + $0x88] sm:$0xff] %vm2886, %v2825
        %2905 = vst.msk [vmem:[#allocation3 + $0x90] sm:$0xff] %vm2886, %v2827
        %2906 = vst.msk [vmem:[#allocation3 + $0x98] sm:$0xff] %vm2886, %v2829
        %2907 = vst.msk [vmem:[#allocation3 + $0xa0] sm:$0xff] %vm2886, %v2831
        %2908 = vst.msk [vmem:[#allocation3 + $0xa8] sm:$0xff] %vm2886, %v2833
        %2909 = vst.msk [vmem:[#allocation3 + $0xb0] sm:$0xff] %vm2886, %v2835
        %2910 = vst.msk [vmem:[#allocation3 + $0xb8] sm:$0xff] %vm2886, %v2837
        %2911 = vst.msk [vmem:[#allocation3 + $0xc0] sm:$0xff] %vm2886, %v2839
        %2912 = vst.msk [vmem:[#allocation3 + $0xc8] sm:$0xff] %vm2886, %v2841
        %2913 = vst.msk [vmem:[#allocation3 + $0xd0] sm:$0xff] %vm2886, %v2843
        %2914 = vst.msk [vmem:[#allocation3 + $0xd8] sm:$0xff] %vm2886, %v2845
        %2915 = vst.msk [vmem:[#allocation3 + $0xe0] sm:$0xff] %vm2886, %v2847
        %2916 = vst.msk [vmem:[#allocation3 + $0xe8] sm:$0xff] %vm2886, %v2849
        %2917 = vst.msk [vmem:[#allocation3 + $0xf0] sm:$0xff] %vm2886, %v2851
        %2918 = vst.msk [vmem:[#allocation3 + $0xf8] sm:$0xff] %vm2886, %v2853
        %v2919 = vld [vmem:[#allocation2 + $0x31] sm:$0xff]
        %v2920 = vld [vmem:[#allocation2 + $0x39] sm:$0xff]
        %v2921 = vld [vmem:[#allocation2 + $0x41] sm:$0xff]
        %v2922 = vld [vmem:[#allocation2 + $0x49] sm:$0xff]
        %v2923 = vld [vmem:[#allocation2 + $0x51] sm:$0xff]
        %v2924 = vld [vmem:[#allocation2 + $0x59] sm:$0xff]
        %v2925 = vld [vmem:[#allocation2 + $0x61] sm:$0xff]
        %v2926 = vld [vmem:[#allocation2 + $0x69] sm:$0xff]
        %v2927 = vld [vmem:[#allocation2 + $0x71] sm:$0xff]
        %v2928 = vld [vmem:[#allocation2 + $0x79] sm:$0xff]
        %v2929 = vld [vmem:[#allocation2 + $0x81] sm:$0xff]
        %v2930 = vld [vmem:[#allocation2 + $0x89] sm:$0xff]
        %v2931 = vld [vmem:[#allocation2 + $0x91] sm:$0xff]
        %v2932 = vld [vmem:[#allocation2 + $0x99] sm:$0xff]
        %v2933 = vld [vmem:[#allocation2 + $0xa1] sm:$0xff]
        %v2934 = vld [vmem:[#allocation2 + $0xa9] sm:$0xff]
        %v2935 = vld [vmem:[#allocation2 + $0xb1] sm:$0xff]
        %v2936 = vld [vmem:[#allocation2 + $0xb9] sm:$0xff]
        %v2937 = vld [vmem:[#allocation2 + $0xc1] sm:$0xff]
        %v2938 = vld [vmem:[#allocation2 + $0xc9] sm:$0xff]
        %v2939 = vld [vmem:[#allocation2 + $0xd1] sm:$0xff]
        %v2940 = vld [vmem:[#allocation2 + $0xd9] sm:$0xff]
        %v2941 = vld [vmem:[#allocation2 + $0xe1] sm:$0xff]
        %v2942 = vld [vmem:[#allocation2 + $0xe9] sm:$0xff]
        %v2943 = vld [vmem:[#allocation2 + $0xf1] sm:$0xff]
        %v2944 = vld [vmem:[#allocation2 + $0xf9] sm:$0xff]
        %v2945 = vld [vmem:[#allocation2 + $0x101] sm:$0xff]
        %v2946 = vld [vmem:[#allocation2 + $0x109] sm:$0xff]
        %v2947 = vld [vmem:[#allocation2 + $0x111] sm:$0xff]
        %v2948 = vld [vmem:[#allocation2 + $0x119] sm:$0xff]
        %v2949 = vld [vmem:[#allocation2 + $0x121] sm:$0xff]
        %v2950 = vld [vmem:[#allocation2 + $0x129] sm:$0xff]
        %v2951 = vsel %vm1633, %v2919, 0.0
        %v2952 = vsel %vm1634, %v2920, 0.0
        %v2953 = vsel %vm1635, %v2921, 0.0
        %v2954 = vsel %vm1636, %v2922, 0.0
        %v2955 = vsel %vm1637, %v2923, 0.0
        %v2956 = vsel %vm1638, %v2924, 0.0
        %v2957 = vsel %vm1639, %v2925, 0.0
        %v2958 = vsel %vm1640, %v2926, 0.0
        %v2959 = vsel %vm1641, %v2927, 0.0
        %v2960 = vsel %vm1642, %v2928, 0.0
        %v2961 = vsel %vm1643, %v2929, 0.0
        %v2962 = vsel %vm1644, %v2930, 0.0
        %v2963 = vsel %vm1645, %v2931, 0.0
        %v2964 = vsel %vm1646, %v2932, 0.0
        %v2965 = vsel %vm1647, %v2933, 0.0
        %v2966 = vsel %vm1648, %v2934, 0.0
        %v2967 = vsel %vm1649, %v2935, 0.0
        %v2968 = vsel %vm1650, %v2936, 0.0
        %v2969 = vsel %vm1651, %v2937, 0.0
        %v2970 = vsel %vm1652, %v2938, 0.0
        %v2971 = vsel %vm1653, %v2939, 0.0
        %v2972 = vsel %vm1654, %v2940, 0.0
        %v2973 = vsel %vm1655, %v2941, 0.0
        %v2974 = vsel %vm1656, %v2942, 0.0
        %v2975 = vsel %vm1657, %v2943, 0.0
        %v2976 = vsel %vm1658, %v2944, 0.0
        %v2977 = vsel %vm1659, %v2945, 0.0
        %v2978 = vsel %vm1660, %v2946, 0.0
        %v2979 = vsel %vm1661, %v2947, 0.0
        %v2980 = vsel %vm1662, %v2948, 0.0
        %v2981 = vsel %vm1663, %v2949, 0.0
        %v2982 = vsel %vm1664, %v2950, 0.0
        %3015 = vrot.lane.b32.xlu0 %v2951, 32
        %v3016 = vpop.permute.xlu0 %3015
        %3017 = vrot.lane.b32.xlu0 %v2952, 32
        %v3018 = vpop.permute.xlu0 %3017
        %3019 = vrot.lane.b32.xlu0 %v2953, 32
        %v3020 = vpop.permute.xlu0 %3019
        %3021 = vrot.lane.b32.xlu0 %v2954, 32
        %v3022 = vpop.permute.xlu0 %3021
        %3023 = vrot.lane.b32.xlu0 %v2955, 32
        %v3024 = vpop.permute.xlu0 %3023
        %3025 = vrot.lane.b32.xlu0 %v2956, 32
        %v3026 = vpop.permute.xlu0 %3025
        %3027 = vrot.lane.b32.xlu0 %v2957, 32
        %v3028 = vpop.permute.xlu0 %3027
        %3029 = vrot.lane.b32.xlu0 %v2958, 32
        %v3030 = vpop.permute.xlu0 %3029
        %3031 = vrot.lane.b32.xlu0 %v2959, 32
        %v3032 = vpop.permute.xlu0 %3031
        %3033 = vrot.lane.b32.xlu0 %v2960, 32
        %v3034 = vpop.permute.xlu0 %3033
        %3035 = vrot.lane.b32.xlu0 %v2961, 32
        %v3036 = vpop.permute.xlu0 %3035
        %3037 = vrot.lane.b32.xlu0 %v2962, 32
        %v3038 = vpop.permute.xlu0 %3037
        %3039 = vrot.lane.b32.xlu0 %v2963, 32
        %v3040 = vpop.permute.xlu0 %3039
        %3041 = vrot.lane.b32.xlu0 %v2964, 32
        %v3042 = vpop.permute.xlu0 %3041
        %3043 = vrot.lane.b32.xlu0 %v2965, 32
        %v3044 = vpop.permute.xlu0 %3043
        %3045 = vrot.lane.b32.xlu0 %v2966, 32
        %v3046 = vpop.permute.xlu0 %3045
        %3047 = vrot.lane.b32.xlu0 %v2967, 32
        %v3048 = vpop.permute.xlu0 %3047
        %3049 = vrot.lane.b32.xlu0 %v2968, 32
        %v3050 = vpop.permute.xlu0 %3049
        %3051 = vrot.lane.b32.xlu0 %v2969, 32
        %v3052 = vpop.permute.xlu0 %3051
        %3053 = vrot.lane.b32.xlu0 %v2970, 32
        %v3054 = vpop.permute.xlu0 %3053
        %3055 = vrot.lane.b32.xlu0 %v2971, 32
        %v3056 = vpop.permute.xlu0 %3055
        %3057 = vrot.lane.b32.xlu0 %v2972, 32
        %v3058 = vpop.permute.xlu0 %3057
        %3059 = vrot.lane.b32.xlu0 %v2973, 32
        %v3060 = vpop.permute.xlu0 %3059
        %3061 = vrot.lane.b32.xlu0 %v2974, 32
        %v3062 = vpop.permute.xlu0 %3061
        %3063 = vrot.lane.b32.xlu0 %v2975, 32
        %v3064 = vpop.permute.xlu0 %3063
        %3065 = vrot.lane.b32.xlu0 %v2976, 32
        %v3066 = vpop.permute.xlu0 %3065
        %3067 = vrot.lane.b32.xlu0 %v2977, 32
        %v3068 = vpop.permute.xlu0 %3067
        %3069 = vrot.lane.b32.xlu0 %v2978, 32
        %v3070 = vpop.permute.xlu0 %3069
        %3071 = vrot.lane.b32.xlu0 %v2979, 32
        %v3072 = vpop.permute.xlu0 %3071
        %3073 = vrot.lane.b32.xlu0 %v2980, 32
        %v3074 = vpop.permute.xlu0 %3073
        %3075 = vrot.lane.b32.xlu0 %v2981, 32
        %v3076 = vpop.permute.xlu0 %3075
        %3077 = vrot.lane.b32.xlu0 %v2982, 32
        %v3078 = vpop.permute.xlu0 %3077
        %vm3111 = vcmask 294144
        %3112 = vst.msk [vmem:[#allocation3] sm:$0xff] %vm3111, %v3016
        %3113 = vst.msk [vmem:[#allocation3 + $0x8] sm:$0xff] %vm3111, %v3018
        %3114 = vst.msk [vmem:[#allocation3 + $0x10] sm:$0xff] %vm3111, %v3020
        %3115 = vst.msk [vmem:[#allocation3 + $0x18] sm:$0xff] %vm3111, %v3022
        %3116 = vst.msk [vmem:[#allocation3 + $0x20] sm:$0xff] %vm3111, %v3024
        %3117 = vst.msk [vmem:[#allocation3 + $0x28] sm:$0xff] %vm3111, %v3026
        %3118 = vst.msk [vmem:[#allocation3 + $0x30] sm:$0xff] %vm3111, %v3028
        %3119 = vst.msk [vmem:[#allocation3 + $0x38] sm:$0xff] %vm3111, %v3030
        %3120 = vst.msk [vmem:[#allocation3 + $0x40] sm:$0xff] %vm3111, %v3032
        %3121 = vst.msk [vmem:[#allocation3 + $0x48] sm:$0xff] %vm3111, %v3034
        %3122 = vst.msk [vmem:[#allocation3 + $0x50] sm:$0xff] %vm3111, %v3036
        %3123 = vst.msk [vmem:[#allocation3 + $0x58] sm:$0xff] %vm3111, %v3038
        %3124 = vst.msk [vmem:[#allocation3 + $0x60] sm:$0xff] %vm3111, %v3040
        %3125 = vst.msk [vmem:[#allocation3 + $0x68] sm:$0xff] %vm3111, %v3042
        %3126 = vst.msk [vmem:[#allocation3 + $0x70] sm:$0xff] %vm3111, %v3044
        %3127 = vst.msk [vmem:[#allocation3 + $0x78] sm:$0xff] %vm3111, %v3046
        %3128 = vst.msk [vmem:[#allocation3 + $0x80] sm:$0xff] %vm3111, %v3048
        %3129 = vst.msk [vmem:[#allocation3 + $0x88] sm:$0xff] %vm3111, %v3050
        %3130 = vst.msk [vmem:[#allocation3 + $0x90] sm:$0xff] %vm3111, %v3052
        %3131 = vst.msk [vmem:[#allocation3 + $0x98] sm:$0xff] %vm3111, %v3054
        %3132 = vst.msk [vmem:[#allocation3 + $0xa0] sm:$0xff] %vm3111, %v3056
        %3133 = vst.msk [vmem:[#allocation3 + $0xa8] sm:$0xff] %vm3111, %v3058
        %3134 = vst.msk [vmem:[#allocation3 + $0xb0] sm:$0xff] %vm3111, %v3060
        %3135 = vst.msk [vmem:[#allocation3 + $0xb8] sm:$0xff] %vm3111, %v3062
        %3136 = vst.msk [vmem:[#allocation3 + $0xc0] sm:$0xff] %vm3111, %v3064
        %3137 = vst.msk [vmem:[#allocation3 + $0xc8] sm:$0xff] %vm3111, %v3066
        %3138 = vst.msk [vmem:[#allocation3 + $0xd0] sm:$0xff] %vm3111, %v3068
        %3139 = vst.msk [vmem:[#allocation3 + $0xd8] sm:$0xff] %vm3111, %v3070
        %3140 = vst.msk [vmem:[#allocation3 + $0xe0] sm:$0xff] %vm3111, %v3072
        %3141 = vst.msk [vmem:[#allocation3 + $0xe8] sm:$0xff] %vm3111, %v3074
        %3142 = vst.msk [vmem:[#allocation3 + $0xf0] sm:$0xff] %vm3111, %v3076
        %3143 = vst.msk [vmem:[#allocation3 + $0xf8] sm:$0xff] %vm3111, %v3078
        %v3144 = vld [vmem:[#allocation3] sm:$0xff]
        %v3145 = vld [vmem:[#allocation3 + $0x8] sm:$0xff]
        %v3146 = vld [vmem:[#allocation3 + $0x10] sm:$0xff]
        %v3147 = vld [vmem:[#allocation3 + $0x18] sm:$0xff]
        %v3148 = vld [vmem:[#allocation3 + $0x20] sm:$0xff]
        %v3149 = vld [vmem:[#allocation3 + $0x28] sm:$0xff]
        %v3150 = vld [vmem:[#allocation3 + $0x30] sm:$0xff]
        %v3151 = vld [vmem:[#allocation3 + $0x38] sm:$0xff]
        %v3152 = vld [vmem:[#allocation3 + $0x40] sm:$0xff]
        %v3153 = vld [vmem:[#allocation3 + $0x48] sm:$0xff]
        %v3154 = vld [vmem:[#allocation3 + $0x50] sm:$0xff]
        %v3155 = vld [vmem:[#allocation3 + $0x58] sm:$0xff]
        %v3156 = vld [vmem:[#allocation3 + $0x60] sm:$0xff]
        %v3157 = vld [vmem:[#allocation3 + $0x68] sm:$0xff]
        %v3158 = vld [vmem:[#allocation3 + $0x70] sm:$0xff]
        %v3159 = vld [vmem:[#allocation3 + $0x78] sm:$0xff]
        %v3160 = vld [vmem:[#allocation3 + $0x80] sm:$0xff]
        %v3161 = vld [vmem:[#allocation3 + $0x88] sm:$0xff]
        %v3162 = vld [vmem:[#allocation3 + $0x90] sm:$0xff]
        %v3163 = vld [vmem:[#allocation3 + $0x98] sm:$0xff]
        %v3164 = vld [vmem:[#allocation3 + $0xa0] sm:$0xff]
        %v3165 = vld [vmem:[#allocation3 + $0xa8] sm:$0xff]
        %v3166 = vld [vmem:[#allocation3 + $0xb0] sm:$0xff]
        %v3167 = vld [vmem:[#allocation3 + $0xb8] sm:$0xff]
        %v3168 = vld [vmem:[#allocation3 + $0xc0] sm:$0xff]
        %v3169 = vld [vmem:[#allocation3 + $0xc8] sm:$0xff]
        %v3170 = vld [vmem:[#allocation3 + $0xd0] sm:$0xff]
        %v3171 = vld [vmem:[#allocation3 + $0xd8] sm:$0xff]
        %v3172 = vld [vmem:[#allocation3 + $0xe0] sm:$0xff]
        %v3173 = vld [vmem:[#allocation3 + $0xe8] sm:$0xff]
        %v3174 = vld [vmem:[#allocation3 + $0xf0] sm:$0xff]
        %v3175 = vld [vmem:[#allocation3 + $0xf8] sm:$0xff]
        %v3176 = vpack.c.bf16 %v3145, %v3144
        %v3177 = vpack.c.bf16 %v3147, %v3146
        %v3178 = vpack.c.bf16 %v3149, %v3148
        %v3179 = vpack.c.bf16 %v3151, %v3150
        %v3180 = vpack.c.bf16 %v3153, %v3152
        %v3181 = vpack.c.bf16 %v3155, %v3154
        %v3182 = vpack.c.bf16 %v3157, %v3156
        %v3183 = vpack.c.bf16 %v3159, %v3158
        %v3184 = vpack.c.bf16 %v3161, %v3160
        %v3185 = vpack.c.bf16 %v3163, %v3162
        %v3186 = vpack.c.bf16 %v3165, %v3164
        %v3187 = vpack.c.bf16 %v3167, %v3166
        %v3188 = vpack.c.bf16 %v3169, %v3168
        %v3189 = vpack.c.bf16 %v3171, %v3170
        %v3190 = vpack.c.bf16 %v3173, %v3172
        %v3191 = vpack.c.bf16 %v3175, %v3174
        %v3192 = vld [vmem:[%s1] sm:$0xf]
        %v3193 = vld [vmem:[%s1 + $0x4] sm:$0xf]
        %v3194 = vld [vmem:[%s1 + $0x8] sm:$0xf]
        %v3195 = vld [vmem:[%s1 + $0xc] sm:$0xf]
        %v3196 = vld [vmem:[%s1 + $0x10] sm:$0x3]
        %v3197 = vld [vmem:[%s2] sm:$0x1]
        %v3199 = vperm.slane %v3197, 0
        %v3206 = vunpack.c.l.b16 %v3192
        %v3207 = vunpack.c.l.b16 %v3193
        %v3208 = vunpack.c.l.b16 %v3194
        %v3209 = vunpack.c.l.b16 %v3195
        %v3210 = vunpack.c.l.b16 %v3196
        %v3211 = vpack.c.b16 %v3207, %v3206
        %v3212 = vpack.c.b16 %v3209, %v3208
        %v3213 = vpack.c.b16 %v3210, %v3210
        %vm3216 = vcmask 293888
        %v3218 = vsel %vm3216, %v3176, 0
        %v3221 = vsel %vm3216, %v3177, 0
        %v3224 = vsel %vm3216, %v3178, 0
        %v3227 = vsel %vm3216, %v3179, 0
        %v3230 = vsel %vm3216, %v3180, 0
        %v3233 = vsel %vm3216, %v3181, 0
        %v3236 = vsel %vm3216, %v3182, 0
        %v3239 = vsel %vm3216, %v3183, 0
        %v3242 = vsel %vm3216, %v3184, 0
        %v3245 = vsel %vm3216, %v3185, 0
        %v3248 = vsel %vm3216, %v3186, 0
        %v3251 = vsel %vm3216, %v3187, 0
        %v3254 = vsel %vm3216, %v3188, 0
        %v3257 = vsel %vm3216, %v3189, 0
        %v3260 = vsel %vm3216, %v3190, 0
        %v3263 = vsel %vm3216, %v3191, 0
        %vm3265 = vcmask 1041408
        %v3267 = vsel %vm3265, %v3213, 0
        %3269 = vmatpush.bf16.msra.mxu0 0
        %3270 = vmatpush.bf16.msra.mxu0 0
        %3271 = vmatpush.bf16.msra.mxu0 0
        %3272 = vmatpush.bf16.msra.mxu0 0
        %3273 = vmatpush.bf16.msra.mxu0 0
        %3274 = vmatpush.bf16.msra.mxu0 %v3267
        %3275 = vmatpush.bf16.msra.mxu0 %v3212
        %3276 = vmatpush.bf16.msra.mxu0 %v3211
        %3277 = vmatmul.bf16.gmra.mxu0 %v3218
        %v3278 = vpop.f32.mrf.mxu0
        %v3279 = vadd.f32 %v3199, %v3278
        %v3280 = vpop.f32.mrf.mxu0
        %v3281 = vadd.f32 %v3199, %v3280
        %3282 = vmatmul.bf16.gmra.mxu0 %v3221
        %v3283 = vpop.f32.mrf.mxu0
        %v3284 = vadd.f32 %v3199, %v3283
        %v3285 = vpop.f32.mrf.mxu0
        %v3286 = vadd.f32 %v3199, %v3285
        %3287 = vmatmul.bf16.gmra.mxu0 %v3224
        %v3288 = vpop.f32.mrf.mxu0
        %v3289 = vadd.f32 %v3199, %v3288
        %v3290 = vpop.f32.mrf.mxu0
        %v3291 = vadd.f32 %v3199, %v3290
        %3292 = vmatmul.bf16.gmra.mxu0 %v3227
        %v3293 = vpop.f32.mrf.mxu0
        %v3294 = vadd.f32 %v3199, %v3293
        %v3295 = vpop.f32.mrf.mxu0
        %v3296 = vadd.f32 %v3199, %v3295
        %3297 = vmatmul.bf16.gmra.mxu0 %v3230
        %v3298 = vpop.f32.mrf.mxu0
        %v3299 = vadd.f32 %v3199, %v3298
        %v3300 = vpop.f32.mrf.mxu0
        %v3301 = vadd.f32 %v3199, %v3300
        %3302 = vmatmul.bf16.gmra.mxu0 %v3233
        %v3303 = vpop.f32.mrf.mxu0
        %v3304 = vadd.f32 %v3199, %v3303
        %v3305 = vpop.f32.mrf.mxu0
        %v3306 = vadd.f32 %v3199, %v3305
        %3307 = vmatmul.bf16.gmra.mxu0 %v3236
        %v3308 = vpop.f32.mrf.mxu0
        %v3309 = vadd.f32 %v3199, %v3308
        %v3310 = vpop.f32.mrf.mxu0
        %v3311 = vadd.f32 %v3199, %v3310
        %3312 = vmatmul.bf16.gmra.mxu0 %v3239
        %v3313 = vpop.f32.mrf.mxu0
        %v3314 = vadd.f32 %v3199, %v3313
        %v3315 = vpop.f32.mrf.mxu0
        %v3316 = vadd.f32 %v3199, %v3315
        %3317 = vmatmul.bf16.gmra.mxu0 %v3242
        %v3318 = vpop.f32.mrf.mxu0
        %v3319 = vadd.f32 %v3199, %v3318
        %v3320 = vpop.f32.mrf.mxu0
        %v3321 = vadd.f32 %v3199, %v3320
        %3322 = vmatmul.bf16.gmra.mxu0 %v3245
        %v3323 = vpop.f32.mrf.mxu0
        %v3324 = vadd.f32 %v3199, %v3323
        %v3325 = vpop.f32.mrf.mxu0
        %v3326 = vadd.f32 %v3199, %v3325
        %3327 = vmatmul.bf16.gmra.mxu0 %v3248
        %v3328 = vpop.f32.mrf.mxu0
        %v3329 = vadd.f32 %v3199, %v3328
        %v3330 = vpop.f32.mrf.mxu0
        %v3331 = vadd.f32 %v3199, %v3330
        %3332 = vmatmul.bf16.gmra.mxu0 %v3251
        %v3333 = vpop.f32.mrf.mxu0
        %v3334 = vadd.f32 %v3199, %v3333
        %v3335 = vpop.f32.mrf.mxu0
        %v3336 = vadd.f32 %v3199, %v3335
        %3337 = vmatmul.bf16.gmra.mxu0 %v3254
        %v3338 = vpop.f32.mrf.mxu0
        %v3339 = vadd.f32 %v3199, %v3338
        %v3340 = vpop.f32.mrf.mxu0
        %v3341 = vadd.f32 %v3199, %v3340
        %3342 = vmatmul.bf16.gmra.mxu0 %v3257
        %v3343 = vpop.f32.mrf.mxu0
        %v3344 = vadd.f32 %v3199, %v3343
        %v3345 = vpop.f32.mrf.mxu0
        %v3346 = vadd.f32 %v3199, %v3345
        %3347 = vmatmul.bf16.gmra.mxu0 %v3260
        %v3348 = vpop.f32.mrf.mxu0
        %v3349 = vadd.f32 %v3199, %v3348
        %v3350 = vpop.f32.mrf.mxu0
        %v3351 = vadd.f32 %v3199, %v3350
        %3352 = vmatmul.bf16.gmra.mxu0 %v3263
        %v3353 = vpop.f32.mrf.mxu0
        %v3354 = vadd.f32 %v3199, %v3353
        %v3355 = vpop.f32.mrf.mxu0
        %v3356 = vadd.f32 %v3199, %v3355
        %3357 = vdwg.mxu0
        %v3358 = vmax.f32 %v3279, 0.0
        %v3359 = vmax.f32 %v3281, 0.0
        %v3360 = vmax.f32 %v3284, 0.0
        %v3361 = vmax.f32 %v3286, 0.0
        %v3362 = vmax.f32 %v3289, 0.0
        %v3363 = vmax.f32 %v3291, 0.0
        %v3364 = vmax.f32 %v3294, 0.0
        %v3365 = vmax.f32 %v3296, 0.0
        %v3366 = vmax.f32 %v3299, 0.0
        %v3367 = vmax.f32 %v3301, 0.0
        %v3368 = vmax.f32 %v3304, 0.0
        %v3369 = vmax.f32 %v3306, 0.0
        %v3370 = vmax.f32 %v3309, 0.0
        %v3371 = vmax.f32 %v3311, 0.0
        %v3372 = vmax.f32 %v3314, 0.0
        %v3373 = vmax.f32 %v3316, 0.0
        %v3374 = vmax.f32 %v3319, 0.0
        %v3375 = vmax.f32 %v3321, 0.0
        %v3376 = vmax.f32 %v3324, 0.0
        %v3377 = vmax.f32 %v3326, 0.0
        %v3378 = vmax.f32 %v3329, 0.0
        %v3379 = vmax.f32 %v3331, 0.0
        %v3380 = vmax.f32 %v3334, 0.0
        %v3381 = vmax.f32 %v3336, 0.0
        %v3382 = vmax.f32 %v3339, 0.0
        %v3383 = vmax.f32 %v3341, 0.0
        %v3384 = vmax.f32 %v3344, 0.0
        %v3385 = vmax.f32 %v3346, 0.0
        %v3386 = vmax.f32 %v3349, 0.0
        %v3387 = vmax.f32 %v3351, 0.0
        %v3388 = vmax.f32 %v3354, 0.0
        %v3389 = vmax.f32 %v3356, 0.0
        %vm3390 = vcmask 261120
        %3391 = vst.msk [vmem:[#allocation4] sm:$0xff] %vm3390, 0.0
        %3392 = vst.msk [vmem:[#allocation4 + $0x8] sm:$0xff] %vm3390, 0.0
        %3393 = vst.msk [vmem:[#allocation4 + $0x10] sm:$0xff] %vm3390, 0.0
        %3394 = vst.msk [vmem:[#allocation4 + $0x18] sm:$0xff] %vm3390, 0.0
        %3395 = vst.msk [vmem:[#allocation4 + $0x20] sm:$0xff] %vm3390, 0.0
        %3396 = vst.msk [vmem:[#allocation4 + $0x28] sm:$0xff] %vm3390, 0.0
        %3397 = vst.msk [vmem:[#allocation4 + $0x30] sm:$0xff] %vm3390, 0.0
        %3398 = vst.msk [vmem:[#allocation4 + $0x38] sm:$0xff] %vm3390, 0.0
        %3399 = vst.msk [vmem:[#allocation4 + $0x40] sm:$0xff] %vm3390, 0.0
        %3400 = vst.msk [vmem:[#allocation4 + $0x48] sm:$0xff] %vm3390, 0.0
        %3401 = vst.msk [vmem:[#allocation4 + $0x50] sm:$0xff] %vm3390, 0.0
        %3402 = vst.msk [vmem:[#allocation4 + $0x58] sm:$0xff] %vm3390, 0.0
        %3403 = vst.msk [vmem:[#allocation4 + $0x60] sm:$0xff] %vm3390, 0.0
        %3404 = vst.msk [vmem:[#allocation4 + $0x68] sm:$0xff] %vm3390, 0.0
        %3405 = vst.msk [vmem:[#allocation4 + $0x70] sm:$0xff] %vm3390, 0.0
        %3406 = vst.msk [vmem:[#allocation4 + $0x78] sm:$0xff] %vm3390, 0.0
        %3407 = vst.msk [vmem:[#allocation4 + $0x80] sm:$0xff] %vm3390, 0.0
        %3408 = vst.msk [vmem:[#allocation4 + $0x88] sm:$0xff] %vm3390, 0.0
        %3409 = vst.msk [vmem:[#allocation4 + $0x90] sm:$0xff] %vm3390, 0.0
        %3410 = vst.msk [vmem:[#allocation4 + $0x98] sm:$0xff] %vm3390, 0.0
        %3411 = vst.msk [vmem:[#allocation4 + $0xa0] sm:$0xff] %vm3390, 0.0
        %3412 = vst.msk [vmem:[#allocation4 + $0xa8] sm:$0xff] %vm3390, 0.0
        %3413 = vst.msk [vmem:[#allocation4 + $0xb0] sm:$0xff] %vm3390, 0.0
        %3414 = vst.msk [vmem:[#allocation4 + $0xb8] sm:$0xff] %vm3390, 0.0
        %3415 = vst.msk [vmem:[#allocation4 + $0xc0] sm:$0xff] %vm3390, 0.0
        %3416 = vst.msk [vmem:[#allocation4 + $0xc8] sm:$0xff] %vm3390, 0.0
        %3417 = vst.msk [vmem:[#allocation4 + $0xd0] sm:$0xff] %vm3390, 0.0
        %3418 = vst.msk [vmem:[#allocation4 + $0xd8] sm:$0xff] %vm3390, 0.0
        %3419 = vst.msk [vmem:[#allocation4 + $0xe0] sm:$0xff] %vm3390, 0.0
        %3420 = vst.msk [vmem:[#allocation4 + $0xe8] sm:$0xff] %vm3390, 0.0
        %3421 = vst.msk [vmem:[#allocation4 + $0xf0] sm:$0xff] %vm3390, 0.0
        %3422 = vst.msk [vmem:[#allocation4 + $0xf8] sm:$0xff] %vm3390, 0.0
        %3423 = vst.msk [vmem:[#allocation4 + $0x100] sm:$0xff] %vm3390, 0.0
        %3424 = vst.msk [vmem:[#allocation4 + $0x108] sm:$0xff] %vm3390, 0.0
        %3425 = vst.msk [vmem:[#allocation4 + $0x110] sm:$0xff] %vm3390, 0.0
        %3426 = vst.msk [vmem:[#allocation4 + $0x118] sm:$0xff] %vm3390, 0.0
        %3427 = vst.msk [vmem:[#allocation4 + $0x120] sm:$0xff] %vm3390, 0.0
        %3428 = vst.msk [vmem:[#allocation4 + $0x128] sm:$0xff] %vm3390, 0.0
        %3429 = vst.msk [vmem:[#allocation4 + $0x130] sm:$0xff] %vm3390, 0.0
        %3430 = vst.msk [vmem:[#allocation4 + $0x138] sm:$0xff] %vm3390, 0.0
        %3431 = vst.msk [vmem:[#allocation4 + $0x20] sm:$0xff] %vm3390, %v3358
        %3432 = vst.msk [vmem:[#allocation4 + $0x28] sm:$0xff] %vm3390, %v3359
        %3433 = vst.msk [vmem:[#allocation4 + $0x30] sm:$0xff] %vm3390, %v3360
        %3434 = vst.msk [vmem:[#allocation4 + $0x38] sm:$0xff] %vm3390, %v3361
        %3435 = vst.msk [vmem:[#allocation4 + $0x40] sm:$0xff] %vm3390, %v3362
        %3436 = vst.msk [vmem:[#allocation4 + $0x48] sm:$0xff] %vm3390, %v3363
        %3437 = vst.msk [vmem:[#allocation4 + $0x50] sm:$0xff] %vm3390, %v3364
        %3438 = vst.msk [vmem:[#allocation4 + $0x58] sm:$0xff] %vm3390, %v3365
        %3439 = vst.msk [vmem:[#allocation4 + $0x60] sm:$0xff] %vm3390, %v3366
        %3440 = vst.msk [vmem:[#allocation4 + $0x68] sm:$0xff] %vm3390, %v3367
        %3441 = vst.msk [vmem:[#allocation4 + $0x70] sm:$0xff] %vm3390, %v3368
        %3442 = vst.msk [vmem:[#allocation4 + $0x78] sm:$0xff] %vm3390, %v3369
        %3443 = vst.msk [vmem:[#allocation4 + $0x80] sm:$0xff] %vm3390, %v3370
        %3444 = vst.msk [vmem:[#allocation4 + $0x88] sm:$0xff] %vm3390, %v3371
        %3445 = vst.msk [vmem:[#allocation4 + $0x90] sm:$0xff] %vm3390, %v3372
        %3446 = vst.msk [vmem:[#allocation4 + $0x98] sm:$0xff] %vm3390, %v3373
        %3447 = vst.msk [vmem:[#allocation4 + $0xa0] sm:$0xff] %vm3390, %v3374
        %3448 = vst.msk [vmem:[#allocation4 + $0xa8] sm:$0xff] %vm3390, %v3375
        %3449 = vst.msk [vmem:[#allocation4 + $0xb0] sm:$0xff] %vm3390, %v3376
        %3450 = vst.msk [vmem:[#allocation4 + $0xb8] sm:$0xff] %vm3390, %v3377
        %3451 = vst.msk [vmem:[#allocation4 + $0xc0] sm:$0xff] %vm3390, %v3378
        %3452 = vst.msk [vmem:[#allocation4 + $0xc8] sm:$0xff] %vm3390, %v3379
        %3453 = vst.msk [vmem:[#allocation4 + $0xd0] sm:$0xff] %vm3390, %v3380
        %3454 = vst.msk [vmem:[#allocation4 + $0xd8] sm:$0xff] %vm3390, %v3381
        %3455 = vst.msk [vmem:[#allocation4 + $0xe0] sm:$0xff] %vm3390, %v3382
        %3456 = vst.msk [vmem:[#allocation4 + $0xe8] sm:$0xff] %vm3390, %v3383
        %3457 = vst.msk [vmem:[#allocation4 + $0xf0] sm:$0xff] %vm3390, %v3384
        %3458 = vst.msk [vmem:[#allocation4 + $0xf8] sm:$0xff] %vm3390, %v3385
        %3459 = vst.msk [vmem:[#allocation4 + $0x100] sm:$0xff] %vm3390, %v3386
        %3460 = vst.msk [vmem:[#allocation4 + $0x108] sm:$0xff] %vm3390, %v3387
        %3461 = vst.msk [vmem:[#allocation4 + $0x110] sm:$0xff] %vm3390, %v3388
        %3462 = vst.msk [vmem:[#allocation4 + $0x118] sm:$0xff] %vm3390, %v3389
        %v3463 = vld [vmem:[#allocation4 + $0xf] sm:$0xff]
        %v3464 = vld [vmem:[#allocation4 + $0x17] sm:$0xff]
        %v3465 = vld [vmem:[#allocation4 + $0x1f] sm:$0xff]
        %v3466 = vld [vmem:[#allocation4 + $0x27] sm:$0xff]
        %v3467 = vld [vmem:[#allocation4 + $0x2f] sm:$0xff]
        %v3468 = vld [vmem:[#allocation4 + $0x37] sm:$0xff]
        %v3469 = vld [vmem:[#allocation4 + $0x3f] sm:$0xff]
        %v3470 = vld [vmem:[#allocation4 + $0x47] sm:$0xff]
        %v3471 = vld [vmem:[#allocation4 + $0x4f] sm:$0xff]
        %v3472 = vld [vmem:[#allocation4 + $0x57] sm:$0xff]
        %v3473 = vld [vmem:[#allocation4 + $0x5f] sm:$0xff]
        %v3474 = vld [vmem:[#allocation4 + $0x67] sm:$0xff]
        %v3475 = vld [vmem:[#allocation4 + $0x6f] sm:$0xff]
        %v3476 = vld [vmem:[#allocation4 + $0x77] sm:$0xff]
        %v3477 = vld [vmem:[#allocation4 + $0x7f] sm:$0xff]
        %v3478 = vld [vmem:[#allocation4 + $0x87] sm:$0xff]
        %v3479 = vld [vmem:[#allocation4 + $0x8f] sm:$0xff]
        %v3480 = vld [vmem:[#allocation4 + $0x97] sm:$0xff]
        %v3481 = vld [vmem:[#allocation4 + $0x9f] sm:$0xff]
        %v3482 = vld [vmem:[#allocation4 + $0xa7] sm:$0xff]
        %v3483 = vld [vmem:[#allocation4 + $0xaf] sm:$0xff]
        %v3484 = vld [vmem:[#allocation4 + $0xb7] sm:$0xff]
        %v3485 = vld [vmem:[#allocation4 + $0xbf] sm:$0xff]
        %v3486 = vld [vmem:[#allocation4 + $0xc7] sm:$0xff]
        %v3487 = vld [vmem:[#allocation4 + $0xcf] sm:$0xff]
        %v3488 = vld [vmem:[#allocation4 + $0xd7] sm:$0xff]
        %v3489 = vld [vmem:[#allocation4 + $0xdf] sm:$0xff]
        %v3490 = vld [vmem:[#allocation4 + $0xe7] sm:$0xff]
        %v3491 = vld [vmem:[#allocation4 + $0xef] sm:$0xff]
        %v3492 = vld [vmem:[#allocation4 + $0xf7] sm:$0xff]
        %v3493 = vld [vmem:[#allocation4 + $0xff] sm:$0xff]
        %v3494 = vld [vmem:[#allocation4 + $0x107] sm:$0xff]
        %v3495 = vsel %vm1248, %v3463, 0.0
        %v3496 = vsel %vm1249, %v3464, 0.0
        %v3497 = vsel %vm1250, %v3465, 0.0
        %v3498 = vsel %vm1251, %v3466, 0.0
        %v3499 = vsel %vm1252, %v3467, 0.0
        %v3500 = vsel %vm1253, %v3468, 0.0
        %v3501 = vsel %vm1254, %v3469, 0.0
        %v3502 = vsel %vm1255, %v3470, 0.0
        %v3503 = vsel %vm1256, %v3471, 0.0
        %v3504 = vsel %vm1257, %v3472, 0.0
        %v3505 = vsel %vm1258, %v3473, 0.0
        %v3506 = vsel %vm1259, %v3474, 0.0
        %v3507 = vsel %vm1260, %v3475, 0.0
        %v3508 = vsel %vm1261, %v3476, 0.0
        %v3509 = vsel %vm1262, %v3477, 0.0
        %v3510 = vsel %vm1263, %v3478, 0.0
        %v3511 = vsel %vm1264, %v3479, 0.0
        %v3512 = vsel %vm1265, %v3480, 0.0
        %v3513 = vsel %vm1266, %v3481, 0.0
        %v3514 = vsel %vm1267, %v3482, 0.0
        %v3515 = vsel %vm1268, %v3483, 0.0
        %v3516 = vsel %vm1269, %v3484, 0.0
        %v3517 = vsel %vm1270, %v3485, 0.0
        %v3518 = vsel %vm1271, %v3486, 0.0
        %v3519 = vsel %vm1272, %v3487, 0.0
        %v3520 = vsel %vm1273, %v3488, 0.0
        %v3521 = vsel %vm1274, %v3489, 0.0
        %v3522 = vsel %vm1275, %v3490, 0.0
        %v3523 = vsel %vm1276, %v3491, 0.0
        %v3524 = vsel %vm1277, %v3492, 0.0
        %v3525 = vsel %vm1278, %v3493, 0.0
        %v3526 = vsel %vm1279, %v3494, 0.0
        %3527 = vst.msk [vmem:[#allocation5] sm:$0xff] %vm3390, %v3495
        %3528 = vst.msk [vmem:[#allocation5 + $0x18] sm:$0xff] %vm3390, %v3496
        %3529 = vst.msk [vmem:[#allocation5 + $0x30] sm:$0xff] %vm3390, %v3497
        %3530 = vst.msk [vmem:[#allocation5 + $0x48] sm:$0xff] %vm3390, %v3498
        %3531 = vst.msk [vmem:[#allocation5 + $0x60] sm:$0xff] %vm3390, %v3499
        %3532 = vst.msk [vmem:[#allocation5 + $0x78] sm:$0xff] %vm3390, %v3500
        %3533 = vst.msk [vmem:[#allocation5 + $0x90] sm:$0xff] %vm3390, %v3501
        %3534 = vst.msk [vmem:[#allocation5 + $0xa8] sm:$0xff] %vm3390, %v3502
        %3535 = vst.msk [vmem:[#allocation5 + $0xc0] sm:$0xff] %vm3390, %v3503
        %3536 = vst.msk [vmem:[#allocation5 + $0xd8] sm:$0xff] %vm3390, %v3504
        %3537 = vst.msk [vmem:[#allocation5 + $0xf0] sm:$0xff] %vm3390, %v3505
        %3538 = vst.msk [vmem:[#allocation5 + $0x108] sm:$0xff] %vm3390, %v3506
        %3539 = vst.msk [vmem:[#allocation5 + $0x120] sm:$0xff] %vm3390, %v3507
        %3540 = vst.msk [vmem:[#allocation5 + $0x138] sm:$0xff] %vm3390, %v3508
        %3541 = vst.msk [vmem:[#allocation5 + $0x150] sm:$0xff] %vm3390, %v3509
        %3542 = vst.msk [vmem:[#allocation5 + $0x168] sm:$0xff] %vm3390, %v3510
        %3543 = vst.msk [vmem:[#allocation5 + $0x180] sm:$0xff] %vm3390, %v3511
        %3544 = vst.msk [vmem:[#allocation5 + $0x198] sm:$0xff] %vm3390, %v3512
        %3545 = vst.msk [vmem:[#allocation5 + $0x1b0] sm:$0xff] %vm3390, %v3513
        %3546 = vst.msk [vmem:[#allocation5 + $0x1c8] sm:$0xff] %vm3390, %v3514
        %3547 = vst.msk [vmem:[#allocation5 + $0x1e0] sm:$0xff] %vm3390, %v3515
        %3548 = vst.msk [vmem:[#allocation5 + $0x1f8] sm:$0xff] %vm3390, %v3516
        %3549 = vst.msk [vmem:[#allocation5 + $0x210] sm:$0xff] %vm3390, %v3517
        %3550 = vst.msk [vmem:[#allocation5 + $0x228] sm:$0xff] %vm3390, %v3518
        %3551 = vst.msk [vmem:[#allocation5 + $0x240] sm:$0xff] %vm3390, %v3519
        %3552 = vst.msk [vmem:[#allocation5 + $0x258] sm:$0xff] %vm3390, %v3520
        %3553 = vst.msk [vmem:[#allocation5 + $0x270] sm:$0xff] %vm3390, %v3521
        %3554 = vst.msk [vmem:[#allocation5 + $0x288] sm:$0xff] %vm3390, %v3522
        %3555 = vst.msk [vmem:[#allocation5 + $0x2a0] sm:$0xff] %vm3390, %v3523
        %3556 = vst.msk [vmem:[#allocation5 + $0x2b8] sm:$0xff] %vm3390, %v3524
        %3557 = vst.msk [vmem:[#allocation5 + $0x2d0] sm:$0xff] %vm3390, %v3525
        %3558 = vst.msk [vmem:[#allocation5 + $0x2e8] sm:$0xff] %vm3390, %v3526
        %v3559 = vld [vmem:[#allocation4 + $0x10] sm:$0xff]
        %v3560 = vld [vmem:[#allocation4 + $0x18] sm:$0xff]
        %v3561 = vld [vmem:[#allocation4 + $0x20] sm:$0xff]
        %v3562 = vld [vmem:[#allocation4 + $0x28] sm:$0xff]
        %v3563 = vld [vmem:[#allocation4 + $0x30] sm:$0xff]
        %v3564 = vld [vmem:[#allocation4 + $0x38] sm:$0xff]
        %v3565 = vld [vmem:[#allocation4 + $0x40] sm:$0xff]
        %v3566 = vld [vmem:[#allocation4 + $0x48] sm:$0xff]
        %v3567 = vld [vmem:[#allocation4 + $0x50] sm:$0xff]
        %v3568 = vld [vmem:[#allocation4 + $0x58] sm:$0xff]
        %v3569 = vld [vmem:[#allocation4 + $0x60] sm:$0xff]
        %v3570 = vld [vmem:[#allocation4 + $0x68] sm:$0xff]
        %v3571 = vld [vmem:[#allocation4 + $0x70] sm:$0xff]
        %v3572 = vld [vmem:[#allocation4 + $0x78] sm:$0xff]
        %v3573 = vld [vmem:[#allocation4 + $0x80] sm:$0xff]
        %v3574 = vld [vmem:[#allocation4 + $0x88] sm:$0xff]
        %v3575 = vld [vmem:[#allocation4 + $0x90] sm:$0xff]
        %v3576 = vld [vmem:[#allocation4 + $0x98] sm:$0xff]
        %v3577 = vld [vmem:[#allocation4 + $0xa0] sm:$0xff]
        %v3578 = vld [vmem:[#allocation4 + $0xa8] sm:$0xff]
        %v3579 = vld [vmem:[#allocation4 + $0xb0] sm:$0xff]
        %v3580 = vld [vmem:[#allocation4 + $0xb8] sm:$0xff]
        %v3581 = vld [vmem:[#allocation4 + $0xc0] sm:$0xff]
        %v3582 = vld [vmem:[#allocation4 + $0xc8] sm:$0xff]
        %v3583 = vld [vmem:[#allocation4 + $0xd0] sm:$0xff]
        %v3584 = vld [vmem:[#allocation4 + $0xd8] sm:$0xff]
        %v3585 = vld [vmem:[#allocation4 + $0xe0] sm:$0xff]
        %v3586 = vld [vmem:[#allocation4 + $0xe8] sm:$0xff]
        %v3587 = vld [vmem:[#allocation4 + $0xf0] sm:$0xff]
        %v3588 = vld [vmem:[#allocation4 + $0xf8] sm:$0xff]
        %v3589 = vld [vmem:[#allocation4 + $0x100] sm:$0xff]
        %v3590 = vld [vmem:[#allocation4 + $0x108] sm:$0xff]
        %3623 = vrot.lane.b32.xlu0 %v3559, 32
        %v3624 = vpop.permute.xlu0 %3623
        %3625 = vrot.lane.b32.xlu0 %v3560, 32
        %v3626 = vpop.permute.xlu0 %3625
        %3627 = vrot.lane.b32.xlu0 %v3561, 32
        %v3628 = vpop.permute.xlu0 %3627
        %3629 = vrot.lane.b32.xlu0 %v3562, 32
        %v3630 = vpop.permute.xlu0 %3629
        %3631 = vrot.lane.b32.xlu0 %v3563, 32
        %v3632 = vpop.permute.xlu0 %3631
        %3633 = vrot.lane.b32.xlu0 %v3564, 32
        %v3634 = vpop.permute.xlu0 %3633
        %3635 = vrot.lane.b32.xlu0 %v3565, 32
        %v3636 = vpop.permute.xlu0 %3635
        %3637 = vrot.lane.b32.xlu0 %v3566, 32
        %v3638 = vpop.permute.xlu0 %3637
        %3639 = vrot.lane.b32.xlu0 %v3567, 32
        %v3640 = vpop.permute.xlu0 %3639
        %3641 = vrot.lane.b32.xlu0 %v3568, 32
        %v3642 = vpop.permute.xlu0 %3641
        %3643 = vrot.lane.b32.xlu0 %v3569, 32
        %v3644 = vpop.permute.xlu0 %3643
        %3645 = vrot.lane.b32.xlu0 %v3570, 32
        %v3646 = vpop.permute.xlu0 %3645
        %3647 = vrot.lane.b32.xlu0 %v3571, 32
        %v3648 = vpop.permute.xlu0 %3647
        %3649 = vrot.lane.b32.xlu0 %v3572, 32
        %v3650 = vpop.permute.xlu0 %3649
        %3651 = vrot.lane.b32.xlu0 %v3573, 32
        %v3652 = vpop.permute.xlu0 %3651
        %3653 = vrot.lane.b32.xlu0 %v3574, 32
        %v3654 = vpop.permute.xlu0 %3653
        %3655 = vrot.lane.b32.xlu0 %v3575, 32
        %v3656 = vpop.permute.xlu0 %3655
        %3657 = vrot.lane.b32.xlu0 %v3576, 32
        %v3658 = vpop.permute.xlu0 %3657
        %3659 = vrot.lane.b32.xlu0 %v3577, 32
        %v3660 = vpop.permute.xlu0 %3659
        %3661 = vrot.lane.b32.xlu0 %v3578, 32
        %v3662 = vpop.permute.xlu0 %3661
        %3663 = vrot.lane.b32.xlu0 %v3579, 32
        %v3664 = vpop.permute.xlu0 %3663
        %3665 = vrot.lane.b32.xlu0 %v3580, 32
        %v3666 = vpop.permute.xlu0 %3665
        %3667 = vrot.lane.b32.xlu0 %v3581, 32
        %v3668 = vpop.permute.xlu0 %3667
        %3669 = vrot.lane.b32.xlu0 %v3582, 32
        %v3670 = vpop.permute.xlu0 %3669
        %3671 = vrot.lane.b32.xlu0 %v3583, 32
        %v3672 = vpop.permute.xlu0 %3671
        %3673 = vrot.lane.b32.xlu0 %v3584, 32
        %v3674 = vpop.permute.xlu0 %3673
        %3675 = vrot.lane.b32.xlu0 %v3585, 32
        %v3676 = vpop.permute.xlu0 %3675
        %3677 = vrot.lane.b32.xlu0 %v3586, 32
        %v3678 = vpop.permute.xlu0 %3677
        %3679 = vrot.lane.b32.xlu0 %v3587, 32
        %v3680 = vpop.permute.xlu0 %3679
        %3681 = vrot.lane.b32.xlu0 %v3588, 32
        %v3682 = vpop.permute.xlu0 %3681
        %3683 = vrot.lane.b32.xlu0 %v3589, 32
        %v3684 = vpop.permute.xlu0 %3683
        %3685 = vrot.lane.b32.xlu0 %v3590, 32
        %v3686 = vpop.permute.xlu0 %3685
        %vm3719 = vcmask 523520
        %3720 = vst.msk [vmem:[#allocation5] sm:$0xff] %vm3719, %v3624
        %3721 = vst.msk [vmem:[#allocation5 + $0x18] sm:$0xff] %vm3719, %v3626
        %3722 = vst.msk [vmem:[#allocation5 + $0x30] sm:$0xff] %vm3719, %v3628
        %3723 = vst.msk [vmem:[#allocation5 + $0x48] sm:$0xff] %vm3719, %v3630
        %3724 = vst.msk [vmem:[#allocation5 + $0x60] sm:$0xff] %vm3719, %v3632
        %3725 = vst.msk [vmem:[#allocation5 + $0x78] sm:$0xff] %vm3719, %v3634
        %3726 = vst.msk [vmem:[#allocation5 + $0x90] sm:$0xff] %vm3719, %v3636
        %3727 = vst.msk [vmem:[#allocation5 + $0xa8] sm:$0xff] %vm3719, %v3638
        %3728 = vst.msk [vmem:[#allocation5 + $0xc0] sm:$0xff] %vm3719, %v3640
        %3729 = vst.msk [vmem:[#allocation5 + $0xd8] sm:$0xff] %vm3719, %v3642
        %3730 = vst.msk [vmem:[#allocation5 + $0xf0] sm:$0xff] %vm3719, %v3644
        %3731 = vst.msk [vmem:[#allocation5 + $0x108] sm:$0xff] %vm3719, %v3646
        %3732 = vst.msk [vmem:[#allocation5 + $0x120] sm:$0xff] %vm3719, %v3648
        %3733 = vst.msk [vmem:[#allocation5 + $0x138] sm:$0xff] %vm3719, %v3650
        %3734 = vst.msk [vmem:[#allocation5 + $0x150] sm:$0xff] %vm3719, %v3652
        %3735 = vst.msk [vmem:[#allocation5 + $0x168] sm:$0xff] %vm3719, %v3654
        %3736 = vst.msk [vmem:[#allocation5 + $0x180] sm:$0xff] %vm3719, %v3656
        %3737 = vst.msk [vmem:[#allocation5 + $0x198] sm:$0xff] %vm3719, %v3658
        %3738 = vst.msk [vmem:[#allocation5 + $0x1b0] sm:$0xff] %vm3719, %v3660
        %3739 = vst.msk [vmem:[#allocation5 + $0x1c8] sm:$0xff] %vm3719, %v3662
        %3740 = vst.msk [vmem:[#allocation5 + $0x1e0] sm:$0xff] %vm3719, %v3664
        %3741 = vst.msk [vmem:[#allocation5 + $0x1f8] sm:$0xff] %vm3719, %v3666
        %3742 = vst.msk [vmem:[#allocation5 + $0x210] sm:$0xff] %vm3719, %v3668
        %3743 = vst.msk [vmem:[#allocation5 + $0x228] sm:$0xff] %vm3719, %v3670
        %3744 = vst.msk [vmem:[#allocation5 + $0x240] sm:$0xff] %vm3719, %v3672
        %3745 = vst.msk [vmem:[#allocation5 + $0x258] sm:$0xff] %vm3719, %v3674
        %3746 = vst.msk [vmem:[#allocation5 + $0x270] sm:$0xff] %vm3719, %v3676
        %3747 = vst.msk [vmem:[#allocation5 + $0x288] sm:$0xff] %vm3719, %v3678
        %3748 = vst.msk [vmem:[#allocation5 + $0x2a0] sm:$0xff] %vm3719, %v3680
        %3749 = vst.msk [vmem:[#allocation5 + $0x2b8] sm:$0xff] %vm3719, %v3682
        %3750 = vst.msk [vmem:[#allocation5 + $0x2d0] sm:$0xff] %vm3719, %v3684
        %3751 = vst.msk [vmem:[#allocation5 + $0x2e8] sm:$0xff] %vm3719, %v3686
        %v3752 = vld [vmem:[#allocation4 + $0x11] sm:$0xff]
        %v3753 = vld [vmem:[#allocation4 + $0x19] sm:$0xff]
        %v3754 = vld [vmem:[#allocation4 + $0x21] sm:$0xff]
        %v3755 = vld [vmem:[#allocation4 + $0x29] sm:$0xff]
        %v3756 = vld [vmem:[#allocation4 + $0x31] sm:$0xff]
        %v3757 = vld [vmem:[#allocation4 + $0x39] sm:$0xff]
        %v3758 = vld [vmem:[#allocation4 + $0x41] sm:$0xff]
        %v3759 = vld [vmem:[#allocation4 + $0x49] sm:$0xff]
        %v3760 = vld [vmem:[#allocation4 + $0x51] sm:$0xff]
        %v3761 = vld [vmem:[#allocation4 + $0x59] sm:$0xff]
        %v3762 = vld [vmem:[#allocation4 + $0x61] sm:$0xff]
        %v3763 = vld [vmem:[#allocation4 + $0x69] sm:$0xff]
        %v3764 = vld [vmem:[#allocation4 + $0x71] sm:$0xff]
        %v3765 = vld [vmem:[#allocation4 + $0x79] sm:$0xff]
        %v3766 = vld [vmem:[#allocation4 + $0x81] sm:$0xff]
        %v3767 = vld [vmem:[#allocation4 + $0x89] sm:$0xff]
        %v3768 = vld [vmem:[#allocation4 + $0x91] sm:$0xff]
        %v3769 = vld [vmem:[#allocation4 + $0x99] sm:$0xff]
        %v3770 = vld [vmem:[#allocation4 + $0xa1] sm:$0xff]
        %v3771 = vld [vmem:[#allocation4 + $0xa9] sm:$0xff]
        %v3772 = vld [vmem:[#allocation4 + $0xb1] sm:$0xff]
        %v3773 = vld [vmem:[#allocation4 + $0xb9] sm:$0xff]
        %v3774 = vld [vmem:[#allocation4 + $0xc1] sm:$0xff]
        %v3775 = vld [vmem:[#allocation4 + $0xc9] sm:$0xff]
        %v3776 = vld [vmem:[#allocation4 + $0xd1] sm:$0xff]
        %v3777 = vld [vmem:[#allocation4 + $0xd9] sm:$0xff]
        %v3778 = vld [vmem:[#allocation4 + $0xe1] sm:$0xff]
        %v3779 = vld [vmem:[#allocation4 + $0xe9] sm:$0xff]
        %v3780 = vld [vmem:[#allocation4 + $0xf1] sm:$0xff]
        %v3781 = vld [vmem:[#allocation4 + $0xf9] sm:$0xff]
        %v3782 = vld [vmem:[#allocation4 + $0x101] sm:$0xff]
        %v3783 = vld [vmem:[#allocation4 + $0x109] sm:$0xff]
        %v3784 = vsel %vm1633, %v3752, 0.0
        %v3785 = vsel %vm1634, %v3753, 0.0
        %v3786 = vsel %vm1635, %v3754, 0.0
        %v3787 = vsel %vm1636, %v3755, 0.0
        %v3788 = vsel %vm1637, %v3756, 0.0
        %v3789 = vsel %vm1638, %v3757, 0.0
        %v3790 = vsel %vm1639, %v3758, 0.0
        %v3791 = vsel %vm1640, %v3759, 0.0
        %v3792 = vsel %vm1641, %v3760, 0.0
        %v3793 = vsel %vm1642, %v3761, 0.0
        %v3794 = vsel %vm1643, %v3762, 0.0
        %v3795 = vsel %vm1644, %v3763, 0.0
        %v3796 = vsel %vm1645, %v3764, 0.0
        %v3797 = vsel %vm1646, %v3765, 0.0
        %v3798 = vsel %vm1647, %v3766, 0.0
        %v3799 = vsel %vm1648, %v3767, 0.0
        %v3800 = vsel %vm1649, %v3768, 0.0
        %v3801 = vsel %vm1650, %v3769, 0.0
        %v3802 = vsel %vm1651, %v3770, 0.0
        %v3803 = vsel %vm1652, %v3771, 0.0
        %v3804 = vsel %vm1653, %v3772, 0.0
        %v3805 = vsel %vm1654, %v3773, 0.0
        %v3806 = vsel %vm1655, %v3774, 0.0
        %v3807 = vsel %vm1656, %v3775, 0.0
        %v3808 = vsel %vm1657, %v3776, 0.0
        %v3809 = vsel %vm1658, %v3777, 0.0
        %v3810 = vsel %vm1659, %v3778, 0.0
        %v3811 = vsel %vm1660, %v3779, 0.0
        %v3812 = vsel %vm1661, %v3780, 0.0
        %v3813 = vsel %vm1662, %v3781, 0.0
        %v3814 = vsel %vm1663, %v3782, 0.0
        %v3815 = vsel %vm1664, %v3783, 0.0
        %3848 = vrot.lane.b32.xlu0 %v3784, 64
        %v3849 = vpop.permute.xlu0 %3848
        %3850 = vrot.lane.b32.xlu0 %v3785, 64
        %v3851 = vpop.permute.xlu0 %3850
        %3852 = vrot.lane.b32.xlu0 %v3786, 64
        %v3853 = vpop.permute.xlu0 %3852
        %3854 = vrot.lane.b32.xlu0 %v3787, 64
        %v3855 = vpop.permute.xlu0 %3854
        %3856 = vrot.lane.b32.xlu0 %v3788, 64
        %v3857 = vpop.permute.xlu0 %3856
        %3858 = vrot.lane.b32.xlu0 %v3789, 64
        %v3859 = vpop.permute.xlu0 %3858
        %3860 = vrot.lane.b32.xlu0 %v3790, 64
        %v3861 = vpop.permute.xlu0 %3860
        %3862 = vrot.lane.b32.xlu0 %v3791, 64
        %v3863 = vpop.permute.xlu0 %3862
        %3864 = vrot.lane.b32.xlu0 %v3792, 64
        %v3865 = vpop.permute.xlu0 %3864
        %3866 = vrot.lane.b32.xlu0 %v3793, 64
        %v3867 = vpop.permute.xlu0 %3866
        %3868 = vrot.lane.b32.xlu0 %v3794, 64
        %v3869 = vpop.permute.xlu0 %3868
        %3870 = vrot.lane.b32.xlu0 %v3795, 64
        %v3871 = vpop.permute.xlu0 %3870
        %3872 = vrot.lane.b32.xlu0 %v3796, 64
        %v3873 = vpop.permute.xlu0 %3872
        %3874 = vrot.lane.b32.xlu0 %v3797, 64
        %v3875 = vpop.permute.xlu0 %3874
        %3876 = vrot.lane.b32.xlu0 %v3798, 64
        %v3877 = vpop.permute.xlu0 %3876
        %3878 = vrot.lane.b32.xlu0 %v3799, 64
        %v3879 = vpop.permute.xlu0 %3878
        %3880 = vrot.lane.b32.xlu0 %v3800, 64
        %v3881 = vpop.permute.xlu0 %3880
        %3882 = vrot.lane.b32.xlu0 %v3801, 64
        %v3883 = vpop.permute.xlu0 %3882
        %3884 = vrot.lane.b32.xlu0 %v3802, 64
        %v3885 = vpop.permute.xlu0 %3884
        %3886 = vrot.lane.b32.xlu0 %v3803, 64
        %v3887 = vpop.permute.xlu0 %3886
        %3888 = vrot.lane.b32.xlu0 %v3804, 64
        %v3889 = vpop.permute.xlu0 %3888
        %3890 = vrot.lane.b32.xlu0 %v3805, 64
        %v3891 = vpop.permute.xlu0 %3890
        %3892 = vrot.lane.b32.xlu0 %v3806, 64
        %v3893 = vpop.permute.xlu0 %3892
        %3894 = vrot.lane.b32.xlu0 %v3807, 64
        %v3895 = vpop.permute.xlu0 %3894
        %3896 = vrot.lane.b32.xlu0 %v3808, 64
        %v3897 = vpop.permute.xlu0 %3896
        %3898 = vrot.lane.b32.xlu0 %v3809, 64
        %v3899 = vpop.permute.xlu0 %3898
        %3900 = vrot.lane.b32.xlu0 %v3810, 64
        %v3901 = vpop.permute.xlu0 %3900
        %3902 = vrot.lane.b32.xlu0 %v3811, 64
        %v3903 = vpop.permute.xlu0 %3902
        %3904 = vrot.lane.b32.xlu0 %v3812, 64
        %v3905 = vpop.permute.xlu0 %3904
        %3906 = vrot.lane.b32.xlu0 %v3813, 64
        %v3907 = vpop.permute.xlu0 %3906
        %3908 = vrot.lane.b32.xlu0 %v3814, 64
        %v3909 = vpop.permute.xlu0 %3908
        %3910 = vrot.lane.b32.xlu0 %v3815, 64
        %v3911 = vpop.permute.xlu0 %3910
        %vm3944 = vcmask 785920
        %3945 = vst.msk [vmem:[#allocation5] sm:$0xff] %vm3944, %v3849
        %3946 = vst.msk [vmem:[#allocation5 + $0x18] sm:$0xff] %vm3944, %v3851
        %3947 = vst.msk [vmem:[#allocation5 + $0x30] sm:$0xff] %vm3944, %v3853
        %3948 = vst.msk [vmem:[#allocation5 + $0x48] sm:$0xff] %vm3944, %v3855
        %3949 = vst.msk [vmem:[#allocation5 + $0x60] sm:$0xff] %vm3944, %v3857
        %3950 = vst.msk [vmem:[#allocation5 + $0x78] sm:$0xff] %vm3944, %v3859
        %3951 = vst.msk [vmem:[#allocation5 + $0x90] sm:$0xff] %vm3944, %v3861
        %3952 = vst.msk [vmem:[#allocation5 + $0xa8] sm:$0xff] %vm3944, %v3863
        %3953 = vst.msk [vmem:[#allocation5 + $0xc0] sm:$0xff] %vm3944, %v3865
        %3954 = vst.msk [vmem:[#allocation5 + $0xd8] sm:$0xff] %vm3944, %v3867
        %3955 = vst.msk [vmem:[#allocation5 + $0xf0] sm:$0xff] %vm3944, %v3869
        %3956 = vst.msk [vmem:[#allocation5 + $0x108] sm:$0xff] %vm3944, %v3871
        %3957 = vst.msk [vmem:[#allocation5 + $0x120] sm:$0xff] %vm3944, %v3873
        %3958 = vst.msk [vmem:[#allocation5 + $0x138] sm:$0xff] %vm3944, %v3875
        %3959 = vst.msk [vmem:[#allocation5 + $0x150] sm:$0xff] %vm3944, %v3877
        %3960 = vst.msk [vmem:[#allocation5 + $0x168] sm:$0xff] %vm3944, %v3879
        %3961 = vst.msk [vmem:[#allocation5 + $0x180] sm:$0xff] %vm3944, %v3881
        %3962 = vst.msk [vmem:[#allocation5 + $0x198] sm:$0xff] %vm3944, %v3883
        %3963 = vst.msk [vmem:[#allocation5 + $0x1b0] sm:$0xff] %vm3944, %v3885
        %3964 = vst.msk [vmem:[#allocation5 + $0x1c8] sm:$0xff] %vm3944, %v3887
        %3965 = vst.msk [vmem:[#allocation5 + $0x1e0] sm:$0xff] %vm3944, %v3889
        %3966 = vst.msk [vmem:[#allocation5 + $0x1f8] sm:$0xff] %vm3944, %v3891
        %3967 = vst.msk [vmem:[#allocation5 + $0x210] sm:$0xff] %vm3944, %v3893
        %3968 = vst.msk [vmem:[#allocation5 + $0x228] sm:$0xff] %vm3944, %v3895
        %3969 = vst.msk [vmem:[#allocation5 + $0x240] sm:$0xff] %vm3944, %v3897
        %3970 = vst.msk [vmem:[#allocation5 + $0x258] sm:$0xff] %vm3944, %v3899
        %3971 = vst.msk [vmem:[#allocation5 + $0x270] sm:$0xff] %vm3944, %v3901
        %3972 = vst.msk [vmem:[#allocation5 + $0x288] sm:$0xff] %vm3944, %v3903
        %3973 = vst.msk [vmem:[#allocation5 + $0x2a0] sm:$0xff] %vm3944, %v3905
        %3974 = vst.msk [vmem:[#allocation5 + $0x2b8] sm:$0xff] %vm3944, %v3907
        %3975 = vst.msk [vmem:[#allocation5 + $0x2d0] sm:$0xff] %vm3944, %v3909
        %3976 = vst.msk [vmem:[#allocation5 + $0x2e8] sm:$0xff] %vm3944, %v3911
        %v3977 = vld [vmem:[#allocation4 + $0x1f] sm:$0xff]
        %v3978 = vld [vmem:[#allocation4 + $0x27] sm:$0xff]
        %v3979 = vld [vmem:[#allocation4 + $0x2f] sm:$0xff]
        %v3980 = vld [vmem:[#allocation4 + $0x37] sm:$0xff]
        %v3981 = vld [vmem:[#allocation4 + $0x3f] sm:$0xff]
        %v3982 = vld [vmem:[#allocation4 + $0x47] sm:$0xff]
        %v3983 = vld [vmem:[#allocation4 + $0x4f] sm:$0xff]
        %v3984 = vld [vmem:[#allocation4 + $0x57] sm:$0xff]
        %v3985 = vld [vmem:[#allocation4 + $0x5f] sm:$0xff]
        %v3986 = vld [vmem:[#allocation4 + $0x67] sm:$0xff]
        %v3987 = vld [vmem:[#allocation4 + $0x6f] sm:$0xff]
        %v3988 = vld [vmem:[#allocation4 + $0x77] sm:$0xff]
        %v3989 = vld [vmem:[#allocation4 + $0x7f] sm:$0xff]
        %v3990 = vld [vmem:[#allocation4 + $0x87] sm:$0xff]
        %v3991 = vld [vmem:[#allocation4 + $0x8f] sm:$0xff]
        %v3992 = vld [vmem:[#allocation4 + $0x97] sm:$0xff]
        %v3993 = vld [vmem:[#allocation4 + $0x9f] sm:$0xff]
        %v3994 = vld [vmem:[#allocation4 + $0xa7] sm:$0xff]
        %v3995 = vld [vmem:[#allocation4 + $0xaf] sm:$0xff]
        %v3996 = vld [vmem:[#allocation4 + $0xb7] sm:$0xff]
        %v3997 = vld [vmem:[#allocation4 + $0xbf] sm:$0xff]
        %v3998 = vld [vmem:[#allocation4 + $0xc7] sm:$0xff]
        %v3999 = vld [vmem:[#allocation4 + $0xcf] sm:$0xff]
        %v4000 = vld [vmem:[#allocation4 + $0xd7] sm:$0xff]
        %v4001 = vld [vmem:[#allocation4 + $0xdf] sm:$0xff]
        %v4002 = vld [vmem:[#allocation4 + $0xe7] sm:$0xff]
        %v4003 = vld [vmem:[#allocation4 + $0xef] sm:$0xff]
        %v4004 = vld [vmem:[#allocation4 + $0xf7] sm:$0xff]
        %v4005 = vld [vmem:[#allocation4 + $0xff] sm:$0xff]
        %v4006 = vld [vmem:[#allocation4 + $0x107] sm:$0xff]
        %v4007 = vld [vmem:[#allocation4 + $0x10f] sm:$0xff]
        %v4008 = vld [vmem:[#allocation4 + $0x117] sm:$0xff]
        %v4009 = vsel %vm1248, %v3977, 0.0
        %v4010 = vsel %vm1249, %v3978, 0.0
        %v4011 = vsel %vm1250, %v3979, 0.0
        %v4012 = vsel %vm1251, %v3980, 0.0
        %v4013 = vsel %vm1252, %v3981, 0.0
        %v4014 = vsel %vm1253, %v3982, 0.0
        %v4015 = vsel %vm1254, %v3983, 0.0
        %v4016 = vsel %vm1255, %v3984, 0.0
        %v4017 = vsel %vm1256, %v3985, 0.0
        %v4018 = vsel %vm1257, %v3986, 0.0
        %v4019 = vsel %vm1258, %v3987, 0.0
        %v4020 = vsel %vm1259, %v3988, 0.0
        %v4021 = vsel %vm1260, %v3989, 0.0
        %v4022 = vsel %vm1261, %v3990, 0.0
        %v4023 = vsel %vm1262, %v3991, 0.0
        %v4024 = vsel %vm1263, %v3992, 0.0
        %v4025 = vsel %vm1264, %v3993, 0.0
        %v4026 = vsel %vm1265, %v3994, 0.0
        %v4027 = vsel %vm1266, %v3995, 0.0
        %v4028 = vsel %vm1267, %v3996, 0.0
        %v4029 = vsel %vm1268, %v3997, 0.0
        %v4030 = vsel %vm1269, %v3998, 0.0
        %v4031 = vsel %vm1270, %v3999, 0.0
        %v4032 = vsel %vm1271, %v4000, 0.0
        %v4033 = vsel %vm1272, %v4001, 0.0
        %v4034 = vsel %vm1273, %v4002, 0.0
        %v4035 = vsel %vm1274, %v4003, 0.0
        %v4036 = vsel %vm1275, %v4004, 0.0
        %v4037 = vsel %vm1276, %v4005, 0.0
        %v4038 = vsel %vm1277, %v4006, 0.0
        %v4039 = vsel %vm1278, %v4007, 0.0
        %v4040 = vsel %vm1279, %v4008, 0.0
        %4073 = vrot.lane.b32.xlu0 %v4009, 96
        %v4074 = vpop.permute.xlu0 %4073
        %4075 = vrot.lane.b32.xlu0 %v4010, 96
        %v4076 = vpop.permute.xlu0 %4075
        %4077 = vrot.lane.b32.xlu0 %v4011, 96
        %v4078 = vpop.permute.xlu0 %4077
        %4079 = vrot.lane.b32.xlu0 %v4012, 96
        %v4080 = vpop.permute.xlu0 %4079
        %4081 = vrot.lane.b32.xlu0 %v4013, 96
        %v4082 = vpop.permute.xlu0 %4081
        %4083 = vrot.lane.b32.xlu0 %v4014, 96
        %v4084 = vpop.permute.xlu0 %4083
        %4085 = vrot.lane.b32.xlu0 %v4015, 96
        %v4086 = vpop.permute.xlu0 %4085
        %4087 = vrot.lane.b32.xlu0 %v4016, 96
        %v4088 = vpop.permute.xlu0 %4087
        %4089 = vrot.lane.b32.xlu0 %v4017, 96
        %v4090 = vpop.permute.xlu0 %4089
        %4091 = vrot.lane.b32.xlu0 %v4018, 96
        %v4092 = vpop.permute.xlu0 %4091
        %4093 = vrot.lane.b32.xlu0 %v4019, 96
        %v4094 = vpop.permute.xlu0 %4093
        %4095 = vrot.lane.b32.xlu0 %v4020, 96
        %v4096 = vpop.permute.xlu0 %4095
        %4097 = vrot.lane.b32.xlu0 %v4021, 96
        %v4098 = vpop.permute.xlu0 %4097
        %4099 = vrot.lane.b32.xlu0 %v4022, 96
        %v4100 = vpop.permute.xlu0 %4099
        %4101 = vrot.lane.b32.xlu0 %v4023, 96
        %v4102 = vpop.permute.xlu0 %4101
        %4103 = vrot.lane.b32.xlu0 %v4024, 96
        %v4104 = vpop.permute.xlu0 %4103
        %4105 = vrot.lane.b32.xlu0 %v4025, 96
        %v4106 = vpop.permute.xlu0 %4105
        %4107 = vrot.lane.b32.xlu0 %v4026, 96
        %v4108 = vpop.permute.xlu0 %4107
        %4109 = vrot.lane.b32.xlu0 %v4027, 96
        %v4110 = vpop.permute.xlu0 %4109
        %4111 = vrot.lane.b32.xlu0 %v4028, 96
        %v4112 = vpop.permute.xlu0 %4111
        %4113 = vrot.lane.b32.xlu0 %v4029, 96
        %v4114 = vpop.permute.xlu0 %4113
        %4115 = vrot.lane.b32.xlu0 %v4030, 96
        %v4116 = vpop.permute.xlu0 %4115
        %4117 = vrot.lane.b32.xlu0 %v4031, 96
        %v4118 = vpop.permute.xlu0 %4117
        %4119 = vrot.lane.b32.xlu0 %v4032, 96
        %v4120 = vpop.permute.xlu0 %4119
        %4121 = vrot.lane.b32.xlu0 %v4033, 96
        %v4122 = vpop.permute.xlu0 %4121
        %4123 = vrot.lane.b32.xlu0 %v4034, 96
        %v4124 = vpop.permute.xlu0 %4123
        %4125 = vrot.lane.b32.xlu0 %v4035, 96
        %v4126 = vpop.permute.xlu0 %4125
        %4127 = vrot.lane.b32.xlu0 %v4036, 96
        %v4128 = vpop.permute.xlu0 %4127
        %4129 = vrot.lane.b32.xlu0 %v4037, 96
        %v4130 = vpop.permute.xlu0 %4129
        %4131 = vrot.lane.b32.xlu0 %v4038, 96
        %v4132 = vpop.permute.xlu0 %4131
        %4133 = vrot.lane.b32.xlu0 %v4039, 96
        %v4134 = vpop.permute.xlu0 %4133
        %4135 = vrot.lane.b32.xlu0 %v4040, 96
        %v4136 = vpop.permute.xlu0 %4135
        %vm4169 = vcmask 1048320
        %4170 = vst.msk [vmem:[#allocation5] sm:$0xff] %vm4169, %v4074
        %4171 = vst.msk [vmem:[#allocation5 + $0x18] sm:$0xff] %vm4169, %v4076
        %4172 = vst.msk [vmem:[#allocation5 + $0x30] sm:$0xff] %vm4169, %v4078
        %4173 = vst.msk [vmem:[#allocation5 + $0x48] sm:$0xff] %vm4169, %v4080
        %4174 = vst.msk [vmem:[#allocation5 + $0x60] sm:$0xff] %vm4169, %v4082
        %4175 = vst.msk [vmem:[#allocation5 + $0x78] sm:$0xff] %vm4169, %v4084
        %4176 = vst.msk [vmem:[#allocation5 + $0x90] sm:$0xff] %vm4169, %v4086
        %4177 = vst.msk [vmem:[#allocation5 + $0xa8] sm:$0xff] %vm4169, %v4088
        %4178 = vst.msk [vmem:[#allocation5 + $0xc0] sm:$0xff] %vm4169, %v4090
        %4179 = vst.msk [vmem:[#allocation5 + $0xd8] sm:$0xff] %vm4169, %v4092
        %4180 = vst.msk [vmem:[#allocation5 + $0xf0] sm:$0xff] %vm4169, %v4094
        %4181 = vst.msk [vmem:[#allocation5 + $0x108] sm:$0xff] %vm4169, %v4096
        %4182 = vst.msk [vmem:[#allocation5 + $0x120] sm:$0xff] %vm4169, %v4098
        %4183 = vst.msk [vmem:[#allocation5 + $0x138] sm:$0xff] %vm4169, %v4100
        %4184 = vst.msk [vmem:[#allocation5 + $0x150] sm:$0xff] %vm4169, %v4102
        %4185 = vst.msk [vmem:[#allocation5 + $0x168] sm:$0xff] %vm4169, %v4104
        %4186 = vst.msk [vmem:[#allocation5 + $0x180] sm:$0xff] %vm4169, %v4106
        %4187 = vst.msk [vmem:[#allocation5 + $0x198] sm:$0xff] %vm4169, %v4108
        %4188 = vst.msk [vmem:[#allocation5 + $0x1b0] sm:$0xff] %vm4169, %v4110
        %4189 = vst.msk [vmem:[#allocation5 + $0x1c8] sm:$0xff] %vm4169, %v4112
        %4190 = vst.msk [vmem:[#allocation5 + $0x1e0] sm:$0xff] %vm4169, %v4114
        %4191 = vst.msk [vmem:[#allocation5 + $0x1f8] sm:$0xff] %vm4169, %v4116
        %4192 = vst.msk [vmem:[#allocation5 + $0x210] sm:$0xff] %vm4169, %v4118
        %4193 = vst.msk [vmem:[#allocation5 + $0x228] sm:$0xff] %vm4169, %v4120
        %4194 = vst.msk [vmem:[#allocation5 + $0x240] sm:$0xff] %vm4169, %v4122
        %4195 = vst.msk [vmem:[#allocation5 + $0x258] sm:$0xff] %vm4169, %v4124
        %4196 = vst.msk [vmem:[#allocation5 + $0x270] sm:$0xff] %vm4169, %v4126
        %4197 = vst.msk [vmem:[#allocation5 + $0x288] sm:$0xff] %vm4169, %v4128
        %4198 = vst.msk [vmem:[#allocation5 + $0x2a0] sm:$0xff] %vm4169, %v4130
        %4199 = vst.msk [vmem:[#allocation5 + $0x2b8] sm:$0xff] %vm4169, %v4132
        %4200 = vst.msk [vmem:[#allocation5 + $0x2d0] sm:$0xff] %vm4169, %v4134
        %4201 = vst.msk [vmem:[#allocation5 + $0x2e8] sm:$0xff] %vm4169, %v4136
        %v4202 = vld [vmem:[#allocation4 + $0x20] sm:$0xff]
        %v4203 = vld [vmem:[#allocation4 + $0x28] sm:$0xff]
        %v4204 = vld [vmem:[#allocation4 + $0x30] sm:$0xff]
        %v4205 = vld [vmem:[#allocation4 + $0x38] sm:$0xff]
        %v4206 = vld [vmem:[#allocation4 + $0x40] sm:$0xff]
        %v4207 = vld [vmem:[#allocation4 + $0x48] sm:$0xff]
        %v4208 = vld [vmem:[#allocation4 + $0x50] sm:$0xff]
        %v4209 = vld [vmem:[#allocation4 + $0x58] sm:$0xff]
        %v4210 = vld [vmem:[#allocation4 + $0x60] sm:$0xff]
        %v4211 = vld [vmem:[#allocation4 + $0x68] sm:$0xff]
        %v4212 = vld [vmem:[#allocation4 + $0x70] sm:$0xff]
        %v4213 = vld [vmem:[#allocation4 + $0x78] sm:$0xff]
        %v4214 = vld [vmem:[#allocation4 + $0x80] sm:$0xff]
        %v4215 = vld [vmem:[#allocation4 + $0x88] sm:$0xff]
        %v4216 = vld [vmem:[#allocation4 + $0x90] sm:$0xff]
        %v4217 = vld [vmem:[#allocation4 + $0x98] sm:$0xff]
        %v4218 = vld [vmem:[#allocation4 + $0xa0] sm:$0xff]
        %v4219 = vld [vmem:[#allocation4 + $0xa8] sm:$0xff]
        %v4220 = vld [vmem:[#allocation4 + $0xb0] sm:$0xff]
        %v4221 = vld [vmem:[#allocation4 + $0xb8] sm:$0xff]
        %v4222 = vld [vmem:[#allocation4 + $0xc0] sm:$0xff]
        %v4223 = vld [vmem:[#allocation4 + $0xc8] sm:$0xff]
        %v4224 = vld [vmem:[#allocation4 + $0xd0] sm:$0xff]
        %v4225 = vld [vmem:[#allocation4 + $0xd8] sm:$0xff]
        %v4226 = vld [vmem:[#allocation4 + $0xe0] sm:$0xff]
        %v4227 = vld [vmem:[#allocation4 + $0xe8] sm:$0xff]
        %v4228 = vld [vmem:[#allocation4 + $0xf0] sm:$0xff]
        %v4229 = vld [vmem:[#allocation4 + $0xf8] sm:$0xff]
        %v4230 = vld [vmem:[#allocation4 + $0x100] sm:$0xff]
        %v4231 = vld [vmem:[#allocation4 + $0x108] sm:$0xff]
        %v4232 = vld [vmem:[#allocation4 + $0x110] sm:$0xff]
        %v4233 = vld [vmem:[#allocation4 + $0x118] sm:$0xff]
        %4234 = vst.msk [vmem:[#allocation5 + $0x8] sm:$0xff] %vm3390, %v4202
        %4235 = vst.msk [vmem:[#allocation5 + $0x20] sm:$0xff] %vm3390, %v4203
        %4236 = vst.msk [vmem:[#allocation5 + $0x38] sm:$0xff] %vm3390, %v4204
        %4237 = vst.msk [vmem:[#allocation5 + $0x50] sm:$0xff] %vm3390, %v4205
        %4238 = vst.msk [vmem:[#allocation5 + $0x68] sm:$0xff] %vm3390, %v4206
        %4239 = vst.msk [vmem:[#allocation5 + $0x80] sm:$0xff] %vm3390, %v4207
        %4240 = vst.msk [vmem:[#allocation5 + $0x98] sm:$0xff] %vm3390, %v4208
        %4241 = vst.msk [vmem:[#allocation5 + $0xb0] sm:$0xff] %vm3390, %v4209
        %4242 = vst.msk [vmem:[#allocation5 + $0xc8] sm:$0xff] %vm3390, %v4210
        %4243 = vst.msk [vmem:[#allocation5 + $0xe0] sm:$0xff] %vm3390, %v4211
        %4244 = vst.msk [vmem:[#allocation5 + $0xf8] sm:$0xff] %vm3390, %v4212
        %4245 = vst.msk [vmem:[#allocation5 + $0x110] sm:$0xff] %vm3390, %v4213
        %4246 = vst.msk [vmem:[#allocation5 + $0x128] sm:$0xff] %vm3390, %v4214
        %4247 = vst.msk [vmem:[#allocation5 + $0x140] sm:$0xff] %vm3390, %v4215
        %4248 = vst.msk [vmem:[#allocation5 + $0x158] sm:$0xff] %vm3390, %v4216
        %4249 = vst.msk [vmem:[#allocation5 + $0x170] sm:$0xff] %vm3390, %v4217
        %4250 = vst.msk [vmem:[#allocation5 + $0x188] sm:$0xff] %vm3390, %v4218
        %4251 = vst.msk [vmem:[#allocation5 + $0x1a0] sm:$0xff] %vm3390, %v4219
        %4252 = vst.msk [vmem:[#allocation5 + $0x1b8] sm:$0xff] %vm3390, %v4220
        %4253 = vst.msk [vmem:[#allocation5 + $0x1d0] sm:$0xff] %vm3390, %v4221
        %4254 = vst.msk [vmem:[#allocation5 + $0x1e8] sm:$0xff] %vm3390, %v4222
        %4255 = vst.msk [vmem:[#allocation5 + $0x200] sm:$0xff] %vm3390, %v4223
        %4256 = vst.msk [vmem:[#allocation5 + $0x218] sm:$0xff] %vm3390, %v4224
        %4257 = vst.msk [vmem:[#allocation5 + $0x230] sm:$0xff] %vm3390, %v4225
        %4258 = vst.msk [vmem:[#allocation5 + $0x248] sm:$0xff] %vm3390, %v4226
        %4259 = vst.msk [vmem:[#allocation5 + $0x260] sm:$0xff] %vm3390, %v4227
        %4260 = vst.msk [vmem:[#allocation5 + $0x278] sm:$0xff] %vm3390, %v4228
        %4261 = vst.msk [vmem:[#allocation5 + $0x290] sm:$0xff] %vm3390, %v4229
        %4262 = vst.msk [vmem:[#allocation5 + $0x2a8] sm:$0xff] %vm3390, %v4230
        %4263 = vst.msk [vmem:[#allocation5 + $0x2c0] sm:$0xff] %vm3390, %v4231
        %4264 = vst.msk [vmem:[#allocation5 + $0x2d8] sm:$0xff] %vm3390, %v4232
        %4265 = vst.msk [vmem:[#allocation5 + $0x2f0] sm:$0xff] %vm3390, %v4233
        %v4266 = vld [vmem:[#allocation4 + $0x21] sm:$0xff]
        %v4267 = vld [vmem:[#allocation4 + $0x29] sm:$0xff]
        %v4268 = vld [vmem:[#allocation4 + $0x31] sm:$0xff]
        %v4269 = vld [vmem:[#allocation4 + $0x39] sm:$0xff]
        %v4270 = vld [vmem:[#allocation4 + $0x41] sm:$0xff]
        %v4271 = vld [vmem:[#allocation4 + $0x49] sm:$0xff]
        %v4272 = vld [vmem:[#allocation4 + $0x51] sm:$0xff]
        %v4273 = vld [vmem:[#allocation4 + $0x59] sm:$0xff]
        %v4274 = vld [vmem:[#allocation4 + $0x61] sm:$0xff]
        %v4275 = vld [vmem:[#allocation4 + $0x69] sm:$0xff]
        %v4276 = vld [vmem:[#allocation4 + $0x71] sm:$0xff]
        %v4277 = vld [vmem:[#allocation4 + $0x79] sm:$0xff]
        %v4278 = vld [vmem:[#allocation4 + $0x81] sm:$0xff]
        %v4279 = vld [vmem:[#allocation4 + $0x89] sm:$0xff]
        %v4280 = vld [vmem:[#allocation4 + $0x91] sm:$0xff]
        %v4281 = vld [vmem:[#allocation4 + $0x99] sm:$0xff]
        %v4282 = vld [vmem:[#allocation4 + $0xa1] sm:$0xff]
        %v4283 = vld [vmem:[#allocation4 + $0xa9] sm:$0xff]
        %v4284 = vld [vmem:[#allocation4 + $0xb1] sm:$0xff]
        %v4285 = vld [vmem:[#allocation4 + $0xb9] sm:$0xff]
        %v4286 = vld [vmem:[#allocation4 + $0xc1] sm:$0xff]
        %v4287 = vld [vmem:[#allocation4 + $0xc9] sm:$0xff]
        %v4288 = vld [vmem:[#allocation4 + $0xd1] sm:$0xff]
        %v4289 = vld [vmem:[#allocation4 + $0xd9] sm:$0xff]
        %v4290 = vld [vmem:[#allocation4 + $0xe1] sm:$0xff]
        %v4291 = vld [vmem:[#allocation4 + $0xe9] sm:$0xff]
        %v4292 = vld [vmem:[#allocation4 + $0xf1] sm:$0xff]
        %v4293 = vld [vmem:[#allocation4 + $0xf9] sm:$0xff]
        %v4294 = vld [vmem:[#allocation4 + $0x101] sm:$0xff]
        %v4295 = vld [vmem:[#allocation4 + $0x109] sm:$0xff]
        %v4296 = vld [vmem:[#allocation4 + $0x111] sm:$0xff]
        %v4297 = vld [vmem:[#allocation4 + $0x119] sm:$0xff]
        %v4298 = vsel %vm1633, %v4266, 0.0
        %v4299 = vsel %vm1634, %v4267, 0.0
        %v4300 = vsel %vm1635, %v4268, 0.0
        %v4301 = vsel %vm1636, %v4269, 0.0
        %v4302 = vsel %vm1637, %v4270, 0.0
        %v4303 = vsel %vm1638, %v4271, 0.0
        %v4304 = vsel %vm1639, %v4272, 0.0
        %v4305 = vsel %vm1640, %v4273, 0.0
        %v4306 = vsel %vm1641, %v4274, 0.0
        %v4307 = vsel %vm1642, %v4275, 0.0
        %v4308 = vsel %vm1643, %v4276, 0.0
        %v4309 = vsel %vm1644, %v4277, 0.0
        %v4310 = vsel %vm1645, %v4278, 0.0
        %v4311 = vsel %vm1646, %v4279, 0.0
        %v4312 = vsel %vm1647, %v4280, 0.0
        %v4313 = vsel %vm1648, %v4281, 0.0
        %v4314 = vsel %vm1649, %v4282, 0.0
        %v4315 = vsel %vm1650, %v4283, 0.0
        %v4316 = vsel %vm1651, %v4284, 0.0
        %v4317 = vsel %vm1652, %v4285, 0.0
        %v4318 = vsel %vm1653, %v4286, 0.0
        %v4319 = vsel %vm1654, %v4287, 0.0
        %v4320 = vsel %vm1655, %v4288, 0.0
        %v4321 = vsel %vm1656, %v4289, 0.0
        %v4322 = vsel %vm1657, %v4290, 0.0
        %v4323 = vsel %vm1658, %v4291, 0.0
        %v4324 = vsel %vm1659, %v4292, 0.0
        %v4325 = vsel %vm1660, %v4293, 0.0
        %v4326 = vsel %vm1661, %v4294, 0.0
        %v4327 = vsel %vm1662, %v4295, 0.0
        %v4328 = vsel %vm1663, %v4296, 0.0
        %v4329 = vsel %vm1664, %v4297, 0.0
        %4362 = vrot.lane.b32.xlu0 %v4298, 32
        %v4363 = vpop.permute.xlu0 %4362
        %4364 = vrot.lane.b32.xlu0 %v4299, 32
        %v4365 = vpop.permute.xlu0 %4364
        %4366 = vrot.lane.b32.xlu0 %v4300, 32
        %v4367 = vpop.permute.xlu0 %4366
        %4368 = vrot.lane.b32.xlu0 %v4301, 32
        %v4369 = vpop.permute.xlu0 %4368
        %4370 = vrot.lane.b32.xlu0 %v4302, 32
        %v4371 = vpop.permute.xlu0 %4370
        %4372 = vrot.lane.b32.xlu0 %v4303, 32
        %v4373 = vpop.permute.xlu0 %4372
        %4374 = vrot.lane.b32.xlu0 %v4304, 32
        %v4375 = vpop.permute.xlu0 %4374
        %4376 = vrot.lane.b32.xlu0 %v4305, 32
        %v4377 = vpop.permute.xlu0 %4376
        %4378 = vrot.lane.b32.xlu0 %v4306, 32
        %v4379 = vpop.permute.xlu0 %4378
        %4380 = vrot.lane.b32.xlu0 %v4307, 32
        %v4381 = vpop.permute.xlu0 %4380
        %4382 = vrot.lane.b32.xlu0 %v4308, 32
        %v4383 = vpop.permute.xlu0 %4382
        %4384 = vrot.lane.b32.xlu0 %v4309, 32
        %v4385 = vpop.permute.xlu0 %4384
        %4386 = vrot.lane.b32.xlu0 %v4310, 32
        %v4387 = vpop.permute.xlu0 %4386
        %4388 = vrot.lane.b32.xlu0 %v4311, 32
        %v4389 = vpop.permute.xlu0 %4388
        %4390 = vrot.lane.b32.xlu0 %v4312, 32
        %v4391 = vpop.permute.xlu0 %4390
        %4392 = vrot.lane.b32.xlu0 %v4313, 32
        %v4393 = vpop.permute.xlu0 %4392
        %4394 = vrot.lane.b32.xlu0 %v4314, 32
        %v4395 = vpop.permute.xlu0 %4394
        %4396 = vrot.lane.b32.xlu0 %v4315, 32
        %v4397 = vpop.permute.xlu0 %4396
        %4398 = vrot.lane.b32.xlu0 %v4316, 32
        %v4399 = vpop.permute.xlu0 %4398
        %4400 = vrot.lane.b32.xlu0 %v4317, 32
        %v4401 = vpop.permute.xlu0 %4400
        %4402 = vrot.lane.b32.xlu0 %v4318, 32
        %v4403 = vpop.permute.xlu0 %4402
        %4404 = vrot.lane.b32.xlu0 %v4319, 32
        %v4405 = vpop.permute.xlu0 %4404
        %4406 = vrot.lane.b32.xlu0 %v4320, 32
        %v4407 = vpop.permute.xlu0 %4406
        %4408 = vrot.lane.b32.xlu0 %v4321, 32
        %v4409 = vpop.permute.xlu0 %4408
        %4410 = vrot.lane.b32.xlu0 %v4322, 32
        %v4411 = vpop.permute.xlu0 %4410
        %4412 = vrot.lane.b32.xlu0 %v4323, 32
        %v4413 = vpop.permute.xlu0 %4412
        %4414 = vrot.lane.b32.xlu0 %v4324, 32
        %v4415 = vpop.permute.xlu0 %4414
        %4416 = vrot.lane.b32.xlu0 %v4325, 32
        %v4417 = vpop.permute.xlu0 %4416
        %4418 = vrot.lane.b32.xlu0 %v4326, 32
        %v4419 = vpop.permute.xlu0 %4418
        %4420 = vrot.lane.b32.xlu0 %v4327, 32
        %v4421 = vpop.permute.xlu0 %4420
        %4422 = vrot.lane.b32.xlu0 %v4328, 32
        %v4423 = vpop.permute.xlu0 %4422
        %4424 = vrot.lane.b32.xlu0 %v4329, 32
        %v4425 = vpop.permute.xlu0 %4424
        %4458 = vst.msk [vmem:[#allocation5 + $0x8] sm:$0xff] %vm3719, %v4363
        %4459 = vst.msk [vmem:[#allocation5 + $0x20] sm:$0xff] %vm3719, %v4365
        %4460 = vst.msk [vmem:[#allocation5 + $0x38] sm:$0xff] %vm3719, %v4367
        %4461 = vst.msk [vmem:[#allocation5 + $0x50] sm:$0xff] %vm3719, %v4369
        %4462 = vst.msk [vmem:[#allocation5 + $0x68] sm:$0xff] %vm3719, %v4371
        %4463 = vst.msk [vmem:[#allocation5 + $0x80] sm:$0xff] %vm3719, %v4373
        %4464 = vst.msk [vmem:[#allocation5 + $0x98] sm:$0xff] %vm3719, %v4375
        %4465 = vst.msk [vmem:[#allocation5 + $0xb0] sm:$0xff] %vm3719, %v4377
        %4466 = vst.msk [vmem:[#allocation5 + $0xc8] sm:$0xff] %vm3719, %v4379
        %4467 = vst.msk [vmem:[#allocation5 + $0xe0] sm:$0xff] %vm3719, %v4381
        %4468 = vst.msk [vmem:[#allocation5 + $0xf8] sm:$0xff] %vm3719, %v4383
        %4469 = vst.msk [vmem:[#allocation5 + $0x110] sm:$0xff] %vm3719, %v4385
        %4470 = vst.msk [vmem:[#allocation5 + $0x128] sm:$0xff] %vm3719, %v4387
        %4471 = vst.msk [vmem:[#allocation5 + $0x140] sm:$0xff] %vm3719, %v4389
        %4472 = vst.msk [vmem:[#allocation5 + $0x158] sm:$0xff] %vm3719, %v4391
        %4473 = vst.msk [vmem:[#allocation5 + $0x170] sm:$0xff] %vm3719, %v4393
        %4474 = vst.msk [vmem:[#allocation5 + $0x188] sm:$0xff] %vm3719, %v4395
        %4475 = vst.msk [vmem:[#allocation5 + $0x1a0] sm:$0xff] %vm3719, %v4397
        %4476 = vst.msk [vmem:[#allocation5 + $0x1b8] sm:$0xff] %vm3719, %v4399
        %4477 = vst.msk [vmem:[#allocation5 + $0x1d0] sm:$0xff] %vm3719, %v4401
        %4478 = vst.msk [vmem:[#allocation5 + $0x1e8] sm:$0xff] %vm3719, %v4403
        %4479 = vst.msk [vmem:[#allocation5 + $0x200] sm:$0xff] %vm3719, %v4405
        %4480 = vst.msk [vmem:[#allocation5 + $0x218] sm:$0xff] %vm3719, %v4407
        %4481 = vst.msk [vmem:[#allocation5 + $0x230] sm:$0xff] %vm3719, %v4409
        %4482 = vst.msk [vmem:[#allocation5 + $0x248] sm:$0xff] %vm3719, %v4411
        %4483 = vst.msk [vmem:[#allocation5 + $0x260] sm:$0xff] %vm3719, %v4413
        %4484 = vst.msk [vmem:[#allocation5 + $0x278] sm:$0xff] %vm3719, %v4415
        %4485 = vst.msk [vmem:[#allocation5 + $0x290] sm:$0xff] %vm3719, %v4417
        %4486 = vst.msk [vmem:[#allocation5 + $0x2a8] sm:$0xff] %vm3719, %v4419
        %4487 = vst.msk [vmem:[#allocation5 + $0x2c0] sm:$0xff] %vm3719, %v4421
        %4488 = vst.msk [vmem:[#allocation5 + $0x2d8] sm:$0xff] %vm3719, %v4423
        %4489 = vst.msk [vmem:[#allocation5 + $0x2f0] sm:$0xff] %vm3719, %v4425
        %v4490 = vld [vmem:[#allocation4 + $0x2f] sm:$0xff]
        %v4491 = vld [vmem:[#allocation4 + $0x37] sm:$0xff]
        %v4492 = vld [vmem:[#allocation4 + $0x3f] sm:$0xff]
        %v4493 = vld [vmem:[#allocation4 + $0x47] sm:$0xff]
        %v4494 = vld [vmem:[#allocation4 + $0x4f] sm:$0xff]
        %v4495 = vld [vmem:[#allocation4 + $0x57] sm:$0xff]
        %v4496 = vld [vmem:[#allocation4 + $0x5f] sm:$0xff]
        %v4497 = vld [vmem:[#allocation4 + $0x67] sm:$0xff]
        %v4498 = vld [vmem:[#allocation4 + $0x6f] sm:$0xff]
        %v4499 = vld [vmem:[#allocation4 + $0x77] sm:$0xff]
        %v4500 = vld [vmem:[#allocation4 + $0x7f] sm:$0xff]
        %v4501 = vld [vmem:[#allocation4 + $0x87] sm:$0xff]
        %v4502 = vld [vmem:[#allocation4 + $0x8f] sm:$0xff]
        %v4503 = vld [vmem:[#allocation4 + $0x97] sm:$0xff]
        %v4504 = vld [vmem:[#allocation4 + $0x9f] sm:$0xff]
        %v4505 = vld [vmem:[#allocation4 + $0xa7] sm:$0xff]
        %v4506 = vld [vmem:[#allocation4 + $0xaf] sm:$0xff]
        %v4507 = vld [vmem:[#allocation4 + $0xb7] sm:$0xff]
        %v4508 = vld [vmem:[#allocation4 + $0xbf] sm:$0xff]
        %v4509 = vld [vmem:[#allocation4 + $0xc7] sm:$0xff]
        %v4510 = vld [vmem:[#allocation4 + $0xcf] sm:$0xff]
        %v4511 = vld [vmem:[#allocation4 + $0xd7] sm:$0xff]
        %v4512 = vld [vmem:[#allocation4 + $0xdf] sm:$0xff]
        %v4513 = vld [vmem:[#allocation4 + $0xe7] sm:$0xff]
        %v4514 = vld [vmem:[#allocation4 + $0xef] sm:$0xff]
        %v4515 = vld [vmem:[#allocation4 + $0xf7] sm:$0xff]
        %v4516 = vld [vmem:[#allocation4 + $0xff] sm:$0xff]
        %v4517 = vld [vmem:[#allocation4 + $0x107] sm:$0xff]
        %v4518 = vld [vmem:[#allocation4 + $0x10f] sm:$0xff]
        %v4519 = vld [vmem:[#allocation4 + $0x117] sm:$0xff]
        %v4520 = vld [vmem:[#allocation4 + $0x11f] sm:$0xff]
        %v4521 = vld [vmem:[#allocation4 + $0x127] sm:$0xff]
        %v4522 = vsel %vm1248, %v4490, 0.0
        %v4523 = vsel %vm1249, %v4491, 0.0
        %v4524 = vsel %vm1250, %v4492, 0.0
        %v4525 = vsel %vm1251, %v4493, 0.0
        %v4526 = vsel %vm1252, %v4494, 0.0
        %v4527 = vsel %vm1253, %v4495, 0.0
        %v4528 = vsel %vm1254, %v4496, 0.0
        %v4529 = vsel %vm1255, %v4497, 0.0
        %v4530 = vsel %vm1256, %v4498, 0.0
        %v4531 = vsel %vm1257, %v4499, 0.0
        %v4532 = vsel %vm1258, %v4500, 0.0
        %v4533 = vsel %vm1259, %v4501, 0.0
        %v4534 = vsel %vm1260, %v4502, 0.0
        %v4535 = vsel %vm1261, %v4503, 0.0
        %v4536 = vsel %vm1262, %v4504, 0.0
        %v4537 = vsel %vm1263, %v4505, 0.0
        %v4538 = vsel %vm1264, %v4506, 0.0
        %v4539 = vsel %vm1265, %v4507, 0.0
        %v4540 = vsel %vm1266, %v4508, 0.0
        %v4541 = vsel %vm1267, %v4509, 0.0
        %v4542 = vsel %vm1268, %v4510, 0.0
        %v4543 = vsel %vm1269, %v4511, 0.0
        %v4544 = vsel %vm1270, %v4512, 0.0
        %v4545 = vsel %vm1271, %v4513, 0.0
        %v4546 = vsel %vm1272, %v4514, 0.0
        %v4547 = vsel %vm1273, %v4515, 0.0
        %v4548 = vsel %vm1274, %v4516, 0.0
        %v4549 = vsel %vm1275, %v4517, 0.0
        %v4550 = vsel %vm1276, %v4518, 0.0
        %v4551 = vsel %vm1277, %v4519, 0.0
        %v4552 = vsel %vm1278, %v4520, 0.0
        %v4553 = vsel %vm1279, %v4521, 0.0
        %4586 = vrot.lane.b32.xlu0 %v4522, 64
        %v4587 = vpop.permute.xlu0 %4586
        %4588 = vrot.lane.b32.xlu0 %v4523, 64
        %v4589 = vpop.permute.xlu0 %4588
        %4590 = vrot.lane.b32.xlu0 %v4524, 64
        %v4591 = vpop.permute.xlu0 %4590
        %4592 = vrot.lane.b32.xlu0 %v4525, 64
        %v4593 = vpop.permute.xlu0 %4592
        %4594 = vrot.lane.b32.xlu0 %v4526, 64
        %v4595 = vpop.permute.xlu0 %4594
        %4596 = vrot.lane.b32.xlu0 %v4527, 64
        %v4597 = vpop.permute.xlu0 %4596
        %4598 = vrot.lane.b32.xlu0 %v4528, 64
        %v4599 = vpop.permute.xlu0 %4598
        %4600 = vrot.lane.b32.xlu0 %v4529, 64
        %v4601 = vpop.permute.xlu0 %4600
        %4602 = vrot.lane.b32.xlu0 %v4530, 64
        %v4603 = vpop.permute.xlu0 %4602
        %4604 = vrot.lane.b32.xlu0 %v4531, 64
        %v4605 = vpop.permute.xlu0 %4604
        %4606 = vrot.lane.b32.xlu0 %v4532, 64
        %v4607 = vpop.permute.xlu0 %4606
        %4608 = vrot.lane.b32.xlu0 %v4533, 64
        %v4609 = vpop.permute.xlu0 %4608
        %4610 = vrot.lane.b32.xlu0 %v4534, 64
        %v4611 = vpop.permute.xlu0 %4610
        %4612 = vrot.lane.b32.xlu0 %v4535, 64
        %v4613 = vpop.permute.xlu0 %4612
        %4614 = vrot.lane.b32.xlu0 %v4536, 64
        %v4615 = vpop.permute.xlu0 %4614
        %4616 = vrot.lane.b32.xlu0 %v4537, 64
        %v4617 = vpop.permute.xlu0 %4616
        %4618 = vrot.lane.b32.xlu0 %v4538, 64
        %v4619 = vpop.permute.xlu0 %4618
        %4620 = vrot.lane.b32.xlu0 %v4539, 64
        %v4621 = vpop.permute.xlu0 %4620
        %4622 = vrot.lane.b32.xlu0 %v4540, 64
        %v4623 = vpop.permute.xlu0 %4622
        %4624 = vrot.lane.b32.xlu0 %v4541, 64
        %v4625 = vpop.permute.xlu0 %4624
        %4626 = vrot.lane.b32.xlu0 %v4542, 64
        %v4627 = vpop.permute.xlu0 %4626
        %4628 = vrot.lane.b32.xlu0 %v4543, 64
        %v4629 = vpop.permute.xlu0 %4628
        %4630 = vrot.lane.b32.xlu0 %v4544, 64
        %v4631 = vpop.permute.xlu0 %4630
        %4632 = vrot.lane.b32.xlu0 %v4545, 64
        %v4633 = vpop.permute.xlu0 %4632
        %4634 = vrot.lane.b32.xlu0 %v4546, 64
        %v4635 = vpop.permute.xlu0 %4634
        %4636 = vrot.lane.b32.xlu0 %v4547, 64
        %v4637 = vpop.permute.xlu0 %4636
        %4638 = vrot.lane.b32.xlu0 %v4548, 64
        %v4639 = vpop.permute.xlu0 %4638
        %4640 = vrot.lane.b32.xlu0 %v4549, 64
        %v4641 = vpop.permute.xlu0 %4640
        %4642 = vrot.lane.b32.xlu0 %v4550, 64
        %v4643 = vpop.permute.xlu0 %4642
        %4644 = vrot.lane.b32.xlu0 %v4551, 64
        %v4645 = vpop.permute.xlu0 %4644
        %4646 = vrot.lane.b32.xlu0 %v4552, 64
        %v4647 = vpop.permute.xlu0 %4646
        %4648 = vrot.lane.b32.xlu0 %v4553, 64
        %v4649 = vpop.permute.xlu0 %4648
        %4682 = vst.msk [vmem:[#allocation5 + $0x8] sm:$0xff] %vm3944, %v4587
        %4683 = vst.msk [vmem:[#allocation5 + $0x20] sm:$0xff] %vm3944, %v4589
        %4684 = vst.msk [vmem:[#allocation5 + $0x38] sm:$0xff] %vm3944, %v4591
        %4685 = vst.msk [vmem:[#allocation5 + $0x50] sm:$0xff] %vm3944, %v4593
        %4686 = vst.msk [vmem:[#allocation5 + $0x68] sm:$0xff] %vm3944, %v4595
        %4687 = vst.msk [vmem:[#allocation5 + $0x80] sm:$0xff] %vm3944, %v4597
        %4688 = vst.msk [vmem:[#allocation5 + $0x98] sm:$0xff] %vm3944, %v4599
        %4689 = vst.msk [vmem:[#allocation5 + $0xb0] sm:$0xff] %vm3944, %v4601
        %4690 = vst.msk [vmem:[#allocation5 + $0xc8] sm:$0xff] %vm3944, %v4603
        %4691 = vst.msk [vmem:[#allocation5 + $0xe0] sm:$0xff] %vm3944, %v4605
        %4692 = vst.msk [vmem:[#allocation5 + $0xf8] sm:$0xff] %vm3944, %v4607
        %4693 = vst.msk [vmem:[#allocation5 + $0x110] sm:$0xff] %vm3944, %v4609
        %4694 = vst.msk [vmem:[#allocation5 + $0x128] sm:$0xff] %vm3944, %v4611
        %4695 = vst.msk [vmem:[#allocation5 + $0x140] sm:$0xff] %vm3944, %v4613
        %4696 = vst.msk [vmem:[#allocation5 + $0x158] sm:$0xff] %vm3944, %v4615
        %4697 = vst.msk [vmem:[#allocation5 + $0x170] sm:$0xff] %vm3944, %v4617
        %4698 = vst.msk [vmem:[#allocation5 + $0x188] sm:$0xff] %vm3944, %v4619
        %4699 = vst.msk [vmem:[#allocation5 + $0x1a0] sm:$0xff] %vm3944, %v4621
        %4700 = vst.msk [vmem:[#allocation5 + $0x1b8] sm:$0xff] %vm3944, %v4623
        %4701 = vst.msk [vmem:[#allocation5 + $0x1d0] sm:$0xff] %vm3944, %v4625
        %4702 = vst.msk [vmem:[#allocation5 + $0x1e8] sm:$0xff] %vm3944, %v4627
        %4703 = vst.msk [vmem:[#allocation5 + $0x200] sm:$0xff] %vm3944, %v4629
        %4704 = vst.msk [vmem:[#allocation5 + $0x218] sm:$0xff] %vm3944, %v4631
        %4705 = vst.msk [vmem:[#allocation5 + $0x230] sm:$0xff] %vm3944, %v4633
        %4706 = vst.msk [vmem:[#allocation5 + $0x248] sm:$0xff] %vm3944, %v4635
        %4707 = vst.msk [vmem:[#allocation5 + $0x260] sm:$0xff] %vm3944, %v4637
        %4708 = vst.msk [vmem:[#allocation5 + $0x278] sm:$0xff] %vm3944, %v4639
        %4709 = vst.msk [vmem:[#allocation5 + $0x290] sm:$0xff] %vm3944, %v4641
        %4710 = vst.msk [vmem:[#allocation5 + $0x2a8] sm:$0xff] %vm3944, %v4643
        %4711 = vst.msk [vmem:[#allocation5 + $0x2c0] sm:$0xff] %vm3944, %v4645
        %4712 = vst.msk [vmem:[#allocation5 + $0x2d8] sm:$0xff] %vm3944, %v4647
        %4713 = vst.msk [vmem:[#allocation5 + $0x2f0] sm:$0xff] %vm3944, %v4649
        %v4714 = vld [vmem:[#allocation4 + $0x30] sm:$0xff]
        %v4715 = vld [vmem:[#allocation4 + $0x38] sm:$0xff]
        %v4716 = vld [vmem:[#allocation4 + $0x40] sm:$0xff]
        %v4717 = vld [vmem:[#allocation4 + $0x48] sm:$0xff]
        %v4718 = vld [vmem:[#allocation4 + $0x50] sm:$0xff]
        %v4719 = vld [vmem:[#allocation4 + $0x58] sm:$0xff]
        %v4720 = vld [vmem:[#allocation4 + $0x60] sm:$0xff]
        %v4721 = vld [vmem:[#allocation4 + $0x68] sm:$0xff]
        %v4722 = vld [vmem:[#allocation4 + $0x70] sm:$0xff]
        %v4723 = vld [vmem:[#allocation4 + $0x78] sm:$0xff]
        %v4724 = vld [vmem:[#allocation4 + $0x80] sm:$0xff]
        %v4725 = vld [vmem:[#allocation4 + $0x88] sm:$0xff]
        %v4726 = vld [vmem:[#allocation4 + $0x90] sm:$0xff]
        %v4727 = vld [vmem:[#allocation4 + $0x98] sm:$0xff]
        %v4728 = vld [vmem:[#allocation4 + $0xa0] sm:$0xff]
        %v4729 = vld [vmem:[#allocation4 + $0xa8] sm:$0xff]
        %v4730 = vld [vmem:[#allocation4 + $0xb0] sm:$0xff]
        %v4731 = vld [vmem:[#allocation4 + $0xb8] sm:$0xff]
        %v4732 = vld [vmem:[#allocation4 + $0xc0] sm:$0xff]
        %v4733 = vld [vmem:[#allocation4 + $0xc8] sm:$0xff]
        %v4734 = vld [vmem:[#allocation4 + $0xd0] sm:$0xff]
        %v4735 = vld [vmem:[#allocation4 + $0xd8] sm:$0xff]
        %v4736 = vld [vmem:[#allocation4 + $0xe0] sm:$0xff]
        %v4737 = vld [vmem:[#allocation4 + $0xe8] sm:$0xff]
        %v4738 = vld [vmem:[#allocation4 + $0xf0] sm:$0xff]
        %v4739 = vld [vmem:[#allocation4 + $0xf8] sm:$0xff]
        %v4740 = vld [vmem:[#allocation4 + $0x100] sm:$0xff]
        %v4741 = vld [vmem:[#allocation4 + $0x108] sm:$0xff]
        %v4742 = vld [vmem:[#allocation4 + $0x110] sm:$0xff]
        %v4743 = vld [vmem:[#allocation4 + $0x118] sm:$0xff]
        %v4744 = vld [vmem:[#allocation4 + $0x120] sm:$0xff]
        %v4745 = vld [vmem:[#allocation4 + $0x128] sm:$0xff]
        %4778 = vrot.lane.b32.xlu0 %v4714, 96
        %v4779 = vpop.permute.xlu0 %4778
        %4780 = vrot.lane.b32.xlu0 %v4715, 96
        %v4781 = vpop.permute.xlu0 %4780
        %4782 = vrot.lane.b32.xlu0 %v4716, 96
        %v4783 = vpop.permute.xlu0 %4782
        %4784 = vrot.lane.b32.xlu0 %v4717, 96
        %v4785 = vpop.permute.xlu0 %4784
        %4786 = vrot.lane.b32.xlu0 %v4718, 96
        %v4787 = vpop.permute.xlu0 %4786
        %4788 = vrot.lane.b32.xlu0 %v4719, 96
        %v4789 = vpop.permute.xlu0 %4788
        %4790 = vrot.lane.b32.xlu0 %v4720, 96
        %v4791 = vpop.permute.xlu0 %4790
        %4792 = vrot.lane.b32.xlu0 %v4721, 96
        %v4793 = vpop.permute.xlu0 %4792
        %4794 = vrot.lane.b32.xlu0 %v4722, 96
        %v4795 = vpop.permute.xlu0 %4794
        %4796 = vrot.lane.b32.xlu0 %v4723, 96
        %v4797 = vpop.permute.xlu0 %4796
        %4798 = vrot.lane.b32.xlu0 %v4724, 96
        %v4799 = vpop.permute.xlu0 %4798
        %4800 = vrot.lane.b32.xlu0 %v4725, 96
        %v4801 = vpop.permute.xlu0 %4800
        %4802 = vrot.lane.b32.xlu0 %v4726, 96
        %v4803 = vpop.permute.xlu0 %4802
        %4804 = vrot.lane.b32.xlu0 %v4727, 96
        %v4805 = vpop.permute.xlu0 %4804
        %4806 = vrot.lane.b32.xlu0 %v4728, 96
        %v4807 = vpop.permute.xlu0 %4806
        %4808 = vrot.lane.b32.xlu0 %v4729, 96
        %v4809 = vpop.permute.xlu0 %4808
        %4810 = vrot.lane.b32.xlu0 %v4730, 96
        %v4811 = vpop.permute.xlu0 %4810
        %4812 = vrot.lane.b32.xlu0 %v4731, 96
        %v4813 = vpop.permute.xlu0 %4812
        %4814 = vrot.lane.b32.xlu0 %v4732, 96
        %v4815 = vpop.permute.xlu0 %4814
        %4816 = vrot.lane.b32.xlu0 %v4733, 96
        %v4817 = vpop.permute.xlu0 %4816
        %4818 = vrot.lane.b32.xlu0 %v4734, 96
        %v4819 = vpop.permute.xlu0 %4818
        %4820 = vrot.lane.b32.xlu0 %v4735, 96
        %v4821 = vpop.permute.xlu0 %4820
        %4822 = vrot.lane.b32.xlu0 %v4736, 96
        %v4823 = vpop.permute.xlu0 %4822
        %4824 = vrot.lane.b32.xlu0 %v4737, 96
        %v4825 = vpop.permute.xlu0 %4824
        %4826 = vrot.lane.b32.xlu0 %v4738, 96
        %v4827 = vpop.permute.xlu0 %4826
        %4828 = vrot.lane.b32.xlu0 %v4739, 96
        %v4829 = vpop.permute.xlu0 %4828
        %4830 = vrot.lane.b32.xlu0 %v4740, 96
        %v4831 = vpop.permute.xlu0 %4830
        %4832 = vrot.lane.b32.xlu0 %v4741, 96
        %v4833 = vpop.permute.xlu0 %4832
        %4834 = vrot.lane.b32.xlu0 %v4742, 96
        %v4835 = vpop.permute.xlu0 %4834
        %4836 = vrot.lane.b32.xlu0 %v4743, 96
        %v4837 = vpop.permute.xlu0 %4836
        %4838 = vrot.lane.b32.xlu0 %v4744, 96
        %v4839 = vpop.permute.xlu0 %4838
        %4840 = vrot.lane.b32.xlu0 %v4745, 96
        %v4841 = vpop.permute.xlu0 %4840
        %4874 = vst.msk [vmem:[#allocation5 + $0x8] sm:$0xff] %vm4169, %v4779
        %4875 = vst.msk [vmem:[#allocation5 + $0x20] sm:$0xff] %vm4169, %v4781
        %4876 = vst.msk [vmem:[#allocation5 + $0x38] sm:$0xff] %vm4169, %v4783
        %4877 = vst.msk [vmem:[#allocation5 + $0x50] sm:$0xff] %vm4169, %v4785
        %4878 = vst.msk [vmem:[#allocation5 + $0x68] sm:$0xff] %vm4169, %v4787
        %4879 = vst.msk [vmem:[#allocation5 + $0x80] sm:$0xff] %vm4169, %v4789
        %4880 = vst.msk [vmem:[#allocation5 + $0x98] sm:$0xff] %vm4169, %v4791
        %4881 = vst.msk [vmem:[#allocation5 + $0xb0] sm:$0xff] %vm4169, %v4793
        %4882 = vst.msk [vmem:[#allocation5 + $0xc8] sm:$0xff] %vm4169, %v4795
        %4883 = vst.msk [vmem:[#allocation5 + $0xe0] sm:$0xff] %vm4169, %v4797
        %4884 = vst.msk [vmem:[#allocation5 + $0xf8] sm:$0xff] %vm4169, %v4799
        %4885 = vst.msk [vmem:[#allocation5 + $0x110] sm:$0xff] %vm4169, %v4801
        %4886 = vst.msk [vmem:[#allocation5 + $0x128] sm:$0xff] %vm4169, %v4803
        %4887 = vst.msk [vmem:[#allocation5 + $0x140] sm:$0xff] %vm4169, %v4805
        %4888 = vst.msk [vmem:[#allocation5 + $0x158] sm:$0xff] %vm4169, %v4807
        %4889 = vst.msk [vmem:[#allocation5 + $0x170] sm:$0xff] %vm4169, %v4809
        %4890 = vst.msk [vmem:[#allocation5 + $0x188] sm:$0xff] %vm4169, %v4811
        %4891 = vst.msk [vmem:[#allocation5 + $0x1a0] sm:$0xff] %vm4169, %v4813
        %4892 = vst.msk [vmem:[#allocation5 + $0x1b8] sm:$0xff] %vm4169, %v4815
        %4893 = vst.msk [vmem:[#allocation5 + $0x1d0] sm:$0xff] %vm4169, %v4817
        %4894 = vst.msk [vmem:[#allocation5 + $0x1e8] sm:$0xff] %vm4169, %v4819
        %4895 = vst.msk [vmem:[#allocation5 + $0x200] sm:$0xff] %vm4169, %v4821
        %4896 = vst.msk [vmem:[#allocation5 + $0x218] sm:$0xff] %vm4169, %v4823
        %4897 = vst.msk [vmem:[#allocation5 + $0x230] sm:$0xff] %vm4169, %v4825
        %4898 = vst.msk [vmem:[#allocation5 + $0x248] sm:$0xff] %vm4169, %v4827
        %4899 = vst.msk [vmem:[#allocation5 + $0x260] sm:$0xff] %vm4169, %v4829
        %4900 = vst.msk [vmem:[#allocation5 + $0x278] sm:$0xff] %vm4169, %v4831
        %4901 = vst.msk [vmem:[#allocation5 + $0x290] sm:$0xff] %vm4169, %v4833
        %4902 = vst.msk [vmem:[#allocation5 + $0x2a8] sm:$0xff] %vm4169, %v4835
        %4903 = vst.msk [vmem:[#allocation5 + $0x2c0] sm:$0xff] %vm4169, %v4837
        %4904 = vst.msk [vmem:[#allocation5 + $0x2d8] sm:$0xff] %vm4169, %v4839
        %4905 = vst.msk [vmem:[#allocation5 + $0x2f0] sm:$0xff] %vm4169, %v4841
        %v4906 = vld [vmem:[#allocation4 + $0x31] sm:$0xff]
        %v4907 = vld [vmem:[#allocation4 + $0x39] sm:$0xff]
        %v4908 = vld [vmem:[#allocation4 + $0x41] sm:$0xff]
        %v4909 = vld [vmem:[#allocation4 + $0x49] sm:$0xff]
        %v4910 = vld [vmem:[#allocation4 + $0x51] sm:$0xff]
        %v4911 = vld [vmem:[#allocation4 + $0x59] sm:$0xff]
        %v4912 = vld [vmem:[#allocation4 + $0x61] sm:$0xff]
        %v4913 = vld [vmem:[#allocation4 + $0x69] sm:$0xff]
        %v4914 = vld [vmem:[#allocation4 + $0x71] sm:$0xff]
        %v4915 = vld [vmem:[#allocation4 + $0x79] sm:$0xff]
        %v4916 = vld [vmem:[#allocation4 + $0x81] sm:$0xff]
        %v4917 = vld [vmem:[#allocation4 + $0x89] sm:$0xff]
        %v4918 = vld [vmem:[#allocation4 + $0x91] sm:$0xff]
        %v4919 = vld [vmem:[#allocation4 + $0x99] sm:$0xff]
        %v4920 = vld [vmem:[#allocation4 + $0xa1] sm:$0xff]
        %v4921 = vld [vmem:[#allocation4 + $0xa9] sm:$0xff]
        %v4922 = vld [vmem:[#allocation4 + $0xb1] sm:$0xff]
        %v4923 = vld [vmem:[#allocation4 + $0xb9] sm:$0xff]
        %v4924 = vld [vmem:[#allocation4 + $0xc1] sm:$0xff]
        %v4925 = vld [vmem:[#allocation4 + $0xc9] sm:$0xff]
        %v4926 = vld [vmem:[#allocation4 + $0xd1] sm:$0xff]
        %v4927 = vld [vmem:[#allocation4 + $0xd9] sm:$0xff]
        %v4928 = vld [vmem:[#allocation4 + $0xe1] sm:$0xff]
        %v4929 = vld [vmem:[#allocation4 + $0xe9] sm:$0xff]
        %v4930 = vld [vmem:[#allocation4 + $0xf1] sm:$0xff]
        %v4931 = vld [vmem:[#allocation4 + $0xf9] sm:$0xff]
        %v4932 = vld [vmem:[#allocation4 + $0x101] sm:$0xff]
        %v4933 = vld [vmem:[#allocation4 + $0x109] sm:$0xff]
        %v4934 = vld [vmem:[#allocation4 + $0x111] sm:$0xff]
        %v4935 = vld [vmem:[#allocation4 + $0x119] sm:$0xff]
        %v4936 = vld [vmem:[#allocation4 + $0x121] sm:$0xff]
        %v4937 = vld [vmem:[#allocation4 + $0x129] sm:$0xff]
        %v4938 = vsel %vm1633, %v4906, 0.0
        %v4939 = vsel %vm1634, %v4907, 0.0
        %v4940 = vsel %vm1635, %v4908, 0.0
        %v4941 = vsel %vm1636, %v4909, 0.0
        %v4942 = vsel %vm1637, %v4910, 0.0
        %v4943 = vsel %vm1638, %v4911, 0.0
        %v4944 = vsel %vm1639, %v4912, 0.0
        %v4945 = vsel %vm1640, %v4913, 0.0
        %v4946 = vsel %vm1641, %v4914, 0.0
        %v4947 = vsel %vm1642, %v4915, 0.0
        %v4948 = vsel %vm1643, %v4916, 0.0
        %v4949 = vsel %vm1644, %v4917, 0.0
        %v4950 = vsel %vm1645, %v4918, 0.0
        %v4951 = vsel %vm1646, %v4919, 0.0
        %v4952 = vsel %vm1647, %v4920, 0.0
        %v4953 = vsel %vm1648, %v4921, 0.0
        %v4954 = vsel %vm1649, %v4922, 0.0
        %v4955 = vsel %vm1650, %v4923, 0.0
        %v4956 = vsel %vm1651, %v4924, 0.0
        %v4957 = vsel %vm1652, %v4925, 0.0
        %v4958 = vsel %vm1653, %v4926, 0.0
        %v4959 = vsel %vm1654, %v4927, 0.0
        %v4960 = vsel %vm1655, %v4928, 0.0
        %v4961 = vsel %vm1656, %v4929, 0.0
        %v4962 = vsel %vm1657, %v4930, 0.0
        %v4963 = vsel %vm1658, %v4931, 0.0
        %v4964 = vsel %vm1659, %v4932, 0.0
        %v4965 = vsel %vm1660, %v4933, 0.0
        %v4966 = vsel %vm1661, %v4934, 0.0
        %v4967 = vsel %vm1662, %v4935, 0.0
        %v4968 = vsel %vm1663, %v4936, 0.0
        %v4969 = vsel %vm1664, %v4937, 0.0
        %4970 = vst.msk [vmem:[#allocation5 + $0x10] sm:$0xff] %vm3390, %v4938
        %4971 = vst.msk [vmem:[#allocation5 + $0x28] sm:$0xff] %vm3390, %v4939
        %4972 = vst.msk [vmem:[#allocation5 + $0x40] sm:$0xff] %vm3390, %v4940
        %4973 = vst.msk [vmem:[#allocation5 + $0x58] sm:$0xff] %vm3390, %v4941
        %4974 = vst.msk [vmem:[#allocation5 + $0x70] sm:$0xff] %vm3390, %v4942
        %4975 = vst.msk [vmem:[#allocation5 + $0x88] sm:$0xff] %vm3390, %v4943
        %4976 = vst.msk [vmem:[#allocation5 + $0xa0] sm:$0xff] %vm3390, %v4944
        %4977 = vst.msk [vmem:[#allocation5 + $0xb8] sm:$0xff] %vm3390, %v4945
        %4978 = vst.msk [vmem:[#allocation5 + $0xd0] sm:$0xff] %vm3390, %v4946
        %4979 = vst.msk [vmem:[#allocation5 + $0xe8] sm:$0xff] %vm3390, %v4947
        %4980 = vst.msk [vmem:[#allocation5 + $0x100] sm:$0xff] %vm3390, %v4948
        %4981 = vst.msk [vmem:[#allocation5 + $0x118] sm:$0xff] %vm3390, %v4949
        %4982 = vst.msk [vmem:[#allocation5 + $0x130] sm:$0xff] %vm3390, %v4950
        %4983 = vst.msk [vmem:[#allocation5 + $0x148] sm:$0xff] %vm3390, %v4951
        %4984 = vst.msk [vmem:[#allocation5 + $0x160] sm:$0xff] %vm3390, %v4952
        %4985 = vst.msk [vmem:[#allocation5 + $0x178] sm:$0xff] %vm3390, %v4953
        %4986 = vst.msk [vmem:[#allocation5 + $0x190] sm:$0xff] %vm3390, %v4954
        %4987 = vst.msk [vmem:[#allocation5 + $0x1a8] sm:$0xff] %vm3390, %v4955
        %4988 = vst.msk [vmem:[#allocation5 + $0x1c0] sm:$0xff] %vm3390, %v4956
        %4989 = vst.msk [vmem:[#allocation5 + $0x1d8] sm:$0xff] %vm3390, %v4957
        %4990 = vst.msk [vmem:[#allocation5 + $0x1f0] sm:$0xff] %vm3390, %v4958
        %4991 = vst.msk [vmem:[#allocation5 + $0x208] sm:$0xff] %vm3390, %v4959
        %4992 = vst.msk [vmem:[#allocation5 + $0x220] sm:$0xff] %vm3390, %v4960
        %4993 = vst.msk [vmem:[#allocation5 + $0x238] sm:$0xff] %vm3390, %v4961
        %4994 = vst.msk [vmem:[#allocation5 + $0x250] sm:$0xff] %vm3390, %v4962
        %4995 = vst.msk [vmem:[#allocation5 + $0x268] sm:$0xff] %vm3390, %v4963
        %4996 = vst.msk [vmem:[#allocation5 + $0x280] sm:$0xff] %vm3390, %v4964
        %4997 = vst.msk [vmem:[#allocation5 + $0x298] sm:$0xff] %vm3390, %v4965
        %4998 = vst.msk [vmem:[#allocation5 + $0x2b0] sm:$0xff] %vm3390, %v4966
        %4999 = vst.msk [vmem:[#allocation5 + $0x2c8] sm:$0xff] %vm3390, %v4967
        %5000 = vst.msk [vmem:[#allocation5 + $0x2e0] sm:$0xff] %vm3390, %v4968
        %5001 = vst.msk [vmem:[#allocation5 + $0x2f8] sm:$0xff] %vm3390, %v4969
        %v5002 = vld [vmem:[#allocation5] sm:$0xff]
        %v5003 = vld [vmem:[#allocation5 + $0x8] sm:$0xff]
        %v5004 = vld [vmem:[#allocation5 + $0x10] sm:$0xff]
        %v5005 = vld [vmem:[#allocation5 + $0x18] sm:$0xff]
        %v5006 = vld [vmem:[#allocation5 + $0x20] sm:$0xff]
        %v5007 = vld [vmem:[#allocation5 + $0x28] sm:$0xff]
        %v5008 = vld [vmem:[#allocation5 + $0x30] sm:$0xff]
        %v5009 = vld [vmem:[#allocation5 + $0x38] sm:$0xff]
        %v5010 = vld [vmem:[#allocation5 + $0x40] sm:$0xff]
        %v5011 = vld [vmem:[#allocation5 + $0x48] sm:$0xff]
        %v5012 = vld [vmem:[#allocation5 + $0x50] sm:$0xff]
        %v5013 = vld [vmem:[#allocation5 + $0x58] sm:$0xff]
        %v5014 = vld [vmem:[#allocation5 + $0x60] sm:$0xff]
        %v5015 = vld [vmem:[#allocation5 + $0x68] sm:$0xff]
        %v5016 = vld [vmem:[#allocation5 + $0x70] sm:$0xff]
        %v5017 = vld [vmem:[#allocation5 + $0x78] sm:$0xff]
        %v5018 = vld [vmem:[#allocation5 + $0x80] sm:$0xff]
        %v5019 = vld [vmem:[#allocation5 + $0x88] sm:$0xff]
        %v5020 = vld [vmem:[#allocation5 + $0x90] sm:$0xff]
        %v5021 = vld [vmem:[#allocation5 + $0x98] sm:$0xff]
        %v5022 = vld [vmem:[#allocation5 + $0xa0] sm:$0xff]
        %v5023 = vld [vmem:[#allocation5 + $0xa8] sm:$0xff]
        %v5024 = vld [vmem:[#allocation5 + $0xb0] sm:$0xff]
        %v5025 = vld [vmem:[#allocation5 + $0xb8] sm:$0xff]
        %v5026 = vld [vmem:[#allocation5 + $0xc0] sm:$0xff]
        %v5027 = vld [vmem:[#allocation5 + $0xc8] sm:$0xff]
        %v5028 = vld [vmem:[#allocation5 + $0xd0] sm:$0xff]
        %v5029 = vld [vmem:[#allocation5 + $0xd8] sm:$0xff]
        %v5030 = vld [vmem:[#allocation5 + $0xe0] sm:$0xff]
        %v5031 = vld [vmem:[#allocation5 + $0xe8] sm:$0xff]
        %v5032 = vld [vmem:[#allocation5 + $0xf0] sm:$0xff]
        %v5033 = vld [vmem:[#allocation5 + $0xf8] sm:$0xff]
        %v5034 = vld [vmem:[#allocation5 + $0x100] sm:$0xff]
        %v5035 = vld [vmem:[#allocation5 + $0x108] sm:$0xff]
        %v5036 = vld [vmem:[#allocation5 + $0x110] sm:$0xff]
        %v5037 = vld [vmem:[#allocation5 + $0x118] sm:$0xff]
        %v5038 = vld [vmem:[#allocation5 + $0x120] sm:$0xff]
        %v5039 = vld [vmem:[#allocation5 + $0x128] sm:$0xff]
        %v5040 = vld [vmem:[#allocation5 + $0x130] sm:$0xff]
        %v5041 = vld [vmem:[#allocation5 + $0x138] sm:$0xff]
        %v5042 = vld [vmem:[#allocation5 + $0x140] sm:$0xff]
        %v5043 = vld [vmem:[#allocation5 + $0x148] sm:$0xff]
        %v5044 = vld [vmem:[#allocation5 + $0x150] sm:$0xff]
        %v5045 = vld [vmem:[#allocation5 + $0x158] sm:$0xff]
        %v5046 = vld [vmem:[#allocation5 + $0x160] sm:$0xff]
        %v5047 = vld [vmem:[#allocation5 + $0x168] sm:$0xff]
        %v5048 = vld [vmem:[#allocation5 + $0x170] sm:$0xff]
        %v5049 = vld [vmem:[#allocation5 + $0x178] sm:$0xff]
        %v5050 = vld [vmem:[#allocation5 + $0x180] sm:$0xff]
        %v5051 = vld [vmem:[#allocation5 + $0x188] sm:$0xff]
        %v5052 = vld [vmem:[#allocation5 + $0x190] sm:$0xff]
        %v5053 = vld [vmem:[#allocation5 + $0x198] sm:$0xff]
        %v5054 = vld [vmem:[#allocation5 + $0x1a0] sm:$0xff]
        %v5055 = vld [vmem:[#allocation5 + $0x1a8] sm:$0xff]
        %v5056 = vld [vmem:[#allocation5 + $0x1b0] sm:$0xff]
        %v5057 = vld [vmem:[#allocation5 + $0x1b8] sm:$0xff]
        %v5058 = vld [vmem:[#allocation5 + $0x1c0] sm:$0xff]
        %v5059 = vld [vmem:[#allocation5 + $0x1c8] sm:$0xff]
        %v5060 = vld [vmem:[#allocation5 + $0x1d0] sm:$0xff]
        %v5061 = vld [vmem:[#allocation5 + $0x1d8] sm:$0xff]
        %v5062 = vld [vmem:[#allocation5 + $0x1e0] sm:$0xff]
        %v5063 = vld [vmem:[#allocation5 + $0x1e8] sm:$0xff]
        %v5064 = vld [vmem:[#allocation5 + $0x1f0] sm:$0xff]
        %v5065 = vld [vmem:[#allocation5 + $0x1f8] sm:$0xff]
        %v5066 = vld [vmem:[#allocation5 + $0x200] sm:$0xff]
        %v5067 = vld [vmem:[#allocation5 + $0x208] sm:$0xff]
        %v5068 = vld [vmem:[#allocation5 + $0x210] sm:$0xff]
        %v5069 = vld [vmem:[#allocation5 + $0x218] sm:$0xff]
        %v5070 = vld [vmem:[#allocation5 + $0x220] sm:$0xff]
        %v5071 = vld [vmem:[#allocation5 + $0x228] sm:$0xff]
        %v5072 = vld [vmem:[#allocation5 + $0x230] sm:$0xff]
        %v5073 = vld [vmem:[#allocation5 + $0x238] sm:$0xff]
        %v5074 = vld [vmem:[#allocation5 + $0x240] sm:$0xff]
        %v5075 = vld [vmem:[#allocation5 + $0x248] sm:$0xff]
        %v5076 = vld [vmem:[#allocation5 + $0x250] sm:$0xff]
        %v5077 = vld [vmem:[#allocation5 + $0x258] sm:$0xff]
        %v5078 = vld [vmem:[#allocation5 + $0x260] sm:$0xff]
        %v5079 = vld [vmem:[#allocation5 + $0x268] sm:$0xff]
        %v5080 = vld [vmem:[#allocation5 + $0x270] sm:$0xff]
        %v5081 = vld [vmem:[#allocation5 + $0x278] sm:$0xff]
        %v5082 = vld [vmem:[#allocation5 + $0x280] sm:$0xff]
        %v5083 = vld [vmem:[#allocation5 + $0x288] sm:$0xff]
        %v5084 = vld [vmem:[#allocation5 + $0x290] sm:$0xff]
        %v5085 = vld [vmem:[#allocation5 + $0x298] sm:$0xff]
        %v5086 = vld [vmem:[#allocation5 + $0x2a0] sm:$0xff]
        %v5087 = vld [vmem:[#allocation5 + $0x2a8] sm:$0xff]
        %v5088 = vld [vmem:[#allocation5 + $0x2b0] sm:$0xff]
        %v5089 = vld [vmem:[#allocation5 + $0x2b8] sm:$0xff]
        %v5090 = vld [vmem:[#allocation5 + $0x2c0] sm:$0xff]
        %v5091 = vld [vmem:[#allocation5 + $0x2c8] sm:$0xff]
        %v5092 = vld [vmem:[#allocation5 + $0x2d0] sm:$0xff]
        %v5093 = vld [vmem:[#allocation5 + $0x2d8] sm:$0xff]
        %v5094 = vld [vmem:[#allocation5 + $0x2e0] sm:$0xff]
        %v5095 = vld [vmem:[#allocation5 + $0x2e8] sm:$0xff]
        %v5096 = vld [vmem:[#allocation5 + $0x2f0] sm:$0xff]
        %v5097 = vld [vmem:[#allocation5 + $0x2f8] sm:$0xff]
        %v5098 = vpack.c.bf16 %v5005, %v5002
        %v5099 = vpack.c.bf16 %v5006, %v5003
        %v5100 = vpack.c.bf16 %v5007, %v5004
        %v5101 = vpack.c.bf16 %v5011, %v5008
        %v5102 = vpack.c.bf16 %v5012, %v5009
        %v5103 = vpack.c.bf16 %v5013, %v5010
        %v5104 = vpack.c.bf16 %v5017, %v5014
        %v5105 = vpack.c.bf16 %v5018, %v5015
        %v5106 = vpack.c.bf16 %v5019, %v5016
        %v5107 = vpack.c.bf16 %v5023, %v5020
        %v5108 = vpack.c.bf16 %v5024, %v5021
        %v5109 = vpack.c.bf16 %v5025, %v5022
        %v5110 = vpack.c.bf16 %v5029, %v5026
        %v5111 = vpack.c.bf16 %v5030, %v5027
        %v5112 = vpack.c.bf16 %v5031, %v5028
        %v5113 = vpack.c.bf16 %v5035, %v5032
        %v5114 = vpack.c.bf16 %v5036, %v5033
        %v5115 = vpack.c.bf16 %v5037, %v5034
        %v5116 = vpack.c.bf16 %v5041, %v5038
        %v5117 = vpack.c.bf16 %v5042, %v5039
        %v5118 = vpack.c.bf16 %v5043, %v5040
        %v5119 = vpack.c.bf16 %v5047, %v5044
        %v5120 = vpack.c.bf16 %v5048, %v5045
        %v5121 = vpack.c.bf16 %v5049, %v5046
        %v5122 = vpack.c.bf16 %v5053, %v5050
        %v5123 = vpack.c.bf16 %v5054, %v5051
        %v5124 = vpack.c.bf16 %v5055, %v5052
        %v5125 = vpack.c.bf16 %v5059, %v5056
        %v5126 = vpack.c.bf16 %v5060, %v5057
        %v5127 = vpack.c.bf16 %v5061, %v5058
        %v5128 = vpack.c.bf16 %v5065, %v5062
        %v5129 = vpack.c.bf16 %v5066, %v5063
        %v5130 = vpack.c.bf16 %v5067, %v5064
        %v5131 = vpack.c.bf16 %v5071, %v5068
        %v5132 = vpack.c.bf16 %v5072, %v5069
        %v5133 = vpack.c.bf16 %v5073, %v5070
        %v5134 = vpack.c.bf16 %v5077, %v5074
        %v5135 = vpack.c.bf16 %v5078, %v5075
        %v5136 = vpack.c.bf16 %v5079, %v5076
        %v5137 = vpack.c.bf16 %v5083, %v5080
        %v5138 = vpack.c.bf16 %v5084, %v5081
        %v5139 = vpack.c.bf16 %v5085, %v5082
        %v5140 = vpack.c.bf16 %v5089, %v5086
        %v5141 = vpack.c.bf16 %v5090, %v5087
        %v5142 = vpack.c.bf16 %v5091, %v5088
        %v5143 = vpack.c.bf16 %v5095, %v5092
        %v5144 = vpack.c.bf16 %v5096, %v5093
        %v5145 = vpack.c.bf16 %v5097, %v5094
        %v5146 = vld [vmem:[%s3] sm:$0xf]
        %v5147 = vld [vmem:[%s3 + $0x4] sm:$0xf]
        %v5148 = vld [vmem:[%s3 + $0x8] sm:$0xf]
        %v5149 = vld [vmem:[%s3 + $0xc] sm:$0xf]
        %v5150 = vld [vmem:[%s3 + $0x10] sm:$0xf]
        %v5151 = vld [vmem:[%s3 + $0x14] sm:$0xf]
        %v5152 = vld [vmem:[%s3 + $0x18] sm:$0xf]
        %v5153 = vld [vmem:[%s3 + $0x1c] sm:$0xf]
        %v5154 = vld [vmem:[%s3 + $0x20] sm:$0xf]
        %v5155 = vld [vmem:[%s3 + $0x24] sm:$0xf]
        %v5156 = vld [vmem:[%s3 + $0x28] sm:$0xf]
        %v5157 = vld [vmem:[%s3 + $0x2c] sm:$0xf]
        %v5158 = vld [vmem:[%s3 + $0x30] sm:$0xf]
        %v5159 = vld [vmem:[%s3 + $0x34] sm:$0xf]
        %v5160 = vld [vmem:[%s3 + $0x38] sm:$0xf]
        %v5161 = vld [vmem:[%s3 + $0x3c] sm:$0xf]
        %v5162 = vld [vmem:[%s3 + $0x40] sm:$0xf]
        %v5163 = vld [vmem:[%s3 + $0x44] sm:$0xf]
        %v5164 = vld [vmem:[%s3 + $0x48] sm:$0xf]
        %v5165 = vld [vmem:[%s3 + $0x4c] sm:$0xf]
        %v5166 = vld [vmem:[%s3 + $0x50] sm:$0xf]
        %v5167 = vld [vmem:[%s3 + $0x54] sm:$0xf]
        %v5168 = vld [vmem:[%s3 + $0x58] sm:$0xf]
        %v5169 = vld [vmem:[%s3 + $0x5c] sm:$0xf]
        %v5170 = vld [vmem:[%s3 + $0x60] sm:$0xf]
        %v5171 = vld [vmem:[%s3 + $0x64] sm:$0xf]
        %v5172 = vld [vmem:[%s3 + $0x68] sm:$0xf]
        %v5173 = vld [vmem:[%s3 + $0x6c] sm:$0xf]
        %v5174 = vld [vmem:[%s3 + $0x70] sm:$0xf]
        %v5175 = vld [vmem:[%s3 + $0x74] sm:$0xf]
        %v5176 = vld [vmem:[%s3 + $0x78] sm:$0xf]
        %v5177 = vld [vmem:[%s3 + $0x7c] sm:$0xf]
        %v5178 = vld [vmem:[%s3 + $0x80] sm:$0xf]
        %v5179 = vld [vmem:[%s3 + $0x84] sm:$0xf]
        %v5180 = vld [vmem:[%s3 + $0x88] sm:$0xf]
        %v5181 = vld [vmem:[%s3 + $0x8c] sm:$0xf]
        %v5182 = vld [vmem:[%s4] sm:$0x1]
        %v5184 = vperm.slane %v5182, 0
        %v5222 = vunpack.c.l.b16 %v5146
        %v5223 = vunpack.c.l.b16 %v5147
        %v5224 = vunpack.c.l.b16 %v5148
        %v5225 = vunpack.c.l.b16 %v5149
        %v5226 = vunpack.c.l.b16 %v5150
        %v5227 = vunpack.c.l.b16 %v5151
        %v5228 = vunpack.c.l.b16 %v5152
        %v5229 = vunpack.c.l.b16 %v5153
        %v5230 = vunpack.c.l.b16 %v5154
        %v5231 = vunpack.c.l.b16 %v5155
        %v5232 = vunpack.c.l.b16 %v5156
        %v5233 = vunpack.c.l.b16 %v5157
        %v5234 = vunpack.c.l.b16 %v5158
        %v5235 = vunpack.c.l.b16 %v5159
        %v5236 = vunpack.c.l.b16 %v5160
        %v5237 = vunpack.c.l.b16 %v5161
        %v5238 = vunpack.c.l.b16 %v5162
        %v5239 = vunpack.c.l.b16 %v5163
        %v5240 = vunpack.c.l.b16 %v5164
        %v5241 = vunpack.c.l.b16 %v5165
        %v5242 = vunpack.c.l.b16 %v5166
        %v5243 = vunpack.c.l.b16 %v5167
        %v5244 = vunpack.c.l.b16 %v5168
        %v5245 = vunpack.c.l.b16 %v5169
        %v5246 = vunpack.c.l.b16 %v5170
        %v5247 = vunpack.c.l.b16 %v5171
        %v5248 = vunpack.c.l.b16 %v5172
        %v5249 = vunpack.c.l.b16 %v5173
        %v5250 = vunpack.c.l.b16 %v5174
        %v5251 = vunpack.c.l.b16 %v5175
        %v5252 = vunpack.c.l.b16 %v5176
        %v5253 = vunpack.c.l.b16 %v5177
        %v5254 = vunpack.c.l.b16 %v5178
        %v5255 = vunpack.c.l.b16 %v5179
        %v5256 = vunpack.c.l.b16 %v5180
        %v5257 = vunpack.c.l.b16 %v5181
        %v5258 = vpack.c.b16 %v5223, %v5222
        %v5259 = vpack.c.b16 %v5225, %v5224
        %v5260 = vpack.c.b16 %v5227, %v5226
        %v5261 = vpack.c.b16 %v5229, %v5228
        %v5262 = vpack.c.b16 %v5231, %v5230
        %v5263 = vpack.c.b16 %v5233, %v5232
        %v5264 = vpack.c.b16 %v5235, %v5234
        %v5265 = vpack.c.b16 %v5237, %v5236
        %v5266 = vpack.c.b16 %v5239, %v5238
        %v5267 = vpack.c.b16 %v5241, %v5240
        %v5268 = vpack.c.b16 %v5243, %v5242
        %v5269 = vpack.c.b16 %v5245, %v5244
        %v5270 = vpack.c.b16 %v5247, %v5246
        %v5271 = vpack.c.b16 %v5249, %v5248
        %v5272 = vpack.c.b16 %v5251, %v5250
        %v5273 = vpack.c.b16 %v5253, %v5252
        %v5274 = vpack.c.b16 %v5255, %v5254
        %v5275 = vpack.c.b16 %v5257, %v5256
        %v5295 = vsel %vm3390, %v5100, 0
        %v5298 = vsel %vm3390, %v5103, 0
        %v5301 = vsel %vm3390, %v5106, 0
        %v5304 = vsel %vm3390, %v5109, 0
        %v5307 = vsel %vm3390, %v5112, 0
        %v5310 = vsel %vm3390, %v5115, 0
        %v5313 = vsel %vm3390, %v5118, 0
        %v5316 = vsel %vm3390, %v5121, 0
        %v5319 = vsel %vm3390, %v5124, 0
        %v5322 = vsel %vm3390, %v5127, 0
        %v5325 = vsel %vm3390, %v5130, 0
        %v5328 = vsel %vm3390, %v5133, 0
        %v5331 = vsel %vm3390, %v5136, 0
        %v5334 = vsel %vm3390, %v5139, 0
        %v5337 = vsel %vm3390, %v5142, 0
        %v5340 = vsel %vm3390, %v5145, 0
        %5342 = vmatpush.bf16.msra.mxu0 %v5265
        %5343 = vmatpush.bf16.msra.mxu0 %v5264
        %5344 = vmatpush.bf16.msra.mxu0 %v5263
        %5345 = vmatpush.bf16.msra.mxu0 %v5262
        %5346 = vmatpush.bf16.msra.mxu0 %v5261
        %5347 = vmatpush.bf16.msra.mxu0 %v5260
        %5348 = vmatpush.bf16.msra.mxu0 %v5259
        %5349 = vmatpush.bf16.msra.mxu0 %v5258
        %5350 = vmatmul.bf16.gmra.mxu0 %v5098
        %v5351 = vpop.f32.mrf.mxu0
        %v5352 = vadd.f32 %v5184, %v5351
        %v5353 = vpop.f32.mrf.mxu0
        %v5354 = vadd.f32 %v5184, %v5353
        %5355 = vmatmul.bf16.gmra.mxu0 %v5101
        %v5356 = vpop.f32.mrf.mxu0
        %v5357 = vadd.f32 %v5184, %v5356
        %v5358 = vpop.f32.mrf.mxu0
        %v5359 = vadd.f32 %v5184, %v5358
        %5360 = vmatmul.bf16.gmra.mxu0 %v5104
        %v5361 = vpop.f32.mrf.mxu0
        %v5362 = vadd.f32 %v5184, %v5361
        %v5363 = vpop.f32.mrf.mxu0
        %v5364 = vadd.f32 %v5184, %v5363
        %5365 = vmatmul.bf16.gmra.mxu0 %v5107
        %v5366 = vpop.f32.mrf.mxu0
        %v5367 = vadd.f32 %v5184, %v5366
        %v5368 = vpop.f32.mrf.mxu0
        %v5369 = vadd.f32 %v5184, %v5368
        %5370 = vmatmul.bf16.gmra.mxu0 %v5110
        %v5371 = vpop.f32.mrf.mxu0
        %v5372 = vadd.f32 %v5184, %v5371
        %v5373 = vpop.f32.mrf.mxu0
        %v5374 = vadd.f32 %v5184, %v5373
        %5375 = vmatmul.bf16.gmra.mxu0 %v5113
        %v5376 = vpop.f32.mrf.mxu0
        %v5377 = vadd.f32 %v5184, %v5376
        %v5378 = vpop.f32.mrf.mxu0
        %v5379 = vadd.f32 %v5184, %v5378
        %5380 = vmatmul.bf16.gmra.mxu0 %v5116
        %v5381 = vpop.f32.mrf.mxu0
        %v5382 = vadd.f32 %v5184, %v5381
        %v5383 = vpop.f32.mrf.mxu0
        %v5384 = vadd.f32 %v5184, %v5383
        %5385 = vmatmul.bf16.gmra.mxu0 %v5119
        %v5386 = vpop.f32.mrf.mxu0
        %v5387 = vadd.f32 %v5184, %v5386
        %v5388 = vpop.f32.mrf.mxu0
        %v5389 = vadd.f32 %v5184, %v5388
        %5390 = vmatmul.bf16.gmra.mxu0 %v5122
        %v5391 = vpop.f32.mrf.mxu0
        %v5392 = vadd.f32 %v5184, %v5391
        %v5393 = vpop.f32.mrf.mxu0
        %v5394 = vadd.f32 %v5184, %v5393
        %5395 = vmatmul.bf16.gmra.mxu0 %v5125
        %v5396 = vpop.f32.mrf.mxu0
        %v5397 = vadd.f32 %v5184, %v5396
        %v5398 = vpop.f32.mrf.mxu0
        %v5399 = vadd.f32 %v5184, %v5398
        %5400 = vmatmul.bf16.gmra.mxu0 %v5128
        %v5401 = vpop.f32.mrf.mxu0
        %v5402 = vadd.f32 %v5184, %v5401
        %v5403 = vpop.f32.mrf.mxu0
        %v5404 = vadd.f32 %v5184, %v5403
        %5405 = vmatmul.bf16.gmra.mxu0 %v5131
        %v5406 = vpop.f32.mrf.mxu0
        %v5407 = vadd.f32 %v5184, %v5406
        %v5408 = vpop.f32.mrf.mxu0
        %v5409 = vadd.f32 %v5184, %v5408
        %5410 = vmatmul.bf16.gmra.mxu0 %v5134
        %v5411 = vpop.f32.mrf.mxu0
        %v5412 = vadd.f32 %v5184, %v5411
        %v5413 = vpop.f32.mrf.mxu0
        %v5414 = vadd.f32 %v5184, %v5413
        %5415 = vmatmul.bf16.gmra.mxu0 %v5137
        %v5416 = vpop.f32.mrf.mxu0
        %v5417 = vadd.f32 %v5184, %v5416
        %v5418 = vpop.f32.mrf.mxu0
        %v5419 = vadd.f32 %v5184, %v5418
        %5420 = vmatmul.bf16.gmra.mxu0 %v5140
        %v5421 = vpop.f32.mrf.mxu0
        %v5422 = vadd.f32 %v5184, %v5421
        %v5423 = vpop.f32.mrf.mxu0
        %v5424 = vadd.f32 %v5184, %v5423
        %5425 = vmatmul.bf16.gmra.mxu0 %v5143
        %v5426 = vpop.f32.mrf.mxu0
        %v5427 = vadd.f32 %v5184, %v5426
        %v5428 = vpop.f32.mrf.mxu0
        %v5429 = vadd.f32 %v5184, %v5428
        %5430 = vdwg.mxu0
        %5431 = vmatpush.bf16.msra.mxu0 %v5273
        %5432 = vmatpush.bf16.msra.mxu0 %v5272
        %5433 = vmatpush.bf16.msra.mxu0 %v5271
        %5434 = vmatpush.bf16.msra.mxu0 %v5270
        %5435 = vmatpush.bf16.msra.mxu0 %v5269
        %5436 = vmatpush.bf16.msra.mxu0 %v5268
        %5437 = vmatpush.bf16.msra.mxu0 %v5267
        %5438 = vmatpush.bf16.msra.mxu0 %v5266
        %5439 = vmatmul.bf16.gmra.mxu0 %v5099
        %v5440 = vpop.f32.mrf.mxu0
        %v5441 = vadd.f32 %v5352, %v5440
        %v5442 = vpop.f32.mrf.mxu0
        %v5443 = vadd.f32 %v5354, %v5442
        %5444 = vmatmul.bf16.gmra.mxu0 %v5102
        %v5445 = vpop.f32.mrf.mxu0
        %v5446 = vadd.f32 %v5357, %v5445
        %v5447 = vpop.f32.mrf.mxu0
        %v5448 = vadd.f32 %v5359, %v5447
        %5449 = vmatmul.bf16.gmra.mxu0 %v5105
        %v5450 = vpop.f32.mrf.mxu0
        %v5451 = vadd.f32 %v5362, %v5450
        %v5452 = vpop.f32.mrf.mxu0
        %v5453 = vadd.f32 %v5364, %v5452
        %5454 = vmatmul.bf16.gmra.mxu0 %v5108
        %v5455 = vpop.f32.mrf.mxu0
        %v5456 = vadd.f32 %v5367, %v5455
        %v5457 = vpop.f32.mrf.mxu0
        %v5458 = vadd.f32 %v5369, %v5457
        %5459 = vmatmul.bf16.gmra.mxu0 %v5111
        %v5460 = vpop.f32.mrf.mxu0
        %v5461 = vadd.f32 %v5372, %v5460
        %v5462 = vpop.f32.mrf.mxu0
        %v5463 = vadd.f32 %v5374, %v5462
        %5464 = vmatmul.bf16.gmra.mxu0 %v5114
        %v5465 = vpop.f32.mrf.mxu0
        %v5466 = vadd.f32 %v5377, %v5465
        %v5467 = vpop.f32.mrf.mxu0
        %v5468 = vadd.f32 %v5379, %v5467
        %5469 = vmatmul.bf16.gmra.mxu0 %v5117
        %v5470 = vpop.f32.mrf.mxu0
        %v5471 = vadd.f32 %v5382, %v5470
        %v5472 = vpop.f32.mrf.mxu0
        %v5473 = vadd.f32 %v5384, %v5472
        %5474 = vmatmul.bf16.gmra.mxu0 %v5120
        %v5475 = vpop.f32.mrf.mxu0
        %v5476 = vadd.f32 %v5387, %v5475
        %v5477 = vpop.f32.mrf.mxu0
        %v5478 = vadd.f32 %v5389, %v5477
        %5479 = vmatmul.bf16.gmra.mxu0 %v5123
        %v5480 = vpop.f32.mrf.mxu0
        %v5481 = vadd.f32 %v5392, %v5480
        %v5482 = vpop.f32.mrf.mxu0
        %v5483 = vadd.f32 %v5394, %v5482
        %5484 = vmatmul.bf16.gmra.mxu0 %v5126
        %v5485 = vpop.f32.mrf.mxu0
        %v5486 = vadd.f32 %v5397, %v5485
        %v5487 = vpop.f32.mrf.mxu0
        %v5488 = vadd.f32 %v5399, %v5487
        %5489 = vmatmul.bf16.gmra.mxu0 %v5129
        %v5490 = vpop.f32.mrf.mxu0
        %v5491 = vadd.f32 %v5402, %v5490
        %v5492 = vpop.f32.mrf.mxu0
        %v5493 = vadd.f32 %v5404, %v5492
        %5494 = vmatmul.bf16.gmra.mxu0 %v5132
        %v5495 = vpop.f32.mrf.mxu0
        %v5496 = vadd.f32 %v5407, %v5495
        %v5497 = vpop.f32.mrf.mxu0
        %v5498 = vadd.f32 %v5409, %v5497
        %5499 = vmatmul.bf16.gmra.mxu0 %v5135
        %v5500 = vpop.f32.mrf.mxu0
        %v5501 = vadd.f32 %v5412, %v5500
        %v5502 = vpop.f32.mrf.mxu0
        %v5503 = vadd.f32 %v5414, %v5502
        %5504 = vmatmul.bf16.gmra.mxu0 %v5138
        %v5505 = vpop.f32.mrf.mxu0
        %v5506 = vadd.f32 %v5417, %v5505
        %v5507 = vpop.f32.mrf.mxu0
        %v5508 = vadd.f32 %v5419, %v5507
        %5509 = vmatmul.bf16.gmra.mxu0 %v5141
        %v5510 = vpop.f32.mrf.mxu0
        %v5511 = vadd.f32 %v5422, %v5510
        %v5512 = vpop.f32.mrf.mxu0
        %v5513 = vadd.f32 %v5424, %v5512
        %5514 = vmatmul.bf16.gmra.mxu0 %v5144
        %v5515 = vpop.f32.mrf.mxu0
        %v5516 = vadd.f32 %v5427, %v5515
        %v5517 = vpop.f32.mrf.mxu0
        %v5518 = vadd.f32 %v5429, %v5517
        %5519 = vdwg.mxu0
        %5520 = vmatpush.bf16.msra.mxu0 0
        %5521 = vmatpush.bf16.msra.mxu0 0
        %5522 = vmatpush.bf16.msra.mxu0 0
        %5523 = vmatpush.bf16.msra.mxu0 0
        %5524 = vmatpush.bf16.msra.mxu0 0
        %5525 = vmatpush.bf16.msra.mxu0 0
        %5526 = vmatpush.bf16.msra.mxu0 %v5275
        %5527 = vmatpush.bf16.msra.mxu0 %v5274
        %5528 = vmatmul.bf16.gmra.mxu0 %v5295
        %v5529 = vpop.f32.mrf.mxu0
        %v5530 = vadd.f32 %v5441, %v5529
        %v5531 = vpop.f32.mrf.mxu0
        %v5532 = vadd.f32 %v5443, %v5531
        %5533 = vmatmul.bf16.gmra.mxu0 %v5298
        %v5534 = vpop.f32.mrf.mxu0
        %v5535 = vadd.f32 %v5446, %v5534
        %v5536 = vpop.f32.mrf.mxu0
        %v5537 = vadd.f32 %v5448, %v5536
        %5538 = vmatmul.bf16.gmra.mxu0 %v5301
        %v5539 = vpop.f32.mrf.mxu0
        %v5540 = vadd.f32 %v5451, %v5539
        %v5541 = vpop.f32.mrf.mxu0
        %v5542 = vadd.f32 %v5453, %v5541
        %5543 = vmatmul.bf16.gmra.mxu0 %v5304
        %v5544 = vpop.f32.mrf.mxu0
        %v5545 = vadd.f32 %v5456, %v5544
        %v5546 = vpop.f32.mrf.mxu0
        %v5547 = vadd.f32 %v5458, %v5546
        %5548 = vmatmul.bf16.gmra.mxu0 %v5307
        %v5549 = vpop.f32.mrf.mxu0
        %v5550 = vadd.f32 %v5461, %v5549
        %v5551 = vpop.f32.mrf.mxu0
        %v5552 = vadd.f32 %v5463, %v5551
        %5553 = vmatmul.bf16.gmra.mxu0 %v5310
        %v5554 = vpop.f32.mrf.mxu0
        %v5555 = vadd.f32 %v5466, %v5554
        %v5556 = vpop.f32.mrf.mxu0
        %v5557 = vadd.f32 %v5468, %v5556
        %5558 = vmatmul.bf16.gmra.mxu0 %v5313
        %v5559 = vpop.f32.mrf.mxu0
        %v5560 = vadd.f32 %v5471, %v5559
        %v5561 = vpop.f32.mrf.mxu0
        %v5562 = vadd.f32 %v5473, %v5561
        %5563 = vmatmul.bf16.gmra.mxu0 %v5316
        %v5564 = vpop.f32.mrf.mxu0
        %v5565 = vadd.f32 %v5476, %v5564
        %v5566 = vpop.f32.mrf.mxu0
        %v5567 = vadd.f32 %v5478, %v5566
        %5568 = vmatmul.bf16.gmra.mxu0 %v5319
        %v5569 = vpop.f32.mrf.mxu0
        %v5570 = vadd.f32 %v5481, %v5569
        %v5571 = vpop.f32.mrf.mxu0
        %v5572 = vadd.f32 %v5483, %v5571
        %5573 = vmatmul.bf16.gmra.mxu0 %v5322
        %v5574 = vpop.f32.mrf.mxu0
        %v5575 = vadd.f32 %v5486, %v5574
        %v5576 = vpop.f32.mrf.mxu0
        %v5577 = vadd.f32 %v5488, %v5576
        %5578 = vmatmul.bf16.gmra.mxu0 %v5325
        %v5579 = vpop.f32.mrf.mxu0
        %v5580 = vadd.f32 %v5491, %v5579
        %v5581 = vpop.f32.mrf.mxu0
        %v5582 = vadd.f32 %v5493, %v5581
        %5583 = vmatmul.bf16.gmra.mxu0 %v5328
        %v5584 = vpop.f32.mrf.mxu0
        %v5585 = vadd.f32 %v5496, %v5584
        %v5586 = vpop.f32.mrf.mxu0
        %v5587 = vadd.f32 %v5498, %v5586
        %5588 = vmatmul.bf16.gmra.mxu0 %v5331
        %v5589 = vpop.f32.mrf.mxu0
        %v5590 = vadd.f32 %v5501, %v5589
        %v5591 = vpop.f32.mrf.mxu0
        %v5592 = vadd.f32 %v5503, %v5591
        %5593 = vmatmul.bf16.gmra.mxu0 %v5334
        %v5594 = vpop.f32.mrf.mxu0
        %v5595 = vadd.f32 %v5506, %v5594
        %v5596 = vpop.f32.mrf.mxu0
        %v5597 = vadd.f32 %v5508, %v5596
        %5598 = vmatmul.bf16.gmra.mxu0 %v5337
        %v5599 = vpop.f32.mrf.mxu0
        %v5600 = vadd.f32 %v5511, %v5599
        %v5601 = vpop.f32.mrf.mxu0
        %v5602 = vadd.f32 %v5513, %v5601
        %5603 = vmatmul.bf16.gmra.mxu0 %v5340
        %v5604 = vpop.f32.mrf.mxu0
        %v5605 = vadd.f32 %v5516, %v5604
        %v5606 = vpop.f32.mrf.mxu0
        %v5607 = vadd.f32 %v5518, %v5606
        %5608 = vdwg.mxu0
        %v5609 = vmax.f32 %v5530, 0.0
        %v5610 = vmax.f32 %v5532, 0.0
        %v5611 = vmax.f32 %v5535, 0.0
        %v5612 = vmax.f32 %v5537, 0.0
        %v5613 = vmax.f32 %v5540, 0.0
        %v5614 = vmax.f32 %v5542, 0.0
        %v5615 = vmax.f32 %v5545, 0.0
        %v5616 = vmax.f32 %v5547, 0.0
        %v5617 = vmax.f32 %v5550, 0.0
        %v5618 = vmax.f32 %v5552, 0.0
        %v5619 = vmax.f32 %v5555, 0.0
        %v5620 = vmax.f32 %v5557, 0.0
        %v5621 = vmax.f32 %v5560, 0.0
        %v5622 = vmax.f32 %v5562, 0.0
        %v5623 = vmax.f32 %v5565, 0.0
        %v5624 = vmax.f32 %v5567, 0.0
        %v5625 = vmax.f32 %v5570, 0.0
        %v5626 = vmax.f32 %v5572, 0.0
        %v5627 = vmax.f32 %v5575, 0.0
        %v5628 = vmax.f32 %v5577, 0.0
        %v5629 = vmax.f32 %v5580, 0.0
        %v5630 = vmax.f32 %v5582, 0.0
        %v5631 = vmax.f32 %v5585, 0.0
        %v5632 = vmax.f32 %v5587, 0.0
        %v5633 = vmax.f32 %v5590, 0.0
        %v5634 = vmax.f32 %v5592, 0.0
        %v5635 = vmax.f32 %v5595, 0.0
        %v5636 = vmax.f32 %v5597, 0.0
        %v5637 = vmax.f32 %v5600, 0.0
        %v5638 = vmax.f32 %v5602, 0.0
        %v5639 = vmax.f32 %v5605, 0.0
        %v5640 = vmax.f32 %v5607, 0.0
        %vm5641 = vcmask 523264
        %5642 = vst.msk [vmem:[#allocation6] sm:$0xff] %vm5641, 0.0
        %5643 = vst.msk [vmem:[#allocation6 + $0x8] sm:$0xff] %vm5641, 0.0
        %5644 = vst.msk [vmem:[#allocation6 + $0x10] sm:$0xff] %vm5641, 0.0
        %5645 = vst.msk [vmem:[#allocation6 + $0x18] sm:$0xff] %vm5641, 0.0
        %5646 = vst.msk [vmem:[#allocation6 + $0x20] sm:$0xff] %vm5641, 0.0
        %5647 = vst.msk [vmem:[#allocation6 + $0x28] sm:$0xff] %vm5641, 0.0
        %5648 = vst.msk [vmem:[#allocation6 + $0x30] sm:$0xff] %vm5641, 0.0
        %5649 = vst.msk [vmem:[#allocation6 + $0x38] sm:$0xff] %vm5641, 0.0
        %5650 = vst.msk [vmem:[#allocation6 + $0x40] sm:$0xff] %vm5641, 0.0
        %5651 = vst.msk [vmem:[#allocation6 + $0x48] sm:$0xff] %vm5641, 0.0
        %5652 = vst.msk [vmem:[#allocation6 + $0x50] sm:$0xff] %vm5641, 0.0
        %5653 = vst.msk [vmem:[#allocation6 + $0x58] sm:$0xff] %vm5641, 0.0
        %5654 = vst.msk [vmem:[#allocation6 + $0x60] sm:$0xff] %vm5641, 0.0
        %5655 = vst.msk [vmem:[#allocation6 + $0x68] sm:$0xff] %vm5641, 0.0
        %5656 = vst.msk [vmem:[#allocation6 + $0x70] sm:$0xff] %vm5641, 0.0
        %5657 = vst.msk [vmem:[#allocation6 + $0x78] sm:$0xff] %vm5641, 0.0
        %5658 = vst.msk [vmem:[#allocation6 + $0x80] sm:$0xff] %vm5641, 0.0
        %5659 = vst.msk [vmem:[#allocation6 + $0x88] sm:$0xff] %vm5641, 0.0
        %5660 = vst.msk [vmem:[#allocation6 + $0x90] sm:$0xff] %vm5641, 0.0
        %5661 = vst.msk [vmem:[#allocation6 + $0x98] sm:$0xff] %vm5641, 0.0
        %5662 = vst.msk [vmem:[#allocation6 + $0xa0] sm:$0xff] %vm5641, 0.0
        %5663 = vst.msk [vmem:[#allocation6 + $0xa8] sm:$0xff] %vm5641, 0.0
        %5664 = vst.msk [vmem:[#allocation6 + $0xb0] sm:$0xff] %vm5641, 0.0
        %5665 = vst.msk [vmem:[#allocation6 + $0xb8] sm:$0xff] %vm5641, 0.0
        %5666 = vst.msk [vmem:[#allocation6 + $0xc0] sm:$0xff] %vm5641, 0.0
        %5667 = vst.msk [vmem:[#allocation6 + $0xc8] sm:$0xff] %vm5641, 0.0
        %5668 = vst.msk [vmem:[#allocation6 + $0xd0] sm:$0xff] %vm5641, 0.0
        %5669 = vst.msk [vmem:[#allocation6 + $0xd8] sm:$0xff] %vm5641, 0.0
        %5670 = vst.msk [vmem:[#allocation6 + $0xe0] sm:$0xff] %vm5641, 0.0
        %5671 = vst.msk [vmem:[#allocation6 + $0xe8] sm:$0xff] %vm5641, 0.0
        %5672 = vst.msk [vmem:[#allocation6 + $0xf0] sm:$0xff] %vm5641, 0.0
        %5673 = vst.msk [vmem:[#allocation6 + $0xf8] sm:$0xff] %vm5641, 0.0
        %5674 = vst.msk [vmem:[#allocation6 + $0x100] sm:$0xff] %vm5641, 0.0
        %5675 = vst.msk [vmem:[#allocation6 + $0x108] sm:$0xff] %vm5641, 0.0
        %5676 = vst.msk [vmem:[#allocation6 + $0x110] sm:$0xff] %vm5641, 0.0
        %5677 = vst.msk [vmem:[#allocation6 + $0x118] sm:$0xff] %vm5641, 0.0
        %5678 = vst.msk [vmem:[#allocation6 + $0x120] sm:$0xff] %vm5641, 0.0
        %5679 = vst.msk [vmem:[#allocation6 + $0x128] sm:$0xff] %vm5641, 0.0
        %5680 = vst.msk [vmem:[#allocation6 + $0x130] sm:$0xff] %vm5641, 0.0
        %5681 = vst.msk [vmem:[#allocation6 + $0x138] sm:$0xff] %vm5641, 0.0
        %5682 = vst.msk [vmem:[#allocation6 + $0x20] sm:$0xff] %vm5641, %v5609
        %5683 = vst.msk [vmem:[#allocation6 + $0x28] sm:$0xff] %vm5641, %v5610
        %5684 = vst.msk [vmem:[#allocation6 + $0x30] sm:$0xff] %vm5641, %v5611
        %5685 = vst.msk [vmem:[#allocation6 + $0x38] sm:$0xff] %vm5641, %v5612
        %5686 = vst.msk [vmem:[#allocation6 + $0x40] sm:$0xff] %vm5641, %v5613
        %5687 = vst.msk [vmem:[#allocation6 + $0x48] sm:$0xff] %vm5641, %v5614
        %5688 = vst.msk [vmem:[#allocation6 + $0x50] sm:$0xff] %vm5641, %v5615
        %5689 = vst.msk [vmem:[#allocation6 + $0x58] sm:$0xff] %vm5641, %v5616
        %5690 = vst.msk [vmem:[#allocation6 + $0x60] sm:$0xff] %vm5641, %v5617
        %5691 = vst.msk [vmem:[#allocation6 + $0x68] sm:$0xff] %vm5641, %v5618
        %5692 = vst.msk [vmem:[#allocation6 + $0x70] sm:$0xff] %vm5641, %v5619
        %5693 = vst.msk [vmem:[#allocation6 + $0x78] sm:$0xff] %vm5641, %v5620
        %5694 = vst.msk [vmem:[#allocation6 + $0x80] sm:$0xff] %vm5641, %v5621
        %5695 = vst.msk [vmem:[#allocation6 + $0x88] sm:$0xff] %vm5641, %v5622
        %5696 = vst.msk [vmem:[#allocation6 + $0x90] sm:$0xff] %vm5641, %v5623
        %5697 = vst.msk [vmem:[#allocation6 + $0x98] sm:$0xff] %vm5641, %v5624
        %5698 = vst.msk [vmem:[#allocation6 + $0xa0] sm:$0xff] %vm5641, %v5625
        %5699 = vst.msk [vmem:[#allocation6 + $0xa8] sm:$0xff] %vm5641, %v5626
        %5700 = vst.msk [vmem:[#allocation6 + $0xb0] sm:$0xff] %vm5641, %v5627
        %5701 = vst.msk [vmem:[#allocation6 + $0xb8] sm:$0xff] %vm5641, %v5628
        %5702 = vst.msk [vmem:[#allocation6 + $0xc0] sm:$0xff] %vm5641, %v5629
        %5703 = vst.msk [vmem:[#allocation6 + $0xc8] sm:$0xff] %vm5641, %v5630
        %5704 = vst.msk [vmem:[#allocation6 + $0xd0] sm:$0xff] %vm5641, %v5631
        %5705 = vst.msk [vmem:[#allocation6 + $0xd8] sm:$0xff] %vm5641, %v5632
        %5706 = vst.msk [vmem:[#allocation6 + $0xe0] sm:$0xff] %vm5641, %v5633
        %5707 = vst.msk [vmem:[#allocation6 + $0xe8] sm:$0xff] %vm5641, %v5634
        %5708 = vst.msk [vmem:[#allocation6 + $0xf0] sm:$0xff] %vm5641, %v5635
        %5709 = vst.msk [vmem:[#allocation6 + $0xf8] sm:$0xff] %vm5641, %v5636
        %5710 = vst.msk [vmem:[#allocation6 + $0x100] sm:$0xff] %vm5641, %v5637
        %5711 = vst.msk [vmem:[#allocation6 + $0x108] sm:$0xff] %vm5641, %v5638
        %5712 = vst.msk [vmem:[#allocation6 + $0x110] sm:$0xff] %vm5641, %v5639
        %5713 = vst.msk [vmem:[#allocation6 + $0x118] sm:$0xff] %vm5641, %v5640
        %v5714 = vld [vmem:[#allocation6 + $0xf] sm:$0xff]
        %v5715 = vld [vmem:[#allocation6 + $0x17] sm:$0xff]
        %v5716 = vld [vmem:[#allocation6 + $0x1f] sm:$0xff]
        %v5717 = vld [vmem:[#allocation6 + $0x27] sm:$0xff]
        %v5718 = vld [vmem:[#allocation6 + $0x2f] sm:$0xff]
        %v5719 = vld [vmem:[#allocation6 + $0x37] sm:$0xff]
        %v5720 = vld [vmem:[#allocation6 + $0x3f] sm:$0xff]
        %v5721 = vld [vmem:[#allocation6 + $0x47] sm:$0xff]
        %v5722 = vld [vmem:[#allocation6 + $0x4f] sm:$0xff]
        %v5723 = vld [vmem:[#allocation6 + $0x57] sm:$0xff]
        %v5724 = vld [vmem:[#allocation6 + $0x5f] sm:$0xff]
        %v5725 = vld [vmem:[#allocation6 + $0x67] sm:$0xff]
        %v5726 = vld [vmem:[#allocation6 + $0x6f] sm:$0xff]
        %v5727 = vld [vmem:[#allocation6 + $0x77] sm:$0xff]
        %v5728 = vld [vmem:[#allocation6 + $0x7f] sm:$0xff]
        %v5729 = vld [vmem:[#allocation6 + $0x87] sm:$0xff]
        %v5730 = vld [vmem:[#allocation6 + $0x8f] sm:$0xff]
        %v5731 = vld [vmem:[#allocation6 + $0x97] sm:$0xff]
        %v5732 = vld [vmem:[#allocation6 + $0x9f] sm:$0xff]
        %v5733 = vld [vmem:[#allocation6 + $0xa7] sm:$0xff]
        %v5734 = vld [vmem:[#allocation6 + $0xaf] sm:$0xff]
        %v5735 = vld [vmem:[#allocation6 + $0xb7] sm:$0xff]
        %v5736 = vld [vmem:[#allocation6 + $0xbf] sm:$0xff]
        %v5737 = vld [vmem:[#allocation6 + $0xc7] sm:$0xff]
        %v5738 = vld [vmem:[#allocation6 + $0xcf] sm:$0xff]
        %v5739 = vld [vmem:[#allocation6 + $0xd7] sm:$0xff]
        %v5740 = vld [vmem:[#allocation6 + $0xdf] sm:$0xff]
        %v5741 = vld [vmem:[#allocation6 + $0xe7] sm:$0xff]
        %v5742 = vld [vmem:[#allocation6 + $0xef] sm:$0xff]
        %v5743 = vld [vmem:[#allocation6 + $0xf7] sm:$0xff]
        %v5744 = vld [vmem:[#allocation6 + $0xff] sm:$0xff]
        %v5745 = vld [vmem:[#allocation6 + $0x107] sm:$0xff]
        %v5746 = vsel %vm1248, %v5714, 0.0
        %v5747 = vsel %vm1249, %v5715, 0.0
        %v5748 = vsel %vm1250, %v5716, 0.0
        %v5749 = vsel %vm1251, %v5717, 0.0
        %v5750 = vsel %vm1252, %v5718, 0.0
        %v5751 = vsel %vm1253, %v5719, 0.0
        %v5752 = vsel %vm1254, %v5720, 0.0
        %v5753 = vsel %vm1255, %v5721, 0.0
        %v5754 = vsel %vm1256, %v5722, 0.0
        %v5755 = vsel %vm1257, %v5723, 0.0
        %v5756 = vsel %vm1258, %v5724, 0.0
        %v5757 = vsel %vm1259, %v5725, 0.0
        %v5758 = vsel %vm1260, %v5726, 0.0
        %v5759 = vsel %vm1261, %v5727, 0.0
        %v5760 = vsel %vm1262, %v5728, 0.0
        %v5761 = vsel %vm1263, %v5729, 0.0
        %v5762 = vsel %vm1264, %v5730, 0.0
        %v5763 = vsel %vm1265, %v5731, 0.0
        %v5764 = vsel %vm1266, %v5732, 0.0
        %v5765 = vsel %vm1267, %v5733, 0.0
        %v5766 = vsel %vm1268, %v5734, 0.0
        %v5767 = vsel %vm1269, %v5735, 0.0
        %v5768 = vsel %vm1270, %v5736, 0.0
        %v5769 = vsel %vm1271, %v5737, 0.0
        %v5770 = vsel %vm1272, %v5738, 0.0
        %v5771 = vsel %vm1273, %v5739, 0.0
        %v5772 = vsel %vm1274, %v5740, 0.0
        %v5773 = vsel %vm1275, %v5741, 0.0
        %v5774 = vsel %vm1276, %v5742, 0.0
        %v5775 = vsel %vm1277, %v5743, 0.0
        %v5776 = vsel %vm1278, %v5744, 0.0
        %v5777 = vsel %vm1279, %v5745, 0.0
        %5778 = vst.msk [vmem:[#allocation7] sm:$0xff] %vm5641, %v5746
        %5779 = vst.msk [vmem:[#allocation7 + $0x28] sm:$0xff] %vm5641, %v5747
        %5780 = vst.msk [vmem:[#allocation7 + $0x50] sm:$0xff] %vm5641, %v5748
        %5781 = vst.msk [vmem:[#allocation7 + $0x78] sm:$0xff] %vm5641, %v5749
        %5782 = vst.msk [vmem:[#allocation7 + $0xa0] sm:$0xff] %vm5641, %v5750
        %5783 = vst.msk [vmem:[#allocation7 + $0xc8] sm:$0xff] %vm5641, %v5751
        %5784 = vst.msk [vmem:[#allocation7 + $0xf0] sm:$0xff] %vm5641, %v5752
        %5785 = vst.msk [vmem:[#allocation7 + $0x118] sm:$0xff] %vm5641, %v5753
        %5786 = vst.msk [vmem:[#allocation7 + $0x140] sm:$0xff] %vm5641, %v5754
        %5787 = vst.msk [vmem:[#allocation7 + $0x168] sm:$0xff] %vm5641, %v5755
        %5788 = vst.msk [vmem:[#allocation7 + $0x190] sm:$0xff] %vm5641, %v5756
        %5789 = vst.msk [vmem:[#allocation7 + $0x1b8] sm:$0xff] %vm5641, %v5757
        %5790 = vst.msk [vmem:[#allocation7 + $0x1e0] sm:$0xff] %vm5641, %v5758
        %5791 = vst.msk [vmem:[#allocation7 + $0x208] sm:$0xff] %vm5641, %v5759
        %5792 = vst.msk [vmem:[#allocation7 + $0x230] sm:$0xff] %vm5641, %v5760
        %5793 = vst.msk [vmem:[#allocation7 + $0x258] sm:$0xff] %vm5641, %v5761
        %5794 = vst.msk [vmem:[#allocation7 + $0x280] sm:$0xff] %vm5641, %v5762
        %5795 = vst.msk [vmem:[#allocation7 + $0x2a8] sm:$0xff] %vm5641, %v5763
        %5796 = vst.msk [vmem:[#allocation7 + $0x2d0] sm:$0xff] %vm5641, %v5764
        %5797 = vst.msk [vmem:[#allocation7 + $0x2f8] sm:$0xff] %vm5641, %v5765
        %5798 = vst.msk [vmem:[#allocation7 + $0x320] sm:$0xff] %vm5641, %v5766
        %5799 = vst.msk [vmem:[#allocation7 + $0x348] sm:$0xff] %vm5641, %v5767
        %5800 = vst.msk [vmem:[#allocation7 + $0x370] sm:$0xff] %vm5641, %v5768
        %5801 = vst.msk [vmem:[#allocation7 + $0x398] sm:$0xff] %vm5641, %v5769
        %5802 = vst.msk [vmem:[#allocation7 + $0x3c0] sm:$0xff] %vm5641, %v5770
        %5803 = vst.msk [vmem:[#allocation7 + $0x3e8] sm:$0xff] %vm5641, %v5771
        %5804 = vst.msk [vmem:[#allocation7 + $0x410] sm:$0xff] %vm5641, %v5772
        %5805 = vst.msk [vmem:[#allocation7 + $0x438] sm:$0xff] %vm5641, %v5773
        %5806 = vst.msk [vmem:[#allocation7 + $0x460] sm:$0xff] %vm5641, %v5774
        %5807 = vst.msk [vmem:[#allocation7 + $0x488] sm:$0xff] %vm5641, %v5775
        %5808 = vst.msk [vmem:[#allocation7 + $0x4b0] sm:$0xff] %vm5641, %v5776
        %5809 = vst.msk [vmem:[#allocation7 + $0x4d8] sm:$0xff] %vm5641, %v5777
        %v5810 = vld [vmem:[#allocation6 + $0x10] sm:$0xff]
        %v5811 = vld [vmem:[#allocation6 + $0x18] sm:$0xff]
        %v5812 = vld [vmem:[#allocation6 + $0x20] sm:$0xff]
        %v5813 = vld [vmem:[#allocation6 + $0x28] sm:$0xff]
        %v5814 = vld [vmem:[#allocation6 + $0x30] sm:$0xff]
        %v5815 = vld [vmem:[#allocation6 + $0x38] sm:$0xff]
        %v5816 = vld [vmem:[#allocation6 + $0x40] sm:$0xff]
        %v5817 = vld [vmem:[#allocation6 + $0x48] sm:$0xff]
        %v5818 = vld [vmem:[#allocation6 + $0x50] sm:$0xff]
        %v5819 = vld [vmem:[#allocation6 + $0x58] sm:$0xff]
        %v5820 = vld [vmem:[#allocation6 + $0x60] sm:$0xff]
        %v5821 = vld [vmem:[#allocation6 + $0x68] sm:$0xff]
        %v5822 = vld [vmem:[#allocation6 + $0x70] sm:$0xff]
        %v5823 = vld [vmem:[#allocation6 + $0x78] sm:$0xff]
        %v5824 = vld [vmem:[#allocation6 + $0x80] sm:$0xff]
        %v5825 = vld [vmem:[#allocation6 + $0x88] sm:$0xff]
        %v5826 = vld [vmem:[#allocation6 + $0x90] sm:$0xff]
        %v5827 = vld [vmem:[#allocation6 + $0x98] sm:$0xff]
        %v5828 = vld [vmem:[#allocation6 + $0xa0] sm:$0xff]
        %v5829 = vld [vmem:[#allocation6 + $0xa8] sm:$0xff]
        %v5830 = vld [vmem:[#allocation6 + $0xb0] sm:$0xff]
        %v5831 = vld [vmem:[#allocation6 + $0xb8] sm:$0xff]
        %v5832 = vld [vmem:[#allocation6 + $0xc0] sm:$0xff]
        %v5833 = vld [vmem:[#allocation6 + $0xc8] sm:$0xff]
        %v5834 = vld [vmem:[#allocation6 + $0xd0] sm:$0xff]
        %v5835 = vld [vmem:[#allocation6 + $0xd8] sm:$0xff]
        %v5836 = vld [vmem:[#allocation6 + $0xe0] sm:$0xff]
        %v5837 = vld [vmem:[#allocation6 + $0xe8] sm:$0xff]
        %v5838 = vld [vmem:[#allocation6 + $0xf0] sm:$0xff]
        %v5839 = vld [vmem:[#allocation6 + $0xf8] sm:$0xff]
        %v5840 = vld [vmem:[#allocation6 + $0x100] sm:$0xff]
        %v5841 = vld [vmem:[#allocation6 + $0x108] sm:$0xff]
        %5874 = vrot.lane.b32.xlu0 %v5810, 64
        %v5875 = vpop.permute.xlu0 %5874
        %5876 = vrot.lane.b32.xlu0 %v5811, 64
        %v5877 = vpop.permute.xlu0 %5876
        %5878 = vrot.lane.b32.xlu0 %v5812, 64
        %v5879 = vpop.permute.xlu0 %5878
        %5880 = vrot.lane.b32.xlu0 %v5813, 64
        %v5881 = vpop.permute.xlu0 %5880
        %5882 = vrot.lane.b32.xlu0 %v5814, 64
        %v5883 = vpop.permute.xlu0 %5882
        %5884 = vrot.lane.b32.xlu0 %v5815, 64
        %v5885 = vpop.permute.xlu0 %5884
        %5886 = vrot.lane.b32.xlu0 %v5816, 64
        %v5887 = vpop.permute.xlu0 %5886
        %5888 = vrot.lane.b32.xlu0 %v5817, 64
        %v5889 = vpop.permute.xlu0 %5888
        %5890 = vrot.lane.b32.xlu0 %v5818, 64
        %v5891 = vpop.permute.xlu0 %5890
        %5892 = vrot.lane.b32.xlu0 %v5819, 64
        %v5893 = vpop.permute.xlu0 %5892
        %5894 = vrot.lane.b32.xlu0 %v5820, 64
        %v5895 = vpop.permute.xlu0 %5894
        %5896 = vrot.lane.b32.xlu0 %v5821, 64
        %v5897 = vpop.permute.xlu0 %5896
        %5898 = vrot.lane.b32.xlu0 %v5822, 64
        %v5899 = vpop.permute.xlu0 %5898
        %5900 = vrot.lane.b32.xlu0 %v5823, 64
        %v5901 = vpop.permute.xlu0 %5900
        %5902 = vrot.lane.b32.xlu0 %v5824, 64
        %v5903 = vpop.permute.xlu0 %5902
        %5904 = vrot.lane.b32.xlu0 %v5825, 64
        %v5905 = vpop.permute.xlu0 %5904
        %5906 = vrot.lane.b32.xlu0 %v5826, 64
        %v5907 = vpop.permute.xlu0 %5906
        %5908 = vrot.lane.b32.xlu0 %v5827, 64
        %v5909 = vpop.permute.xlu0 %5908
        %5910 = vrot.lane.b32.xlu0 %v5828, 64
        %v5911 = vpop.permute.xlu0 %5910
        %5912 = vrot.lane.b32.xlu0 %v5829, 64
        %v5913 = vpop.permute.xlu0 %5912
        %5914 = vrot.lane.b32.xlu0 %v5830, 64
        %v5915 = vpop.permute.xlu0 %5914
        %5916 = vrot.lane.b32.xlu0 %v5831, 64
        %v5917 = vpop.permute.xlu0 %5916
        %5918 = vrot.lane.b32.xlu0 %v5832, 64
        %v5919 = vpop.permute.xlu0 %5918
        %5920 = vrot.lane.b32.xlu0 %v5833, 64
        %v5921 = vpop.permute.xlu0 %5920
        %5922 = vrot.lane.b32.xlu0 %v5834, 64
        %v5923 = vpop.permute.xlu0 %5922
        %5924 = vrot.lane.b32.xlu0 %v5835, 64
        %v5925 = vpop.permute.xlu0 %5924
        %5926 = vrot.lane.b32.xlu0 %v5836, 64
        %v5927 = vpop.permute.xlu0 %5926
        %5928 = vrot.lane.b32.xlu0 %v5837, 64
        %v5929 = vpop.permute.xlu0 %5928
        %5930 = vrot.lane.b32.xlu0 %v5838, 64
        %v5931 = vpop.permute.xlu0 %5930
        %5932 = vrot.lane.b32.xlu0 %v5839, 64
        %v5933 = vpop.permute.xlu0 %5932
        %5934 = vrot.lane.b32.xlu0 %v5840, 64
        %v5935 = vpop.permute.xlu0 %5934
        %5936 = vrot.lane.b32.xlu0 %v5841, 64
        %v5937 = vpop.permute.xlu0 %5936
        %vm5970 = vcmask 1048064
        %5971 = vst.msk [vmem:[#allocation7] sm:$0xff] %vm5970, %v5875
        %5972 = vst.msk [vmem:[#allocation7 + $0x28] sm:$0xff] %vm5970, %v5877
        %5973 = vst.msk [vmem:[#allocation7 + $0x50] sm:$0xff] %vm5970, %v5879
        %5974 = vst.msk [vmem:[#allocation7 + $0x78] sm:$0xff] %vm5970, %v5881
        %5975 = vst.msk [vmem:[#allocation7 + $0xa0] sm:$0xff] %vm5970, %v5883
        %5976 = vst.msk [vmem:[#allocation7 + $0xc8] sm:$0xff] %vm5970, %v5885
        %5977 = vst.msk [vmem:[#allocation7 + $0xf0] sm:$0xff] %vm5970, %v5887
        %5978 = vst.msk [vmem:[#allocation7 + $0x118] sm:$0xff] %vm5970, %v5889
        %5979 = vst.msk [vmem:[#allocation7 + $0x140] sm:$0xff] %vm5970, %v5891
        %5980 = vst.msk [vmem:[#allocation7 + $0x168] sm:$0xff] %vm5970, %v5893
        %5981 = vst.msk [vmem:[#allocation7 + $0x190] sm:$0xff] %vm5970, %v5895
        %5982 = vst.msk [vmem:[#allocation7 + $0x1b8] sm:$0xff] %vm5970, %v5897
        %5983 = vst.msk [vmem:[#allocation7 + $0x1e0] sm:$0xff] %vm5970, %v5899
        %5984 = vst.msk [vmem:[#allocation7 + $0x208] sm:$0xff] %vm5970, %v5901
        %5985 = vst.msk [vmem:[#allocation7 + $0x230] sm:$0xff] %vm5970, %v5903
        %5986 = vst.msk [vmem:[#allocation7 + $0x258] sm:$0xff] %vm5970, %v5905
        %5987 = vst.msk [vmem:[#allocation7 + $0x280] sm:$0xff] %vm5970, %v5907
        %5988 = vst.msk [vmem:[#allocation7 + $0x2a8] sm:$0xff] %vm5970, %v5909
        %5989 = vst.msk [vmem:[#allocation7 + $0x2d0] sm:$0xff] %vm5970, %v5911
        %5990 = vst.msk [vmem:[#allocation7 + $0x2f8] sm:$0xff] %vm5970, %v5913
        %5991 = vst.msk [vmem:[#allocation7 + $0x320] sm:$0xff] %vm5970, %v5915
        %5992 = vst.msk [vmem:[#allocation7 + $0x348] sm:$0xff] %vm5970, %v5917
        %5993 = vst.msk [vmem:[#allocation7 + $0x370] sm:$0xff] %vm5970, %v5919
        %5994 = vst.msk [vmem:[#allocation7 + $0x398] sm:$0xff] %vm5970, %v5921
        %5995 = vst.msk [vmem:[#allocation7 + $0x3c0] sm:$0xff] %vm5970, %v5923
        %5996 = vst.msk [vmem:[#allocation7 + $0x3e8] sm:$0xff] %vm5970, %v5925
        %5997 = vst.msk [vmem:[#allocation7 + $0x410] sm:$0xff] %vm5970, %v5927
        %5998 = vst.msk [vmem:[#allocation7 + $0x438] sm:$0xff] %vm5970, %v5929
        %5999 = vst.msk [vmem:[#allocation7 + $0x460] sm:$0xff] %vm5970, %v5931
        %6000 = vst.msk [vmem:[#allocation7 + $0x488] sm:$0xff] %vm5970, %v5933
        %6001 = vst.msk [vmem:[#allocation7 + $0x4b0] sm:$0xff] %vm5970, %v5935
        %6002 = vst.msk [vmem:[#allocation7 + $0x4d8] sm:$0xff] %vm5970, %v5937
        %v6003 = vld [vmem:[#allocation6 + $0x11] sm:$0xff]
        %v6004 = vld [vmem:[#allocation6 + $0x19] sm:$0xff]
        %v6005 = vld [vmem:[#allocation6 + $0x21] sm:$0xff]
        %v6006 = vld [vmem:[#allocation6 + $0x29] sm:$0xff]
        %v6007 = vld [vmem:[#allocation6 + $0x31] sm:$0xff]
        %v6008 = vld [vmem:[#allocation6 + $0x39] sm:$0xff]
        %v6009 = vld [vmem:[#allocation6 + $0x41] sm:$0xff]
        %v6010 = vld [vmem:[#allocation6 + $0x49] sm:$0xff]
        %v6011 = vld [vmem:[#allocation6 + $0x51] sm:$0xff]
        %v6012 = vld [vmem:[#allocation6 + $0x59] sm:$0xff]
        %v6013 = vld [vmem:[#allocation6 + $0x61] sm:$0xff]
        %v6014 = vld [vmem:[#allocation6 + $0x69] sm:$0xff]
        %v6015 = vld [vmem:[#allocation6 + $0x71] sm:$0xff]
        %v6016 = vld [vmem:[#allocation6 + $0x79] sm:$0xff]
        %v6017 = vld [vmem:[#allocation6 + $0x81] sm:$0xff]
        %v6018 = vld [vmem:[#allocation6 + $0x89] sm:$0xff]
        %v6019 = vld [vmem:[#allocation6 + $0x91] sm:$0xff]
        %v6020 = vld [vmem:[#allocation6 + $0x99] sm:$0xff]
        %v6021 = vld [vmem:[#allocation6 + $0xa1] sm:$0xff]
        %v6022 = vld [vmem:[#allocation6 + $0xa9] sm:$0xff]
        %v6023 = vld [vmem:[#allocation6 + $0xb1] sm:$0xff]
        %v6024 = vld [vmem:[#allocation6 + $0xb9] sm:$0xff]
        %v6025 = vld [vmem:[#allocation6 + $0xc1] sm:$0xff]
        %v6026 = vld [vmem:[#allocation6 + $0xc9] sm:$0xff]
        %v6027 = vld [vmem:[#allocation6 + $0xd1] sm:$0xff]
        %v6028 = vld [vmem:[#allocation6 + $0xd9] sm:$0xff]
        %v6029 = vld [vmem:[#allocation6 + $0xe1] sm:$0xff]
        %v6030 = vld [vmem:[#allocation6 + $0xe9] sm:$0xff]
        %v6031 = vld [vmem:[#allocation6 + $0xf1] sm:$0xff]
        %v6032 = vld [vmem:[#allocation6 + $0xf9] sm:$0xff]
        %v6033 = vld [vmem:[#allocation6 + $0x101] sm:$0xff]
        %v6034 = vld [vmem:[#allocation6 + $0x109] sm:$0xff]
        %v6035 = vsel %vm1633, %v6003, 0.0
        %v6036 = vsel %vm1634, %v6004, 0.0
        %v6037 = vsel %vm1635, %v6005, 0.0
        %v6038 = vsel %vm1636, %v6006, 0.0
        %v6039 = vsel %vm1637, %v6007, 0.0
        %v6040 = vsel %vm1638, %v6008, 0.0
        %v6041 = vsel %vm1639, %v6009, 0.0
        %v6042 = vsel %vm1640, %v6010, 0.0
        %v6043 = vsel %vm1641, %v6011, 0.0
        %v6044 = vsel %vm1642, %v6012, 0.0
        %v6045 = vsel %vm1643, %v6013, 0.0
        %v6046 = vsel %vm1644, %v6014, 0.0
        %v6047 = vsel %vm1645, %v6015, 0.0
        %v6048 = vsel %vm1646, %v6016, 0.0
        %v6049 = vsel %vm1647, %v6017, 0.0
        %v6050 = vsel %vm1648, %v6018, 0.0
        %v6051 = vsel %vm1649, %v6019, 0.0
        %v6052 = vsel %vm1650, %v6020, 0.0
        %v6053 = vsel %vm1651, %v6021, 0.0
        %v6054 = vsel %vm1652, %v6022, 0.0
        %v6055 = vsel %vm1653, %v6023, 0.0
        %v6056 = vsel %vm1654, %v6024, 0.0
        %v6057 = vsel %vm1655, %v6025, 0.0
        %v6058 = vsel %vm1656, %v6026, 0.0
        %v6059 = vsel %vm1657, %v6027, 0.0
        %v6060 = vsel %vm1658, %v6028, 0.0
        %v6061 = vsel %vm1659, %v6029, 0.0
        %v6062 = vsel %vm1660, %v6030, 0.0
        %v6063 = vsel %vm1661, %v6031, 0.0
        %v6064 = vsel %vm1662, %v6032, 0.0
        %v6065 = vsel %vm1663, %v6033, 0.0
        %v6066 = vsel %vm1664, %v6034, 0.0
        %6067 = vst.msk [vmem:[#allocation7 + $0x8] sm:$0xff] %vm5641, %v6035
        %6068 = vst.msk [vmem:[#allocation7 + $0x30] sm:$0xff] %vm5641, %v6036
        %6069 = vst.msk [vmem:[#allocation7 + $0x58] sm:$0xff] %vm5641, %v6037
        %6070 = vst.msk [vmem:[#allocation7 + $0x80] sm:$0xff] %vm5641, %v6038
        %6071 = vst.msk [vmem:[#allocation7 + $0xa8] sm:$0xff] %vm5641, %v6039
        %6072 = vst.msk [vmem:[#allocation7 + $0xd0] sm:$0xff] %vm5641, %v6040
        %6073 = vst.msk [vmem:[#allocation7 + $0xf8] sm:$0xff] %vm5641, %v6041
        %6074 = vst.msk [vmem:[#allocation7 + $0x120] sm:$0xff] %vm5641, %v6042
        %6075 = vst.msk [vmem:[#allocation7 + $0x148] sm:$0xff] %vm5641, %v6043
        %6076 = vst.msk [vmem:[#allocation7 + $0x170] sm:$0xff] %vm5641, %v6044
        %6077 = vst.msk [vmem:[#allocation7 + $0x198] sm:$0xff] %vm5641, %v6045
        %6078 = vst.msk [vmem:[#allocation7 + $0x1c0] sm:$0xff] %vm5641, %v6046
        %6079 = vst.msk [vmem:[#allocation7 + $0x1e8] sm:$0xff] %vm5641, %v6047
        %6080 = vst.msk [vmem:[#allocation7 + $0x210] sm:$0xff] %vm5641, %v6048
        %6081 = vst.msk [vmem:[#allocation7 + $0x238] sm:$0xff] %vm5641, %v6049
        %6082 = vst.msk [vmem:[#allocation7 + $0x260] sm:$0xff] %vm5641, %v6050
        %6083 = vst.msk [vmem:[#allocation7 + $0x288] sm:$0xff] %vm5641, %v6051
        %6084 = vst.msk [vmem:[#allocation7 + $0x2b0] sm:$0xff] %vm5641, %v6052
        %6085 = vst.msk [vmem:[#allocation7 + $0x2d8] sm:$0xff] %vm5641, %v6053
        %6086 = vst.msk [vmem:[#allocation7 + $0x300] sm:$0xff] %vm5641, %v6054
        %6087 = vst.msk [vmem:[#allocation7 + $0x328] sm:$0xff] %vm5641, %v6055
        %6088 = vst.msk [vmem:[#allocation7 + $0x350] sm:$0xff] %vm5641, %v6056
        %6089 = vst.msk [vmem:[#allocation7 + $0x378] sm:$0xff] %vm5641, %v6057
        %6090 = vst.msk [vmem:[#allocation7 + $0x3a0] sm:$0xff] %vm5641, %v6058
        %6091 = vst.msk [vmem:[#allocation7 + $0x3c8] sm:$0xff] %vm5641, %v6059
        %6092 = vst.msk [vmem:[#allocation7 + $0x3f0] sm:$0xff] %vm5641, %v6060
        %6093 = vst.msk [vmem:[#allocation7 + $0x418] sm:$0xff] %vm5641, %v6061
        %6094 = vst.msk [vmem:[#allocation7 + $0x440] sm:$0xff] %vm5641, %v6062
        %6095 = vst.msk [vmem:[#allocation7 + $0x468] sm:$0xff] %vm5641, %v6063
        %6096 = vst.msk [vmem:[#allocation7 + $0x490] sm:$0xff] %vm5641, %v6064
        %6097 = vst.msk [vmem:[#allocation7 + $0x4b8] sm:$0xff] %vm5641, %v6065
        %6098 = vst.msk [vmem:[#allocation7 + $0x4e0] sm:$0xff] %vm5641, %v6066
        %v6099 = vld [vmem:[#allocation6 + $0x1f] sm:$0xff]
        %v6100 = vld [vmem:[#allocation6 + $0x27] sm:$0xff]
        %v6101 = vld [vmem:[#allocation6 + $0x2f] sm:$0xff]
        %v6102 = vld [vmem:[#allocation6 + $0x37] sm:$0xff]
        %v6103 = vld [vmem:[#allocation6 + $0x3f] sm:$0xff]
        %v6104 = vld [vmem:[#allocation6 + $0x47] sm:$0xff]
        %v6105 = vld [vmem:[#allocation6 + $0x4f] sm:$0xff]
        %v6106 = vld [vmem:[#allocation6 + $0x57] sm:$0xff]
        %v6107 = vld [vmem:[#allocation6 + $0x5f] sm:$0xff]
        %v6108 = vld [vmem:[#allocation6 + $0x67] sm:$0xff]
        %v6109 = vld [vmem:[#allocation6 + $0x6f] sm:$0xff]
        %v6110 = vld [vmem:[#allocation6 + $0x77] sm:$0xff]
        %v6111 = vld [vmem:[#allocation6 + $0x7f] sm:$0xff]
        %v6112 = vld [vmem:[#allocation6 + $0x87] sm:$0xff]
        %v6113 = vld [vmem:[#allocation6 + $0x8f] sm:$0xff]
        %v6114 = vld [vmem:[#allocation6 + $0x97] sm:$0xff]
        %v6115 = vld [vmem:[#allocation6 + $0x9f] sm:$0xff]
        %v6116 = vld [vmem:[#allocation6 + $0xa7] sm:$0xff]
        %v6117 = vld [vmem:[#allocation6 + $0xaf] sm:$0xff]
        %v6118 = vld [vmem:[#allocation6 + $0xb7] sm:$0xff]
        %v6119 = vld [vmem:[#allocation6 + $0xbf] sm:$0xff]
        %v6120 = vld [vmem:[#allocation6 + $0xc7] sm:$0xff]
        %v6121 = vld [vmem:[#allocation6 + $0xcf] sm:$0xff]
        %v6122 = vld [vmem:[#allocation6 + $0xd7] sm:$0xff]
        %v6123 = vld [vmem:[#allocation6 + $0xdf] sm:$0xff]
        %v6124 = vld [vmem:[#allocation6 + $0xe7] sm:$0xff]
        %v6125 = vld [vmem:[#allocation6 + $0xef] sm:$0xff]
        %v6126 = vld [vmem:[#allocation6 + $0xf7] sm:$0xff]
        %v6127 = vld [vmem:[#allocation6 + $0xff] sm:$0xff]
        %v6128 = vld [vmem:[#allocation6 + $0x107] sm:$0xff]
        %v6129 = vld [vmem:[#allocation6 + $0x10f] sm:$0xff]
        %v6130 = vld [vmem:[#allocation6 + $0x117] sm:$0xff]
        %v6131 = vsel %vm1248, %v6099, 0.0
        %v6132 = vsel %vm1249, %v6100, 0.0
        %v6133 = vsel %vm1250, %v6101, 0.0
        %v6134 = vsel %vm1251, %v6102, 0.0
        %v6135 = vsel %vm1252, %v6103, 0.0
        %v6136 = vsel %vm1253, %v6104, 0.0
        %v6137 = vsel %vm1254, %v6105, 0.0
        %v6138 = vsel %vm1255, %v6106, 0.0
        %v6139 = vsel %vm1256, %v6107, 0.0
        %v6140 = vsel %vm1257, %v6108, 0.0
        %v6141 = vsel %vm1258, %v6109, 0.0
        %v6142 = vsel %vm1259, %v6110, 0.0
        %v6143 = vsel %vm1260, %v6111, 0.0
        %v6144 = vsel %vm1261, %v6112, 0.0
        %v6145 = vsel %vm1262, %v6113, 0.0
        %v6146 = vsel %vm1263, %v6114, 0.0
        %v6147 = vsel %vm1264, %v6115, 0.0
        %v6148 = vsel %vm1265, %v6116, 0.0
        %v6149 = vsel %vm1266, %v6117, 0.0
        %v6150 = vsel %vm1267, %v6118, 0.0
        %v6151 = vsel %vm1268, %v6119, 0.0
        %v6152 = vsel %vm1269, %v6120, 0.0
        %v6153 = vsel %vm1270, %v6121, 0.0
        %v6154 = vsel %vm1271, %v6122, 0.0
        %v6155 = vsel %vm1272, %v6123, 0.0
        %v6156 = vsel %vm1273, %v6124, 0.0
        %v6157 = vsel %vm1274, %v6125, 0.0
        %v6158 = vsel %vm1275, %v6126, 0.0
        %v6159 = vsel %vm1276, %v6127, 0.0
        %v6160 = vsel %vm1277, %v6128, 0.0
        %v6161 = vsel %vm1278, %v6129, 0.0
        %v6162 = vsel %vm1279, %v6130, 0.0
        %6195 = vrot.lane.b32.xlu0 %v6131, 64
        %v6196 = vpop.permute.xlu0 %6195
        %6197 = vrot.lane.b32.xlu0 %v6132, 64
        %v6198 = vpop.permute.xlu0 %6197
        %6199 = vrot.lane.b32.xlu0 %v6133, 64
        %v6200 = vpop.permute.xlu0 %6199
        %6201 = vrot.lane.b32.xlu0 %v6134, 64
        %v6202 = vpop.permute.xlu0 %6201
        %6203 = vrot.lane.b32.xlu0 %v6135, 64
        %v6204 = vpop.permute.xlu0 %6203
        %6205 = vrot.lane.b32.xlu0 %v6136, 64
        %v6206 = vpop.permute.xlu0 %6205
        %6207 = vrot.lane.b32.xlu0 %v6137, 64
        %v6208 = vpop.permute.xlu0 %6207
        %6209 = vrot.lane.b32.xlu0 %v6138, 64
        %v6210 = vpop.permute.xlu0 %6209
        %6211 = vrot.lane.b32.xlu0 %v6139, 64
        %v6212 = vpop.permute.xlu0 %6211
        %6213 = vrot.lane.b32.xlu0 %v6140, 64
        %v6214 = vpop.permute.xlu0 %6213
        %6215 = vrot.lane.b32.xlu0 %v6141, 64
        %v6216 = vpop.permute.xlu0 %6215
        %6217 = vrot.lane.b32.xlu0 %v6142, 64
        %v6218 = vpop.permute.xlu0 %6217
        %6219 = vrot.lane.b32.xlu0 %v6143, 64
        %v6220 = vpop.permute.xlu0 %6219
        %6221 = vrot.lane.b32.xlu0 %v6144, 64
        %v6222 = vpop.permute.xlu0 %6221
        %6223 = vrot.lane.b32.xlu0 %v6145, 64
        %v6224 = vpop.permute.xlu0 %6223
        %6225 = vrot.lane.b32.xlu0 %v6146, 64
        %v6226 = vpop.permute.xlu0 %6225
        %6227 = vrot.lane.b32.xlu0 %v6147, 64
        %v6228 = vpop.permute.xlu0 %6227
        %6229 = vrot.lane.b32.xlu0 %v6148, 64
        %v6230 = vpop.permute.xlu0 %6229
        %6231 = vrot.lane.b32.xlu0 %v6149, 64
        %v6232 = vpop.permute.xlu0 %6231
        %6233 = vrot.lane.b32.xlu0 %v6150, 64
        %v6234 = vpop.permute.xlu0 %6233
        %6235 = vrot.lane.b32.xlu0 %v6151, 64
        %v6236 = vpop.permute.xlu0 %6235
        %6237 = vrot.lane.b32.xlu0 %v6152, 64
        %v6238 = vpop.permute.xlu0 %6237
        %6239 = vrot.lane.b32.xlu0 %v6153, 64
        %v6240 = vpop.permute.xlu0 %6239
        %6241 = vrot.lane.b32.xlu0 %v6154, 64
        %v6242 = vpop.permute.xlu0 %6241
        %6243 = vrot.lane.b32.xlu0 %v6155, 64
        %v6244 = vpop.permute.xlu0 %6243
        %6245 = vrot.lane.b32.xlu0 %v6156, 64
        %v6246 = vpop.permute.xlu0 %6245
        %6247 = vrot.lane.b32.xlu0 %v6157, 64
        %v6248 = vpop.permute.xlu0 %6247
        %6249 = vrot.lane.b32.xlu0 %v6158, 64
        %v6250 = vpop.permute.xlu0 %6249
        %6251 = vrot.lane.b32.xlu0 %v6159, 64
        %v6252 = vpop.permute.xlu0 %6251
        %6253 = vrot.lane.b32.xlu0 %v6160, 64
        %v6254 = vpop.permute.xlu0 %6253
        %6255 = vrot.lane.b32.xlu0 %v6161, 64
        %v6256 = vpop.permute.xlu0 %6255
        %6257 = vrot.lane.b32.xlu0 %v6162, 64
        %v6258 = vpop.permute.xlu0 %6257
        %6291 = vst.msk [vmem:[#allocation7 + $0x8] sm:$0xff] %vm5970, %v6196
        %6292 = vst.msk [vmem:[#allocation7 + $0x30] sm:$0xff] %vm5970, %v6198
        %6293 = vst.msk [vmem:[#allocation7 + $0x58] sm:$0xff] %vm5970, %v6200
        %6294 = vst.msk [vmem:[#allocation7 + $0x80] sm:$0xff] %vm5970, %v6202
        %6295 = vst.msk [vmem:[#allocation7 + $0xa8] sm:$0xff] %vm5970, %v6204
        %6296 = vst.msk [vmem:[#allocation7 + $0xd0] sm:$0xff] %vm5970, %v6206
        %6297 = vst.msk [vmem:[#allocation7 + $0xf8] sm:$0xff] %vm5970, %v6208
        %6298 = vst.msk [vmem:[#allocation7 + $0x120] sm:$0xff] %vm5970, %v6210
        %6299 = vst.msk [vmem:[#allocation7 + $0x148] sm:$0xff] %vm5970, %v6212
        %6300 = vst.msk [vmem:[#allocation7 + $0x170] sm:$0xff] %vm5970, %v6214
        %6301 = vst.msk [vmem:[#allocation7 + $0x198] sm:$0xff] %vm5970, %v6216
        %6302 = vst.msk [vmem:[#allocation7 + $0x1c0] sm:$0xff] %vm5970, %v6218
        %6303 = vst.msk [vmem:[#allocation7 + $0x1e8] sm:$0xff] %vm5970, %v6220
        %6304 = vst.msk [vmem:[#allocation7 + $0x210] sm:$0xff] %vm5970, %v6222
        %6305 = vst.msk [vmem:[#allocation7 + $0x238] sm:$0xff] %vm5970, %v6224
        %6306 = vst.msk [vmem:[#allocation7 + $0x260] sm:$0xff] %vm5970, %v6226
        %6307 = vst.msk [vmem:[#allocation7 + $0x288] sm:$0xff] %vm5970, %v6228
        %6308 = vst.msk [vmem:[#allocation7 + $0x2b0] sm:$0xff] %vm5970, %v6230
        %6309 = vst.msk [vmem:[#allocation7 + $0x2d8] sm:$0xff] %vm5970, %v6232
        %6310 = vst.msk [vmem:[#allocation7 + $0x300] sm:$0xff] %vm5970, %v6234
        %6311 = vst.msk [vmem:[#allocation7 + $0x328] sm:$0xff] %vm5970, %v6236
        %6312 = vst.msk [vmem:[#allocation7 + $0x350] sm:$0xff] %vm5970, %v6238
        %6313 = vst.msk [vmem:[#allocation7 + $0x378] sm:$0xff] %vm5970, %v6240
        %6314 = vst.msk [vmem:[#allocation7 + $0x3a0] sm:$0xff] %vm5970, %v6242
        %6315 = vst.msk [vmem:[#allocation7 + $0x3c8] sm:$0xff] %vm5970, %v6244
        %6316 = vst.msk [vmem:[#allocation7 + $0x3f0] sm:$0xff] %vm5970, %v6246
        %6317 = vst.msk [vmem:[#allocation7 + $0x418] sm:$0xff] %vm5970, %v6248
        %6318 = vst.msk [vmem:[#allocation7 + $0x440] sm:$0xff] %vm5970, %v6250
        %6319 = vst.msk [vmem:[#allocation7 + $0x468] sm:$0xff] %vm5970, %v6252
        %6320 = vst.msk [vmem:[#allocation7 + $0x490] sm:$0xff] %vm5970, %v6254
        %6321 = vst.msk [vmem:[#allocation7 + $0x4b8] sm:$0xff] %vm5970, %v6256
        %6322 = vst.msk [vmem:[#allocation7 + $0x4e0] sm:$0xff] %vm5970, %v6258
        %v6323 = vld [vmem:[#allocation6 + $0x20] sm:$0xff]
        %v6324 = vld [vmem:[#allocation6 + $0x28] sm:$0xff]
        %v6325 = vld [vmem:[#allocation6 + $0x30] sm:$0xff]
        %v6326 = vld [vmem:[#allocation6 + $0x38] sm:$0xff]
        %v6327 = vld [vmem:[#allocation6 + $0x40] sm:$0xff]
        %v6328 = vld [vmem:[#allocation6 + $0x48] sm:$0xff]
        %v6329 = vld [vmem:[#allocation6 + $0x50] sm:$0xff]
        %v6330 = vld [vmem:[#allocation6 + $0x58] sm:$0xff]
        %v6331 = vld [vmem:[#allocation6 + $0x60] sm:$0xff]
        %v6332 = vld [vmem:[#allocation6 + $0x68] sm:$0xff]
        %v6333 = vld [vmem:[#allocation6 + $0x70] sm:$0xff]
        %v6334 = vld [vmem:[#allocation6 + $0x78] sm:$0xff]
        %v6335 = vld [vmem:[#allocation6 + $0x80] sm:$0xff]
        %v6336 = vld [vmem:[#allocation6 + $0x88] sm:$0xff]
        %v6337 = vld [vmem:[#allocation6 + $0x90] sm:$0xff]
        %v6338 = vld [vmem:[#allocation6 + $0x98] sm:$0xff]
        %v6339 = vld [vmem:[#allocation6 + $0xa0] sm:$0xff]
        %v6340 = vld [vmem:[#allocation6 + $0xa8] sm:$0xff]
        %v6341 = vld [vmem:[#allocation6 + $0xb0] sm:$0xff]
        %v6342 = vld [vmem:[#allocation6 + $0xb8] sm:$0xff]
        %v6343 = vld [vmem:[#allocation6 + $0xc0] sm:$0xff]
        %v6344 = vld [vmem:[#allocation6 + $0xc8] sm:$0xff]
        %v6345 = vld [vmem:[#allocation6 + $0xd0] sm:$0xff]
        %v6346 = vld [vmem:[#allocation6 + $0xd8] sm:$0xff]
        %v6347 = vld [vmem:[#allocation6 + $0xe0] sm:$0xff]
        %v6348 = vld [vmem:[#allocation6 + $0xe8] sm:$0xff]
        %v6349 = vld [vmem:[#allocation6 + $0xf0] sm:$0xff]
        %v6350 = vld [vmem:[#allocation6 + $0xf8] sm:$0xff]
        %v6351 = vld [vmem:[#allocation6 + $0x100] sm:$0xff]
        %v6352 = vld [vmem:[#allocation6 + $0x108] sm:$0xff]
        %v6353 = vld [vmem:[#allocation6 + $0x110] sm:$0xff]
        %v6354 = vld [vmem:[#allocation6 + $0x118] sm:$0xff]
        %6355 = vst.msk [vmem:[#allocation7 + $0x10] sm:$0xff] %vm5641, %v6323
        %6356 = vst.msk [vmem:[#allocation7 + $0x38] sm:$0xff] %vm5641, %v6324
        %6357 = vst.msk [vmem:[#allocation7 + $0x60] sm:$0xff] %vm5641, %v6325
        %6358 = vst.msk [vmem:[#allocation7 + $0x88] sm:$0xff] %vm5641, %v6326
        %6359 = vst.msk [vmem:[#allocation7 + $0xb0] sm:$0xff] %vm5641, %v6327
        %6360 = vst.msk [vmem:[#allocation7 + $0xd8] sm:$0xff] %vm5641, %v6328
        %6361 = vst.msk [vmem:[#allocation7 + $0x100] sm:$0xff] %vm5641, %v6329
        %6362 = vst.msk [vmem:[#allocation7 + $0x128] sm:$0xff] %vm5641, %v6330
        %6363 = vst.msk [vmem:[#allocation7 + $0x150] sm:$0xff] %vm5641, %v6331
        %6364 = vst.msk [vmem:[#allocation7 + $0x178] sm:$0xff] %vm5641, %v6332
        %6365 = vst.msk [vmem:[#allocation7 + $0x1a0] sm:$0xff] %vm5641, %v6333
        %6366 = vst.msk [vmem:[#allocation7 + $0x1c8] sm:$0xff] %vm5641, %v6334
        %6367 = vst.msk [vmem:[#allocation7 + $0x1f0] sm:$0xff] %vm5641, %v6335
        %6368 = vst.msk [vmem:[#allocation7 + $0x218] sm:$0xff] %vm5641, %v6336
        %6369 = vst.msk [vmem:[#allocation7 + $0x240] sm:$0xff] %vm5641, %v6337
        %6370 = vst.msk [vmem:[#allocation7 + $0x268] sm:$0xff] %vm5641, %v6338
        %6371 = vst.msk [vmem:[#allocation7 + $0x290] sm:$0xff] %vm5641, %v6339
        %6372 = vst.msk [vmem:[#allocation7 + $0x2b8] sm:$0xff] %vm5641, %v6340
        %6373 = vst.msk [vmem:[#allocation7 + $0x2e0] sm:$0xff] %vm5641, %v6341
        %6374 = vst.msk [vmem:[#allocation7 + $0x308] sm:$0xff] %vm5641, %v6342
        %6375 = vst.msk [vmem:[#allocation7 + $0x330] sm:$0xff] %vm5641, %v6343
        %6376 = vst.msk [vmem:[#allocation7 + $0x358] sm:$0xff] %vm5641, %v6344
        %6377 = vst.msk [vmem:[#allocation7 + $0x380] sm:$0xff] %vm5641, %v6345
        %6378 = vst.msk [vmem:[#allocation7 + $0x3a8] sm:$0xff] %vm5641, %v6346
        %6379 = vst.msk [vmem:[#allocation7 + $0x3d0] sm:$0xff] %vm5641, %v6347
        %6380 = vst.msk [vmem:[#allocation7 + $0x3f8] sm:$0xff] %vm5641, %v6348
        %6381 = vst.msk [vmem:[#allocation7 + $0x420] sm:$0xff] %vm5641, %v6349
        %6382 = vst.msk [vmem:[#allocation7 + $0x448] sm:$0xff] %vm5641, %v6350
        %6383 = vst.msk [vmem:[#allocation7 + $0x470] sm:$0xff] %vm5641, %v6351
        %6384 = vst.msk [vmem:[#allocation7 + $0x498] sm:$0xff] %vm5641, %v6352
        %6385 = vst.msk [vmem:[#allocation7 + $0x4c0] sm:$0xff] %vm5641, %v6353
        %6386 = vst.msk [vmem:[#allocation7 + $0x4e8] sm:$0xff] %vm5641, %v6354
        %v6387 = vld [vmem:[#allocation6 + $0x21] sm:$0xff]
        %v6388 = vld [vmem:[#allocation6 + $0x29] sm:$0xff]
        %v6389 = vld [vmem:[#allocation6 + $0x31] sm:$0xff]
        %v6390 = vld [vmem:[#allocation6 + $0x39] sm:$0xff]
        %v6391 = vld [vmem:[#allocation6 + $0x41] sm:$0xff]
        %v6392 = vld [vmem:[#allocation6 + $0x49] sm:$0xff]
        %v6393 = vld [vmem:[#allocation6 + $0x51] sm:$0xff]
        %v6394 = vld [vmem:[#allocation6 + $0x59] sm:$0xff]
        %v6395 = vld [vmem:[#allocation6 + $0x61] sm:$0xff]
        %v6396 = vld [vmem:[#allocation6 + $0x69] sm:$0xff]
        %v6397 = vld [vmem:[#allocation6 + $0x71] sm:$0xff]
        %v6398 = vld [vmem:[#allocation6 + $0x79] sm:$0xff]
        %v6399 = vld [vmem:[#allocation6 + $0x81] sm:$0xff]
        %v6400 = vld [vmem:[#allocation6 + $0x89] sm:$0xff]
        %v6401 = vld [vmem:[#allocation6 + $0x91] sm:$0xff]
        %v6402 = vld [vmem:[#allocation6 + $0x99] sm:$0xff]
        %v6403 = vld [vmem:[#allocation6 + $0xa1] sm:$0xff]
        %v6404 = vld [vmem:[#allocation6 + $0xa9] sm:$0xff]
        %v6405 = vld [vmem:[#allocation6 + $0xb1] sm:$0xff]
        %v6406 = vld [vmem:[#allocation6 + $0xb9] sm:$0xff]
        %v6407 = vld [vmem:[#allocation6 + $0xc1] sm:$0xff]
        %v6408 = vld [vmem:[#allocation6 + $0xc9] sm:$0xff]
        %v6409 = vld [vmem:[#allocation6 + $0xd1] sm:$0xff]
        %v6410 = vld [vmem:[#allocation6 + $0xd9] sm:$0xff]
        %v6411 = vld [vmem:[#allocation6 + $0xe1] sm:$0xff]
        %v6412 = vld [vmem:[#allocation6 + $0xe9] sm:$0xff]
        %v6413 = vld [vmem:[#allocation6 + $0xf1] sm:$0xff]
        %v6414 = vld [vmem:[#allocation6 + $0xf9] sm:$0xff]
        %v6415 = vld [vmem:[#allocation6 + $0x101] sm:$0xff]
        %v6416 = vld [vmem:[#allocation6 + $0x109] sm:$0xff]
        %v6417 = vld [vmem:[#allocation6 + $0x111] sm:$0xff]
        %v6418 = vld [vmem:[#allocation6 + $0x119] sm:$0xff]
        %v6419 = vsel %vm1633, %v6387, 0.0
        %v6420 = vsel %vm1634, %v6388, 0.0
        %v6421 = vsel %vm1635, %v6389, 0.0
        %v6422 = vsel %vm1636, %v6390, 0.0
        %v6423 = vsel %vm1637, %v6391, 0.0
        %v6424 = vsel %vm1638, %v6392, 0.0
        %v6425 = vsel %vm1639, %v6393, 0.0
        %v6426 = vsel %vm1640, %v6394, 0.0
        %v6427 = vsel %vm1641, %v6395, 0.0
        %v6428 = vsel %vm1642, %v6396, 0.0
        %v6429 = vsel %vm1643, %v6397, 0.0
        %v6430 = vsel %vm1644, %v6398, 0.0
        %v6431 = vsel %vm1645, %v6399, 0.0
        %v6432 = vsel %vm1646, %v6400, 0.0
        %v6433 = vsel %vm1647, %v6401, 0.0
        %v6434 = vsel %vm1648, %v6402, 0.0
        %v6435 = vsel %vm1649, %v6403, 0.0
        %v6436 = vsel %vm1650, %v6404, 0.0
        %v6437 = vsel %vm1651, %v6405, 0.0
        %v6438 = vsel %vm1652, %v6406, 0.0
        %v6439 = vsel %vm1653, %v6407, 0.0
        %v6440 = vsel %vm1654, %v6408, 0.0
        %v6441 = vsel %vm1655, %v6409, 0.0
        %v6442 = vsel %vm1656, %v6410, 0.0
        %v6443 = vsel %vm1657, %v6411, 0.0
        %v6444 = vsel %vm1658, %v6412, 0.0
        %v6445 = vsel %vm1659, %v6413, 0.0
        %v6446 = vsel %vm1660, %v6414, 0.0
        %v6447 = vsel %vm1661, %v6415, 0.0
        %v6448 = vsel %vm1662, %v6416, 0.0
        %v6449 = vsel %vm1663, %v6417, 0.0
        %v6450 = vsel %vm1664, %v6418, 0.0
        %6483 = vrot.lane.b32.xlu0 %v6419, 64
        %v6484 = vpop.permute.xlu0 %6483
        %6485 = vrot.lane.b32.xlu0 %v6420, 64
        %v6486 = vpop.permute.xlu0 %6485
        %6487 = vrot.lane.b32.xlu0 %v6421, 64
        %v6488 = vpop.permute.xlu0 %6487
        %6489 = vrot.lane.b32.xlu0 %v6422, 64
        %v6490 = vpop.permute.xlu0 %6489
        %6491 = vrot.lane.b32.xlu0 %v6423, 64
        %v6492 = vpop.permute.xlu0 %6491
        %6493 = vrot.lane.b32.xlu0 %v6424, 64
        %v6494 = vpop.permute.xlu0 %6493
        %6495 = vrot.lane.b32.xlu0 %v6425, 64
        %v6496 = vpop.permute.xlu0 %6495
        %6497 = vrot.lane.b32.xlu0 %v6426, 64
        %v6498 = vpop.permute.xlu0 %6497
        %6499 = vrot.lane.b32.xlu0 %v6427, 64
        %v6500 = vpop.permute.xlu0 %6499
        %6501 = vrot.lane.b32.xlu0 %v6428, 64
        %v6502 = vpop.permute.xlu0 %6501
        %6503 = vrot.lane.b32.xlu0 %v6429, 64
        %v6504 = vpop.permute.xlu0 %6503
        %6505 = vrot.lane.b32.xlu0 %v6430, 64
        %v6506 = vpop.permute.xlu0 %6505
        %6507 = vrot.lane.b32.xlu0 %v6431, 64
        %v6508 = vpop.permute.xlu0 %6507
        %6509 = vrot.lane.b32.xlu0 %v6432, 64
        %v6510 = vpop.permute.xlu0 %6509
        %6511 = vrot.lane.b32.xlu0 %v6433, 64
        %v6512 = vpop.permute.xlu0 %6511
        %6513 = vrot.lane.b32.xlu0 %v6434, 64
        %v6514 = vpop.permute.xlu0 %6513
        %6515 = vrot.lane.b32.xlu0 %v6435, 64
        %v6516 = vpop.permute.xlu0 %6515
        %6517 = vrot.lane.b32.xlu0 %v6436, 64
        %v6518 = vpop.permute.xlu0 %6517
        %6519 = vrot.lane.b32.xlu0 %v6437, 64
        %v6520 = vpop.permute.xlu0 %6519
        %6521 = vrot.lane.b32.xlu0 %v6438, 64
        %v6522 = vpop.permute.xlu0 %6521
        %6523 = vrot.lane.b32.xlu0 %v6439, 64
        %v6524 = vpop.permute.xlu0 %6523
        %6525 = vrot.lane.b32.xlu0 %v6440, 64
        %v6526 = vpop.permute.xlu0 %6525
        %6527 = vrot.lane.b32.xlu0 %v6441, 64
        %v6528 = vpop.permute.xlu0 %6527
        %6529 = vrot.lane.b32.xlu0 %v6442, 64
        %v6530 = vpop.permute.xlu0 %6529
        %6531 = vrot.lane.b32.xlu0 %v6443, 64
        %v6532 = vpop.permute.xlu0 %6531
        %6533 = vrot.lane.b32.xlu0 %v6444, 64
        %v6534 = vpop.permute.xlu0 %6533
        %6535 = vrot.lane.b32.xlu0 %v6445, 64
        %v6536 = vpop.permute.xlu0 %6535
        %6537 = vrot.lane.b32.xlu0 %v6446, 64
        %v6538 = vpop.permute.xlu0 %6537
        %6539 = vrot.lane.b32.xlu0 %v6447, 64
        %v6540 = vpop.permute.xlu0 %6539
        %6541 = vrot.lane.b32.xlu0 %v6448, 64
        %v6542 = vpop.permute.xlu0 %6541
        %6543 = vrot.lane.b32.xlu0 %v6449, 64
        %v6544 = vpop.permute.xlu0 %6543
        %6545 = vrot.lane.b32.xlu0 %v6450, 64
        %v6546 = vpop.permute.xlu0 %6545
        %6579 = vst.msk [vmem:[#allocation7 + $0x10] sm:$0xff] %vm5970, %v6484
        %6580 = vst.msk [vmem:[#allocation7 + $0x38] sm:$0xff] %vm5970, %v6486
        %6581 = vst.msk [vmem:[#allocation7 + $0x60] sm:$0xff] %vm5970, %v6488
        %6582 = vst.msk [vmem:[#allocation7 + $0x88] sm:$0xff] %vm5970, %v6490
        %6583 = vst.msk [vmem:[#allocation7 + $0xb0] sm:$0xff] %vm5970, %v6492
        %6584 = vst.msk [vmem:[#allocation7 + $0xd8] sm:$0xff] %vm5970, %v6494
        %6585 = vst.msk [vmem:[#allocation7 + $0x100] sm:$0xff] %vm5970, %v6496
        %6586 = vst.msk [vmem:[#allocation7 + $0x128] sm:$0xff] %vm5970, %v6498
        %6587 = vst.msk [vmem:[#allocation7 + $0x150] sm:$0xff] %vm5970, %v6500
        %6588 = vst.msk [vmem:[#allocation7 + $0x178] sm:$0xff] %vm5970, %v6502
        %6589 = vst.msk [vmem:[#allocation7 + $0x1a0] sm:$0xff] %vm5970, %v6504
        %6590 = vst.msk [vmem:[#allocation7 + $0x1c8] sm:$0xff] %vm5970, %v6506
        %6591 = vst.msk [vmem:[#allocation7 + $0x1f0] sm:$0xff] %vm5970, %v6508
        %6592 = vst.msk [vmem:[#allocation7 + $0x218] sm:$0xff] %vm5970, %v6510
        %6593 = vst.msk [vmem:[#allocation7 + $0x240] sm:$0xff] %vm5970, %v6512
        %6594 = vst.msk [vmem:[#allocation7 + $0x268] sm:$0xff] %vm5970, %v6514
        %6595 = vst.msk [vmem:[#allocation7 + $0x290] sm:$0xff] %vm5970, %v6516
        %6596 = vst.msk [vmem:[#allocation7 + $0x2b8] sm:$0xff] %vm5970, %v6518
        %6597 = vst.msk [vmem:[#allocation7 + $0x2e0] sm:$0xff] %vm5970, %v6520
        %6598 = vst.msk [vmem:[#allocation7 + $0x308] sm:$0xff] %vm5970, %v6522
        %6599 = vst.msk [vmem:[#allocation7 + $0x330] sm:$0xff] %vm5970, %v6524
        %6600 = vst.msk [vmem:[#allocation7 + $0x358] sm:$0xff] %vm5970, %v6526
        %6601 = vst.msk [vmem:[#allocation7 + $0x380] sm:$0xff] %vm5970, %v6528
        %6602 = vst.msk [vmem:[#allocation7 + $0x3a8] sm:$0xff] %vm5970, %v6530
        %6603 = vst.msk [vmem:[#allocation7 + $0x3d0] sm:$0xff] %vm5970, %v6532
        %6604 = vst.msk [vmem:[#allocation7 + $0x3f8] sm:$0xff] %vm5970, %v6534
        %6605 = vst.msk [vmem:[#allocation7 + $0x420] sm:$0xff] %vm5970, %v6536
        %6606 = vst.msk [vmem:[#allocation7 + $0x448] sm:$0xff] %vm5970, %v6538
        %6607 = vst.msk [vmem:[#allocation7 + $0x470] sm:$0xff] %vm5970, %v6540
        %6608 = vst.msk [vmem:[#allocation7 + $0x498] sm:$0xff] %vm5970, %v6542
        %6609 = vst.msk [vmem:[#allocation7 + $0x4c0] sm:$0xff] %vm5970, %v6544
        %6610 = vst.msk [vmem:[#allocation7 + $0x4e8] sm:$0xff] %vm5970, %v6546
        %v6611 = vld [vmem:[#allocation6 + $0x2f] sm:$0xff]
        %v6612 = vld [vmem:[#allocation6 + $0x37] sm:$0xff]
        %v6613 = vld [vmem:[#allocation6 + $0x3f] sm:$0xff]
        %v6614 = vld [vmem:[#allocation6 + $0x47] sm:$0xff]
        %v6615 = vld [vmem:[#allocation6 + $0x4f] sm:$0xff]
        %v6616 = vld [vmem:[#allocation6 + $0x57] sm:$0xff]
        %v6617 = vld [vmem:[#allocation6 + $0x5f] sm:$0xff]
        %v6618 = vld [vmem:[#allocation6 + $0x67] sm:$0xff]
        %v6619 = vld [vmem:[#allocation6 + $0x6f] sm:$0xff]
        %v6620 = vld [vmem:[#allocation6 + $0x77] sm:$0xff]
        %v6621 = vld [vmem:[#allocation6 + $0x7f] sm:$0xff]
        %v6622 = vld [vmem:[#allocation6 + $0x87] sm:$0xff]
        %v6623 = vld [vmem:[#allocation6 + $0x8f] sm:$0xff]
        %v6624 = vld [vmem:[#allocation6 + $0x97] sm:$0xff]
        %v6625 = vld [vmem:[#allocation6 + $0x9f] sm:$0xff]
        %v6626 = vld [vmem:[#allocation6 + $0xa7] sm:$0xff]
        %v6627 = vld [vmem:[#allocation6 + $0xaf] sm:$0xff]
        %v6628 = vld [vmem:[#allocation6 + $0xb7] sm:$0xff]
        %v6629 = vld [vmem:[#allocation6 + $0xbf] sm:$0xff]
        %v6630 = vld [vmem:[#allocation6 + $0xc7] sm:$0xff]
        %v6631 = vld [vmem:[#allocation6 + $0xcf] sm:$0xff]
        %v6632 = vld [vmem:[#allocation6 + $0xd7] sm:$0xff]
        %v6633 = vld [vmem:[#allocation6 + $0xdf] sm:$0xff]
        %v6634 = vld [vmem:[#allocation6 + $0xe7] sm:$0xff]
        %v6635 = vld [vmem:[#allocation6 + $0xef] sm:$0xff]
        %v6636 = vld [vmem:[#allocation6 + $0xf7] sm:$0xff]
        %v6637 = vld [vmem:[#allocation6 + $0xff] sm:$0xff]
        %v6638 = vld [vmem:[#allocation6 + $0x107] sm:$0xff]
        %v6639 = vld [vmem:[#allocation6 + $0x10f] sm:$0xff]
        %v6640 = vld [vmem:[#allocation6 + $0x117] sm:$0xff]
        %v6641 = vld [vmem:[#allocation6 + $0x11f] sm:$0xff]
        %v6642 = vld [vmem:[#allocation6 + $0x127] sm:$0xff]
        %v6643 = vsel %vm1248, %v6611, 0.0
        %v6644 = vsel %vm1249, %v6612, 0.0
        %v6645 = vsel %vm1250, %v6613, 0.0
        %v6646 = vsel %vm1251, %v6614, 0.0
        %v6647 = vsel %vm1252, %v6615, 0.0
        %v6648 = vsel %vm1253, %v6616, 0.0
        %v6649 = vsel %vm1254, %v6617, 0.0
        %v6650 = vsel %vm1255, %v6618, 0.0
        %v6651 = vsel %vm1256, %v6619, 0.0
        %v6652 = vsel %vm1257, %v6620, 0.0
        %v6653 = vsel %vm1258, %v6621, 0.0
        %v6654 = vsel %vm1259, %v6622, 0.0
        %v6655 = vsel %vm1260, %v6623, 0.0
        %v6656 = vsel %vm1261, %v6624, 0.0
        %v6657 = vsel %vm1262, %v6625, 0.0
        %v6658 = vsel %vm1263, %v6626, 0.0
        %v6659 = vsel %vm1264, %v6627, 0.0
        %v6660 = vsel %vm1265, %v6628, 0.0
        %v6661 = vsel %vm1266, %v6629, 0.0
        %v6662 = vsel %vm1267, %v6630, 0.0
        %v6663 = vsel %vm1268, %v6631, 0.0
        %v6664 = vsel %vm1269, %v6632, 0.0
        %v6665 = vsel %vm1270, %v6633, 0.0
        %v6666 = vsel %vm1271, %v6634, 0.0
        %v6667 = vsel %vm1272, %v6635, 0.0
        %v6668 = vsel %vm1273, %v6636, 0.0
        %v6669 = vsel %vm1274, %v6637, 0.0
        %v6670 = vsel %vm1275, %v6638, 0.0
        %v6671 = vsel %vm1276, %v6639, 0.0
        %v6672 = vsel %vm1277, %v6640, 0.0
        %v6673 = vsel %vm1278, %v6641, 0.0
        %v6674 = vsel %vm1279, %v6642, 0.0
        %6675 = vst.msk [vmem:[#allocation7 + $0x18] sm:$0xff] %vm5641, %v6643
        %6676 = vst.msk [vmem:[#allocation7 + $0x40] sm:$0xff] %vm5641, %v6644
        %6677 = vst.msk [vmem:[#allocation7 + $0x68] sm:$0xff] %vm5641, %v6645
        %6678 = vst.msk [vmem:[#allocation7 + $0x90] sm:$0xff] %vm5641, %v6646
        %6679 = vst.msk [vmem:[#allocation7 + $0xb8] sm:$0xff] %vm5641, %v6647
        %6680 = vst.msk [vmem:[#allocation7 + $0xe0] sm:$0xff] %vm5641, %v6648
        %6681 = vst.msk [vmem:[#allocation7 + $0x108] sm:$0xff] %vm5641, %v6649
        %6682 = vst.msk [vmem:[#allocation7 + $0x130] sm:$0xff] %vm5641, %v6650
        %6683 = vst.msk [vmem:[#allocation7 + $0x158] sm:$0xff] %vm5641, %v6651
        %6684 = vst.msk [vmem:[#allocation7 + $0x180] sm:$0xff] %vm5641, %v6652
        %6685 = vst.msk [vmem:[#allocation7 + $0x1a8] sm:$0xff] %vm5641, %v6653
        %6686 = vst.msk [vmem:[#allocation7 + $0x1d0] sm:$0xff] %vm5641, %v6654
        %6687 = vst.msk [vmem:[#allocation7 + $0x1f8] sm:$0xff] %vm5641, %v6655
        %6688 = vst.msk [vmem:[#allocation7 + $0x220] sm:$0xff] %vm5641, %v6656
        %6689 = vst.msk [vmem:[#allocation7 + $0x248] sm:$0xff] %vm5641, %v6657
        %6690 = vst.msk [vmem:[#allocation7 + $0x270] sm:$0xff] %vm5641, %v6658
        %6691 = vst.msk [vmem:[#allocation7 + $0x298] sm:$0xff] %vm5641, %v6659
        %6692 = vst.msk [vmem:[#allocation7 + $0x2c0] sm:$0xff] %vm5641, %v6660
        %6693 = vst.msk [vmem:[#allocation7 + $0x2e8] sm:$0xff] %vm5641, %v6661
        %6694 = vst.msk [vmem:[#allocation7 + $0x310] sm:$0xff] %vm5641, %v6662
        %6695 = vst.msk [vmem:[#allocation7 + $0x338] sm:$0xff] %vm5641, %v6663
        %6696 = vst.msk [vmem:[#allocation7 + $0x360] sm:$0xff] %vm5641, %v6664
        %6697 = vst.msk [vmem:[#allocation7 + $0x388] sm:$0xff] %vm5641, %v6665
        %6698 = vst.msk [vmem:[#allocation7 + $0x3b0] sm:$0xff] %vm5641, %v6666
        %6699 = vst.msk [vmem:[#allocation7 + $0x3d8] sm:$0xff] %vm5641, %v6667
        %6700 = vst.msk [vmem:[#allocation7 + $0x400] sm:$0xff] %vm5641, %v6668
        %6701 = vst.msk [vmem:[#allocation7 + $0x428] sm:$0xff] %vm5641, %v6669
        %6702 = vst.msk [vmem:[#allocation7 + $0x450] sm:$0xff] %vm5641, %v6670
        %6703 = vst.msk [vmem:[#allocation7 + $0x478] sm:$0xff] %vm5641, %v6671
        %6704 = vst.msk [vmem:[#allocation7 + $0x4a0] sm:$0xff] %vm5641, %v6672
        %6705 = vst.msk [vmem:[#allocation7 + $0x4c8] sm:$0xff] %vm5641, %v6673
        %6706 = vst.msk [vmem:[#allocation7 + $0x4f0] sm:$0xff] %vm5641, %v6674
        %v6707 = vld [vmem:[#allocation6 + $0x30] sm:$0xff]
        %v6708 = vld [vmem:[#allocation6 + $0x38] sm:$0xff]
        %v6709 = vld [vmem:[#allocation6 + $0x40] sm:$0xff]
        %v6710 = vld [vmem:[#allocation6 + $0x48] sm:$0xff]
        %v6711 = vld [vmem:[#allocation6 + $0x50] sm:$0xff]
        %v6712 = vld [vmem:[#allocation6 + $0x58] sm:$0xff]
        %v6713 = vld [vmem:[#allocation6 + $0x60] sm:$0xff]
        %v6714 = vld [vmem:[#allocation6 + $0x68] sm:$0xff]
        %v6715 = vld [vmem:[#allocation6 + $0x70] sm:$0xff]
        %v6716 = vld [vmem:[#allocation6 + $0x78] sm:$0xff]
        %v6717 = vld [vmem:[#allocation6 + $0x80] sm:$0xff]
        %v6718 = vld [vmem:[#allocation6 + $0x88] sm:$0xff]
        %v6719 = vld [vmem:[#allocation6 + $0x90] sm:$0xff]
        %v6720 = vld [vmem:[#allocation6 + $0x98] sm:$0xff]
        %v6721 = vld [vmem:[#allocation6 + $0xa0] sm:$0xff]
        %v6722 = vld [vmem:[#allocation6 + $0xa8] sm:$0xff]
        %v6723 = vld [vmem:[#allocation6 + $0xb0] sm:$0xff]
        %v6724 = vld [vmem:[#allocation6 + $0xb8] sm:$0xff]
        %v6725 = vld [vmem:[#allocation6 + $0xc0] sm:$0xff]
        %v6726 = vld [vmem:[#allocation6 + $0xc8] sm:$0xff]
        %v6727 = vld [vmem:[#allocation6 + $0xd0] sm:$0xff]
        %v6728 = vld [vmem:[#allocation6 + $0xd8] sm:$0xff]
        %v6729 = vld [vmem:[#allocation6 + $0xe0] sm:$0xff]
        %v6730 = vld [vmem:[#allocation6 + $0xe8] sm:$0xff]
        %v6731 = vld [vmem:[#allocation6 + $0xf0] sm:$0xff]
        %v6732 = vld [vmem:[#allocation6 + $0xf8] sm:$0xff]
        %v6733 = vld [vmem:[#allocation6 + $0x100] sm:$0xff]
        %v6734 = vld [vmem:[#allocation6 + $0x108] sm:$0xff]
        %v6735 = vld [vmem:[#allocation6 + $0x110] sm:$0xff]
        %v6736 = vld [vmem:[#allocation6 + $0x118] sm:$0xff]
        %v6737 = vld [vmem:[#allocation6 + $0x120] sm:$0xff]
        %v6738 = vld [vmem:[#allocation6 + $0x128] sm:$0xff]
        %6771 = vrot.lane.b32.xlu0 %v6707, 64
        %v6772 = vpop.permute.xlu0 %6771
        %6773 = vrot.lane.b32.xlu0 %v6708, 64
        %v6774 = vpop.permute.xlu0 %6773
        %6775 = vrot.lane.b32.xlu0 %v6709, 64
        %v6776 = vpop.permute.xlu0 %6775
        %6777 = vrot.lane.b32.xlu0 %v6710, 64
        %v6778 = vpop.permute.xlu0 %6777
        %6779 = vrot.lane.b32.xlu0 %v6711, 64
        %v6780 = vpop.permute.xlu0 %6779
        %6781 = vrot.lane.b32.xlu0 %v6712, 64
        %v6782 = vpop.permute.xlu0 %6781
        %6783 = vrot.lane.b32.xlu0 %v6713, 64
        %v6784 = vpop.permute.xlu0 %6783
        %6785 = vrot.lane.b32.xlu0 %v6714, 64
        %v6786 = vpop.permute.xlu0 %6785
        %6787 = vrot.lane.b32.xlu0 %v6715, 64
        %v6788 = vpop.permute.xlu0 %6787
        %6789 = vrot.lane.b32.xlu0 %v6716, 64
        %v6790 = vpop.permute.xlu0 %6789
        %6791 = vrot.lane.b32.xlu0 %v6717, 64
        %v6792 = vpop.permute.xlu0 %6791
        %6793 = vrot.lane.b32.xlu0 %v6718, 64
        %v6794 = vpop.permute.xlu0 %6793
        %6795 = vrot.lane.b32.xlu0 %v6719, 64
        %v6796 = vpop.permute.xlu0 %6795
        %6797 = vrot.lane.b32.xlu0 %v6720, 64
        %v6798 = vpop.permute.xlu0 %6797
        %6799 = vrot.lane.b32.xlu0 %v6721, 64
        %v6800 = vpop.permute.xlu0 %6799
        %6801 = vrot.lane.b32.xlu0 %v6722, 64
        %v6802 = vpop.permute.xlu0 %6801
        %6803 = vrot.lane.b32.xlu0 %v6723, 64
        %v6804 = vpop.permute.xlu0 %6803
        %6805 = vrot.lane.b32.xlu0 %v6724, 64
        %v6806 = vpop.permute.xlu0 %6805
        %6807 = vrot.lane.b32.xlu0 %v6725, 64
        %v6808 = vpop.permute.xlu0 %6807
        %6809 = vrot.lane.b32.xlu0 %v6726, 64
        %v6810 = vpop.permute.xlu0 %6809
        %6811 = vrot.lane.b32.xlu0 %v6727, 64
        %v6812 = vpop.permute.xlu0 %6811
        %6813 = vrot.lane.b32.xlu0 %v6728, 64
        %v6814 = vpop.permute.xlu0 %6813
        %6815 = vrot.lane.b32.xlu0 %v6729, 64
        %v6816 = vpop.permute.xlu0 %6815
        %6817 = vrot.lane.b32.xlu0 %v6730, 64
        %v6818 = vpop.permute.xlu0 %6817
        %6819 = vrot.lane.b32.xlu0 %v6731, 64
        %v6820 = vpop.permute.xlu0 %6819
        %6821 = vrot.lane.b32.xlu0 %v6732, 64
        %v6822 = vpop.permute.xlu0 %6821
        %6823 = vrot.lane.b32.xlu0 %v6733, 64
        %v6824 = vpop.permute.xlu0 %6823
        %6825 = vrot.lane.b32.xlu0 %v6734, 64
        %v6826 = vpop.permute.xlu0 %6825
        %6827 = vrot.lane.b32.xlu0 %v6735, 64
        %v6828 = vpop.permute.xlu0 %6827
        %6829 = vrot.lane.b32.xlu0 %v6736, 64
        %v6830 = vpop.permute.xlu0 %6829
        %6831 = vrot.lane.b32.xlu0 %v6737, 64
        %v6832 = vpop.permute.xlu0 %6831
        %6833 = vrot.lane.b32.xlu0 %v6738, 64
        %v6834 = vpop.permute.xlu0 %6833
        %6867 = vst.msk [vmem:[#allocation7 + $0x18] sm:$0xff] %vm5970, %v6772
        %6868 = vst.msk [vmem:[#allocation7 + $0x40] sm:$0xff] %vm5970, %v6774
        %6869 = vst.msk [vmem:[#allocation7 + $0x68] sm:$0xff] %vm5970, %v6776
        %6870 = vst.msk [vmem:[#allocation7 + $0x90] sm:$0xff] %vm5970, %v6778
        %6871 = vst.msk [vmem:[#allocation7 + $0xb8] sm:$0xff] %vm5970, %v6780
        %6872 = vst.msk [vmem:[#allocation7 + $0xe0] sm:$0xff] %vm5970, %v6782
        %6873 = vst.msk [vmem:[#allocation7 + $0x108] sm:$0xff] %vm5970, %v6784
        %6874 = vst.msk [vmem:[#allocation7 + $0x130] sm:$0xff] %vm5970, %v6786
        %6875 = vst.msk [vmem:[#allocation7 + $0x158] sm:$0xff] %vm5970, %v6788
        %6876 = vst.msk [vmem:[#allocation7 + $0x180] sm:$0xff] %vm5970, %v6790
        %6877 = vst.msk [vmem:[#allocation7 + $0x1a8] sm:$0xff] %vm5970, %v6792
        %6878 = vst.msk [vmem:[#allocation7 + $0x1d0] sm:$0xff] %vm5970, %v6794
        %6879 = vst.msk [vmem:[#allocation7 + $0x1f8] sm:$0xff] %vm5970, %v6796
        %6880 = vst.msk [vmem:[#allocation7 + $0x220] sm:$0xff] %vm5970, %v6798
        %6881 = vst.msk [vmem:[#allocation7 + $0x248] sm:$0xff] %vm5970, %v6800
        %6882 = vst.msk [vmem:[#allocation7 + $0x270] sm:$0xff] %vm5970, %v6802
        %6883 = vst.msk [vmem:[#allocation7 + $0x298] sm:$0xff] %vm5970, %v6804
        %6884 = vst.msk [vmem:[#allocation7 + $0x2c0] sm:$0xff] %vm5970, %v6806
        %6885 = vst.msk [vmem:[#allocation7 + $0x2e8] sm:$0xff] %vm5970, %v6808
        %6886 = vst.msk [vmem:[#allocation7 + $0x310] sm:$0xff] %vm5970, %v6810
        %6887 = vst.msk [vmem:[#allocation7 + $0x338] sm:$0xff] %vm5970, %v6812
        %6888 = vst.msk [vmem:[#allocation7 + $0x360] sm:$0xff] %vm5970, %v6814
        %6889 = vst.msk [vmem:[#allocation7 + $0x388] sm:$0xff] %vm5970, %v6816
        %6890 = vst.msk [vmem:[#allocation7 + $0x3b0] sm:$0xff] %vm5970, %v6818
        %6891 = vst.msk [vmem:[#allocation7 + $0x3d8] sm:$0xff] %vm5970, %v6820
        %6892 = vst.msk [vmem:[#allocation7 + $0x400] sm:$0xff] %vm5970, %v6822
        %6893 = vst.msk [vmem:[#allocation7 + $0x428] sm:$0xff] %vm5970, %v6824
        %6894 = vst.msk [vmem:[#allocation7 + $0x450] sm:$0xff] %vm5970, %v6826
        %6895 = vst.msk [vmem:[#allocation7 + $0x478] sm:$0xff] %vm5970, %v6828
        %6896 = vst.msk [vmem:[#allocation7 + $0x4a0] sm:$0xff] %vm5970, %v6830
        %6897 = vst.msk [vmem:[#allocation7 + $0x4c8] sm:$0xff] %vm5970, %v6832
        %6898 = vst.msk [vmem:[#allocation7 + $0x4f0] sm:$0xff] %vm5970, %v6834
        %v6899 = vld [vmem:[#allocation6 + $0x31] sm:$0xff]
        %v6900 = vld [vmem:[#allocation6 + $0x39] sm:$0xff]
        %v6901 = vld [vmem:[#allocation6 + $0x41] sm:$0xff]
        %v6902 = vld [vmem:[#allocation6 + $0x49] sm:$0xff]
        %v6903 = vld [vmem:[#allocation6 + $0x51] sm:$0xff]
        %v6904 = vld [vmem:[#allocation6 + $0x59] sm:$0xff]
        %v6905 = vld [vmem:[#allocation6 + $0x61] sm:$0xff]
        %v6906 = vld [vmem:[#allocation6 + $0x69] sm:$0xff]
        %v6907 = vld [vmem:[#allocation6 + $0x71] sm:$0xff]
        %v6908 = vld [vmem:[#allocation6 + $0x79] sm:$0xff]
        %v6909 = vld [vmem:[#allocation6 + $0x81] sm:$0xff]
        %v6910 = vld [vmem:[#allocation6 + $0x89] sm:$0xff]
        %v6911 = vld [vmem:[#allocation6 + $0x91] sm:$0xff]
        %v6912 = vld [vmem:[#allocation6 + $0x99] sm:$0xff]
        %v6913 = vld [vmem:[#allocation6 + $0xa1] sm:$0xff]
        %v6914 = vld [vmem:[#allocation6 + $0xa9] sm:$0xff]
        %v6915 = vld [vmem:[#allocation6 + $0xb1] sm:$0xff]
        %v6916 = vld [vmem:[#allocation6 + $0xb9] sm:$0xff]
        %v6917 = vld [vmem:[#allocation6 + $0xc1] sm:$0xff]
        %v6918 = vld [vmem:[#allocation6 + $0xc9] sm:$0xff]
        %v6919 = vld [vmem:[#allocation6 + $0xd1] sm:$0xff]
        %v6920 = vld [vmem:[#allocation6 + $0xd9] sm:$0xff]
        %v6921 = vld [vmem:[#allocation6 + $0xe1] sm:$0xff]
        %v6922 = vld [vmem:[#allocation6 + $0xe9] sm:$0xff]
        %v6923 = vld [vmem:[#allocation6 + $0xf1] sm:$0xff]
        %v6924 = vld [vmem:[#allocation6 + $0xf9] sm:$0xff]
        %v6925 = vld [vmem:[#allocation6 + $0x101] sm:$0xff]
        %v6926 = vld [vmem:[#allocation6 + $0x109] sm:$0xff]
        %v6927 = vld [vmem:[#allocation6 + $0x111] sm:$0xff]
        %v6928 = vld [vmem:[#allocation6 + $0x119] sm:$0xff]
        %v6929 = vld [vmem:[#allocation6 + $0x121] sm:$0xff]
        %v6930 = vld [vmem:[#allocation6 + $0x129] sm:$0xff]
        %v6931 = vsel %vm1633, %v6899, 0.0
        %v6932 = vsel %vm1634, %v6900, 0.0
        %v6933 = vsel %vm1635, %v6901, 0.0
        %v6934 = vsel %vm1636, %v6902, 0.0
        %v6935 = vsel %vm1637, %v6903, 0.0
        %v6936 = vsel %vm1638, %v6904, 0.0
        %v6937 = vsel %vm1639, %v6905, 0.0
        %v6938 = vsel %vm1640, %v6906, 0.0
        %v6939 = vsel %vm1641, %v6907, 0.0
        %v6940 = vsel %vm1642, %v6908, 0.0
        %v6941 = vsel %vm1643, %v6909, 0.0
        %v6942 = vsel %vm1644, %v6910, 0.0
        %v6943 = vsel %vm1645, %v6911, 0.0
        %v6944 = vsel %vm1646, %v6912, 0.0
        %v6945 = vsel %vm1647, %v6913, 0.0
        %v6946 = vsel %vm1648, %v6914, 0.0
        %v6947 = vsel %vm1649, %v6915, 0.0
        %v6948 = vsel %vm1650, %v6916, 0.0
        %v6949 = vsel %vm1651, %v6917, 0.0
        %v6950 = vsel %vm1652, %v6918, 0.0
        %v6951 = vsel %vm1653, %v6919, 0.0
        %v6952 = vsel %vm1654, %v6920, 0.0
        %v6953 = vsel %vm1655, %v6921, 0.0
        %v6954 = vsel %vm1656, %v6922, 0.0
        %v6955 = vsel %vm1657, %v6923, 0.0
        %v6956 = vsel %vm1658, %v6924, 0.0
        %v6957 = vsel %vm1659, %v6925, 0.0
        %v6958 = vsel %vm1660, %v6926, 0.0
        %v6959 = vsel %vm1661, %v6927, 0.0
        %v6960 = vsel %vm1662, %v6928, 0.0
        %v6961 = vsel %vm1663, %v6929, 0.0
        %v6962 = vsel %vm1664, %v6930, 0.0
        %6963 = vst.msk [vmem:[#allocation7 + $0x20] sm:$0xff] %vm5641, %v6931
        %6964 = vst.msk [vmem:[#allocation7 + $0x48] sm:$0xff] %vm5641, %v6932
        %6965 = vst.msk [vmem:[#allocation7 + $0x70] sm:$0xff] %vm5641, %v6933
        %6966 = vst.msk [vmem:[#allocation7 + $0x98] sm:$0xff] %vm5641, %v6934
        %6967 = vst.msk [vmem:[#allocation7 + $0xc0] sm:$0xff] %vm5641, %v6935
        %6968 = vst.msk [vmem:[#allocation7 + $0xe8] sm:$0xff] %vm5641, %v6936
        %6969 = vst.msk [vmem:[#allocation7 + $0x110] sm:$0xff] %vm5641, %v6937
        %6970 = vst.msk [vmem:[#allocation7 + $0x138] sm:$0xff] %vm5641, %v6938
        %6971 = vst.msk [vmem:[#allocation7 + $0x160] sm:$0xff] %vm5641, %v6939
        %6972 = vst.msk [vmem:[#allocation7 + $0x188] sm:$0xff] %vm5641, %v6940
        %6973 = vst.msk [vmem:[#allocation7 + $0x1b0] sm:$0xff] %vm5641, %v6941
        %6974 = vst.msk [vmem:[#allocation7 + $0x1d8] sm:$0xff] %vm5641, %v6942
        %6975 = vst.msk [vmem:[#allocation7 + $0x200] sm:$0xff] %vm5641, %v6943
        %6976 = vst.msk [vmem:[#allocation7 + $0x228] sm:$0xff] %vm5641, %v6944
        %6977 = vst.msk [vmem:[#allocation7 + $0x250] sm:$0xff] %vm5641, %v6945
        %6978 = vst.msk [vmem:[#allocation7 + $0x278] sm:$0xff] %vm5641, %v6946
        %6979 = vst.msk [vmem:[#allocation7 + $0x2a0] sm:$0xff] %vm5641, %v6947
        %6980 = vst.msk [vmem:[#allocation7 + $0x2c8] sm:$0xff] %vm5641, %v6948
        %6981 = vst.msk [vmem:[#allocation7 + $0x2f0] sm:$0xff] %vm5641, %v6949
        %6982 = vst.msk [vmem:[#allocation7 + $0x318] sm:$0xff] %vm5641, %v6950
        %6983 = vst.msk [vmem:[#allocation7 + $0x340] sm:$0xff] %vm5641, %v6951
        %6984 = vst.msk [vmem:[#allocation7 + $0x368] sm:$0xff] %vm5641, %v6952
        %6985 = vst.msk [vmem:[#allocation7 + $0x390] sm:$0xff] %vm5641, %v6953
        %6986 = vst.msk [vmem:[#allocation7 + $0x3b8] sm:$0xff] %vm5641, %v6954
        %6987 = vst.msk [vmem:[#allocation7 + $0x3e0] sm:$0xff] %vm5641, %v6955
        %6988 = vst.msk [vmem:[#allocation7 + $0x408] sm:$0xff] %vm5641, %v6956
        %6989 = vst.msk [vmem:[#allocation7 + $0x430] sm:$0xff] %vm5641, %v6957
        %6990 = vst.msk [vmem:[#allocation7 + $0x458] sm:$0xff] %vm5641, %v6958
        %6991 = vst.msk [vmem:[#allocation7 + $0x480] sm:$0xff] %vm5641, %v6959
        %6992 = vst.msk [vmem:[#allocation7 + $0x4a8] sm:$0xff] %vm5641, %v6960
        %6993 = vst.msk [vmem:[#allocation7 + $0x4d0] sm:$0xff] %vm5641, %v6961
        %6994 = vst.msk [vmem:[#allocation7 + $0x4f8] sm:$0xff] %vm5641, %v6962
        %v6995 = vld [vmem:[#allocation7] sm:$0xff]
        %v6996 = vld [vmem:[#allocation7 + $0x8] sm:$0xff]
        %v6997 = vld [vmem:[#allocation7 + $0x10] sm:$0xff]
        %v6998 = vld [vmem:[#allocation7 + $0x18] sm:$0xff]
        %v6999 = vld [vmem:[#allocation7 + $0x20] sm:$0xff]
        %v7000 = vld [vmem:[#allocation7 + $0x28] sm:$0xff]
        %v7001 = vld [vmem:[#allocation7 + $0x30] sm:$0xff]
        %v7002 = vld [vmem:[#allocation7 + $0x38] sm:$0xff]
        %v7003 = vld [vmem:[#allocation7 + $0x40] sm:$0xff]
        %v7004 = vld [vmem:[#allocation7 + $0x48] sm:$0xff]
        %v7005 = vld [vmem:[#allocation7 + $0x50] sm:$0xff]
        %v7006 = vld [vmem:[#allocation7 + $0x58] sm:$0xff]
        %v7007 = vld [vmem:[#allocation7 + $0x60] sm:$0xff]
        %v7008 = vld [vmem:[#allocation7 + $0x68] sm:$0xff]
        %v7009 = vld [vmem:[#allocation7 + $0x70] sm:$0xff]
        %v7010 = vld [vmem:[#allocation7 + $0x78] sm:$0xff]
        %v7011 = vld [vmem:[#allocation7 + $0x80] sm:$0xff]
        %v7012 = vld [vmem:[#allocation7 + $0x88] sm:$0xff]
        %v7013 = vld [vmem:[#allocation7 + $0x90] sm:$0xff]
        %v7014 = vld [vmem:[#allocation7 + $0x98] sm:$0xff]
        %v7015 = vld [vmem:[#allocation7 + $0xa0] sm:$0xff]
        %v7016 = vld [vmem:[#allocation7 + $0xa8] sm:$0xff]
        %v7017 = vld [vmem:[#allocation7 + $0xb0] sm:$0xff]
        %v7018 = vld [vmem:[#allocation7 + $0xb8] sm:$0xff]
        %v7019 = vld [vmem:[#allocation7 + $0xc0] sm:$0xff]
        %v7020 = vld [vmem:[#allocation7 + $0xc8] sm:$0xff]
        %v7021 = vld [vmem:[#allocation7 + $0xd0] sm:$0xff]
        %v7022 = vld [vmem:[#allocation7 + $0xd8] sm:$0xff]
        %v7023 = vld [vmem:[#allocation7 + $0xe0] sm:$0xff]
        %v7024 = vld [vmem:[#allocation7 + $0xe8] sm:$0xff]
        %v7025 = vld [vmem:[#allocation7 + $0xf0] sm:$0xff]
        %v7026 = vld [vmem:[#allocation7 + $0xf8] sm:$0xff]
        %v7027 = vld [vmem:[#allocation7 + $0x100] sm:$0xff]
        %v7028 = vld [vmem:[#allocation7 + $0x108] sm:$0xff]
        %v7029 = vld [vmem:[#allocation7 + $0x110] sm:$0xff]
        %v7030 = vld [vmem:[#allocation7 + $0x118] sm:$0xff]
        %v7031 = vld [vmem:[#allocation7 + $0x120] sm:$0xff]
        %v7032 = vld [vmem:[#allocation7 + $0x128] sm:$0xff]
        %v7033 = vld [vmem:[#allocation7 + $0x130] sm:$0xff]
        %v7034 = vld [vmem:[#allocation7 + $0x138] sm:$0xff]
        %v7035 = vld [vmem:[#allocation7 + $0x140] sm:$0xff]
        %v7036 = vld [vmem:[#allocation7 + $0x148] sm:$0xff]
        %v7037 = vld [vmem:[#allocation7 + $0x150] sm:$0xff]
        %v7038 = vld [vmem:[#allocation7 + $0x158] sm:$0xff]
        %v7039 = vld [vmem:[#allocation7 + $0x160] sm:$0xff]
        %v7040 = vld [vmem:[#allocation7 + $0x168] sm:$0xff]
        %v7041 = vld [vmem:[#allocation7 + $0x170] sm:$0xff]
        %v7042 = vld [vmem:[#allocation7 + $0x178] sm:$0xff]
        %v7043 = vld [vmem:[#allocation7 + $0x180] sm:$0xff]
        %v7044 = vld [vmem:[#allocation7 + $0x188] sm:$0xff]
        %v7045 = vld [vmem:[#allocation7 + $0x190] sm:$0xff]
        %v7046 = vld [vmem:[#allocation7 + $0x198] sm:$0xff]
        %v7047 = vld [vmem:[#allocation7 + $0x1a0] sm:$0xff]
        %v7048 = vld [vmem:[#allocation7 + $0x1a8] sm:$0xff]
        %v7049 = vld [vmem:[#allocation7 + $0x1b0] sm:$0xff]
        %v7050 = vld [vmem:[#allocation7 + $0x1b8] sm:$0xff]
        %v7051 = vld [vmem:[#allocation7 + $0x1c0] sm:$0xff]
        %v7052 = vld [vmem:[#allocation7 + $0x1c8] sm:$0xff]
        %v7053 = vld [vmem:[#allocation7 + $0x1d0] sm:$0xff]
        %v7054 = vld [vmem:[#allocation7 + $0x1d8] sm:$0xff]
        %v7055 = vld [vmem:[#allocation7 + $0x1e0] sm:$0xff]
        %v7056 = vld [vmem:[#allocation7 + $0x1e8] sm:$0xff]
        %v7057 = vld [vmem:[#allocation7 + $0x1f0] sm:$0xff]
        %v7058 = vld [vmem:[#allocation7 + $0x1f8] sm:$0xff]
        %v7059 = vld [vmem:[#allocation7 + $0x200] sm:$0xff]
        %v7060 = vld [vmem:[#allocation7 + $0x208] sm:$0xff]
        %v7061 = vld [vmem:[#allocation7 + $0x210] sm:$0xff]
        %v7062 = vld [vmem:[#allocation7 + $0x218] sm:$0xff]
        %v7063 = vld [vmem:[#allocation7 + $0x220] sm:$0xff]
        %v7064 = vld [vmem:[#allocation7 + $0x228] sm:$0xff]
        %v7065 = vld [vmem:[#allocation7 + $0x230] sm:$0xff]
        %v7066 = vld [vmem:[#allocation7 + $0x238] sm:$0xff]
        %v7067 = vld [vmem:[#allocation7 + $0x240] sm:$0xff]
        %v7068 = vld [vmem:[#allocation7 + $0x248] sm:$0xff]
        %v7069 = vld [vmem:[#allocation7 + $0x250] sm:$0xff]
        %v7070 = vld [vmem:[#allocation7 + $0x258] sm:$0xff]
        %v7071 = vld [vmem:[#allocation7 + $0x260] sm:$0xff]
        %v7072 = vld [vmem:[#allocation7 + $0x268] sm:$0xff]
        %v7073 = vld [vmem:[#allocation7 + $0x270] sm:$0xff]
        %v7074 = vld [vmem:[#allocation7 + $0x278] sm:$0xff]
        %v7075 = vld [vmem:[#allocation7 + $0x280] sm:$0xff]
        %v7076 = vld [vmem:[#allocation7 + $0x288] sm:$0xff]
        %v7077 = vld [vmem:[#allocation7 + $0x290] sm:$0xff]
        %v7078 = vld [vmem:[#allocation7 + $0x298] sm:$0xff]
        %v7079 = vld [vmem:[#allocation7 + $0x2a0] sm:$0xff]
        %v7080 = vld [vmem:[#allocation7 + $0x2a8] sm:$0xff]
        %v7081 = vld [vmem:[#allocation7 + $0x2b0] sm:$0xff]
        %v7082 = vld [vmem:[#allocation7 + $0x2b8] sm:$0xff]
        %v7083 = vld [vmem:[#allocation7 + $0x2c0] sm:$0xff]
        %v7084 = vld [vmem:[#allocation7 + $0x2c8] sm:$0xff]
        %v7085 = vld [vmem:[#allocation7 + $0x2d0] sm:$0xff]
        %v7086 = vld [vmem:[#allocation7 + $0x2d8] sm:$0xff]
        %v7087 = vld [vmem:[#allocation7 + $0x2e0] sm:$0xff]
        %v7088 = vld [vmem:[#allocation7 + $0x2e8] sm:$0xff]
        %v7089 = vld [vmem:[#allocation7 + $0x2f0] sm:$0xff]
        %v7090 = vld [vmem:[#allocation7 + $0x2f8] sm:$0xff]
        %v7091 = vld [vmem:[#allocation7 + $0x300] sm:$0xff]
        %v7092 = vld [vmem:[#allocation7 + $0x308] sm:$0xff]
        %v7093 = vld [vmem:[#allocation7 + $0x310] sm:$0xff]
        %v7094 = vld [vmem:[#allocation7 + $0x318] sm:$0xff]
        %v7095 = vld [vmem:[#allocation7 + $0x320] sm:$0xff]
        %v7096 = vld [vmem:[#allocation7 + $0x328] sm:$0xff]
        %v7097 = vld [vmem:[#allocation7 + $0x330] sm:$0xff]
        %v7098 = vld [vmem:[#allocation7 + $0x338] sm:$0xff]
        %v7099 = vld [vmem:[#allocation7 + $0x340] sm:$0xff]
        %v7100 = vld [vmem:[#allocation7 + $0x348] sm:$0xff]
        %v7101 = vld [vmem:[#allocation7 + $0x350] sm:$0xff]
        %v7102 = vld [vmem:[#allocation7 + $0x358] sm:$0xff]
        %v7103 = vld [vmem:[#allocation7 + $0x360] sm:$0xff]
        %v7104 = vld [vmem:[#allocation7 + $0x368] sm:$0xff]
        %v7105 = vld [vmem:[#allocation7 + $0x370] sm:$0xff]
        %v7106 = vld [vmem:[#allocation7 + $0x378] sm:$0xff]
        %v7107 = vld [vmem:[#allocation7 + $0x380] sm:$0xff]
        %v7108 = vld [vmem:[#allocation7 + $0x388] sm:$0xff]
        %v7109 = vld [vmem:[#allocation7 + $0x390] sm:$0xff]
        %v7110 = vld [vmem:[#allocation7 + $0x398] sm:$0xff]
        %v7111 = vld [vmem:[#allocation7 + $0x3a0] sm:$0xff]
        %v7112 = vld [vmem:[#allocation7 + $0x3a8] sm:$0xff]
        %v7113 = vld [vmem:[#allocation7 + $0x3b0] sm:$0xff]
        %v7114 = vld [vmem:[#allocation7 + $0x3b8] sm:$0xff]
        %v7115 = vld [vmem:[#allocation7 + $0x3c0] sm:$0xff]
        %v7116 = vld [vmem:[#allocation7 + $0x3c8] sm:$0xff]
        %v7117 = vld [vmem:[#allocation7 + $0x3d0] sm:$0xff]
        %v7118 = vld [vmem:[#allocation7 + $0x3d8] sm:$0xff]
        %v7119 = vld [vmem:[#allocation7 + $0x3e0] sm:$0xff]
        %v7120 = vld [vmem:[#allocation7 + $0x3e8] sm:$0xff]
        %v7121 = vld [vmem:[#allocation7 + $0x3f0] sm:$0xff]
        %v7122 = vld [vmem:[#allocation7 + $0x3f8] sm:$0xff]
        %v7123 = vld [vmem:[#allocation7 + $0x400] sm:$0xff]
        %v7124 = vld [vmem:[#allocation7 + $0x408] sm:$0xff]
        %v7125 = vld [vmem:[#allocation7 + $0x410] sm:$0xff]
        %v7126 = vld [vmem:[#allocation7 + $0x418] sm:$0xff]
        %v7127 = vld [vmem:[#allocation7 + $0x420] sm:$0xff]
        %v7128 = vld [vmem:[#allocation7 + $0x428] sm:$0xff]
        %v7129 = vld [vmem:[#allocation7 + $0x430] sm:$0xff]
        %v7130 = vld [vmem:[#allocation7 + $0x438] sm:$0xff]
        %v7131 = vld [vmem:[#allocation7 + $0x440] sm:$0xff]
        %v7132 = vld [vmem:[#allocation7 + $0x448] sm:$0xff]
        %v7133 = vld [vmem:[#allocation7 + $0x450] sm:$0xff]
        %v7134 = vld [vmem:[#allocation7 + $0x458] sm:$0xff]
        %v7135 = vld [vmem:[#allocation7 + $0x460] sm:$0xff]
        %v7136 = vld [vmem:[#allocation7 + $0x468] sm:$0xff]
        %v7137 = vld [vmem:[#allocation7 + $0x470] sm:$0xff]
        %v7138 = vld [vmem:[#allocation7 + $0x478] sm:$0xff]
        %v7139 = vld [vmem:[#allocation7 + $0x480] sm:$0xff]
        %v7140 = vld [vmem:[#allocation7 + $0x488] sm:$0xff]
        %v7141 = vld [vmem:[#allocation7 + $0x490] sm:$0xff]
        %v7142 = vld [vmem:[#allocation7 + $0x498] sm:$0xff]
        %v7143 = vld [vmem:[#allocation7 + $0x4a0] sm:$0xff]
        %v7144 = vld [vmem:[#allocation7 + $0x4a8] sm:$0xff]
        %v7145 = vld [vmem:[#allocation7 + $0x4b0] sm:$0xff]
        %v7146 = vld [vmem:[#allocation7 + $0x4b8] sm:$0xff]
        %v7147 = vld [vmem:[#allocation7 + $0x4c0] sm:$0xff]
        %v7148 = vld [vmem:[#allocation7 + $0x4c8] sm:$0xff]
        %v7149 = vld [vmem:[#allocation7 + $0x4d0] sm:$0xff]
        %v7150 = vld [vmem:[#allocation7 + $0x4d8] sm:$0xff]
        %v7151 = vld [vmem:[#allocation7 + $0x4e0] sm:$0xff]
        %v7152 = vld [vmem:[#allocation7 + $0x4e8] sm:$0xff]
        %v7153 = vld [vmem:[#allocation7 + $0x4f0] sm:$0xff]
        %v7154 = vld [vmem:[#allocation7 + $0x4f8] sm:$0xff]
        %v7155 = vpack.c.bf16 %v7000, %v6995
        %v7156 = vpack.c.bf16 %v7001, %v6996
        %v7157 = vpack.c.bf16 %v7002, %v6997
        %v7158 = vpack.c.bf16 %v7003, %v6998
        %v7159 = vpack.c.bf16 %v7004, %v6999
        %v7160 = vpack.c.bf16 %v7010, %v7005
        %v7161 = vpack.c.bf16 %v7011, %v7006
        %v7162 = vpack.c.bf16 %v7012, %v7007
        %v7163 = vpack.c.bf16 %v7013, %v7008
        %v7164 = vpack.c.bf16 %v7014, %v7009
        %v7165 = vpack.c.bf16 %v7020, %v7015
        %v7166 = vpack.c.bf16 %v7021, %v7016
        %v7167 = vpack.c.bf16 %v7022, %v7017
        %v7168 = vpack.c.bf16 %v7023, %v7018
        %v7169 = vpack.c.bf16 %v7024, %v7019
        %v7170 = vpack.c.bf16 %v7030, %v7025
        %v7171 = vpack.c.bf16 %v7031, %v7026
        %v7172 = vpack.c.bf16 %v7032, %v7027
        %v7173 = vpack.c.bf16 %v7033, %v7028
        %v7174 = vpack.c.bf16 %v7034, %v7029
        %v7175 = vpack.c.bf16 %v7040, %v7035
        %v7176 = vpack.c.bf16 %v7041, %v7036
        %v7177 = vpack.c.bf16 %v7042, %v7037
        %v7178 = vpack.c.bf16 %v7043, %v7038
        %v7179 = vpack.c.bf16 %v7044, %v7039
        %v7180 = vpack.c.bf16 %v7050, %v7045
        %v7181 = vpack.c.bf16 %v7051, %v7046
        %v7182 = vpack.c.bf16 %v7052, %v7047
        %v7183 = vpack.c.bf16 %v7053, %v7048
        %v7184 = vpack.c.bf16 %v7054, %v7049
        %v7185 = vpack.c.bf16 %v7060, %v7055
        %v7186 = vpack.c.bf16 %v7061, %v7056
        %v7187 = vpack.c.bf16 %v7062, %v7057
        %v7188 = vpack.c.bf16 %v7063, %v7058
        %v7189 = vpack.c.bf16 %v7064, %v7059
        %v7190 = vpack.c.bf16 %v7070, %v7065
        %v7191 = vpack.c.bf16 %v7071, %v7066
        %v7192 = vpack.c.bf16 %v7072, %v7067
        %v7193 = vpack.c.bf16 %v7073, %v7068
        %v7194 = vpack.c.bf16 %v7074, %v7069
        %v7195 = vpack.c.bf16 %v7080, %v7075
        %v7196 = vpack.c.bf16 %v7081, %v7076
        %v7197 = vpack.c.bf16 %v7082, %v7077
        %v7198 = vpack.c.bf16 %v7083, %v7078
        %v7199 = vpack.c.bf16 %v7084, %v7079
        %v7200 = vpack.c.bf16 %v7090, %v7085
        %v7201 = vpack.c.bf16 %v7091, %v7086
        %v7202 = vpack.c.bf16 %v7092, %v7087
        %v7203 = vpack.c.bf16 %v7093, %v7088
        %v7204 = vpack.c.bf16 %v7094, %v7089
        %v7205 = vpack.c.bf16 %v7100, %v7095
        %v7206 = vpack.c.bf16 %v7101, %v7096
        %v7207 = vpack.c.bf16 %v7102, %v7097
        %v7208 = vpack.c.bf16 %v7103, %v7098
        %v7209 = vpack.c.bf16 %v7104, %v7099
        %v7210 = vpack.c.bf16 %v7110, %v7105
        %v7211 = vpack.c.bf16 %v7111, %v7106
        %v7212 = vpack.c.bf16 %v7112, %v7107
        %v7213 = vpack.c.bf16 %v7113, %v7108
        %v7214 = vpack.c.bf16 %v7114, %v7109
        %v7215 = vpack.c.bf16 %v7120, %v7115
        %v7216 = vpack.c.bf16 %v7121, %v7116
        %v7217 = vpack.c.bf16 %v7122, %v7117
        %v7218 = vpack.c.bf16 %v7123, %v7118
        %v7219 = vpack.c.bf16 %v7124, %v7119
        %v7220 = vpack.c.bf16 %v7130, %v7125
        %v7221 = vpack.c.bf16 %v7131, %v7126
        %v7222 = vpack.c.bf16 %v7132, %v7127
        %v7223 = vpack.c.bf16 %v7133, %v7128
        %v7224 = vpack.c.bf16 %v7134, %v7129
        %v7225 = vpack.c.bf16 %v7140, %v7135
        %v7226 = vpack.c.bf16 %v7141, %v7136
        %v7227 = vpack.c.bf16 %v7142, %v7137
        %v7228 = vpack.c.bf16 %v7143, %v7138
        %v7229 = vpack.c.bf16 %v7144, %v7139
        %v7230 = vpack.c.bf16 %v7150, %v7145
        %v7231 = vpack.c.bf16 %v7151, %v7146
        %v7232 = vpack.c.bf16 %v7152, %v7147
        %v7233 = vpack.c.bf16 %v7153, %v7148
        %v7234 = vpack.c.bf16 %v7154, %v7149
        %v7235 = vld [vmem:[%s5] sm:$0xf]
        %v7236 = vld [vmem:[%s5 + $0x4] sm:$0xf]
        %v7237 = vld [vmem:[%s5 + $0x8] sm:$0xf]
        %v7238 = vld [vmem:[%s5 + $0xc] sm:$0xf]
        %v7239 = vld [vmem:[%s5 + $0x10] sm:$0xf]
        %v7240 = vld [vmem:[%s5 + $0x14] sm:$0xf]
        %v7241 = vld [vmem:[%s5 + $0x18] sm:$0xf]
        %v7242 = vld [vmem:[%s5 + $0x1c] sm:$0xf]
        %v7243 = vld [vmem:[%s5 + $0x20] sm:$0xf]
        %v7244 = vld [vmem:[%s5 + $0x24] sm:$0xf]
        %v7245 = vld [vmem:[%s5 + $0x28] sm:$0xf]
        %v7246 = vld [vmem:[%s5 + $0x2c] sm:$0xf]
        %v7247 = vld [vmem:[%s5 + $0x30] sm:$0xf]
        %v7248 = vld [vmem:[%s5 + $0x34] sm:$0xf]
        %v7249 = vld [vmem:[%s5 + $0x38] sm:$0xf]
        %v7250 = vld [vmem:[%s5 + $0x3c] sm:$0xf]
        %v7251 = vld [vmem:[%s5 + $0x40] sm:$0xf]
        %v7252 = vld [vmem:[%s5 + $0x44] sm:$0xf]
        %v7253 = vld [vmem:[%s5 + $0x48] sm:$0xf]
        %v7254 = vld [vmem:[%s5 + $0x4c] sm:$0xf]
        %v7255 = vld [vmem:[%s5 + $0x50] sm:$0xf]
        %v7256 = vld [vmem:[%s5 + $0x54] sm:$0xf]
        %v7257 = vld [vmem:[%s5 + $0x58] sm:$0xf]
        %v7258 = vld [vmem:[%s5 + $0x5c] sm:$0xf]
        %v7259 = vld [vmem:[%s5 + $0x60] sm:$0xf]
        %v7260 = vld [vmem:[%s5 + $0x64] sm:$0xf]
        %v7261 = vld [vmem:[%s5 + $0x68] sm:$0xf]
        %v7262 = vld [vmem:[%s5 + $0x6c] sm:$0xf]
        %v7263 = vld [vmem:[%s5 + $0x70] sm:$0xf]
        %v7264 = vld [vmem:[%s5 + $0x74] sm:$0xf]
        %v7265 = vld [vmem:[%s5 + $0x78] sm:$0xf]
        %v7266 = vld [vmem:[%s5 + $0x7c] sm:$0xf]
        %v7267 = vld [vmem:[%s5 + $0x80] sm:$0xf]
        %v7268 = vld [vmem:[%s5 + $0x84] sm:$0xf]
        %v7269 = vld [vmem:[%s5 + $0x88] sm:$0xf]
        %v7270 = vld [vmem:[%s5 + $0x8c] sm:$0xf]
        %v7271 = vld [vmem:[%s5 + $0x90] sm:$0xf]
        %v7272 = vld [vmem:[%s5 + $0x94] sm:$0xf]
        %v7273 = vld [vmem:[%s5 + $0x98] sm:$0xf]
        %v7274 = vld [vmem:[%s5 + $0x9c] sm:$0xf]
        %v7275 = vld [vmem:[%s5 + $0xa0] sm:$0xf]
        %v7276 = vld [vmem:[%s5 + $0xa4] sm:$0xf]
        %v7277 = vld [vmem:[%s5 + $0xa8] sm:$0xf]
        %v7278 = vld [vmem:[%s5 + $0xac] sm:$0xf]
        %v7279 = vld [vmem:[%s5 + $0xb0] sm:$0xf]
        %v7280 = vld [vmem:[%s5 + $0xb4] sm:$0xf]
        %v7281 = vld [vmem:[%s5 + $0xb8] sm:$0xf]
        %v7282 = vld [vmem:[%s5 + $0xbc] sm:$0xf]
        %v7283 = vld [vmem:[%s5 + $0xc0] sm:$0xf]
        %v7284 = vld [vmem:[%s5 + $0xc4] sm:$0xf]
        %v7285 = vld [vmem:[%s5 + $0xc8] sm:$0xf]
        %v7286 = vld [vmem:[%s5 + $0xcc] sm:$0xf]
        %v7287 = vld [vmem:[%s5 + $0xd0] sm:$0xf]
        %v7288 = vld [vmem:[%s5 + $0xd4] sm:$0xf]
        %v7289 = vld [vmem:[%s5 + $0xd8] sm:$0xf]
        %v7290 = vld [vmem:[%s5 + $0xdc] sm:$0xf]
        %v7291 = vld [vmem:[%s5 + $0xe0] sm:$0xf]
        %v7292 = vld [vmem:[%s5 + $0xe4] sm:$0xf]
        %v7293 = vld [vmem:[%s5 + $0xe8] sm:$0xf]
        %v7294 = vld [vmem:[%s5 + $0xec] sm:$0xf]
        %v7295 = vld [vmem:[%s5 + $0xf0] sm:$0xf]
        %v7296 = vld [vmem:[%s5 + $0xf4] sm:$0xf]
        %v7297 = vld [vmem:[%s5 + $0xf8] sm:$0xf]
        %v7298 = vld [vmem:[%s5 + $0xfc] sm:$0xf]
        %v7299 = vld [vmem:[%s5 + $0x100] sm:$0xf]
        %v7300 = vld [vmem:[%s5 + $0x104] sm:$0xf]
        %v7301 = vld [vmem:[%s5 + $0x108] sm:$0xf]
        %v7302 = vld [vmem:[%s5 + $0x10c] sm:$0xf]
        %v7303 = vld [vmem:[%s5 + $0x110] sm:$0xf]
        %v7304 = vld [vmem:[%s5 + $0x114] sm:$0xf]
        %v7305 = vld [vmem:[%s5 + $0x118] sm:$0xf]
        %v7306 = vld [vmem:[%s5 + $0x11c] sm:$0xf]
        %v7307 = vld [vmem:[%s6] sm:$0x1]
        %v7309 = vperm.slane %v7307, 0
        %v7383 = vunpack.c.l.b16 %v7235
        %v7384 = vunpack.c.l.b16 %v7236
        %v7385 = vunpack.c.l.b16 %v7237
        %v7386 = vunpack.c.l.b16 %v7238
        %v7387 = vunpack.c.l.b16 %v7239
        %v7388 = vunpack.c.l.b16 %v7240
        %v7389 = vunpack.c.l.b16 %v7241
        %v7390 = vunpack.c.l.b16 %v7242
        %v7391 = vunpack.c.l.b16 %v7243
        %v7392 = vunpack.c.l.b16 %v7244
        %v7393 = vunpack.c.l.b16 %v7245
        %v7394 = vunpack.c.l.b16 %v7246
        %v7395 = vunpack.c.l.b16 %v7247
        %v7396 = vunpack.c.l.b16 %v7248
        %v7397 = vunpack.c.l.b16 %v7249
        %v7398 = vunpack.c.l.b16 %v7250
        %v7399 = vunpack.c.l.b16 %v7251
        %v7400 = vunpack.c.l.b16 %v7252
        %v7401 = vunpack.c.l.b16 %v7253
        %v7402 = vunpack.c.l.b16 %v7254
        %v7403 = vunpack.c.l.b16 %v7255
        %v7404 = vunpack.c.l.b16 %v7256
        %v7405 = vunpack.c.l.b16 %v7257
        %v7406 = vunpack.c.l.b16 %v7258
        %v7407 = vunpack.c.l.b16 %v7259
        %v7408 = vunpack.c.l.b16 %v7260
        %v7409 = vunpack.c.l.b16 %v7261
        %v7410 = vunpack.c.l.b16 %v7262
        %v7411 = vunpack.c.l.b16 %v7263
        %v7412 = vunpack.c.l.b16 %v7264
        %v7413 = vunpack.c.l.b16 %v7265
        %v7414 = vunpack.c.l.b16 %v7266
        %v7415 = vunpack.c.l.b16 %v7267
        %v7416 = vunpack.c.l.b16 %v7268
        %v7417 = vunpack.c.l.b16 %v7269
        %v7418 = vunpack.c.l.b16 %v7270
        %v7419 = vunpack.c.l.b16 %v7271
        %v7420 = vunpack.c.l.b16 %v7272
        %v7421 = vunpack.c.l.b16 %v7273
        %v7422 = vunpack.c.l.b16 %v7274
        %v7423 = vunpack.c.l.b16 %v7275
        %v7424 = vunpack.c.l.b16 %v7276
        %v7425 = vunpack.c.l.b16 %v7277
        %v7426 = vunpack.c.l.b16 %v7278
        %v7427 = vunpack.c.l.b16 %v7279
        %v7428 = vunpack.c.l.b16 %v7280
        %v7429 = vunpack.c.l.b16 %v7281
        %v7430 = vunpack.c.l.b16 %v7282
        %v7431 = vunpack.c.l.b16 %v7283
        %v7432 = vunpack.c.l.b16 %v7284
        %v7433 = vunpack.c.l.b16 %v7285
        %v7434 = vunpack.c.l.b16 %v7286
        %v7435 = vunpack.c.l.b16 %v7287
        %v7436 = vunpack.c.l.b16 %v7288
        %v7437 = vunpack.c.l.b16 %v7289
        %v7438 = vunpack.c.l.b16 %v7290
        %v7439 = vunpack.c.l.b16 %v7291
        %v7440 = vunpack.c.l.b16 %v7292
        %v7441 = vunpack.c.l.b16 %v7293
        %v7442 = vunpack.c.l.b16 %v7294
        %v7443 = vunpack.c.l.b16 %v7295
        %v7444 = vunpack.c.l.b16 %v7296
        %v7445 = vunpack.c.l.b16 %v7297
        %v7446 = vunpack.c.l.b16 %v7298
        %v7447 = vunpack.c.l.b16 %v7299
        %v7448 = vunpack.c.l.b16 %v7300
        %v7449 = vunpack.c.l.b16 %v7301
        %v7450 = vunpack.c.l.b16 %v7302
        %v7451 = vunpack.c.l.b16 %v7303
        %v7452 = vunpack.c.l.b16 %v7304
        %v7453 = vunpack.c.l.b16 %v7305
        %v7454 = vunpack.c.l.b16 %v7306
        %v7455 = vpack.c.b16 %v7384, %v7383
        %v7456 = vpack.c.b16 %v7386, %v7385
        %v7457 = vpack.c.b16 %v7388, %v7387
        %v7458 = vpack.c.b16 %v7390, %v7389
        %v7459 = vpack.c.b16 %v7392, %v7391
        %v7460 = vpack.c.b16 %v7394, %v7393
        %v7461 = vpack.c.b16 %v7396, %v7395
        %v7462 = vpack.c.b16 %v7398, %v7397
        %v7463 = vpack.c.b16 %v7400, %v7399
        %v7464 = vpack.c.b16 %v7402, %v7401
        %v7465 = vpack.c.b16 %v7404, %v7403
        %v7466 = vpack.c.b16 %v7406, %v7405
        %v7467 = vpack.c.b16 %v7408, %v7407
        %v7468 = vpack.c.b16 %v7410, %v7409
        %v7469 = vpack.c.b16 %v7412, %v7411
        %v7470 = vpack.c.b16 %v7414, %v7413
        %v7471 = vpack.c.b16 %v7416, %v7415
        %v7472 = vpack.c.b16 %v7418, %v7417
        %v7473 = vpack.c.b16 %v7420, %v7419
        %v7474 = vpack.c.b16 %v7422, %v7421
        %v7475 = vpack.c.b16 %v7424, %v7423
        %v7476 = vpack.c.b16 %v7426, %v7425
        %v7477 = vpack.c.b16 %v7428, %v7427
        %v7478 = vpack.c.b16 %v7430, %v7429
        %v7479 = vpack.c.b16 %v7432, %v7431
        %v7480 = vpack.c.b16 %v7434, %v7433
        %v7481 = vpack.c.b16 %v7436, %v7435
        %v7482 = vpack.c.b16 %v7438, %v7437
        %v7483 = vpack.c.b16 %v7440, %v7439
        %v7484 = vpack.c.b16 %v7442, %v7441
        %v7485 = vpack.c.b16 %v7444, %v7443
        %v7486 = vpack.c.b16 %v7446, %v7445
        %v7487 = vpack.c.b16 %v7448, %v7447
        %v7488 = vpack.c.b16 %v7450, %v7449
        %v7489 = vpack.c.b16 %v7452, %v7451
        %v7490 = vpack.c.b16 %v7454, %v7453
        %v7528 = vsel %vm5641, %v7159, 0
        %v7531 = vsel %vm5641, %v7164, 0
        %v7534 = vsel %vm5641, %v7169, 0
        %v7537 = vsel %vm5641, %v7174, 0
        %v7540 = vsel %vm5641, %v7179, 0
        %v7543 = vsel %vm5641, %v7184, 0
        %v7546 = vsel %vm5641, %v7189, 0
        %v7549 = vsel %vm5641, %v7194, 0
        %v7552 = vsel %vm5641, %v7199, 0
        %v7555 = vsel %vm5641, %v7204, 0
        %v7558 = vsel %vm5641, %v7209, 0
        %v7561 = vsel %vm5641, %v7214, 0
        %v7564 = vsel %vm5641, %v7219, 0
        %v7567 = vsel %vm5641, %v7224, 0
        %v7570 = vsel %vm5641, %v7229, 0
        %v7573 = vsel %vm5641, %v7234, 0
        %7575 = vmatpush.bf16.msra.mxu0 %v7462
        %7576 = vmatpush.bf16.msra.mxu0 %v7461
        %7577 = vmatpush.bf16.msra.mxu0 %v7460
        %7578 = vmatpush.bf16.msra.mxu0 %v7459
        %7579 = vmatpush.bf16.msra.mxu0 %v7458
        %7580 = vmatpush.bf16.msra.mxu0 %v7457
        %7581 = vmatpush.bf16.msra.mxu0 %v7456
        %7582 = vmatpush.bf16.msra.mxu0 %v7455
        %7583 = vmatmul.bf16.gmra.mxu0 %v7155
        %v7584 = vpop.f32.mrf.mxu0
        %v7585 = vadd.f32 %v7309, %v7584
        %v7586 = vpop.f32.mrf.mxu0
        %v7587 = vadd.f32 %v7309, %v7586
        %7588 = vmatmul.bf16.gmra.mxu0 %v7160
        %v7589 = vpop.f32.mrf.mxu0
        %v7590 = vadd.f32 %v7309, %v7589
        %v7591 = vpop.f32.mrf.mxu0
        %v7592 = vadd.f32 %v7309, %v7591
        %7593 = vmatmul.bf16.gmra.mxu0 %v7165
        %v7594 = vpop.f32.mrf.mxu0
        %v7595 = vadd.f32 %v7309, %v7594
        %v7596 = vpop.f32.mrf.mxu0
        %v7597 = vadd.f32 %v7309, %v7596
        %7598 = vmatmul.bf16.gmra.mxu0 %v7170
        %v7599 = vpop.f32.mrf.mxu0
        %v7600 = vadd.f32 %v7309, %v7599
        %v7601 = vpop.f32.mrf.mxu0
        %v7602 = vadd.f32 %v7309, %v7601
        %7603 = vmatmul.bf16.gmra.mxu0 %v7175
        %v7604 = vpop.f32.mrf.mxu0
        %v7605 = vadd.f32 %v7309, %v7604
        %v7606 = vpop.f32.mrf.mxu0
        %v7607 = vadd.f32 %v7309, %v7606
        %7608 = vmatmul.bf16.gmra.mxu0 %v7180
        %v7609 = vpop.f32.mrf.mxu0
        %v7610 = vadd.f32 %v7309, %v7609
        %v7611 = vpop.f32.mrf.mxu0
        %v7612 = vadd.f32 %v7309, %v7611
        %7613 = vmatmul.bf16.gmra.mxu0 %v7185
        %v7614 = vpop.f32.mrf.mxu0
        %v7615 = vadd.f32 %v7309, %v7614
        %v7616 = vpop.f32.mrf.mxu0
        %v7617 = vadd.f32 %v7309, %v7616
        %7618 = vmatmul.bf16.gmra.mxu0 %v7190
        %v7619 = vpop.f32.mrf.mxu0
        %v7620 = vadd.f32 %v7309, %v7619
        %v7621 = vpop.f32.mrf.mxu0
        %v7622 = vadd.f32 %v7309, %v7621
        %7623 = vmatmul.bf16.gmra.mxu0 %v7195
        %v7624 = vpop.f32.mrf.mxu0
        %v7625 = vadd.f32 %v7309, %v7624
        %v7626 = vpop.f32.mrf.mxu0
        %v7627 = vadd.f32 %v7309, %v7626
        %7628 = vmatmul.bf16.gmra.mxu0 %v7200
        %v7629 = vpop.f32.mrf.mxu0
        %v7630 = vadd.f32 %v7309, %v7629
        %v7631 = vpop.f32.mrf.mxu0
        %v7632 = vadd.f32 %v7309, %v7631
        %7633 = vmatmul.bf16.gmra.mxu0 %v7205
        %v7634 = vpop.f32.mrf.mxu0
        %v7635 = vadd.f32 %v7309, %v7634
        %v7636 = vpop.f32.mrf.mxu0
        %v7637 = vadd.f32 %v7309, %v7636
        %7638 = vmatmul.bf16.gmra.mxu0 %v7210
        %v7639 = vpop.f32.mrf.mxu0
        %v7640 = vadd.f32 %v7309, %v7639
        %v7641 = vpop.f32.mrf.mxu0
        %v7642 = vadd.f32 %v7309, %v7641
        %7643 = vmatmul.bf16.gmra.mxu0 %v7215
        %v7644 = vpop.f32.mrf.mxu0
        %v7645 = vadd.f32 %v7309, %v7644
        %v7646 = vpop.f32.mrf.mxu0
        %v7647 = vadd.f32 %v7309, %v7646
        %7648 = vmatmul.bf16.gmra.mxu0 %v7220
        %v7649 = vpop.f32.mrf.mxu0
        %v7650 = vadd.f32 %v7309, %v7649
        %v7651 = vpop.f32.mrf.mxu0
        %v7652 = vadd.f32 %v7309, %v7651
        %7653 = vmatmul.bf16.gmra.mxu0 %v7225
        %v7654 = vpop.f32.mrf.mxu0
        %v7655 = vadd.f32 %v7309, %v7654
        %v7656 = vpop.f32.mrf.mxu0
        %v7657 = vadd.f32 %v7309, %v7656
        %7658 = vmatmul.bf16.gmra.mxu0 %v7230
        %v7659 = vpop.f32.mrf.mxu0
        %v7660 = vadd.f32 %v7309, %v7659
        %v7661 = vpop.f32.mrf.mxu0
        %v7662 = vadd.f32 %v7309, %v7661
        %7663 = vdwg.mxu0
        %7664 = vmatpush.bf16.msra.mxu0 %v7470
        %7665 = vmatpush.bf16.msra.mxu0 %v7469
        %7666 = vmatpush.bf16.msra.mxu0 %v7468
        %7667 = vmatpush.bf16.msra.mxu0 %v7467
        %7668 = vmatpush.bf16.msra.mxu0 %v7466
        %7669 = vmatpush.bf16.msra.mxu0 %v7465
        %7670 = vmatpush.bf16.msra.mxu0 %v7464
        %7671 = vmatpush.bf16.msra.mxu0 %v7463
        %7672 = vmatmul.bf16.gmra.mxu0 %v7156
        %v7673 = vpop.f32.mrf.mxu0
        %v7674 = vadd.f32 %v7585, %v7673
        %v7675 = vpop.f32.mrf.mxu0
        %v7676 = vadd.f32 %v7587, %v7675
        %7677 = vmatmul.bf16.gmra.mxu0 %v7161
        %v7678 = vpop.f32.mrf.mxu0
        %v7679 = vadd.f32 %v7590, %v7678
        %v7680 = vpop.f32.mrf.mxu0
        %v7681 = vadd.f32 %v7592, %v7680
        %7682 = vmatmul.bf16.gmra.mxu0 %v7166
        %v7683 = vpop.f32.mrf.mxu0
        %v7684 = vadd.f32 %v7595, %v7683
        %v7685 = vpop.f32.mrf.mxu0
        %v7686 = vadd.f32 %v7597, %v7685
        %7687 = vmatmul.bf16.gmra.mxu0 %v7171
        %v7688 = vpop.f32.mrf.mxu0
        %v7689 = vadd.f32 %v7600, %v7688
        %v7690 = vpop.f32.mrf.mxu0
        %v7691 = vadd.f32 %v7602, %v7690
        %7692 = vmatmul.bf16.gmra.mxu0 %v7176
        %v7693 = vpop.f32.mrf.mxu0
        %v7694 = vadd.f32 %v7605, %v7693
        %v7695 = vpop.f32.mrf.mxu0
        %v7696 = vadd.f32 %v7607, %v7695
        %7697 = vmatmul.bf16.gmra.mxu0 %v7181
        %v7698 = vpop.f32.mrf.mxu0
        %v7699 = vadd.f32 %v7610, %v7698
        %v7700 = vpop.f32.mrf.mxu0
        %v7701 = vadd.f32 %v7612, %v7700
        %7702 = vmatmul.bf16.gmra.mxu0 %v7186
        %v7703 = vpop.f32.mrf.mxu0
        %v7704 = vadd.f32 %v7615, %v7703
        %v7705 = vpop.f32.mrf.mxu0
        %v7706 = vadd.f32 %v7617, %v7705
        %7707 = vmatmul.bf16.gmra.mxu0 %v7191
        %v7708 = vpop.f32.mrf.mxu0
        %v7709 = vadd.f32 %v7620, %v7708
        %v7710 = vpop.f32.mrf.mxu0
        %v7711 = vadd.f32 %v7622, %v7710
        %7712 = vmatmul.bf16.gmra.mxu0 %v7196
        %v7713 = vpop.f32.mrf.mxu0
        %v7714 = vadd.f32 %v7625, %v7713
        %v7715 = vpop.f32.mrf.mxu0
        %v7716 = vadd.f32 %v7627, %v7715
        %7717 = vmatmul.bf16.gmra.mxu0 %v7201
        %v7718 = vpop.f32.mrf.mxu0
        %v7719 = vadd.f32 %v7630, %v7718
        %v7720 = vpop.f32.mrf.mxu0
        %v7721 = vadd.f32 %v7632, %v7720
        %7722 = vmatmul.bf16.gmra.mxu0 %v7206
        %v7723 = vpop.f32.mrf.mxu0
        %v7724 = vadd.f32 %v7635, %v7723
        %v7725 = vpop.f32.mrf.mxu0
        %v7726 = vadd.f32 %v7637, %v7725
        %7727 = vmatmul.bf16.gmra.mxu0 %v7211
        %v7728 = vpop.f32.mrf.mxu0
        %v7729 = vadd.f32 %v7640, %v7728
        %v7730 = vpop.f32.mrf.mxu0
        %v7731 = vadd.f32 %v7642, %v7730
        %7732 = vmatmul.bf16.gmra.mxu0 %v7216
        %v7733 = vpop.f32.mrf.mxu0
        %v7734 = vadd.f32 %v7645, %v7733
        %v7735 = vpop.f32.mrf.mxu0
        %v7736 = vadd.f32 %v7647, %v7735
        %7737 = vmatmul.bf16.gmra.mxu0 %v7221
        %v7738 = vpop.f32.mrf.mxu0
        %v7739 = vadd.f32 %v7650, %v7738
        %v7740 = vpop.f32.mrf.mxu0
        %v7741 = vadd.f32 %v7652, %v7740
        %7742 = vmatmul.bf16.gmra.mxu0 %v7226
        %v7743 = vpop.f32.mrf.mxu0
        %v7744 = vadd.f32 %v7655, %v7743
        %v7745 = vpop.f32.mrf.mxu0
        %v7746 = vadd.f32 %v7657, %v7745
        %7747 = vmatmul.bf16.gmra.mxu0 %v7231
        %v7748 = vpop.f32.mrf.mxu0
        %v7749 = vadd.f32 %v7660, %v7748
        %v7750 = vpop.f32.mrf.mxu0
        %v7751 = vadd.f32 %v7662, %v7750
        %7752 = vdwg.mxu0
        %7753 = vmatpush.bf16.msra.mxu0 %v7478
        %7754 = vmatpush.bf16.msra.mxu0 %v7477
        %7755 = vmatpush.bf16.msra.mxu0 %v7476
        %7756 = vmatpush.bf16.msra.mxu0 %v7475
        %7757 = vmatpush.bf16.msra.mxu0 %v7474
        %7758 = vmatpush.bf16.msra.mxu0 %v7473
        %7759 = vmatpush.bf16.msra.mxu0 %v7472
        %7760 = vmatpush.bf16.msra.mxu0 %v7471
        %7761 = vmatmul.bf16.gmra.mxu0 %v7157
        %v7762 = vpop.f32.mrf.mxu0
        %v7763 = vadd.f32 %v7674, %v7762
        %v7764 = vpop.f32.mrf.mxu0
        %v7765 = vadd.f32 %v7676, %v7764
        %7766 = vmatmul.bf16.gmra.mxu0 %v7162
        %v7767 = vpop.f32.mrf.mxu0
        %v7768 = vadd.f32 %v7679, %v7767
        %v7769 = vpop.f32.mrf.mxu0
        %v7770 = vadd.f32 %v7681, %v7769
        %7771 = vmatmul.bf16.gmra.mxu0 %v7167
        %v7772 = vpop.f32.mrf.mxu0
        %v7773 = vadd.f32 %v7684, %v7772
        %v7774 = vpop.f32.mrf.mxu0
        %v7775 = vadd.f32 %v7686, %v7774
        %7776 = vmatmul.bf16.gmra.mxu0 %v7172
        %v7777 = vpop.f32.mrf.mxu0
        %v7778 = vadd.f32 %v7689, %v7777
        %v7779 = vpop.f32.mrf.mxu0
        %v7780 = vadd.f32 %v7691, %v7779
        %7781 = vmatmul.bf16.gmra.mxu0 %v7177
        %v7782 = vpop.f32.mrf.mxu0
        %v7783 = vadd.f32 %v7694, %v7782
        %v7784 = vpop.f32.mrf.mxu0
        %v7785 = vadd.f32 %v7696, %v7784
        %7786 = vmatmul.bf16.gmra.mxu0 %v7182
        %v7787 = vpop.f32.mrf.mxu0
        %v7788 = vadd.f32 %v7699, %v7787
        %v7789 = vpop.f32.mrf.mxu0
        %v7790 = vadd.f32 %v7701, %v7789
        %7791 = vmatmul.bf16.gmra.mxu0 %v7187
        %v7792 = vpop.f32.mrf.mxu0
        %v7793 = vadd.f32 %v7704, %v7792
        %v7794 = vpop.f32.mrf.mxu0
        %v7795 = vadd.f32 %v7706, %v7794
        %7796 = vmatmul.bf16.gmra.mxu0 %v7192
        %v7797 = vpop.f32.mrf.mxu0
        %v7798 = vadd.f32 %v7709, %v7797
        %v7799 = vpop.f32.mrf.mxu0
        %v7800 = vadd.f32 %v7711, %v7799
        %7801 = vmatmul.bf16.gmra.mxu0 %v7197
        %v7802 = vpop.f32.mrf.mxu0
        %v7803 = vadd.f32 %v7714, %v7802
        %v7804 = vpop.f32.mrf.mxu0
        %v7805 = vadd.f32 %v7716, %v7804
        %7806 = vmatmul.bf16.gmra.mxu0 %v7202
        %v7807 = vpop.f32.mrf.mxu0
        %v7808 = vadd.f32 %v7719, %v7807
        %v7809 = vpop.f32.mrf.mxu0
        %v7810 = vadd.f32 %v7721, %v7809
        %7811 = vmatmul.bf16.gmra.mxu0 %v7207
        %v7812 = vpop.f32.mrf.mxu0
        %v7813 = vadd.f32 %v7724, %v7812
        %v7814 = vpop.f32.mrf.mxu0
        %v7815 = vadd.f32 %v7726, %v7814
        %7816 = vmatmul.bf16.gmra.mxu0 %v7212
        %v7817 = vpop.f32.mrf.mxu0
        %v7818 = vadd.f32 %v7729, %v7817
        %v7819 = vpop.f32.mrf.mxu0
        %v7820 = vadd.f32 %v7731, %v7819
        %7821 = vmatmul.bf16.gmra.mxu0 %v7217
        %v7822 = vpop.f32.mrf.mxu0
        %v7823 = vadd.f32 %v7734, %v7822
        %v7824 = vpop.f32.mrf.mxu0
        %v7825 = vadd.f32 %v7736, %v7824
        %7826 = vmatmul.bf16.gmra.mxu0 %v7222
        %v7827 = vpop.f32.mrf.mxu0
        %v7828 = vadd.f32 %v7739, %v7827
        %v7829 = vpop.f32.mrf.mxu0
        %v7830 = vadd.f32 %v7741, %v7829
        %7831 = vmatmul.bf16.gmra.mxu0 %v7227
        %v7832 = vpop.f32.mrf.mxu0
        %v7833 = vadd.f32 %v7744, %v7832
        %v7834 = vpop.f32.mrf.mxu0
        %v7835 = vadd.f32 %v7746, %v7834
        %7836 = vmatmul.bf16.gmra.mxu0 %v7232
        %v7837 = vpop.f32.mrf.mxu0
        %v7838 = vadd.f32 %v7749, %v7837
        %v7839 = vpop.f32.mrf.mxu0
        %v7840 = vadd.f32 %v7751, %v7839
        %7841 = vdwg.mxu0
        %7842 = vmatpush.bf16.msra.mxu0 %v7486
        %7843 = vmatpush.bf16.msra.mxu0 %v7485
        %7844 = vmatpush.bf16.msra.mxu0 %v7484
        %7845 = vmatpush.bf16.msra.mxu0 %v7483
        %7846 = vmatpush.bf16.msra.mxu0 %v7482
        %7847 = vmatpush.bf16.msra.mxu0 %v7481
        %7848 = vmatpush.bf16.msra.mxu0 %v7480
        %7849 = vmatpush.bf16.msra.mxu0 %v7479
        %7850 = vmatmul.bf16.gmra.mxu0 %v7158
        %v7851 = vpop.f32.mrf.mxu0
        %v7852 = vadd.f32 %v7763, %v7851
        %v7853 = vpop.f32.mrf.mxu0
        %v7854 = vadd.f32 %v7765, %v7853
        %7855 = vmatmul.bf16.gmra.mxu0 %v7163
        %v7856 = vpop.f32.mrf.mxu0
        %v7857 = vadd.f32 %v7768, %v7856
        %v7858 = vpop.f32.mrf.mxu0
        %v7859 = vadd.f32 %v7770, %v7858
        %7860 = vmatmul.bf16.gmra.mxu0 %v7168
        %v7861 = vpop.f32.mrf.mxu0
        %v7862 = vadd.f32 %v7773, %v7861
        %v7863 = vpop.f32.mrf.mxu0
        %v7864 = vadd.f32 %v7775, %v7863
        %7865 = vmatmul.bf16.gmra.mxu0 %v7173
        %v7866 = vpop.f32.mrf.mxu0
        %v7867 = vadd.f32 %v7778, %v7866
        %v7868 = vpop.f32.mrf.mxu0
        %v7869 = vadd.f32 %v7780, %v7868
        %7870 = vmatmul.bf16.gmra.mxu0 %v7178
        %v7871 = vpop.f32.mrf.mxu0
        %v7872 = vadd.f32 %v7783, %v7871
        %v7873 = vpop.f32.mrf.mxu0
        %v7874 = vadd.f32 %v7785, %v7873
        %7875 = vmatmul.bf16.gmra.mxu0 %v7183
        %v7876 = vpop.f32.mrf.mxu0
        %v7877 = vadd.f32 %v7788, %v7876
        %v7878 = vpop.f32.mrf.mxu0
        %v7879 = vadd.f32 %v7790, %v7878
        %7880 = vmatmul.bf16.gmra.mxu0 %v7188
        %v7881 = vpop.f32.mrf.mxu0
        %v7882 = vadd.f32 %v7793, %v7881
        %v7883 = vpop.f32.mrf.mxu0
        %v7884 = vadd.f32 %v7795, %v7883
        %7885 = vmatmul.bf16.gmra.mxu0 %v7193
        %v7886 = vpop.f32.mrf.mxu0
        %v7887 = vadd.f32 %v7798, %v7886
        %v7888 = vpop.f32.mrf.mxu0
        %v7889 = vadd.f32 %v7800, %v7888
        %7890 = vmatmul.bf16.gmra.mxu0 %v7198
        %v7891 = vpop.f32.mrf.mxu0
        %v7892 = vadd.f32 %v7803, %v7891
        %v7893 = vpop.f32.mrf.mxu0
        %v7894 = vadd.f32 %v7805, %v7893
        %7895 = vmatmul.bf16.gmra.mxu0 %v7203
        %v7896 = vpop.f32.mrf.mxu0
        %v7897 = vadd.f32 %v7808, %v7896
        %v7898 = vpop.f32.mrf.mxu0
        %v7899 = vadd.f32 %v7810, %v7898
        %7900 = vmatmul.bf16.gmra.mxu0 %v7208
        %v7901 = vpop.f32.mrf.mxu0
        %v7902 = vadd.f32 %v7813, %v7901
        %v7903 = vpop.f32.mrf.mxu0
        %v7904 = vadd.f32 %v7815, %v7903
        %7905 = vmatmul.bf16.gmra.mxu0 %v7213
        %v7906 = vpop.f32.mrf.mxu0
        %v7907 = vadd.f32 %v7818, %v7906
        %v7908 = vpop.f32.mrf.mxu0
        %v7909 = vadd.f32 %v7820, %v7908
        %7910 = vmatmul.bf16.gmra.mxu0 %v7218
        %v7911 = vpop.f32.mrf.mxu0
        %v7912 = vadd.f32 %v7823, %v7911
        %v7913 = vpop.f32.mrf.mxu0
        %v7914 = vadd.f32 %v7825, %v7913
        %7915 = vmatmul.bf16.gmra.mxu0 %v7223
        %v7916 = vpop.f32.mrf.mxu0
        %v7917 = vadd.f32 %v7828, %v7916
        %v7918 = vpop.f32.mrf.mxu0
        %v7919 = vadd.f32 %v7830, %v7918
        %7920 = vmatmul.bf16.gmra.mxu0 %v7228
        %v7921 = vpop.f32.mrf.mxu0
        %v7922 = vadd.f32 %v7833, %v7921
        %v7923 = vpop.f32.mrf.mxu0
        %v7924 = vadd.f32 %v7835, %v7923
        %7925 = vmatmul.bf16.gmra.mxu0 %v7233
        %v7926 = vpop.f32.mrf.mxu0
        %v7927 = vadd.f32 %v7838, %v7926
        %v7928 = vpop.f32.mrf.mxu0
        %v7929 = vadd.f32 %v7840, %v7928
        %7930 = vdwg.mxu0
        %7931 = vmatpush.bf16.msra.mxu0 0
        %7932 = vmatpush.bf16.msra.mxu0 0
        %7933 = vmatpush.bf16.msra.mxu0 0
        %7934 = vmatpush.bf16.msra.mxu0 0
        %7935 = vmatpush.bf16.msra.mxu0 %v7490
        %7936 = vmatpush.bf16.msra.mxu0 %v7489
        %7937 = vmatpush.bf16.msra.mxu0 %v7488
        %7938 = vmatpush.bf16.msra.mxu0 %v7487
        %7939 = vmatmul.bf16.gmra.mxu0 %v7528
        %v7940 = vpop.f32.mrf.mxu0
        %v7941 = vadd.f32 %v7852, %v7940
        %v7942 = vpop.f32.mrf.mxu0
        %v7943 = vadd.f32 %v7854, %v7942
        %7944 = vmatmul.bf16.gmra.mxu0 %v7531
        %v7945 = vpop.f32.mrf.mxu0
        %v7946 = vadd.f32 %v7857, %v7945
        %v7947 = vpop.f32.mrf.mxu0
        %v7948 = vadd.f32 %v7859, %v7947
        %7949 = vmatmul.bf16.gmra.mxu0 %v7534
        %v7950 = vpop.f32.mrf.mxu0
        %v7951 = vadd.f32 %v7862, %v7950
        %v7952 = vpop.f32.mrf.mxu0
        %v7953 = vadd.f32 %v7864, %v7952
        %7954 = vmatmul.bf16.gmra.mxu0 %v7537
        %v7955 = vpop.f32.mrf.mxu0
        %v7956 = vadd.f32 %v7867, %v7955
        %v7957 = vpop.f32.mrf.mxu0
        %v7958 = vadd.f32 %v7869, %v7957
        %7959 = vmatmul.bf16.gmra.mxu0 %v7540
        %v7960 = vpop.f32.mrf.mxu0
        %v7961 = vadd.f32 %v7872, %v7960
        %v7962 = vpop.f32.mrf.mxu0
        %v7963 = vadd.f32 %v7874, %v7962
        %7964 = vmatmul.bf16.gmra.mxu0 %v7543
        %v7965 = vpop.f32.mrf.mxu0
        %v7966 = vadd.f32 %v7877, %v7965
        %v7967 = vpop.f32.mrf.mxu0
        %v7968 = vadd.f32 %v7879, %v7967
        %7969 = vmatmul.bf16.gmra.mxu0 %v7546
        %v7970 = vpop.f32.mrf.mxu0
        %v7971 = vadd.f32 %v7882, %v7970
        %v7972 = vpop.f32.mrf.mxu0
        %v7973 = vadd.f32 %v7884, %v7972
        %7974 = vmatmul.bf16.gmra.mxu0 %v7549
        %v7975 = vpop.f32.mrf.mxu0
        %v7976 = vadd.f32 %v7887, %v7975
        %v7977 = vpop.f32.mrf.mxu0
        %v7978 = vadd.f32 %v7889, %v7977
        %7979 = vmatmul.bf16.gmra.mxu0 %v7552
        %v7980 = vpop.f32.mrf.mxu0
        %v7981 = vadd.f32 %v7892, %v7980
        %v7982 = vpop.f32.mrf.mxu0
        %v7983 = vadd.f32 %v7894, %v7982
        %7984 = vmatmul.bf16.gmra.mxu0 %v7555
        %v7985 = vpop.f32.mrf.mxu0
        %v7986 = vadd.f32 %v7897, %v7985
        %v7987 = vpop.f32.mrf.mxu0
        %v7988 = vadd.f32 %v7899, %v7987
        %7989 = vmatmul.bf16.gmra.mxu0 %v7558
        %v7990 = vpop.f32.mrf.mxu0
        %v7991 = vadd.f32 %v7902, %v7990
        %v7992 = vpop.f32.mrf.mxu0
        %v7993 = vadd.f32 %v7904, %v7992
        %7994 = vmatmul.bf16.gmra.mxu0 %v7561
        %v7995 = vpop.f32.mrf.mxu0
        %v7996 = vadd.f32 %v7907, %v7995
        %v7997 = vpop.f32.mrf.mxu0
        %v7998 = vadd.f32 %v7909, %v7997
        %7999 = vmatmul.bf16.gmra.mxu0 %v7564
        %v8000 = vpop.f32.mrf.mxu0
        %v8001 = vadd.f32 %v7912, %v8000
        %v8002 = vpop.f32.mrf.mxu0
        %v8003 = vadd.f32 %v7914, %v8002
        %8004 = vmatmul.bf16.gmra.mxu0 %v7567
        %v8005 = vpop.f32.mrf.mxu0
        %v8006 = vadd.f32 %v7917, %v8005
        %v8007 = vpop.f32.mrf.mxu0
        %v8008 = vadd.f32 %v7919, %v8007
        %8009 = vmatmul.bf16.gmra.mxu0 %v7570
        %v8010 = vpop.f32.mrf.mxu0
        %v8011 = vadd.f32 %v7922, %v8010
        %v8012 = vpop.f32.mrf.mxu0
        %v8013 = vadd.f32 %v7924, %v8012
        %8014 = vmatmul.bf16.gmra.mxu0 %v7573
        %v8015 = vpop.f32.mrf.mxu0
        %v8016 = vadd.f32 %v7927, %v8015
        %v8017 = vpop.f32.mrf.mxu0
        %v8018 = vadd.f32 %v7929, %v8017
        %8019 = vdwg.mxu0
        %v8020 = vmax.f32 %v7941, 0.0
        %v8021 = vmax.f32 %v7943, 0.0
        %v8022 = vmax.f32 %v7946, 0.0
        %v8023 = vmax.f32 %v7948, 0.0
        %v8024 = vmax.f32 %v7951, 0.0
        %v8025 = vmax.f32 %v7953, 0.0
        %v8026 = vmax.f32 %v7956, 0.0
        %v8027 = vmax.f32 %v7958, 0.0
        %v8028 = vmax.f32 %v7961, 0.0
        %v8029 = vmax.f32 %v7963, 0.0
        %v8030 = vmax.f32 %v7966, 0.0
        %v8031 = vmax.f32 %v7968, 0.0
        %v8032 = vmax.f32 %v7971, 0.0
        %v8033 = vmax.f32 %v7973, 0.0
        %v8034 = vmax.f32 %v7976, 0.0
        %v8035 = vmax.f32 %v7978, 0.0
        %v8036 = vmax.f32 %v7981, 0.0
        %v8037 = vmax.f32 %v7983, 0.0
        %v8038 = vmax.f32 %v7986, 0.0
        %v8039 = vmax.f32 %v7988, 0.0
        %v8040 = vmax.f32 %v7991, 0.0
        %v8041 = vmax.f32 %v7993, 0.0
        %v8042 = vmax.f32 %v7996, 0.0
        %v8043 = vmax.f32 %v7998, 0.0
        %v8044 = vmax.f32 %v8001, 0.0
        %v8045 = vmax.f32 %v8003, 0.0
        %v8046 = vmax.f32 %v8006, 0.0
        %v8047 = vmax.f32 %v8008, 0.0
        %v8048 = vmax.f32 %v8011, 0.0
        %v8049 = vmax.f32 %v8013, 0.0
        %v8050 = vmax.f32 %v8016, 0.0
        %v8051 = vmax.f32 %v8018, 0.0
        %8052 = vxpose.xlu0.b32.start [1/16] %v8020, 128
        %8053 = vxpose.xlu0.b32.cont [2/16] %v8021, 128
        %8054 = vxpose.xlu0.b32.cont [3/16] %v8022, 128
        %8055 = vxpose.xlu0.b32.cont [4/16] %v8023, 128
        %8056 = vxpose.xlu0.b32.cont [5/16] %v8024, 128
        %8057 = vxpose.xlu0.b32.cont [6/16] %v8025, 128
        %8058 = vxpose.xlu0.b32.cont [7/16] %v8026, 128
        %8059 = vxpose.xlu0.b32.cont [8/16] %v8027, 128
        %8060 = vxpose.xlu0.b32.cont [9/16] %v8028, 128
        %8061 = vxpose.xlu0.b32.cont [10/16] %v8029, 128
        %8062 = vxpose.xlu0.b32.cont [11/16] %v8030, 128
        %8063 = vxpose.xlu0.b32.cont [12/16] %v8031, 128
        %8064 = vxpose.xlu0.b32.cont [13/16] %v8032, 128
        %8065 = vxpose.xlu0.b32.cont [14/16] %v8033, 128
        %8066 = vxpose.xlu0.b32.cont [15/16] %v8034, 128
        %8067 = vxpose.xlu0.b32.end [16/16] %v8035, 128
        %v8068 = vpop.trf.xlu0
        %v8069 = vpop.trf.xlu0
        %v8070 = vpop.trf.xlu0
        %v8071 = vpop.trf.xlu0
        %v8072 = vpop.trf.xlu0
        %v8073 = vpop.trf.xlu0
        %v8074 = vpop.trf.xlu0
        %v8075 = vpop.trf.xlu0
        %v8076 = vpop.trf.xlu0
        %v8077 = vpop.trf.xlu0
        %v8078 = vpop.trf.xlu0
        %v8079 = vpop.trf.xlu0
        %v8080 = vpop.trf.xlu0
        %v8081 = vpop.trf.xlu0
        %v8082 = vpop.trf.xlu0
        %v8083 = vpop.trf.xlu0
        %8084 = vxpose.xlu0.b32.start [1/16] %v8036, 128
        %8085 = vxpose.xlu0.b32.cont [2/16] %v8037, 128
        %8086 = vxpose.xlu0.b32.cont [3/16] %v8038, 128
        %8087 = vxpose.xlu0.b32.cont [4/16] %v8039, 128
        %8088 = vxpose.xlu0.b32.cont [5/16] %v8040, 128
        %8089 = vxpose.xlu0.b32.cont [6/16] %v8041, 128
        %8090 = vxpose.xlu0.b32.cont [7/16] %v8042, 128
        %8091 = vxpose.xlu0.b32.cont [8/16] %v8043, 128
        %8092 = vxpose.xlu0.b32.cont [9/16] %v8044, 128
        %8093 = vxpose.xlu0.b32.cont [10/16] %v8045, 128
        %8094 = vxpose.xlu0.b32.cont [11/16] %v8046, 128
        %8095 = vxpose.xlu0.b32.cont [12/16] %v8047, 128
        %8096 = vxpose.xlu0.b32.cont [13/16] %v8048, 128
        %8097 = vxpose.xlu0.b32.cont [14/16] %v8049, 128
        %8098 = vxpose.xlu0.b32.cont [15/16] %v8050, 128
        %8099 = vxpose.xlu0.b32.end [16/16] %v8051, 128
        %v8100 = vpop.trf.xlu0
        %v8101 = vpop.trf.xlu0
        %v8102 = vpop.trf.xlu0
        %v8103 = vpop.trf.xlu0
        %v8104 = vpop.trf.xlu0
        %v8105 = vpop.trf.xlu0
        %v8106 = vpop.trf.xlu0
        %v8107 = vpop.trf.xlu0
        %v8108 = vpop.trf.xlu0
        %v8109 = vpop.trf.xlu0
        %v8110 = vpop.trf.xlu0
        %v8111 = vpop.trf.xlu0
        %v8112 = vpop.trf.xlu0
        %v8113 = vpop.trf.xlu0
        %v8114 = vpop.trf.xlu0
        %v8115 = vpop.trf.xlu0
        %v8116 = vadd.f32 %v8068, %v8100
        %8117 = vadd.xlane.f32.xlu0 %v8116
        %v8118 = vpop.xlane.xlu0 %8117
        %v8119 = vadd.f32 %v8069, %v8101
        %8120 = vadd.xlane.f32.xlu0 %v8119
        %v8121 = vpop.xlane.xlu0 %8120
        %v8122 = vadd.f32 %v8070, %v8102
        %8123 = vadd.xlane.f32.xlu0 %v8122
        %v8124 = vpop.xlane.xlu0 %8123
        %v8125 = vadd.f32 %v8071, %v8103
        %8126 = vadd.xlane.f32.xlu0 %v8125
        %v8127 = vpop.xlane.xlu0 %8126
        %v8128 = vadd.f32 %v8072, %v8104
        %8129 = vadd.xlane.f32.xlu0 %v8128
        %v8130 = vpop.xlane.xlu0 %8129
        %v8131 = vadd.f32 %v8073, %v8105
        %8132 = vadd.xlane.f32.xlu0 %v8131
        %v8133 = vpop.xlane.xlu0 %8132
        %v8134 = vadd.f32 %v8074, %v8106
        %8135 = vadd.xlane.f32.xlu0 %v8134
        %v8136 = vpop.xlane.xlu0 %8135
        %v8137 = vadd.f32 %v8075, %v8107
        %8138 = vadd.xlane.f32.xlu0 %v8137
        %v8139 = vpop.xlane.xlu0 %8138
        %v8140 = vadd.f32 %v8076, %v8108
        %8141 = vadd.xlane.f32.xlu0 %v8140
        %v8142 = vpop.xlane.xlu0 %8141
        %v8143 = vadd.f32 %v8077, %v8109
        %8144 = vadd.xlane.f32.xlu0 %v8143
        %v8145 = vpop.xlane.xlu0 %8144
        %v8146 = vadd.f32 %v8078, %v8110
        %8147 = vadd.xlane.f32.xlu0 %v8146
        %v8148 = vpop.xlane.xlu0 %8147
        %v8149 = vadd.f32 %v8079, %v8111
        %8150 = vadd.xlane.f32.xlu0 %v8149
        %v8151 = vpop.xlane.xlu0 %8150
        %v8152 = vadd.f32 %v8080, %v8112
        %8153 = vadd.xlane.f32.xlu0 %v8152
        %v8154 = vpop.xlane.xlu0 %8153
        %v8155 = vadd.f32 %v8081, %v8113
        %8156 = vadd.xlane.f32.xlu0 %v8155
        %v8157 = vpop.xlane.xlu0 %8156
        %v8158 = vadd.f32 %v8082, %v8114
        %8159 = vadd.xlane.f32.xlu0 %v8158
        %v8160 = vpop.xlane.xlu0 %8159
        %v8161 = vadd.f32 %v8083, %v8115
        %8162 = vadd.xlane.f32.xlu0 %v8161
        %v8163 = vpop.xlane.xlu0 %8162
        %v8164 = vrcp.pop 256.0
        %v8165 = vmul.f32 256.0, %v8164
        %v8166 = vsub.f32 1.0, %v8165
        %v8167 = vmul.f32 %v8164, %v8166
        %v8168 = vadd.f32 %v8164, %v8167
        %vm8169 = vweird.f32 %v8164
        %v8170 = vsel %vm8169, %v8164, %v8168
        %v8171 = vmul.f32 %v8118, %v8170
        %v8172 = vmul.f32 %v8121, %v8170
        %v8173 = vmul.f32 %v8124, %v8170
        %v8174 = vmul.f32 %v8127, %v8170
        %v8175 = vmul.f32 %v8130, %v8170
        %v8176 = vmul.f32 %v8133, %v8170
        %v8177 = vmul.f32 %v8136, %v8170
        %v8178 = vmul.f32 %v8139, %v8170
        %v8179 = vmul.f32 %v8142, %v8170
        %v8180 = vmul.f32 %v8145, %v8170
        %v8181 = vmul.f32 %v8148, %v8170
        %v8182 = vmul.f32 %v8151, %v8170
        %v8183 = vmul.f32 %v8154, %v8170
        %v8184 = vmul.f32 %v8157, %v8170
        %v8185 = vmul.f32 %v8160, %v8170
        %v8186 = vmul.f32 %v8163, %v8170
        %v8187 = vmax.f32 %v8068, %v8100
        %8188 = vmax.xlane.f32.xlu0 %v8187
        %v8189 = vpop.xlane.xlu0 %8188
        %v8190 = vmax.f32 %v8069, %v8101
        %8191 = vmax.xlane.f32.xlu0 %v8190
        %v8192 = vpop.xlane.xlu0 %8191
        %v8193 = vmax.f32 %v8070, %v8102
        %8194 = vmax.xlane.f32.xlu0 %v8193
        %v8195 = vpop.xlane.xlu0 %8194
        %v8196 = vmax.f32 %v8071, %v8103
        %8197 = vmax.xlane.f32.xlu0 %v8196
        %v8198 = vpop.xlane.xlu0 %8197
        %v8199 = vmax.f32 %v8072, %v8104
        %8200 = vmax.xlane.f32.xlu0 %v8199
        %v8201 = vpop.xlane.xlu0 %8200
        %v8202 = vmax.f32 %v8073, %v8105
        %8203 = vmax.xlane.f32.xlu0 %v8202
        %v8204 = vpop.xlane.xlu0 %8203
        %v8205 = vmax.f32 %v8074, %v8106
        %8206 = vmax.xlane.f32.xlu0 %v8205
        %v8207 = vpop.xlane.xlu0 %8206
        %v8208 = vmax.f32 %v8075, %v8107
        %8209 = vmax.xlane.f32.xlu0 %v8208
        %v8210 = vpop.xlane.xlu0 %8209
        %v8211 = vmax.f32 %v8076, %v8108
        %8212 = vmax.xlane.f32.xlu0 %v8211
        %v8213 = vpop.xlane.xlu0 %8212
        %v8214 = vmax.f32 %v8077, %v8109
        %8215 = vmax.xlane.f32.xlu0 %v8214
        %v8216 = vpop.xlane.xlu0 %8215
        %v8217 = vmax.f32 %v8078, %v8110
        %8218 = vmax.xlane.f32.xlu0 %v8217
        %v8219 = vpop.xlane.xlu0 %8218
        %v8220 = vmax.f32 %v8079, %v8111
        %8221 = vmax.xlane.f32.xlu0 %v8220
        %v8222 = vpop.xlane.xlu0 %8221
        %v8223 = vmax.f32 %v8080, %v8112
        %8224 = vmax.xlane.f32.xlu0 %v8223
        %v8225 = vpop.xlane.xlu0 %8224
        %v8226 = vmax.f32 %v8081, %v8113
        %8227 = vmax.xlane.f32.xlu0 %v8226
        %v8228 = vpop.xlane.xlu0 %8227
        %v8229 = vmax.f32 %v8082, %v8114
        %8230 = vmax.xlane.f32.xlu0 %v8229
        %v8231 = vpop.xlane.xlu0 %8230
        %v8232 = vmax.f32 %v8083, %v8115
        %8233 = vmax.xlane.f32.xlu0 %v8232
        %v8234 = vpop.xlane.xlu0 %8233
        %v8235 = vld [vmem:[%s7] sm:$0xff]
        %v8236 = vld [vmem:[%s7 + $0x8] sm:$0xff]
        %v8237 = vld [vmem:[%s7 + $0x10] sm:$0xff]
        %v8238 = vld [vmem:[%s7 + $0x18] sm:$0xff]
        %v8239 = vld [vmem:[%s7 + $0x20] sm:$0xff]
        %v8240 = vld [vmem:[%s7 + $0x28] sm:$0xff]
        %v8241 = vld [vmem:[%s7 + $0x30] sm:$0xff]
        %v8242 = vld [vmem:[%s7 + $0x38] sm:$0xff]
        %v8243 = vld [vmem:[%s7 + $0x40] sm:$0xff]
        %v8244 = vld [vmem:[%s7 + $0x48] sm:$0xff]
        %v8245 = vld [vmem:[%s7 + $0x50] sm:$0xff]
        %v8246 = vld [vmem:[%s7 + $0x58] sm:$0xff]
        %v8247 = vld [vmem:[%s7 + $0x60] sm:$0xff]
        %v8248 = vld [vmem:[%s7 + $0x68] sm:$0xff]
        %v8249 = vld [vmem:[%s7 + $0x70] sm:$0xff]
        %v8250 = vld [vmem:[%s7 + $0x78] sm:$0xff]
        %s8251 = scalar_lea.vmem %s7, 128
        %v8252 = vld [vmem:[%s8251] sm:$0xff]
        %v8253 = vld [vmem:[%s8251 + $0x8] sm:$0xff]
        %v8254 = vld [vmem:[%s8251 + $0x10] sm:$0xff]
        %v8255 = vld [vmem:[%s8251 + $0x18] sm:$0xff]
        %v8256 = vld [vmem:[%s8251 + $0x20] sm:$0xff]
        %v8257 = vld [vmem:[%s8251 + $0x28] sm:$0xff]
        %v8258 = vld [vmem:[%s8251 + $0x30] sm:$0xff]
        %v8259 = vld [vmem:[%s8251 + $0x38] sm:$0xff]
        %v8260 = vld [vmem:[%s8251 + $0x40] sm:$0xff]
        %v8261 = vld [vmem:[%s8251 + $0x48] sm:$0xff]
        %v8262 = vld [vmem:[%s8251 + $0x50] sm:$0xff]
        %v8263 = vld [vmem:[%s8251 + $0x58] sm:$0xff]
        %v8264 = vld [vmem:[%s8251 + $0x60] sm:$0xff]
        %v8265 = vld [vmem:[%s8251 + $0x68] sm:$0xff]
        %v8266 = vld [vmem:[%s8251 + $0x70] sm:$0xff]
        %v8267 = vld [vmem:[%s8251 + $0x78] sm:$0xff]
        %8268 = vmatpush.msra.mxu0 %v8234
        %8269 = vmatpush.msra.mxu0 %v8231
        %8270 = vmatpush.msra.mxu0 %v8228
        %8271 = vmatpush.msra.mxu0 %v8225
        %8272 = vmatpush.msra.mxu0 %v8222
        %8273 = vmatpush.msra.mxu0 %v8219
        %8274 = vmatpush.msra.mxu0 %v8216
        %8275 = vmatpush.msra.mxu0 %v8213
        %8276 = vmatpush.msra.mxu0 %v8210
        %8277 = vmatpush.msra.mxu0 %v8207
        %8278 = vmatpush.msra.mxu0 %v8204
        %8279 = vmatpush.msra.mxu0 %v8201
        %8280 = vmatpush.msra.mxu0 %v8198
        %8281 = vmatpush.msra.mxu0 %v8195
        %8282 = vmatpush.msra.mxu0 %v8192
        %8283 = vmatpush.msra.mxu0 %v8189
        %8284 = vmatmul.f32.gmra.mxu0 %v8252
        %v8285 = vpop.f32.mrf.mxu0
        %v8286 = vadd.f32 0.0, %v8285
        %8287 = vmatmul.f32.gmra.mxu0 %v8253
        %v8288 = vpop.f32.mrf.mxu0
        %v8289 = vadd.f32 0.0, %v8288
        %8290 = vmatmul.f32.gmra.mxu0 %v8254
        %v8291 = vpop.f32.mrf.mxu0
        %v8292 = vadd.f32 0.0, %v8291
        %8293 = vmatmul.f32.gmra.mxu0 %v8255
        %v8294 = vpop.f32.mrf.mxu0
        %v8295 = vadd.f32 0.0, %v8294
        %8296 = vmatmul.f32.gmra.mxu0 %v8256
        %v8297 = vpop.f32.mrf.mxu0
        %v8298 = vadd.f32 0.0, %v8297
        %8299 = vmatmul.f32.gmra.mxu0 %v8257
        %v8300 = vpop.f32.mrf.mxu0
        %v8301 = vadd.f32 0.0, %v8300
        %8302 = vmatmul.f32.gmra.mxu0 %v8258
        %v8303 = vpop.f32.mrf.mxu0
        %v8304 = vadd.f32 0.0, %v8303
        %8305 = vmatmul.f32.gmra.mxu0 %v8259
        %v8306 = vpop.f32.mrf.mxu0
        %v8307 = vadd.f32 0.0, %v8306
        %8308 = vmatmul.f32.gmra.mxu0 %v8260
        %v8309 = vpop.f32.mrf.mxu0
        %v8310 = vadd.f32 0.0, %v8309
        %8311 = vmatmul.f32.gmra.mxu0 %v8261
        %v8312 = vpop.f32.mrf.mxu0
        %v8313 = vadd.f32 0.0, %v8312
        %8314 = vmatmul.f32.gmra.mxu0 %v8262
        %v8315 = vpop.f32.mrf.mxu0
        %v8316 = vadd.f32 0.0, %v8315
        %8317 = vmatmul.f32.gmra.mxu0 %v8263
        %v8318 = vpop.f32.mrf.mxu0
        %v8319 = vadd.f32 0.0, %v8318
        %8320 = vmatmul.f32.gmra.mxu0 %v8264
        %v8321 = vpop.f32.mrf.mxu0
        %v8322 = vadd.f32 0.0, %v8321
        %8323 = vmatmul.f32.gmra.mxu0 %v8265
        %v8324 = vpop.f32.mrf.mxu0
        %v8325 = vadd.f32 0.0, %v8324
        %8326 = vmatmul.f32.gmra.mxu0 %v8266
        %v8327 = vpop.f32.mrf.mxu0
        %v8328 = vadd.f32 0.0, %v8327
        %8329 = vmatmul.f32.gmra.mxu0 %v8267
        %v8330 = vpop.f32.mrf.mxu0
        %v8331 = vadd.f32 0.0, %v8330
        %8332 = vdwg.mxu0
        %8333 = vmatpush.msra.mxu0 %v8186
        %8334 = vmatpush.msra.mxu0 %v8185
        %8335 = vmatpush.msra.mxu0 %v8184
        %8336 = vmatpush.msra.mxu0 %v8183
        %8337 = vmatpush.msra.mxu0 %v8182
        %8338 = vmatpush.msra.mxu0 %v8181
        %8339 = vmatpush.msra.mxu0 %v8180
        %8340 = vmatpush.msra.mxu0 %v8179
        %8341 = vmatpush.msra.mxu0 %v8178
        %8342 = vmatpush.msra.mxu0 %v8177
        %8343 = vmatpush.msra.mxu0 %v8176
        %8344 = vmatpush.msra.mxu0 %v8175
        %8345 = vmatpush.msra.mxu0 %v8174
        %8346 = vmatpush.msra.mxu0 %v8173
        %8347 = vmatpush.msra.mxu0 %v8172
        %8348 = vmatpush.msra.mxu0 %v8171
        %8349 = vmatmul.f32.gmra.mxu0 %v8235
        %v8350 = vpop.f32.mrf.mxu0
        %v8351 = vadd.f32 %v8286, %v8350
        %8352 = vmatmul.f32.gmra.mxu0 %v8236
        %v8353 = vpop.f32.mrf.mxu0
        %v8354 = vadd.f32 %v8289, %v8353
        %8355 = vmatmul.f32.gmra.mxu0 %v8237
        %v8356 = vpop.f32.mrf.mxu0
        %v8357 = vadd.f32 %v8292, %v8356
        %8358 = vmatmul.f32.gmra.mxu0 %v8238
        %v8359 = vpop.f32.mrf.mxu0
        %v8360 = vadd.f32 %v8295, %v8359
        %8361 = vmatmul.f32.gmra.mxu0 %v8239
        %v8362 = vpop.f32.mrf.mxu0
        %v8363 = vadd.f32 %v8298, %v8362
        %8364 = vmatmul.f32.gmra.mxu0 %v8240
        %v8365 = vpop.f32.mrf.mxu0
        %v8366 = vadd.f32 %v8301, %v8365
        %8367 = vmatmul.f32.gmra.mxu0 %v8241
        %v8368 = vpop.f32.mrf.mxu0
        %v8369 = vadd.f32 %v8304, %v8368
        %8370 = vmatmul.f32.gmra.mxu0 %v8242
        %v8371 = vpop.f32.mrf.mxu0
        %v8372 = vadd.f32 %v8307, %v8371
        %8373 = vmatmul.f32.gmra.mxu0 %v8243
        %v8374 = vpop.f32.mrf.mxu0
        %v8375 = vadd.f32 %v8310, %v8374
        %8376 = vmatmul.f32.gmra.mxu0 %v8244
        %v8377 = vpop.f32.mrf.mxu0
        %v8378 = vadd.f32 %v8313, %v8377
        %8379 = vmatmul.f32.gmra.mxu0 %v8245
        %v8380 = vpop.f32.mrf.mxu0
        %v8381 = vadd.f32 %v8316, %v8380
        %8382 = vmatmul.f32.gmra.mxu0 %v8246
        %v8383 = vpop.f32.mrf.mxu0
        %v8384 = vadd.f32 %v8319, %v8383
        %8385 = vmatmul.f32.gmra.mxu0 %v8247
        %v8386 = vpop.f32.mrf.mxu0
        %v8387 = vadd.f32 %v8322, %v8386
        %8388 = vmatmul.f32.gmra.mxu0 %v8248
        %v8389 = vpop.f32.mrf.mxu0
        %v8390 = vadd.f32 %v8325, %v8389
        %8391 = vmatmul.f32.gmra.mxu0 %v8249
        %v8392 = vpop.f32.mrf.mxu0
        %v8393 = vadd.f32 %v8328, %v8392
        %8394 = vmatmul.f32.gmra.mxu0 %v8250
        %v8395 = vpop.f32.mrf.mxu0
        %v8396 = vadd.f32 %v8331, %v8395
        %8397 = vdwg.mxu0
        %8399 = vset.pattern.permute.xlu0 0
        %8400 = vperm.xlu0 %8399, %v8351
        %v8401 = vpop.permute.xlu0 %8400
        %8404 = vset.pattern.permute.xlu0 0
        %8405 = vperm.xlu0 %8404, %v8354
        %v8406 = vpop.permute.xlu0 %8405
        %8409 = vset.pattern.permute.xlu0 0
        %8410 = vperm.xlu0 %8409, %v8357
        %v8411 = vpop.permute.xlu0 %8410
        %8414 = vset.pattern.permute.xlu0 0
        %8415 = vperm.xlu0 %8414, %v8360
        %v8416 = vpop.permute.xlu0 %8415
        %8419 = vset.pattern.permute.xlu0 0
        %8420 = vperm.xlu0 %8419, %v8363
        %v8421 = vpop.permute.xlu0 %8420
        %8424 = vset.pattern.permute.xlu0 0
        %8425 = vperm.xlu0 %8424, %v8366
        %v8426 = vpop.permute.xlu0 %8425
        %8429 = vset.pattern.permute.xlu0 0
        %8430 = vperm.xlu0 %8429, %v8369
        %v8431 = vpop.permute.xlu0 %8430
        %8434 = vset.pattern.permute.xlu0 0
        %8435 = vperm.xlu0 %8434, %v8372
        %v8436 = vpop.permute.xlu0 %8435
        %8439 = vset.pattern.permute.xlu0 0
        %8440 = vperm.xlu0 %8439, %v8375
        %v8441 = vpop.permute.xlu0 %8440
        %8444 = vset.pattern.permute.xlu0 0
        %8445 = vperm.xlu0 %8444, %v8378
        %v8446 = vpop.permute.xlu0 %8445
        %8449 = vset.pattern.permute.xlu0 0
        %8450 = vperm.xlu0 %8449, %v8381
        %v8451 = vpop.permute.xlu0 %8450
        %8454 = vset.pattern.permute.xlu0 0
        %8455 = vperm.xlu0 %8454, %v8384
        %v8456 = vpop.permute.xlu0 %8455
        %8459 = vset.pattern.permute.xlu0 0
        %8460 = vperm.xlu0 %8459, %v8387
        %v8461 = vpop.permute.xlu0 %8460
        %8464 = vset.pattern.permute.xlu0 0
        %8465 = vperm.xlu0 %8464, %v8390
        %v8466 = vpop.permute.xlu0 %8465
        %8469 = vset.pattern.permute.xlu0 0
        %8470 = vperm.xlu0 %8469, %v8393
        %v8471 = vpop.permute.xlu0 %8470
        %8474 = vset.pattern.permute.xlu0 0
        %8475 = vperm.xlu0 %8474, %v8396
        %v8476 = vpop.permute.xlu0 %8475
        %v8478 = vadd.f32 %v8068, %v8401
        %v8479 = vadd.f32 %v8100, %v8401
        %v8480 = vadd.f32 %v8069, %v8406
        %v8481 = vadd.f32 %v8101, %v8406
        %v8482 = vadd.f32 %v8070, %v8411
        %v8483 = vadd.f32 %v8102, %v8411
        %v8484 = vadd.f32 %v8071, %v8416
        %v8485 = vadd.f32 %v8103, %v8416
        %v8486 = vadd.f32 %v8072, %v8421
        %v8487 = vadd.f32 %v8104, %v8421
        %v8488 = vadd.f32 %v8073, %v8426
        %v8489 = vadd.f32 %v8105, %v8426
        %v8490 = vadd.f32 %v8074, %v8431
        %v8491 = vadd.f32 %v8106, %v8431
        %v8492 = vadd.f32 %v8075, %v8436
        %v8493 = vadd.f32 %v8107, %v8436
        %v8494 = vadd.f32 %v8076, %v8441
        %v8495 = vadd.f32 %v8108, %v8441
        %v8496 = vadd.f32 %v8077, %v8446
        %v8497 = vadd.f32 %v8109, %v8446
        %v8498 = vadd.f32 %v8078, %v8451
        %v8499 = vadd.f32 %v8110, %v8451
        %v8500 = vadd.f32 %v8079, %v8456
        %v8501 = vadd.f32 %v8111, %v8456
        %v8502 = vadd.f32 %v8080, %v8461
        %v8503 = vadd.f32 %v8112, %v8461
        %v8504 = vadd.f32 %v8081, %v8466
        %v8505 = vadd.f32 %v8113, %v8466
        %v8506 = vadd.f32 %v8082, %v8471
        %v8507 = vadd.f32 %v8114, %v8471
        %v8508 = vadd.f32 %v8083, %v8476
        %v8509 = vadd.f32 %v8115, %v8476
        %v8510 = vpack.c.bf16 %v8480, %v8478
        %v8511 = vpack.c.bf16 %v8481, %v8479
        %v8512 = vpack.c.bf16 %v8484, %v8482
        %v8513 = vpack.c.bf16 %v8485, %v8483
        %v8514 = vpack.c.bf16 %v8488, %v8486
        %v8515 = vpack.c.bf16 %v8489, %v8487
        %v8516 = vpack.c.bf16 %v8492, %v8490
        %v8517 = vpack.c.bf16 %v8493, %v8491
        %v8518 = vpack.c.bf16 %v8496, %v8494
        %v8519 = vpack.c.bf16 %v8497, %v8495
        %v8520 = vpack.c.bf16 %v8500, %v8498
        %v8521 = vpack.c.bf16 %v8501, %v8499
        %v8522 = vpack.c.bf16 %v8504, %v8502
        %v8523 = vpack.c.bf16 %v8505, %v8503
        %v8524 = vpack.c.bf16 %v8508, %v8506
        %v8525 = vpack.c.bf16 %v8509, %v8507
        %v8526 = vld [vmem:[%s8] sm:$0x3]
        %v8527 = vld [vmem:[%s9] sm:$0xf]
        %8529 = vset.pattern.permute.xlu0 0
        %8530 = vperm.xlu0 %8529, %v8527
        %v8531 = vpop.permute.xlu0 %8530
        %8533 = vmatpush.bf16.msra.mxu0 %v8524
        %8534 = vmatpush.bf16.msra.mxu0 %v8522
        %8535 = vmatpush.bf16.msra.mxu0 %v8520
        %8536 = vmatpush.bf16.msra.mxu0 %v8518
        %8537 = vmatpush.bf16.msra.mxu0 %v8516
        %8538 = vmatpush.bf16.msra.mxu0 %v8514
        %8539 = vmatpush.bf16.msra.mxu0 %v8512
        %8540 = vmatpush.bf16.msra.mxu0 %v8510
        %8541 = vmatmul.bf16.gmra.mxu0 %v8526
        %v8542 = vpop.f32.mrf.mxu0
        %v8543 = vadd.f32 %v8531, %v8542
        %v8544 = vpop.f32.mrf.mxu0
        %8545 = vdwg.mxu0
        %8546 = vmatpush.bf16.msra.mxu0 %v8525
        %8547 = vmatpush.bf16.msra.mxu0 %v8523
        %8548 = vmatpush.bf16.msra.mxu0 %v8521
        %8549 = vmatpush.bf16.msra.mxu0 %v8519
        %8550 = vmatpush.bf16.msra.mxu0 %v8517
        %8551 = vmatpush.bf16.msra.mxu0 %v8515
        %8552 = vmatpush.bf16.msra.mxu0 %v8513
        %8553 = vmatpush.bf16.msra.mxu0 %v8511
        %8554 = vmatmul.bf16.gmra.mxu0 %v8526
        %v8555 = vpop.f32.mrf.mxu0
        %v8556 = vadd.f32 %v8531, %v8555
        %v8557 = vpop.f32.mrf.mxu0
        %8558 = vdwg.mxu0
        %v8559 = vmax.f32 %v8543, 0.0
        %v8560 = vmax.f32 %v8556, 0.0
        %v8561 = vld [vmem:[%s10] sm:$0x1]
        %v8562 = vld [vmem:[%s11] sm:$0x3]
        %8564 = vset.pattern.permute.xlu0 0
        %8565 = vperm.xlu0 %8564, %v8562
        %v8566 = vpop.permute.xlu0 %8565
        %8568 = vmatpush.bf16.msra.mxu0 %v8524
        %8569 = vmatpush.bf16.msra.mxu0 %v8522
        %8570 = vmatpush.bf16.msra.mxu0 %v8520
        %8571 = vmatpush.bf16.msra.mxu0 %v8518
        %8572 = vmatpush.bf16.msra.mxu0 %v8516
        %8573 = vmatpush.bf16.msra.mxu0 %v8514
        %8574 = vmatpush.bf16.msra.mxu0 %v8512
        %8575 = vmatpush.bf16.msra.mxu0 %v8510
        %8576 = vmatmul.bf16.gmra.mxu0 %v8561
        %v8577 = vpop.f32.mrf.mxu0
        %v8578 = vadd.f32 %v8566, %v8577
        %v8579 = vpop.f32.mrf.mxu0
        %8580 = vdwg.mxu0
        %8581 = vmatpush.bf16.msra.mxu0 %v8525
        %8582 = vmatpush.bf16.msra.mxu0 %v8523
        %8583 = vmatpush.bf16.msra.mxu0 %v8521
        %8584 = vmatpush.bf16.msra.mxu0 %v8519
        %8585 = vmatpush.bf16.msra.mxu0 %v8517
        %8586 = vmatpush.bf16.msra.mxu0 %v8515
        %8587 = vmatpush.bf16.msra.mxu0 %v8513
        %8588 = vmatpush.bf16.msra.mxu0 %v8511
        %8589 = vmatmul.bf16.gmra.mxu0 %v8561
        %v8590 = vpop.f32.mrf.mxu0
        %v8591 = vadd.f32 %v8566, %v8590
        %v8592 = vpop.f32.mrf.mxu0
        %8593 = vdwg.mxu0
        %v8594 = vmax.f32 %v8578, 0.0
        %v8595 = vmax.f32 %v8591, 0.0
        %v8596 = vld [vmem:[%s13] sm:$0x3]
        %v8597 = vpack.c.bf16 %v8560, %v8559
        %v8598 = vld [vmem:[#allocation9] sm:$0xff]
        %v8599 = vld [vmem:[#allocation9 + $0x8] sm:$0xff]
        %v8600 = vld [vmem:[#allocation9 + $0x10] sm:$0xff]
        %v8601 = vld [vmem:[#allocation9 + $0x18] sm:$0xff]
        %v8602 = vld [vmem:[#allocation9 + $0x20] sm:$0xff]
        %v8603 = vld [vmem:[#allocation9 + $0x28] sm:$0xff]
        %v8604 = vld [vmem:[#allocation9 + $0x30] sm:$0xff]
        %v8605 = vld [vmem:[#allocation9 + $0x38] sm:$0xff]
        %v8606 = vld [vmem:[#allocation9 + $0x40] sm:$0xff]
        %v8607 = vld [vmem:[#allocation9 + $0x48] sm:$0xff]
        %v8608 = vld [vmem:[#allocation9 + $0x50] sm:$0xff]
        %v8609 = vld [vmem:[#allocation9 + $0x58] sm:$0xff]
        %v8610 = vld [vmem:[#allocation9 + $0x60] sm:$0xff]
        %v8611 = vld [vmem:[#allocation9 + $0x68] sm:$0xff]
        %v8612 = vld [vmem:[#allocation9 + $0x70] sm:$0xff]
        %v8613 = vld [vmem:[#allocation9 + $0x78] sm:$0xff]
        %v8614 = vld [vmem:[#allocation9 + $0x80] sm:$0xff]
        %v8615 = vld [vmem:[#allocation9 + $0x88] sm:$0xff]
        %v8616 = vld [vmem:[#allocation9 + $0x90] sm:$0xff]
        %v8617 = vld [vmem:[#allocation9 + $0x98] sm:$0xff]
        %v8618 = vld [vmem:[#allocation9 + $0xa0] sm:$0xff]
        %v8619 = vld [vmem:[#allocation9 + $0xa8] sm:$0xff]
        %v8620 = vld [vmem:[#allocation9 + $0xb0] sm:$0xff]
        %v8621 = vld [vmem:[#allocation9 + $0xb8] sm:$0xff]
        %v8622 = vld [vmem:[#allocation9 + $0xc0] sm:$0xff]
        %v8623 = vld [vmem:[#allocation9 + $0xc8] sm:$0xff]
        %v8624 = vld [vmem:[#allocation9 + $0xd0] sm:$0xff]
        %v8625 = vld [vmem:[#allocation9 + $0xd8] sm:$0xff]
        %v8626 = vld [vmem:[#allocation9 + $0xe0] sm:$0xff]
        %v8627 = vld [vmem:[#allocation9 + $0xe8] sm:$0xff]
        %v8628 = vld [vmem:[#allocation9 + $0xf0] sm:$0xff]
        %v8629 = vld [vmem:[#allocation9 + $0xf8] sm:$0xff]
        %v8631 = vunpack.c.l.b16 %v8597
        %v8632 = vunpack.c.h.b16 %v8597
        %v8633 = vpack.c.b16 %v8631, %v8631
        %v8634 = vpack.c.b16 %v8632, %v8632
        %v8669 = vunpack.c.l.b16 %v8598
        %v8670 = vunpack.c.h.b16 %v8598
        %v8671 = vunpack.c.l.b16 %v8599
        %v8672 = vunpack.c.h.b16 %v8599
        %v8673 = vunpack.c.l.b16 %v8600
        %v8674 = vunpack.c.h.b16 %v8600
        %v8675 = vunpack.c.l.b16 %v8601
        %v8676 = vunpack.c.h.b16 %v8601
        %v8677 = vunpack.c.l.b16 %v8602
        %v8678 = vunpack.c.h.b16 %v8602
        %v8679 = vunpack.c.l.b16 %v8603
        %v8680 = vunpack.c.h.b16 %v8603
        %v8681 = vunpack.c.l.b16 %v8604
        %v8682 = vunpack.c.h.b16 %v8604
        %v8683 = vunpack.c.l.b16 %v8605
        %v8684 = vunpack.c.h.b16 %v8605
        %v8685 = vunpack.c.l.b16 %v8606
        %v8686 = vunpack.c.h.b16 %v8606
        %v8687 = vunpack.c.l.b16 %v8607
        %v8688 = vunpack.c.h.b16 %v8607
        %v8689 = vunpack.c.l.b16 %v8608
        %v8690 = vunpack.c.h.b16 %v8608
        %v8691 = vunpack.c.l.b16 %v8609
        %v8692 = vunpack.c.h.b16 %v8609
        %v8693 = vunpack.c.l.b16 %v8610
        %v8694 = vunpack.c.h.b16 %v8610
        %v8695 = vunpack.c.l.b16 %v8611
        %v8696 = vunpack.c.h.b16 %v8611
        %v8697 = vunpack.c.l.b16 %v8612
        %v8698 = vunpack.c.h.b16 %v8612
        %v8699 = vunpack.c.l.b16 %v8613
        %v8700 = vunpack.c.h.b16 %v8613
        %v8701 = vunpack.c.l.b16 %v8614
        %v8702 = vunpack.c.h.b16 %v8614
        %v8703 = vunpack.c.l.b16 %v8615
        %v8704 = vunpack.c.h.b16 %v8615
        %v8705 = vunpack.c.l.b16 %v8616
        %v8706 = vunpack.c.h.b16 %v8616
        %v8707 = vunpack.c.l.b16 %v8617
        %v8708 = vunpack.c.h.b16 %v8617
        %v8709 = vunpack.c.l.b16 %v8618
        %v8710 = vunpack.c.h.b16 %v8618
        %v8711 = vunpack.c.l.b16 %v8619
        %v8712 = vunpack.c.h.b16 %v8619
        %v8713 = vunpack.c.l.b16 %v8620
        %v8714 = vunpack.c.h.b16 %v8620
        %v8715 = vunpack.c.l.b16 %v8621
        %v8716 = vunpack.c.h.b16 %v8621
        %v8717 = vunpack.c.l.b16 %v8622
        %v8718 = vunpack.c.h.b16 %v8622
        %v8719 = vunpack.c.l.b16 %v8623
        %v8720 = vunpack.c.h.b16 %v8623
        %v8721 = vunpack.c.l.b16 %v8624
        %v8722 = vunpack.c.h.b16 %v8624
        %v8723 = vunpack.c.l.b16 %v8625
        %v8724 = vunpack.c.h.b16 %v8625
        %v8725 = vunpack.c.l.b16 %v8626
        %v8726 = vunpack.c.h.b16 %v8626
        %v8727 = vunpack.c.l.b16 %v8627
        %v8728 = vunpack.c.h.b16 %v8627
        %v8729 = vunpack.c.l.b16 %v8628
        %v8730 = vunpack.c.h.b16 %v8628
        %v8731 = vunpack.c.l.b16 %v8629
        %v8732 = vunpack.c.h.b16 %v8629
        %v8733 = vpack.c.b16 %v8671, %v8669
        %v8734 = vpack.c.b16 %v8672, %v8670
        %v8735 = vpack.c.b16 %v8675, %v8673
        %v8736 = vpack.c.b16 %v8676, %v8674
        %v8737 = vpack.c.b16 %v8679, %v8677
        %v8738 = vpack.c.b16 %v8680, %v8678
        %v8739 = vpack.c.b16 %v8683, %v8681
        %v8740 = vpack.c.b16 %v8684, %v8682
        %v8741 = vpack.c.b16 %v8687, %v8685
        %v8742 = vpack.c.b16 %v8688, %v8686
        %v8743 = vpack.c.b16 %v8691, %v8689
        %v8744 = vpack.c.b16 %v8692, %v8690
        %v8745 = vpack.c.b16 %v8695, %v8693
        %v8746 = vpack.c.b16 %v8696, %v8694
        %v8747 = vpack.c.b16 %v8699, %v8697
        %v8748 = vpack.c.b16 %v8700, %v8698
        %v8749 = vpack.c.b16 %v8703, %v8701
        %v8750 = vpack.c.b16 %v8704, %v8702
        %v8751 = vpack.c.b16 %v8707, %v8705
        %v8752 = vpack.c.b16 %v8708, %v8706
        %v8753 = vpack.c.b16 %v8711, %v8709
        %v8754 = vpack.c.b16 %v8712, %v8710
        %v8755 = vpack.c.b16 %v8715, %v8713
        %v8756 = vpack.c.b16 %v8716, %v8714
        %v8757 = vpack.c.b16 %v8719, %v8717
        %v8758 = vpack.c.b16 %v8720, %v8718
        %v8759 = vpack.c.b16 %v8723, %v8721
        %v8760 = vpack.c.b16 %v8724, %v8722
        %v8761 = vpack.c.b16 %v8727, %v8725
        %v8762 = vpack.c.b16 %v8728, %v8726
        %v8763 = vpack.c.b16 %v8731, %v8729
        %v8764 = vpack.c.b16 %v8732, %v8730
        %8797 = vmatpush.bf16.msra.mxu0 %v8747
        %8798 = vmatpush.bf16.msra.mxu0 %v8745
        %8799 = vmatpush.bf16.msra.mxu0 %v8743
        %8800 = vmatpush.bf16.msra.mxu0 %v8741
        %8801 = vmatpush.bf16.msra.mxu0 %v8739
        %8802 = vmatpush.bf16.msra.mxu0 %v8737
        %8803 = vmatpush.bf16.msra.mxu0 %v8735
        %8804 = vmatpush.bf16.msra.mxu0 %v8733
        %8805 = vmatmul.bf16.gmra.mxu0 %v8633
        %v8806 = vpop.f32.mrf.mxu0
        %v8807 = vadd.f32 0.0, %v8806
        %v8808 = vpop.f32.mrf.mxu0
        %8809 = vdwg.mxu0
        %8810 = vmatpush.bf16.msra.mxu0 %v8763
        %8811 = vmatpush.bf16.msra.mxu0 %v8761
        %8812 = vmatpush.bf16.msra.mxu0 %v8759
        %8813 = vmatpush.bf16.msra.mxu0 %v8757
        %8814 = vmatpush.bf16.msra.mxu0 %v8755
        %8815 = vmatpush.bf16.msra.mxu0 %v8753
        %8816 = vmatpush.bf16.msra.mxu0 %v8751
        %8817 = vmatpush.bf16.msra.mxu0 %v8749
        %8818 = vmatmul.bf16.gmra.mxu0 %v8634
        %v8819 = vpop.f32.mrf.mxu0
        %v8820 = vadd.f32 %v8807, %v8819
        %v8821 = vpop.f32.mrf.mxu0
        %8822 = vdwg.mxu0
        %8823 = vmatpush.bf16.msra.mxu0 %v8748
        %8824 = vmatpush.bf16.msra.mxu0 %v8746
        %8825 = vmatpush.bf16.msra.mxu0 %v8744
        %8826 = vmatpush.bf16.msra.mxu0 %v8742
        %8827 = vmatpush.bf16.msra.mxu0 %v8740
        %8828 = vmatpush.bf16.msra.mxu0 %v8738
        %8829 = vmatpush.bf16.msra.mxu0 %v8736
        %8830 = vmatpush.bf16.msra.mxu0 %v8734
        %8831 = vmatmul.bf16.gmra.mxu0 %v8633
        %v8832 = vpop.f32.mrf.mxu0
        %v8833 = vadd.f32 0.0, %v8832
        %v8834 = vpop.f32.mrf.mxu0
        %8835 = vdwg.mxu0
        %8836 = vmatpush.bf16.msra.mxu0 %v8764
        %8837 = vmatpush.bf16.msra.mxu0 %v8762
        %8838 = vmatpush.bf16.msra.mxu0 %v8760
        %8839 = vmatpush.bf16.msra.mxu0 %v8758
        %8840 = vmatpush.bf16.msra.mxu0 %v8756
        %8841 = vmatpush.bf16.msra.mxu0 %v8754
        %8842 = vmatpush.bf16.msra.mxu0 %v8752
        %8843 = vmatpush.bf16.msra.mxu0 %v8750
        %8844 = vmatmul.bf16.gmra.mxu0 %v8634
        %v8845 = vpop.f32.mrf.mxu0
        %v8846 = vadd.f32 %v8833, %v8845
        %v8847 = vpop.f32.mrf.mxu0
        %8848 = vdwg.mxu0
        %v8851 = vrot.slane %v8846, 7
        %vm8852 = vcmask 1040384
        %v8853 = vsel %vm8852, %v8820, %v8851
        %v8855 = vadd.f32 %v8596, %v8853
        %s8856 = scalar_lea.vmem [#allocation9], 256
        %v8857 = vld [vmem:[%s8856] sm:$0xff]
        %v8858 = vld [vmem:[%s8856 + $0x8] sm:$0xff]
        %v8859 = vld [vmem:[%s8856 + $0x10] sm:$0xff]
        %v8860 = vld [vmem:[%s8856 + $0x18] sm:$0xff]
        %v8861 = vld [vmem:[%s8856 + $0x20] sm:$0xff]
        %v8862 = vld [vmem:[%s8856 + $0x28] sm:$0xff]
        %v8863 = vld [vmem:[%s8856 + $0x30] sm:$0xff]
        %v8864 = vld [vmem:[%s8856 + $0x38] sm:$0xff]
        %v8865 = vld [vmem:[%s8856 + $0x40] sm:$0xff]
        %v8866 = vld [vmem:[%s8856 + $0x48] sm:$0xff]
        %v8867 = vld [vmem:[%s8856 + $0x50] sm:$0xff]
        %v8868 = vld [vmem:[%s8856 + $0x58] sm:$0xff]
        %v8869 = vld [vmem:[%s8856 + $0x60] sm:$0xff]
        %v8870 = vld [vmem:[%s8856 + $0x68] sm:$0xff]
        %v8871 = vld [vmem:[%s8856 + $0x70] sm:$0xff]
        %v8872 = vld [vmem:[%s8856 + $0x78] sm:$0xff]
        %v8873 = vld [vmem:[%s8856 + $0x80] sm:$0xff]
        %v8874 = vld [vmem:[%s8856 + $0x88] sm:$0xff]
        %v8875 = vld [vmem:[%s8856 + $0x90] sm:$0xff]
        %v8876 = vld [vmem:[%s8856 + $0x98] sm:$0xff]
        %v8877 = vld [vmem:[%s8856 + $0xa0] sm:$0xff]
        %v8878 = vld [vmem:[%s8856 + $0xa8] sm:$0xff]
        %v8879 = vld [vmem:[%s8856 + $0xb0] sm:$0xff]
        %v8880 = vld [vmem:[%s8856 + $0xb8] sm:$0xff]
        %v8881 = vld [vmem:[%s8856 + $0xc0] sm:$0xff]
        %v8882 = vld [vmem:[%s8856 + $0xc8] sm:$0xff]
        %v8883 = vld [vmem:[%s8856 + $0xd0] sm:$0xff]
        %v8884 = vld [vmem:[%s8856 + $0xd8] sm:$0xff]
        %v8885 = vld [vmem:[%s8856 + $0xe0] sm:$0xff]
        %v8886 = vld [vmem:[%s8856 + $0xe8] sm:$0xff]
        %v8887 = vld [vmem:[%s8856 + $0xf0] sm:$0xff]
        %v8888 = vld [vmem:[%s8856 + $0xf8] sm:$0xff]
        %v8890 = vshrl.u32 %v8633, 16
        %v8893 = vshrl.u32 %v8634, 16
        %v8929 = vunpack.c.l.b16 %v8857
        %v8930 = vunpack.c.h.b16 %v8857
        %v8931 = vunpack.c.l.b16 %v8858
        %v8932 = vunpack.c.h.b16 %v8858
        %v8933 = vunpack.c.l.b16 %v8859
        %v8934 = vunpack.c.h.b16 %v8859
        %v8935 = vunpack.c.l.b16 %v8860
        %v8936 = vunpack.c.h.b16 %v8860
        %v8937 = vunpack.c.l.b16 %v8861
        %v8938 = vunpack.c.h.b16 %v8861
        %v8939 = vunpack.c.l.b16 %v8862
        %v8940 = vunpack.c.h.b16 %v8862
        %v8941 = vunpack.c.l.b16 %v8863
        %v8942 = vunpack.c.h.b16 %v8863
        %v8943 = vunpack.c.l.b16 %v8864
        %v8944 = vunpack.c.h.b16 %v8864
        %v8945 = vunpack.c.l.b16 %v8865
        %v8946 = vunpack.c.h.b16 %v8865
        %v8947 = vunpack.c.l.b16 %v8866
        %v8948 = vunpack.c.h.b16 %v8866
        %v8949 = vunpack.c.l.b16 %v8867
        %v8950 = vunpack.c.h.b16 %v8867
        %v8951 = vunpack.c.l.b16 %v8868
        %v8952 = vunpack.c.h.b16 %v8868
        %v8953 = vunpack.c.l.b16 %v8869
        %v8954 = vunpack.c.h.b16 %v8869
        %v8955 = vunpack.c.l.b16 %v8870
        %v8956 = vunpack.c.h.b16 %v8870
        %v8957 = vunpack.c.l.b16 %v8871
        %v8958 = vunpack.c.h.b16 %v8871
        %v8959 = vunpack.c.l.b16 %v8872
        %v8960 = vunpack.c.h.b16 %v8872
        %v8961 = vunpack.c.l.b16 %v8873
        %v8962 = vunpack.c.h.b16 %v8873
        %v8963 = vunpack.c.l.b16 %v8874
        %v8964 = vunpack.c.h.b16 %v8874
        %v8965 = vunpack.c.l.b16 %v8875
        %v8966 = vunpack.c.h.b16 %v8875
        %v8967 = vunpack.c.l.b16 %v8876
        %v8968 = vunpack.c.h.b16 %v8876
        %v8969 = vunpack.c.l.b16 %v8877
        %v8970 = vunpack.c.h.b16 %v8877
        %v8971 = vunpack.c.l.b16 %v8878
        %v8972 = vunpack.c.h.b16 %v8878
        %v8973 = vunpack.c.l.b16 %v8879
        %v8974 = vunpack.c.h.b16 %v8879
        %v8975 = vunpack.c.l.b16 %v8880
        %v8976 = vunpack.c.h.b16 %v8880
        %v8977 = vunpack.c.l.b16 %v8881
        %v8978 = vunpack.c.h.b16 %v8881
        %v8979 = vunpack.c.l.b16 %v8882
        %v8980 = vunpack.c.h.b16 %v8882
        %v8981 = vunpack.c.l.b16 %v8883
        %v8982 = vunpack.c.h.b16 %v8883
        %v8983 = vunpack.c.l.b16 %v8884
        %v8984 = vunpack.c.h.b16 %v8884
        %v8985 = vunpack.c.l.b16 %v8885
        %v8986 = vunpack.c.h.b16 %v8885
        %v8987 = vunpack.c.l.b16 %v8886
        %v8988 = vunpack.c.h.b16 %v8886
        %v8989 = vunpack.c.l.b16 %v8887
        %v8990 = vunpack.c.h.b16 %v8887
        %v8991 = vunpack.c.l.b16 %v8888
        %v8992 = vunpack.c.h.b16 %v8888
        %v8993 = vpack.c.b16 %v8931, %v8929
        %v8994 = vpack.c.b16 %v8932, %v8930
        %v8995 = vpack.c.b16 %v8935, %v8933
        %v8996 = vpack.c.b16 %v8936, %v8934
        %v8997 = vpack.c.b16 %v8939, %v8937
        %v8998 = vpack.c.b16 %v8940, %v8938
        %v8999 = vpack.c.b16 %v8943, %v8941
        %v9000 = vpack.c.b16 %v8944, %v8942
        %v9001 = vpack.c.b16 %v8947, %v8945
        %v9002 = vpack.c.b16 %v8948, %v8946
        %v9003 = vpack.c.b16 %v8951, %v8949
        %v9004 = vpack.c.b16 %v8952, %v8950
        %v9005 = vpack.c.b16 %v8955, %v8953
        %v9006 = vpack.c.b16 %v8956, %v8954
        %v9007 = vpack.c.b16 %v8959, %v8957
        %v9008 = vpack.c.b16 %v8960, %v8958
        %v9009 = vpack.c.b16 %v8963, %v8961
        %v9010 = vpack.c.b16 %v8964, %v8962
        %v9011 = vpack.c.b16 %v8967, %v8965
        %v9012 = vpack.c.b16 %v8968, %v8966
        %v9013 = vpack.c.b16 %v8971, %v8969
        %v9014 = vpack.c.b16 %v8972, %v8970
        %v9015 = vpack.c.b16 %v8975, %v8973
        %v9016 = vpack.c.b16 %v8976, %v8974
        %v9017 = vpack.c.b16 %v8979, %v8977
        %v9018 = vpack.c.b16 %v8980, %v8978
        %v9019 = vpack.c.b16 %v8983, %v8981
        %v9020 = vpack.c.b16 %v8984, %v8982
        %v9021 = vpack.c.b16 %v8987, %v8985
        %v9022 = vpack.c.b16 %v8988, %v8986
        %v9023 = vpack.c.b16 %v8991, %v8989
        %v9024 = vpack.c.b16 %v8992, %v8990
        %9057 = vmatpush.bf16.msra.mxu0 %v9007
        %9058 = vmatpush.bf16.msra.mxu0 %v9005
        %9059 = vmatpush.bf16.msra.mxu0 %v9003
        %9060 = vmatpush.bf16.msra.mxu0 %v9001
        %9061 = vmatpush.bf16.msra.mxu0 %v8999
        %9062 = vmatpush.bf16.msra.mxu0 %v8997
        %9063 = vmatpush.bf16.msra.mxu0 %v8995
        %9064 = vmatpush.bf16.msra.mxu0 %v8993
        %9065 = vmatmul.bf16.gmra.mxu0 %v8890
        %v9066 = vpop.f32.mrf.mxu0
        %v9067 = vadd.f32 0.0, %v9066
        %v9068 = vpop.f32.mrf.mxu0
        %9069 = vdwg.mxu0
        %9070 = vmatpush.bf16.msra.mxu0 %v9023
        %9071 = vmatpush.bf16.msra.mxu0 %v9021
        %9072 = vmatpush.bf16.msra.mxu0 %v9019
        %9073 = vmatpush.bf16.msra.mxu0 %v9017
        %9074 = vmatpush.bf16.msra.mxu0 %v9015
        %9075 = vmatpush.bf16.msra.mxu0 %v9013
        %9076 = vmatpush.bf16.msra.mxu0 %v9011
        %9077 = vmatpush.bf16.msra.mxu0 %v9009
        %9078 = vmatmul.bf16.gmra.mxu0 %v8893
        %v9079 = vpop.f32.mrf.mxu0
        %v9080 = vadd.f32 %v9067, %v9079
        %v9081 = vpop.f32.mrf.mxu0
        %9082 = vdwg.mxu0
        %9083 = vmatpush.bf16.msra.mxu0 %v9008
        %9084 = vmatpush.bf16.msra.mxu0 %v9006
        %9085 = vmatpush.bf16.msra.mxu0 %v9004
        %9086 = vmatpush.bf16.msra.mxu0 %v9002
        %9087 = vmatpush.bf16.msra.mxu0 %v9000
        %9088 = vmatpush.bf16.msra.mxu0 %v8998
        %9089 = vmatpush.bf16.msra.mxu0 %v8996
        %9090 = vmatpush.bf16.msra.mxu0 %v8994
        %9091 = vmatmul.bf16.gmra.mxu0 %v8890
        %v9092 = vpop.f32.mrf.mxu0
        %v9093 = vadd.f32 0.0, %v9092
        %v9094 = vpop.f32.mrf.mxu0
        %9095 = vdwg.mxu0
        %9096 = vmatpush.bf16.msra.mxu0 %v9024
        %9097 = vmatpush.bf16.msra.mxu0 %v9022
        %9098 = vmatpush.bf16.msra.mxu0 %v9020
        %9099 = vmatpush.bf16.msra.mxu0 %v9018
        %9100 = vmatpush.bf16.msra.mxu0 %v9016
        %9101 = vmatpush.bf16.msra.mxu0 %v9014
        %9102 = vmatpush.bf16.msra.mxu0 %v9012
        %9103 = vmatpush.bf16.msra.mxu0 %v9010
        %9104 = vmatmul.bf16.gmra.mxu0 %v8893
        %v9105 = vpop.f32.mrf.mxu0
        %v9106 = vadd.f32 %v9093, %v9105
        %v9107 = vpop.f32.mrf.mxu0
        %9108 = vdwg.mxu0
        %v9111 = vrot.slane %v9106, 7
        %v9112 = vsel %vm8852, %v9080, %v9111
        %v9114 = vadd.f32 %v8855, %v9112
        %s9115 = scalar_lea.vmem [#allocation9], 512
        %v9116 = vld [vmem:[%s9115] sm:$0xff]
        %v9117 = vld [vmem:[%s9115 + $0x8] sm:$0xff]
        %v9118 = vld [vmem:[%s9115 + $0x10] sm:$0xff]
        %v9119 = vld [vmem:[%s9115 + $0x18] sm:$0xff]
        %v9120 = vld [vmem:[%s9115 + $0x20] sm:$0xff]
        %v9121 = vld [vmem:[%s9115 + $0x28] sm:$0xff]
        %v9122 = vld [vmem:[%s9115 + $0x30] sm:$0xff]
        %v9123 = vld [vmem:[%s9115 + $0x38] sm:$0xff]
        %v9124 = vld [vmem:[%s9115 + $0x40] sm:$0xff]
        %v9125 = vld [vmem:[%s9115 + $0x48] sm:$0xff]
        %v9126 = vld [vmem:[%s9115 + $0x50] sm:$0xff]
        %v9127 = vld [vmem:[%s9115 + $0x58] sm:$0xff]
        %v9128 = vld [vmem:[%s9115 + $0x60] sm:$0xff]
        %v9129 = vld [vmem:[%s9115 + $0x68] sm:$0xff]
        %v9130 = vld [vmem:[%s9115 + $0x70] sm:$0xff]
        %v9131 = vld [vmem:[%s9115 + $0x78] sm:$0xff]
        %v9132 = vld [vmem:[%s9115 + $0x80] sm:$0xff]
        %v9133 = vld [vmem:[%s9115 + $0x88] sm:$0xff]
        %v9134 = vld [vmem:[%s9115 + $0x90] sm:$0xff]
        %v9135 = vld [vmem:[%s9115 + $0x98] sm:$0xff]
        %v9136 = vld [vmem:[%s9115 + $0xa0] sm:$0xff]
        %v9137 = vld [vmem:[%s9115 + $0xa8] sm:$0xff]
        %v9138 = vld [vmem:[%s9115 + $0xb0] sm:$0xff]
        %v9139 = vld [vmem:[%s9115 + $0xb8] sm:$0xff]
        %v9140 = vld [vmem:[%s9115 + $0xc0] sm:$0xff]
        %v9141 = vld [vmem:[%s9115 + $0xc8] sm:$0xff]
        %v9142 = vld [vmem:[%s9115 + $0xd0] sm:$0xff]
        %v9143 = vld [vmem:[%s9115 + $0xd8] sm:$0xff]
        %v9144 = vld [vmem:[%s9115 + $0xe0] sm:$0xff]
        %v9145 = vld [vmem:[%s9115 + $0xe8] sm:$0xff]
        %v9146 = vld [vmem:[%s9115 + $0xf0] sm:$0xff]
        %v9147 = vld [vmem:[%s9115 + $0xf8] sm:$0xff]
        %v9148 = vrot.slane %v8633, 1
        %v9149 = vrot.slane %v8634, 1
        %v9184 = vunpack.c.l.b16 %v9116
        %v9185 = vunpack.c.h.b16 %v9116
        %v9186 = vunpack.c.l.b16 %v9117
        %v9187 = vunpack.c.h.b16 %v9117
        %v9188 = vunpack.c.l.b16 %v9118
        %v9189 = vunpack.c.h.b16 %v9118
        %v9190 = vunpack.c.l.b16 %v9119
        %v9191 = vunpack.c.h.b16 %v9119
        %v9192 = vunpack.c.l.b16 %v9120
        %v9193 = vunpack.c.h.b16 %v9120
        %v9194 = vunpack.c.l.b16 %v9121
        %v9195 = vunpack.c.h.b16 %v9121
        %v9196 = vunpack.c.l.b16 %v9122
        %v9197 = vunpack.c.h.b16 %v9122
        %v9198 = vunpack.c.l.b16 %v9123
        %v9199 = vunpack.c.h.b16 %v9123
        %v9200 = vunpack.c.l.b16 %v9124
        %v9201 = vunpack.c.h.b16 %v9124
        %v9202 = vunpack.c.l.b16 %v9125
        %v9203 = vunpack.c.h.b16 %v9125
        %v9204 = vunpack.c.l.b16 %v9126
        %v9205 = vunpack.c.h.b16 %v9126
        %v9206 = vunpack.c.l.b16 %v9127
        %v9207 = vunpack.c.h.b16 %v9127
        %v9208 = vunpack.c.l.b16 %v9128
        %v9209 = vunpack.c.h.b16 %v9128
        %v9210 = vunpack.c.l.b16 %v9129
        %v9211 = vunpack.c.h.b16 %v9129
        %v9212 = vunpack.c.l.b16 %v9130
        %v9213 = vunpack.c.h.b16 %v9130
        %v9214 = vunpack.c.l.b16 %v9131
        %v9215 = vunpack.c.h.b16 %v9131
        %v9216 = vunpack.c.l.b16 %v9132
        %v9217 = vunpack.c.h.b16 %v9132
        %v9218 = vunpack.c.l.b16 %v9133
        %v9219 = vunpack.c.h.b16 %v9133
        %v9220 = vunpack.c.l.b16 %v9134
        %v9221 = vunpack.c.h.b16 %v9134
        %v9222 = vunpack.c.l.b16 %v9135
        %v9223 = vunpack.c.h.b16 %v9135
        %v9224 = vunpack.c.l.b16 %v9136
        %v9225 = vunpack.c.h.b16 %v9136
        %v9226 = vunpack.c.l.b16 %v9137
        %v9227 = vunpack.c.h.b16 %v9137
        %v9228 = vunpack.c.l.b16 %v9138
        %v9229 = vunpack.c.h.b16 %v9138
        %v9230 = vunpack.c.l.b16 %v9139
        %v9231 = vunpack.c.h.b16 %v9139
        %v9232 = vunpack.c.l.b16 %v9140
        %v9233 = vunpack.c.h.b16 %v9140
        %v9234 = vunpack.c.l.b16 %v9141
        %v9235 = vunpack.c.h.b16 %v9141
        %v9236 = vunpack.c.l.b16 %v9142
        %v9237 = vunpack.c.h.b16 %v9142
        %v9238 = vunpack.c.l.b16 %v9143
        %v9239 = vunpack.c.h.b16 %v9143
        %v9240 = vunpack.c.l.b16 %v9144
        %v9241 = vunpack.c.h.b16 %v9144
        %v9242 = vunpack.c.l.b16 %v9145
        %v9243 = vunpack.c.h.b16 %v9145
        %v9244 = vunpack.c.l.b16 %v9146
        %v9245 = vunpack.c.h.b16 %v9146
        %v9246 = vunpack.c.l.b16 %v9147
        %v9247 = vunpack.c.h.b16 %v9147
        %v9248 = vpack.c.b16 %v9186, %v9184
        %v9249 = vpack.c.b16 %v9187, %v9185
        %v9250 = vpack.c.b16 %v9190, %v9188
        %v9251 = vpack.c.b16 %v9191, %v9189
        %v9252 = vpack.c.b16 %v9194, %v9192
        %v9253 = vpack.c.b16 %v9195, %v9193
        %v9254 = vpack.c.b16 %v9198, %v9196
        %v9255 = vpack.c.b16 %v9199, %v9197
        %v9256 = vpack.c.b16 %v9202, %v9200
        %v9257 = vpack.c.b16 %v9203, %v9201
        %v9258 = vpack.c.b16 %v9206, %v9204
        %v9259 = vpack.c.b16 %v9207, %v9205
        %v9260 = vpack.c.b16 %v9210, %v9208
        %v9261 = vpack.c.b16 %v9211, %v9209
        %v9262 = vpack.c.b16 %v9214, %v9212
        %v9263 = vpack.c.b16 %v9215, %v9213
        %v9264 = vpack.c.b16 %v9218, %v9216
        %v9265 = vpack.c.b16 %v9219, %v9217
        %v9266 = vpack.c.b16 %v9222, %v9220
        %v9267 = vpack.c.b16 %v9223, %v9221
        %v9268 = vpack.c.b16 %v9226, %v9224
        %v9269 = vpack.c.b16 %v9227, %v9225
        %v9270 = vpack.c.b16 %v9230, %v9228
        %v9271 = vpack.c.b16 %v9231, %v9229
        %v9272 = vpack.c.b16 %v9234, %v9232
        %v9273 = vpack.c.b16 %v9235, %v9233
        %v9274 = vpack.c.b16 %v9238, %v9236
        %v9275 = vpack.c.b16 %v9239, %v9237
        %v9276 = vpack.c.b16 %v9242, %v9240
        %v9277 = vpack.c.b16 %v9243, %v9241
        %v9278 = vpack.c.b16 %v9246, %v9244
        %v9279 = vpack.c.b16 %v9247, %v9245
        %9312 = vmatpush.bf16.msra.mxu0 %v9262
        %9313 = vmatpush.bf16.msra.mxu0 %v9260
        %9314 = vmatpush.bf16.msra.mxu0 %v9258
        %9315 = vmatpush.bf16.msra.mxu0 %v9256
        %9316 = vmatpush.bf16.msra.mxu0 %v9254
        %9317 = vmatpush.bf16.msra.mxu0 %v9252
        %9318 = vmatpush.bf16.msra.mxu0 %v9250
        %9319 = vmatpush.bf16.msra.mxu0 %v9248
        %9320 = vmatmul.bf16.gmra.mxu0 %v9148
        %v9321 = vpop.f32.mrf.mxu0
        %v9322 = vadd.f32 0.0, %v9321
        %v9323 = vpop.f32.mrf.mxu0
        %9324 = vdwg.mxu0
        %9325 = vmatpush.bf16.msra.mxu0 %v9278
        %9326 = vmatpush.bf16.msra.mxu0 %v9276
        %9327 = vmatpush.bf16.msra.mxu0 %v9274
        %9328 = vmatpush.bf16.msra.mxu0 %v9272
        %9329 = vmatpush.bf16.msra.mxu0 %v9270
        %9330 = vmatpush.bf16.msra.mxu0 %v9268
        %9331 = vmatpush.bf16.msra.mxu0 %v9266
        %9332 = vmatpush.bf16.msra.mxu0 %v9264
        %9333 = vmatmul.bf16.gmra.mxu0 %v9149
        %v9334 = vpop.f32.mrf.mxu0
        %v9335 = vadd.f32 %v9322, %v9334
        %v9336 = vpop.f32.mrf.mxu0
        %9337 = vdwg.mxu0
        %9338 = vmatpush.bf16.msra.mxu0 %v9263
        %9339 = vmatpush.bf16.msra.mxu0 %v9261
        %9340 = vmatpush.bf16.msra.mxu0 %v9259
        %9341 = vmatpush.bf16.msra.mxu0 %v9257
        %9342 = vmatpush.bf16.msra.mxu0 %v9255
        %9343 = vmatpush.bf16.msra.mxu0 %v9253
        %9344 = vmatpush.bf16.msra.mxu0 %v9251
        %9345 = vmatpush.bf16.msra.mxu0 %v9249
        %9346 = vmatmul.bf16.gmra.mxu0 %v9148
        %v9347 = vpop.f32.mrf.mxu0
        %v9348 = vadd.f32 0.0, %v9347
        %v9349 = vpop.f32.mrf.mxu0
        %9350 = vdwg.mxu0
        %9351 = vmatpush.bf16.msra.mxu0 %v9279
        %9352 = vmatpush.bf16.msra.mxu0 %v9277
        %9353 = vmatpush.bf16.msra.mxu0 %v9275
        %9354 = vmatpush.bf16.msra.mxu0 %v9273
        %9355 = vmatpush.bf16.msra.mxu0 %v9271
        %9356 = vmatpush.bf16.msra.mxu0 %v9269
        %9357 = vmatpush.bf16.msra.mxu0 %v9267
        %9358 = vmatpush.bf16.msra.mxu0 %v9265
        %9359 = vmatmul.bf16.gmra.mxu0 %v9149
        %v9360 = vpop.f32.mrf.mxu0
        %v9361 = vadd.f32 %v9348, %v9360
        %v9362 = vpop.f32.mrf.mxu0
        %9363 = vdwg.mxu0
        %v9366 = vrot.slane %v9361, 7
        %v9367 = vsel %vm8852, %v9335, %v9366
        %v9369 = vadd.f32 %v9114, %v9367
        %s9370 = scalar_lea.vmem [#allocation9], 768
        %v9371 = vld [vmem:[%s9370] sm:$0xff]
        %v9372 = vld [vmem:[%s9370 + $0x8] sm:$0xff]
        %v9373 = vld [vmem:[%s9370 + $0x10] sm:$0xff]
        %v9374 = vld [vmem:[%s9370 + $0x18] sm:$0xff]
        %v9375 = vld [vmem:[%s9370 + $0x20] sm:$0xff]
        %v9376 = vld [vmem:[%s9370 + $0x28] sm:$0xff]
        %v9377 = vld [vmem:[%s9370 + $0x30] sm:$0xff]
        %v9378 = vld [vmem:[%s9370 + $0x38] sm:$0xff]
        %v9379 = vld [vmem:[%s9370 + $0x40] sm:$0xff]
        %v9380 = vld [vmem:[%s9370 + $0x48] sm:$0xff]
        %v9381 = vld [vmem:[%s9370 + $0x50] sm:$0xff]
        %v9382 = vld [vmem:[%s9370 + $0x58] sm:$0xff]
        %v9383 = vld [vmem:[%s9370 + $0x60] sm:$0xff]
        %v9384 = vld [vmem:[%s9370 + $0x68] sm:$0xff]
        %v9385 = vld [vmem:[%s9370 + $0x70] sm:$0xff]
        %v9386 = vld [vmem:[%s9370 + $0x78] sm:$0xff]
        %v9387 = vld [vmem:[%s9370 + $0x80] sm:$0xff]
        %v9388 = vld [vmem:[%s9370 + $0x88] sm:$0xff]
        %v9389 = vld [vmem:[%s9370 + $0x90] sm:$0xff]
        %v9390 = vld [vmem:[%s9370 + $0x98] sm:$0xff]
        %v9391 = vld [vmem:[%s9370 + $0xa0] sm:$0xff]
        %v9392 = vld [vmem:[%s9370 + $0xa8] sm:$0xff]
        %v9393 = vld [vmem:[%s9370 + $0xb0] sm:$0xff]
        %v9394 = vld [vmem:[%s9370 + $0xb8] sm:$0xff]
        %v9395 = vld [vmem:[%s9370 + $0xc0] sm:$0xff]
        %v9396 = vld [vmem:[%s9370 + $0xc8] sm:$0xff]
        %v9397 = vld [vmem:[%s9370 + $0xd0] sm:$0xff]
        %v9398 = vld [vmem:[%s9370 + $0xd8] sm:$0xff]
        %v9399 = vld [vmem:[%s9370 + $0xe0] sm:$0xff]
        %v9400 = vld [vmem:[%s9370 + $0xe8] sm:$0xff]
        %v9401 = vld [vmem:[%s9370 + $0xf0] sm:$0xff]
        %v9402 = vld [vmem:[%s9370 + $0xf8] sm:$0xff]
        %v9403 = vrot.slane %v8890, 1
        %v9404 = vrot.slane %v8893, 1
        %v9439 = vunpack.c.l.b16 %v9371
        %v9440 = vunpack.c.h.b16 %v9371
        %v9441 = vunpack.c.l.b16 %v9372
        %v9442 = vunpack.c.h.b16 %v9372
        %v9443 = vunpack.c.l.b16 %v9373
        %v9444 = vunpack.c.h.b16 %v9373
        %v9445 = vunpack.c.l.b16 %v9374
        %v9446 = vunpack.c.h.b16 %v9374
        %v9447 = vunpack.c.l.b16 %v9375
        %v9448 = vunpack.c.h.b16 %v9375
        %v9449 = vunpack.c.l.b16 %v9376
        %v9450 = vunpack.c.h.b16 %v9376
        %v9451 = vunpack.c.l.b16 %v9377
        %v9452 = vunpack.c.h.b16 %v9377
        %v9453 = vunpack.c.l.b16 %v9378
        %v9454 = vunpack.c.h.b16 %v9378
        %v9455 = vunpack.c.l.b16 %v9379
        %v9456 = vunpack.c.h.b16 %v9379
        %v9457 = vunpack.c.l.b16 %v9380
        %v9458 = vunpack.c.h.b16 %v9380
        %v9459 = vunpack.c.l.b16 %v9381
        %v9460 = vunpack.c.h.b16 %v9381
        %v9461 = vunpack.c.l.b16 %v9382
        %v9462 = vunpack.c.h.b16 %v9382
        %v9463 = vunpack.c.l.b16 %v9383
        %v9464 = vunpack.c.h.b16 %v9383
        %v9465 = vunpack.c.l.b16 %v9384
        %v9466 = vunpack.c.h.b16 %v9384
        %v9467 = vunpack.c.l.b16 %v9385
        %v9468 = vunpack.c.h.b16 %v9385
        %v9469 = vunpack.c.l.b16 %v9386
        %v9470 = vunpack.c.h.b16 %v9386
        %v9471 = vunpack.c.l.b16 %v9387
        %v9472 = vunpack.c.h.b16 %v9387
        %v9473 = vunpack.c.l.b16 %v9388
        %v9474 = vunpack.c.h.b16 %v9388
        %v9475 = vunpack.c.l.b16 %v9389
        %v9476 = vunpack.c.h.b16 %v9389
        %v9477 = vunpack.c.l.b16 %v9390
        %v9478 = vunpack.c.h.b16 %v9390
        %v9479 = vunpack.c.l.b16 %v9391
        %v9480 = vunpack.c.h.b16 %v9391
        %v9481 = vunpack.c.l.b16 %v9392
        %v9482 = vunpack.c.h.b16 %v9392
        %v9483 = vunpack.c.l.b16 %v9393
        %v9484 = vunpack.c.h.b16 %v9393
        %v9485 = vunpack.c.l.b16 %v9394
        %v9486 = vunpack.c.h.b16 %v9394
        %v9487 = vunpack.c.l.b16 %v9395
        %v9488 = vunpack.c.h.b16 %v9395
        %v9489 = vunpack.c.l.b16 %v9396
        %v9490 = vunpack.c.h.b16 %v9396
        %v9491 = vunpack.c.l.b16 %v9397
        %v9492 = vunpack.c.h.b16 %v9397
        %v9493 = vunpack.c.l.b16 %v9398
        %v9494 = vunpack.c.h.b16 %v9398
        %v9495 = vunpack.c.l.b16 %v9399
        %v9496 = vunpack.c.h.b16 %v9399
        %v9497 = vunpack.c.l.b16 %v9400
        %v9498 = vunpack.c.h.b16 %v9400
        %v9499 = vunpack.c.l.b16 %v9401
        %v9500 = vunpack.c.h.b16 %v9401
        %v9501 = vunpack.c.l.b16 %v9402
        %v9502 = vunpack.c.h.b16 %v9402
        %v9503 = vpack.c.b16 %v9441, %v9439
        %v9504 = vpack.c.b16 %v9442, %v9440
        %v9505 = vpack.c.b16 %v9445, %v9443
        %v9506 = vpack.c.b16 %v9446, %v9444
        %v9507 = vpack.c.b16 %v9449, %v9447
        %v9508 = vpack.c.b16 %v9450, %v9448
        %v9509 = vpack.c.b16 %v9453, %v9451
        %v9510 = vpack.c.b16 %v9454, %v9452
        %v9511 = vpack.c.b16 %v9457, %v9455
        %v9512 = vpack.c.b16 %v9458, %v9456
        %v9513 = vpack.c.b16 %v9461, %v9459
        %v9514 = vpack.c.b16 %v9462, %v9460
        %v9515 = vpack.c.b16 %v9465, %v9463
        %v9516 = vpack.c.b16 %v9466, %v9464
        %v9517 = vpack.c.b16 %v9469, %v9467
        %v9518 = vpack.c.b16 %v9470, %v9468
        %v9519 = vpack.c.b16 %v9473, %v9471
        %v9520 = vpack.c.b16 %v9474, %v9472
        %v9521 = vpack.c.b16 %v9477, %v9475
        %v9522 = vpack.c.b16 %v9478, %v9476
        %v9523 = vpack.c.b16 %v9481, %v9479
        %v9524 = vpack.c.b16 %v9482, %v9480
        %v9525 = vpack.c.b16 %v9485, %v9483
        %v9526 = vpack.c.b16 %v9486, %v9484
        %v9527 = vpack.c.b16 %v9489, %v9487
        %v9528 = vpack.c.b16 %v9490, %v9488
        %v9529 = vpack.c.b16 %v9493, %v9491
        %v9530 = vpack.c.b16 %v9494, %v9492
        %v9531 = vpack.c.b16 %v9497, %v9495
        %v9532 = vpack.c.b16 %v9498, %v9496
        %v9533 = vpack.c.b16 %v9501, %v9499
        %v9534 = vpack.c.b16 %v9502, %v9500
        %9567 = vmatpush.bf16.msra.mxu0 %v9517
        %9568 = vmatpush.bf16.msra.mxu0 %v9515
        %9569 = vmatpush.bf16.msra.mxu0 %v9513
        %9570 = vmatpush.bf16.msra.mxu0 %v9511
        %9571 = vmatpush.bf16.msra.mxu0 %v9509
        %9572 = vmatpush.bf16.msra.mxu0 %v9507
        %9573 = vmatpush.bf16.msra.mxu0 %v9505
        %9574 = vmatpush.bf16.msra.mxu0 %v9503
        %9575 = vmatmul.bf16.gmra.mxu0 %v9403
        %v9576 = vpop.f32.mrf.mxu0
        %v9577 = vadd.f32 0.0, %v9576
        %v9578 = vpop.f32.mrf.mxu0
        %9579 = vdwg.mxu0
        %9580 = vmatpush.bf16.msra.mxu0 %v9533
        %9581 = vmatpush.bf16.msra.mxu0 %v9531
        %9582 = vmatpush.bf16.msra.mxu0 %v9529
        %9583 = vmatpush.bf16.msra.mxu0 %v9527
        %9584 = vmatpush.bf16.msra.mxu0 %v9525
        %9585 = vmatpush.bf16.msra.mxu0 %v9523
        %9586 = vmatpush.bf16.msra.mxu0 %v9521
        %9587 = vmatpush.bf16.msra.mxu0 %v9519
        %9588 = vmatmul.bf16.gmra.mxu0 %v9404
        %v9589 = vpop.f32.mrf.mxu0
        %v9590 = vadd.f32 %v9577, %v9589
        %v9591 = vpop.f32.mrf.mxu0
        %9592 = vdwg.mxu0
        %9593 = vmatpush.bf16.msra.mxu0 %v9518
        %9594 = vmatpush.bf16.msra.mxu0 %v9516
        %9595 = vmatpush.bf16.msra.mxu0 %v9514
        %9596 = vmatpush.bf16.msra.mxu0 %v9512
        %9597 = vmatpush.bf16.msra.mxu0 %v9510
        %9598 = vmatpush.bf16.msra.mxu0 %v9508
        %9599 = vmatpush.bf16.msra.mxu0 %v9506
        %9600 = vmatpush.bf16.msra.mxu0 %v9504
        %9601 = vmatmul.bf16.gmra.mxu0 %v9403
        %v9602 = vpop.f32.mrf.mxu0
        %v9603 = vadd.f32 0.0, %v9602
        %v9604 = vpop.f32.mrf.mxu0
        %9605 = vdwg.mxu0
        %9606 = vmatpush.bf16.msra.mxu0 %v9534
        %9607 = vmatpush.bf16.msra.mxu0 %v9532
        %9608 = vmatpush.bf16.msra.mxu0 %v9530
        %9609 = vmatpush.bf16.msra.mxu0 %v9528
        %9610 = vmatpush.bf16.msra.mxu0 %v9526
        %9611 = vmatpush.bf16.msra.mxu0 %v9524
        %9612 = vmatpush.bf16.msra.mxu0 %v9522
        %9613 = vmatpush.bf16.msra.mxu0 %v9520
        %9614 = vmatmul.bf16.gmra.mxu0 %v9404
        %v9615 = vpop.f32.mrf.mxu0
        %v9616 = vadd.f32 %v9603, %v9615
        %v9617 = vpop.f32.mrf.mxu0
        %9618 = vdwg.mxu0
        %v9621 = vrot.slane %v9616, 7
        %v9622 = vsel %vm8852, %v9590, %v9621
        %v9624 = vadd.f32 %v9369, %v9622
        %v9626 = vperm.slane %v9624, 0
        %v9627 = vperm.slane %v9624, 1
        %v9630 = vsel %vm8852, %v9626, -inf
        %v9631 = vsel %vm8852, %v9627, -inf
        %v9632 = vmax.f32 %v9630, %v9631
        %9633 = vmax.xlane.f32.xlu0 %v9632
        %v9634 = vpop.xlane.xlu0 %9633
        %v9636 = vperm.slane %v9634, 0
        %v9638 = vsub.f32 %v9624, %v9636
        %v9639 = vmul.f32 %v9638, 1.442695
        %v9640 = vpow.pop %v9639
        %v9642 = vperm.slane %v9640, 0
        %v9643 = vperm.slane %v9640, 1
        %v9646 = vsel %vm8852, %v9642, 0.0
        %v9647 = vsel %vm8852, %v9643, 0.0
        %v9648 = vadd.f32 %v9646, %v9647
        %9649 = vadd.xlane.f32.xlu0 %v9648
        %v9650 = vpop.xlane.xlu0 %9649
        %v9651 = vlog2.pop %v9650
        %v9652 = vmul.f32 %v9651, 0.6931472
        %v9653 = vadd.f32 %v9652, %v9634
        %v9655 = vperm.slane %v9653, 0
        %v9657 = vsub.f32 %v9624, %v9655
        %v9658 = vlaneseq
        %vm9659 = vcmp.ge.s32.totalorder %v9658, 0
        %vm9660 = vcmp.lt.s32.totalorder %v9658, 256
        %vm9661 = vmand %vm9659, %vm9660
        %9662 = vst.msk [vmem:[%s625] sm:$0x3] %vm9661, %v9657
        %v9663 = vld [vmem:[%s15] sm:$0x1]
        %v9664 = vpack.c.bf16 %v8595, %v8594
        %v9665 = vld [vmem:[%s14] sm:$0xf]
        %v9666 = vld [vmem:[%s14 + $0x4] sm:$0xf]
        %v9667 = vld [vmem:[%s14 + $0x8] sm:$0xf]
        %v9668 = vld [vmem:[%s14 + $0xc] sm:$0xf]
        %v9669 = vld [vmem:[%s14 + $0x10] sm:$0xf]
        %v9670 = vld [vmem:[%s14 + $0x14] sm:$0xf]
        %v9671 = vld [vmem:[%s14 + $0x18] sm:$0xf]
        %v9672 = vld [vmem:[%s14 + $0x1c] sm:$0xf]
        %v9673 = vld [vmem:[%s14 + $0x20] sm:$0xf]
        %v9674 = vld [vmem:[%s14 + $0x24] sm:$0xf]
        %v9675 = vld [vmem:[%s14 + $0x28] sm:$0xf]
        %v9676 = vld [vmem:[%s14 + $0x2c] sm:$0xf]
        %v9677 = vld [vmem:[%s14 + $0x30] sm:$0xf]
        %v9678 = vld [vmem:[%s14 + $0x34] sm:$0xf]
        %v9679 = vld [vmem:[%s14 + $0x38] sm:$0xf]
        %v9680 = vld [vmem:[%s14 + $0x3c] sm:$0xf]
        %v9681 = vld [vmem:[%s14 + $0x40] sm:$0xf]
        %v9682 = vld [vmem:[%s14 + $0x44] sm:$0xf]
        %v9683 = vld [vmem:[%s14 + $0x48] sm:$0xf]
        %v9684 = vld [vmem:[%s14 + $0x4c] sm:$0xf]
        %v9685 = vld [vmem:[%s14 + $0x50] sm:$0xf]
        %v9686 = vld [vmem:[%s14 + $0x54] sm:$0xf]
        %v9687 = vld [vmem:[%s14 + $0x58] sm:$0xf]
        %v9688 = vld [vmem:[%s14 + $0x5c] sm:$0xf]
        %v9689 = vld [vmem:[%s14 + $0x60] sm:$0xf]
        %v9690 = vld [vmem:[%s14 + $0x64] sm:$0xf]
        %v9691 = vld [vmem:[%s14 + $0x68] sm:$0xf]
        %v9692 = vld [vmem:[%s14 + $0x6c] sm:$0xf]
        %v9693 = vld [vmem:[%s14 + $0x70] sm:$0xf]
        %v9694 = vld [vmem:[%s14 + $0x74] sm:$0xf]
        %v9695 = vld [vmem:[%s14 + $0x78] sm:$0xf]
        %v9696 = vld [vmem:[%s14 + $0x7c] sm:$0xf]
        %v9698 = vunpack.c.l.b16 %v9664
        %v9699 = vunpack.c.h.b16 %v9664
        %v9700 = vpack.c.b16 %v9698, %v9698
        %v9701 = vpack.c.b16 %v9699, %v9699
        %v9736 = vunpack.c.l.b16 %v9665
        %v9737 = vunpack.c.l.b16 %v9666
        %v9738 = vunpack.c.l.b16 %v9667
        %v9739 = vunpack.c.l.b16 %v9668
        %v9740 = vunpack.c.l.b16 %v9669
        %v9741 = vunpack.c.l.b16 %v9670
        %v9742 = vunpack.c.l.b16 %v9671
        %v9743 = vunpack.c.l.b16 %v9672
        %v9744 = vunpack.c.l.b16 %v9673
        %v9745 = vunpack.c.l.b16 %v9674
        %v9746 = vunpack.c.l.b16 %v9675
        %v9747 = vunpack.c.l.b16 %v9676
        %v9748 = vunpack.c.l.b16 %v9677
        %v9749 = vunpack.c.l.b16 %v9678
        %v9750 = vunpack.c.l.b16 %v9679
        %v9751 = vunpack.c.l.b16 %v9680
        %v9752 = vunpack.c.l.b16 %v9681
        %v9753 = vunpack.c.l.b16 %v9682
        %v9754 = vunpack.c.l.b16 %v9683
        %v9755 = vunpack.c.l.b16 %v9684
        %v9756 = vunpack.c.l.b16 %v9685
        %v9757 = vunpack.c.l.b16 %v9686
        %v9758 = vunpack.c.l.b16 %v9687
        %v9759 = vunpack.c.l.b16 %v9688
        %v9760 = vunpack.c.l.b16 %v9689
        %v9761 = vunpack.c.l.b16 %v9690
        %v9762 = vunpack.c.l.b16 %v9691
        %v9763 = vunpack.c.l.b16 %v9692
        %v9764 = vunpack.c.l.b16 %v9693
        %v9765 = vunpack.c.l.b16 %v9694
        %v9766 = vunpack.c.l.b16 %v9695
        %v9767 = vunpack.c.l.b16 %v9696
        %v9768 = vpack.c.b16 %v9737, %v9736
        %v9769 = vpack.c.b16 %v9739, %v9738
        %v9770 = vpack.c.b16 %v9741, %v9740
        %v9771 = vpack.c.b16 %v9743, %v9742
        %v9772 = vpack.c.b16 %v9745, %v9744
        %v9773 = vpack.c.b16 %v9747, %v9746
        %v9774 = vpack.c.b16 %v9749, %v9748
        %v9775 = vpack.c.b16 %v9751, %v9750
        %v9776 = vpack.c.b16 %v9753, %v9752
        %v9777 = vpack.c.b16 %v9755, %v9754
        %v9778 = vpack.c.b16 %v9757, %v9756
        %v9779 = vpack.c.b16 %v9759, %v9758
        %v9780 = vpack.c.b16 %v9761, %v9760
        %v9781 = vpack.c.b16 %v9763, %v9762
        %v9782 = vpack.c.b16 %v9765, %v9764
        %v9783 = vpack.c.b16 %v9767, %v9766
        %9800 = vmatpush.bf16.msra.mxu0 %v9775
        %9801 = vmatpush.bf16.msra.mxu0 %v9774
        %9802 = vmatpush.bf16.msra.mxu0 %v9773
        %9803 = vmatpush.bf16.msra.mxu0 %v9772
        %9804 = vmatpush.bf16.msra.mxu0 %v9771
        %9805 = vmatpush.bf16.msra.mxu0 %v9770
        %9806 = vmatpush.bf16.msra.mxu0 %v9769
        %9807 = vmatpush.bf16.msra.mxu0 %v9768
        %9808 = vmatmul.bf16.gmra.mxu0 %v9700
        %v9809 = vpop.f32.mrf.mxu0
        %v9810 = vadd.f32 0.0, %v9809
        %v9811 = vpop.f32.mrf.mxu0
        %9812 = vdwg.mxu0
        %9813 = vmatpush.bf16.msra.mxu0 %v9783
        %9814 = vmatpush.bf16.msra.mxu0 %v9782
        %9815 = vmatpush.bf16.msra.mxu0 %v9781
        %9816 = vmatpush.bf16.msra.mxu0 %v9780
        %9817 = vmatpush.bf16.msra.mxu0 %v9779
        %9818 = vmatpush.bf16.msra.mxu0 %v9778
        %9819 = vmatpush.bf16.msra.mxu0 %v9777
        %9820 = vmatpush.bf16.msra.mxu0 %v9776
        %9821 = vmatmul.bf16.gmra.mxu0 %v9701
        %v9822 = vpop.f32.mrf.mxu0
        %v9823 = vadd.f32 %v9810, %v9822
        %v9824 = vpop.f32.mrf.mxu0
        %9825 = vdwg.mxu0
        %v9826 = vadd.f32 %v9663, %v9823
        %s9827 = scalar_lea.vmem %s14, 128
        %v9828 = vld [vmem:[%s9827] sm:$0xf]
        %v9829 = vld [vmem:[%s9827 + $0x4] sm:$0xf]
        %v9830 = vld [vmem:[%s9827 + $0x8] sm:$0xf]
        %v9831 = vld [vmem:[%s9827 + $0xc] sm:$0xf]
        %v9832 = vld [vmem:[%s9827 + $0x10] sm:$0xf]
        %v9833 = vld [vmem:[%s9827 + $0x14] sm:$0xf]
        %v9834 = vld [vmem:[%s9827 + $0x18] sm:$0xf]
        %v9835 = vld [vmem:[%s9827 + $0x1c] sm:$0xf]
        %v9836 = vld [vmem:[%s9827 + $0x20] sm:$0xf]
        %v9837 = vld [vmem:[%s9827 + $0x24] sm:$0xf]
        %v9838 = vld [vmem:[%s9827 + $0x28] sm:$0xf]
        %v9839 = vld [vmem:[%s9827 + $0x2c] sm:$0xf]
        %v9840 = vld [vmem:[%s9827 + $0x30] sm:$0xf]
        %v9841 = vld [vmem:[%s9827 + $0x34] sm:$0xf]
        %v9842 = vld [vmem:[%s9827 + $0x38] sm:$0xf]
        %v9843 = vld [vmem:[%s9827 + $0x3c] sm:$0xf]
        %v9844 = vld [vmem:[%s9827 + $0x40] sm:$0xf]
        %v9845 = vld [vmem:[%s9827 + $0x44] sm:$0xf]
        %v9846 = vld [vmem:[%s9827 + $0x48] sm:$0xf]
        %v9847 = vld [vmem:[%s9827 + $0x4c] sm:$0xf]
        %v9848 = vld [vmem:[%s9827 + $0x50] sm:$0xf]
        %v9849 = vld [vmem:[%s9827 + $0x54] sm:$0xf]
        %v9850 = vld [vmem:[%s9827 + $0x58] sm:$0xf]
        %v9851 = vld [vmem:[%s9827 + $0x5c] sm:$0xf]
        %v9852 = vld [vmem:[%s9827 + $0x60] sm:$0xf]
        %v9853 = vld [vmem:[%s9827 + $0x64] sm:$0xf]
        %v9854 = vld [vmem:[%s9827 + $0x68] sm:$0xf]
        %v9855 = vld [vmem:[%s9827 + $0x6c] sm:$0xf]
        %v9856 = vld [vmem:[%s9827 + $0x70] sm:$0xf]
        %v9857 = vld [vmem:[%s9827 + $0x74] sm:$0xf]
        %v9858 = vld [vmem:[%s9827 + $0x78] sm:$0xf]
        %v9859 = vld [vmem:[%s9827 + $0x7c] sm:$0xf]
        %v9861 = vshrl.u32 %v9700, 16
        %v9864 = vshrl.u32 %v9701, 16
        %v9900 = vunpack.c.l.b16 %v9828
        %v9901 = vunpack.c.l.b16 %v9829
        %v9902 = vunpack.c.l.b16 %v9830
        %v9903 = vunpack.c.l.b16 %v9831
        %v9904 = vunpack.c.l.b16 %v9832
        %v9905 = vunpack.c.l.b16 %v9833
        %v9906 = vunpack.c.l.b16 %v9834
        %v9907 = vunpack.c.l.b16 %v9835
        %v9908 = vunpack.c.l.b16 %v9836
        %v9909 = vunpack.c.l.b16 %v9837
        %v9910 = vunpack.c.l.b16 %v9838
        %v9911 = vunpack.c.l.b16 %v9839
        %v9912 = vunpack.c.l.b16 %v9840
        %v9913 = vunpack.c.l.b16 %v9841
        %v9914 = vunpack.c.l.b16 %v9842
        %v9915 = vunpack.c.l.b16 %v9843
        %v9916 = vunpack.c.l.b16 %v9844
        %v9917 = vunpack.c.l.b16 %v9845
        %v9918 = vunpack.c.l.b16 %v9846
        %v9919 = vunpack.c.l.b16 %v9847
        %v9920 = vunpack.c.l.b16 %v9848
        %v9921 = vunpack.c.l.b16 %v9849
        %v9922 = vunpack.c.l.b16 %v9850
        %v9923 = vunpack.c.l.b16 %v9851
        %v9924 = vunpack.c.l.b16 %v9852
        %v9925 = vunpack.c.l.b16 %v9853
        %v9926 = vunpack.c.l.b16 %v9854
        %v9927 = vunpack.c.l.b16 %v9855
        %v9928 = vunpack.c.l.b16 %v9856
        %v9929 = vunpack.c.l.b16 %v9857
        %v9930 = vunpack.c.l.b16 %v9858
        %v9931 = vunpack.c.l.b16 %v9859
        %v9932 = vpack.c.b16 %v9901, %v9900
        %v9933 = vpack.c.b16 %v9903, %v9902
        %v9934 = vpack.c.b16 %v9905, %v9904
        %v9935 = vpack.c.b16 %v9907, %v9906
        %v9936 = vpack.c.b16 %v9909, %v9908
        %v9937 = vpack.c.b16 %v9911, %v9910
        %v9938 = vpack.c.b16 %v9913, %v9912
        %v9939 = vpack.c.b16 %v9915, %v9914
        %v9940 = vpack.c.b16 %v9917, %v9916
        %v9941 = vpack.c.b16 %v9919, %v9918
        %v9942 = vpack.c.b16 %v9921, %v9920
        %v9943 = vpack.c.b16 %v9923, %v9922
        %v9944 = vpack.c.b16 %v9925, %v9924
        %v9945 = vpack.c.b16 %v9927, %v9926
        %v9946 = vpack.c.b16 %v9929, %v9928
        %v9947 = vpack.c.b16 %v9931, %v9930
        %9964 = vmatpush.bf16.msra.mxu0 %v9939
        %9965 = vmatpush.bf16.msra.mxu0 %v9938
        %9966 = vmatpush.bf16.msra.mxu0 %v9937
        %9967 = vmatpush.bf16.msra.mxu0 %v9936
        %9968 = vmatpush.bf16.msra.mxu0 %v9935
        %9969 = vmatpush.bf16.msra.mxu0 %v9934
        %9970 = vmatpush.bf16.msra.mxu0 %v9933
        %9971 = vmatpush.bf16.msra.mxu0 %v9932
        %9972 = vmatmul.bf16.gmra.mxu0 %v9861
        %v9973 = vpop.f32.mrf.mxu0
        %v9974 = vadd.f32 0.0, %v9973
        %v9975 = vpop.f32.mrf.mxu0
        %9976 = vdwg.mxu0
        %9977 = vmatpush.bf16.msra.mxu0 %v9947
        %9978 = vmatpush.bf16.msra.mxu0 %v9946
        %9979 = vmatpush.bf16.msra.mxu0 %v9945
        %9980 = vmatpush.bf16.msra.mxu0 %v9944
        %9981 = vmatpush.bf16.msra.mxu0 %v9943
        %9982 = vmatpush.bf16.msra.mxu0 %v9942
        %9983 = vmatpush.bf16.msra.mxu0 %v9941
        %9984 = vmatpush.bf16.msra.mxu0 %v9940
        %9985 = vmatmul.bf16.gmra.mxu0 %v9864
        %v9986 = vpop.f32.mrf.mxu0
        %v9987 = vadd.f32 %v9974, %v9986
        %v9988 = vpop.f32.mrf.mxu0
        %9989 = vdwg.mxu0
        %v9990 = vadd.f32 %v9826, %v9987
        %v9991 = vmax.f32 %v9990, 0.0
        %v9992 = vld [vmem:[%s16] sm:$0xff]
        %v9993 = vld [vmem:[%s16 + $0x8] sm:$0xff]
        %v9994 = vld [vmem:[%s16 + $0x10] sm:$0xff]
        %v9995 = vld [vmem:[%s16 + $0x18] sm:$0xff]
        %v9996 = vld [vmem:[%s16 + $0x20] sm:$0xff]
        %v9997 = vld [vmem:[%s16 + $0x28] sm:$0xff]
        %v9998 = vld [vmem:[%s16 + $0x30] sm:$0xff]
        %v9999 = vld [vmem:[%s16 + $0x38] sm:$0xff]
        %v10000 = vld [vmem:[#allocation8] sm:$0x1]
        %v10002 = vsel %vm5641, %v9991, 0
        %10004 = vmatpush.msra.mxu0 0.0
        %10005 = vmatpush.msra.mxu0 0.0
        %10006 = vmatpush.msra.mxu0 0.0
        %10007 = vmatpush.msra.mxu0 0.0
        %10008 = vmatpush.msra.mxu0 0.0
        %10009 = vmatpush.msra.mxu0 0.0
        %10010 = vmatpush.msra.mxu0 0.0
        %10011 = vmatpush.msra.mxu0 0.0
        %10012 = vmatpush.msra.mxu0 %v9999
        %10013 = vmatpush.msra.mxu0 %v9998
        %10014 = vmatpush.msra.mxu0 %v9997
        %10015 = vmatpush.msra.mxu0 %v9996
        %10016 = vmatpush.msra.mxu0 %v9995
        %10017 = vmatpush.msra.mxu0 %v9994
        %10018 = vmatpush.msra.mxu0 %v9993
        %10019 = vmatpush.msra.mxu0 %v9992
        %10020 = vmatmul.f32.gmra.mxu0 %v10002
        %v10021 = vpop.f32.mrf.mxu0
        %v10022 = vadd.f32 %v10000, %v10021
        %10023 = vdwg.mxu0
        %v10024 = vtanh.pop %v10022
        %vm10025 = vcmask 0
        %10026 = vst.msk [vmem:[%s628] sm:$0x1] %vm10025, %v10024
        %p10027 = scmp.lt.s32.totalorder %s34, 1
        %s10028 = scalar_select %p10027, %s34, 1
        %s10029 = smul.addr %s10028, 2
        %s10030 = scalar_lea.vmem %s18, %s10029
        %p10031 = scmp.lt.s32.totalorder %s34, 1
        %s10032 = scalar_select %p10031, %s34, 1
        %s10033 = scalar_lea.vmem %s19, %s10032
        // Predicated region
        $region97: #{forward.1} parent=91 // pred_check
          %p10034 = pneg %p435
        $region98: #{forward.1} parent=91 // pred_check_branch
          %10036 = sbr.rel (%p10034) target = $region100
        $region99: #{forward.1} parent=91 // pred_region
          _
        $region100: #{forward.1} parent=91 // pred_fallthru
          _
        // Predicated region
        $region101: #{forward.1} parent=91 // pred_check
          %p10037 = pneg %p461
        $region102: #{forward.1} parent=91 // pred_check_branch
          %10039 = sbr.rel (%p10037) target = $region104
        $region103: #{forward.1} parent=91 // pred_region
          _
        $region104: #{forward.1} parent=91 // pred_fallthru
          _
      $region92: #{forward.1} parent=5 // pred_fallthru
        _
      %p10040 = scmp.le.s32.totalorder 2, %s29
      // Predicated region
      $region105: #{forward.1} parent=5 // pred_check
        %p10041 = pneg %p10040
      $region106: #{forward.1} parent=5 // pred_check_branch
        %10043 = sbr.rel (%p10041) target = $region108
      $region107: #{forward.1} parent=5 // pred_region
        %s10044 = ssub.s32 %s29, 2
        // Predicated region
        $region109: #{forward.1} parent=107 // pred_check
          %p10045 = pneg %p441
        $region110: #{forward.1} parent=107 // pred_check_branch
          %10047 = sbr.rel (%p10045) target = $region112
        $region111: #{forward.1} parent=107 // pred_region
          %p10048 = scmp.lt.s32.totalorder %s35, 1
          %s10049 = scalar_select %p10048, %s35, 1
          %s10050 = smul.addr %s10049, 2
          %s10051 = scalar_lea.vmem %s18, %s10050
        $region112: #{forward.1} parent=107 // pred_fallthru
          _
        // Predicated region
        $region113: #{forward.1} parent=107 // pred_check
          %p10052 = pneg %p467
        $region114: #{forward.1} parent=107 // pred_check_branch
          %10054 = sbr.rel (%p10052) target = $region116
        $region115: #{forward.1} parent=107 // pred_region
          %p10055 = scmp.lt.s32.totalorder %s35, 1
          %s10056 = scalar_select %p10055, %s35, 1
          %s10057 = scalar_lea.vmem %s19, %s10056
        $region116: #{forward.1} parent=107 // pred_fallthru
          _
      $region108: #{forward.1} parent=5 // pred_fallthru
        _
    $region6: #{forward.1} parent=1 // loop_footer
      %s33 = sadd.s32 1, %s29
    $region7: #{forward.1} parent=1 // loop_footer_branch
      %28 = sbr.rel target = $region3
    $region8: #{forward.1} parent=1 // loop_exit
      _
    %10058 = vsyncpa [#allocation10], 1
    %s10059 = scalar_lea.sflag [#allocation10], 1
    %10060 = vsyncpa %s10059, 1

</llo_original>
